<compile_context>
chip_gen: v7x
topology: tpu7x:2x2x1
jax: 0.10.0
libtpu: 0.0.40
codegen_flags: <defaults>
</compile_context>

<pallas_src>
import functools

import jax
import jax.numpy as jnp
import numpy as np
from jax import lax
from jax.experimental import pallas as pl
from jax.experimental.pallas import tpu as pltpu

LANES = 128      # padded channel / feature width (lane-dense matmul K/N)
BLOCK_B = 8      # samples per grid step (must be a multiple of 8)


# ----------------------------------------------------------------------------
# Fused kernel: one block of B samples per grid step
# ----------------------------------------------------------------------------
def _lenet_kernel(x_ref, w1_ref, b1_ref, w2_ref, b2_ref, w3_ref, b3_ref,
                  w4_ref, b4_ref, w5_ref, b5_ref, o_ref, p1_ref,
                  *, cin, B, wc1, hp1, wp1, wc2, hp2, wp2):
    f32 = jnp.float32
    C = w4_ref.shape[0]                 # padded feature width (= LANES)

    b1 = b1_ref[...]                    # (1, C)
    b2 = b2_ref[...]                    # (1, C)

    def col_max(a, j):
        # max over the column pair (2j, 2j+1); rows are (col * B + sample)
        return jnp.maximum(a[(2 * j) * B:(2 * j + 1) * B, :],
                           a[(2 * j + 1) * B:(2 * j + 2) * B, :])

    # ------------------------------------------------------------------
    # Stage 1: conv1 (VPU tap-accumulate in registers) + pool1 + ReLU.
    # ------------------------------------------------------------------
    def conv1_row(r):
        acc = jnp.zeros((wc1 * B, C), f32)
        for di in range(3):
            for dj in range(3):
                for c in range(cin):
                    k = (di * 3 + dj) * cin + c
                    xs = x_ref[0, r + di, pl.ds(dj * B, wc1 * B), c:c + 1]
                    acc = acc + xs * w1_ref[k:k + 1, :]
        return acc

    def conv1_body(i, carry):
        a0 = conv1_row(2 * i)
        cp0 = [col_max(a0, j) for j in range(wp1)]     # column-pooled row 2i
        a1 = conv1_row(2 * i + 1)
        for j in range(wp1):
            v = jnp.maximum(jnp.maximum(cp0[j], col_max(a1, j)) + b1, 0.0)
            p1_ref[i, pl.ds(j * B, B), :] = v
        return carry

    lax.fori_loop(0, hp1, conv1_body, 0)

    # ------------------------------------------------------------------
    # Stage 2: conv2 on the MXU (per-tap matmuls, register accumulation),
    # pool2 + ReLU fused, fc3 accumulated as (B, C) x (C, C) matmuls.
    # ------------------------------------------------------------------
    def conv2_row(r):
        acc = jnp.zeros((wc2 * B, C), f32)
        for di in range(3):
            for dj in range(3):
                lhs = p1_ref[r + di, pl.ds(dj * B, wc2 * B), :]
                acc = acc + jnp.dot(lhs, w2_ref[di * 3 + dj],
                                    preferred_element_type=f32)
        return acc

    def conv2_body(i, fc3_acc):
        a0 = conv2_row(2 * i)
        a1 = conv2_row(2 * i + 1)
        for j in range(wp2):
            m = jnp.maximum(col_max(a0, j), col_max(a1, j))
            v = jnp.maximum(m + b2, 0.0)                       # (B, C)
            fc3_acc = fc3_acc + jnp.dot(v, w3_ref[i * wp2 + j],
                                        preferred_element_type=f32)
        return fc3_acc

    fc3_acc = lax.fori_loop(0, hp2, conv2_body, jnp.zeros((B, C), f32))

    # ------------------------------------------------------------------
    # Stage 3: fc3 bias/ReLU and fc4/fc5 as (B, C) x (C, C) MXU matmuls.
    # ------------------------------------------------------------------
    h3 = jnp.maximum(fc3_acc + b3_ref[...], 0.0)
    h4 = jnp.maximum(jnp.dot(h3, w4_ref[...], preferred_element_type=f32)
                     + b4_ref[...], 0.0)
    h5 = jnp.maximum(jnp.dot(h4, w5_ref[...], preferred_element_type=f32)
                     + b5_ref[...], 0.0)
    o_ref[0] = h5


# ----------------------------------------------------------------------------
# Forward wrapper (jit-able)
# ----------------------------------------------------------------------------
def lenet_forward(x_nchw, prep, num_classes=10, block_b=BLOCK_B):
    n, cin, h, w = x_nchw.shape
    B = block_b
    assert B % 8 == 0, "block batch must be a multiple of 8 (sublane tile)"

    hc1, wc1 = h - 2, w - 2                       # 30, 30
    hp1, wp1 = hc1 // 2, wc1 // 2                 # 15, 15
    hc2, wc2 = hp1 - 2, wp1 - 2                   # 13, 13
    hp2, wp2 = hc2 // 2, wc2 // 2                 # 6, 6
    assert hp2 * wp2 == prep["w3"].shape[0], \
        "input spatial size inconsistent with fc3 weight layout"

    C = prep["w4"].shape[0]                       # padded feature width (128)
    nb = -(-n // B)
    npad = nb * B

    x = x_nchw.astype(jnp.float32)
    x = jnp.pad(x, ((0, npad - n), (0, 0), (0, 0), (0, 0)))
    # (N, cin, H, W) -> (nb, H, W*B, cin);  flat col index = spatial_col*B + b
    x = x.reshape(nb, B, cin, h, w)
    x = jnp.transpose(x, (0, 3, 4, 1, 2))
    x = x.reshape(nb, h, w * B, cin)

    kern = functools.partial(
        _lenet_kernel, cin=cin, B=B,
        wc1=wc1, hp1=hp1, wp1=wp1, wc2=wc2, hp2=hp2, wp2=wp2)

    def whole(arr):
        nd = arr.ndim
        return pl.BlockSpec(arr.shape, lambda b, _nd=nd: (0,) * _nd)

    out = pl.pallas_call(
        kern,
        out_shape=jax.ShapeDtypeStruct((nb, B, C), jnp.float32),
        grid=(nb,),
        in_specs=[
            pl.BlockSpec((1, h, w * B, cin), lambda b: (b, 0, 0, 0)),
            whole(prep["w1"]), whole(prep["b1"]),
            whole(prep["w2"]), whole(prep["b2"]),
            whole(prep["w3"]), whole(prep["b3"]),
            whole(prep["w4"]), whole(prep["b4"]),
            whole(prep["w5"]), whole(prep["b5"]),
        ],
        out_specs=pl.BlockSpec((1, B, C), lambda b: (b, 0, 0)),
        scratch_shapes=[pltpu.VMEM((hp1, wp1 * B, C), jnp.float32)],  # pool1
        compiler_params=pltpu.CompilerParams(
            dimension_semantics=("parallel",)),
    )(x, prep["w1"], prep["b1"], prep["w2"], prep["b2"],
      prep["w3"], prep["b3"], prep["w4"], prep["b4"],
      prep["w5"], prep["b5"])

    return out.reshape(npad, C)[:n, :num_classes]


# ----------------------------------------------------------------------------
# One-time parameter re-layout (outside the jitted forward)
#   * conv weights -> rows ordered (kh, kw, cin), out channels zero-padded
#   * conv2 weight -> (9, C, C) per-tap matmul slices
#   * fc3 weight   -> (36, C, C) per pool2-spatial-position slices; the PyTorch
#                     NCHW .view() permutation is folded into this layout
#   * fc4/fc5      -> (in, out) padded to (C, C); biases -> (1, C)
# ----------------------------------------------------------------------------
def prepare_params(p, lanes=LANES):
    f32 = jnp.float32

    def pad_vec(v):
        out = jnp.zeros((1, lanes), f32)
        return out.at[0, :v.shape[0]].set(v.astype(f32))

    def pad_fc(wt):                       # torch (out, in) -> padded (in, out)
        o, i = wt.shape
        out = jnp.zeros((lanes, lanes), f32)
        return out.at[:i, :o].set(wt.T.astype(f32))

    w1 = p["w1"]                          # (6, cin, 3, 3)
    c1o, cin, kh, kw = w1.shape
    w1r = jnp.transpose(w1, (2, 3, 1, 0)).reshape(kh * kw * cin, c1o)
    w1p = jnp.zeros((kh * kw * cin, lanes), f32).at[:, :c1o].set(w1r.astype(f32))

    w2 = p["w2"]                          # (16, 6, 3, 3)
    c2o = w2.shape[0]
    w2r = jnp.transpose(w2, (2, 3, 1, 0)).reshape(kh * kw, c1o, c2o)
    w2p = jnp.zeros((kh * kw, lanes, lanes), f32)
    w2p = w2p.at[:, :c1o, :c2o].set(w2r.astype(f32))

    w3 = p["w3"]                          # (120, c2*sp*sp), features = (c, i, j)
    f3 = w3.shape[0]
    sp = int(round((w3.shape[1] // c2o) ** 0.5))
    w3r = w3.reshape(f3, c2o, sp, sp)                     # (o, c, i, j)
    w3r = jnp.transpose(w3r, (2, 3, 1, 0)).reshape(sp * sp, c2o, f3)
    w3p = jnp.zeros((sp * sp, lanes, lanes), f32)
    w3p = w3p.at[:, :c2o, :f3].set(w3r.astype(f32))

    return {
        "w1": w1p, "b1": pad_vec(p["b1"]),
        "w2": w2p, "b2": pad_vec(p["b2"]),
        "w3": w3p, "b3": pad_vec(p["b3"]),
        "w4": pad_fc(p["w4"]), "b4": pad_vec(p["b4"]),
        "w5": pad_fc(p["w5"]), "b5": pad_vec(p["b5"]),
    }


# ----------------------------------------------------------------------------
# Deterministic parameter init (PyTorch-like uniform(-1/sqrt(fan_in), ...))
# ----------------------------------------------------------------------------
def init_params(key, in_channel=1):
    ks = jax.random.split(key, 10)

    def u(k, shape, fan_in):
        bound = 1.0 / np.sqrt(fan_in)
        return jax.random.uniform(k, shape, jnp.float32, -bound, bound)

    return {
        "w1": u(ks[0], (6, in_channel, 3, 3), in_channel * 9),
        "b1": u(ks[1], (6,), in_channel * 9),
        "w2": u(ks[2], (16, 6, 3, 3), 6 * 9),
        "b2": u(ks[3], (16,), 6 * 9),
        "w3": u(ks[4], (120, 16 * 6 * 6), 16 * 6 * 6),
        "b3": u(ks[5], (120,), 16 * 6 * 6),
        "w4": u(ks[6], (84, 120), 120),
        "b4": u(ks[7], (84,), 120),
        "w5": u(ks[8], (10, 84), 84),
        "b5": u(ks[9], (10,), 84),
    }


# ----------------------------------------------------------------------------
# Pure-JAX reference (correctness check only)
# ----------------------------------------------------------------------------
def lenet_ref(x, p):
    def conv(x, w, b):
        y = jax.lax.conv_general_dilated(
            x, w, (1, 1), "VALID", dimension_numbers=("NCHW", "OIHW", "NCHW"))
        return jax.nn.relu(y + b[None, :, None, None])

    def pool(x):
        return jax.lax.reduce_window(
            x, -jnp.inf, jax.lax.max, (1, 1, 2, 2), (1, 1, 2, 2), "VALID")

    x = pool(conv(x, p["w1"], p["b1"]))
    x = pool(conv(x, p["w2"], p["b2"]))
    x = x.reshape(x.shape[0], -1)
    x = jax.nn.relu(x @ p["w3"].T + p["b3"])
    x = jax.nn.relu(x @ p["w4"].T + p["b4"])
    x = jax.nn.relu(x @ p["w5"].T + p["b5"])
    return x


if __name__ == "__main__":
    key = jax.random.PRNGKey(0)
    k_x, k_p = jax.random.split(key)
    # 32x32 input -> conv(30) -> pool(15) -> conv(13) -> pool(6) -> 16*6*6 = 576
    x = jax.random.normal(k_x, (2, 1, 32, 32), dtype=jnp.float32)
    params = init_params(k_p, in_channel=1)
    prep = prepare_params(params)          # one-time weight re-layout

    fwd = jax.jit(lenet_forward)
    out = jax.block_until_ready(fwd(x, prep))

    ref = jax.block_until_ready(lenet_ref(x, params))
    assert out.shape == (2, 10), out.shape
    np.testing.assert_allclose(np.asarray(out), np.asarray(ref),
                               rtol=1e-4, atol=1e-4)
    print("KERNEL_OK")
</pallas_src>

<mosaic_0001>
module attributes {stable_mosaic.version = 11 : i64} {
  func.func @_lenet_kernel(%arg0: i32, %arg1: memref<1x32x256x1xf32, #tpu.memory_space<vmem>>, %arg2: memref<9x128xf32, #tpu.memory_space<vmem>>, %arg3: memref<1x128xf32, #tpu.memory_space<vmem>>, %arg4: memref<9x128x128xf32, #tpu.memory_space<vmem>>, %arg5: memref<1x128xf32, #tpu.memory_space<vmem>>, %arg6: memref<36x128x128xf32, #tpu.memory_space<vmem>>, %arg7: memref<1x128xf32, #tpu.memory_space<vmem>>, %arg8: memref<128x128xf32, #tpu.memory_space<vmem>>, %arg9: memref<1x128xf32, #tpu.memory_space<vmem>>, %arg10: memref<128x128xf32, #tpu.memory_space<vmem>>, %arg11: memref<1x128xf32, #tpu.memory_space<vmem>>, %arg12: memref<1x8x128xf32, #tpu.memory_space<vmem>>, %arg13: memref<15x120x128xf32, #tpu.memory_space<vmem>>) attributes {dimension_semantics = [#tpu.dimension_semantics<parallel>], iteration_bounds = array<i64: 1>, scalar_prefetch = 0 : i64, scratch_operands = 1 : i64, tpu.core_type = #tpu.core_type<tc>, window_params = [{transform_indices = @transform_0, window_bounds = array<i64: 1, 32, 256, 1>}, {pipeline_mode = #tpu.pipeline_mode<synchronous>, transform_indices = @transform_1, window_bounds = array<i64: 9, 128>}, {pipeline_mode = #tpu.pipeline_mode<synchronous>, transform_indices = @transform_2, window_bounds = array<i64: 1, 128>}, {pipeline_mode = #tpu.pipeline_mode<synchronous>, transform_indices = @transform_3, window_bounds = array<i64: 9, 128, 128>}, {pipeline_mode = #tpu.pipeline_mode<synchronous>, transform_indices = @transform_4, window_bounds = array<i64: 1, 128>}, {pipeline_mode = #tpu.pipeline_mode<synchronous>, transform_indices = @transform_5, window_bounds = array<i64: 36, 128, 128>}, {pipeline_mode = #tpu.pipeline_mode<synchronous>, transform_indices = @transform_6, window_bounds = array<i64: 1, 128>}, {pipeline_mode = #tpu.pipeline_mode<synchronous>, transform_indices = @transform_7, window_bounds = array<i64: 128, 128>}, {pipeline_mode = #tpu.pipeline_mode<synchronous>, transform_indices = @transform_8, window_bounds = array<i64: 1, 128>}, {pipeline_mode = #tpu.pipeline_mode<synchronous>, transform_indices = @transform_9, window_bounds = array<i64: 128, 128>}, {pipeline_mode = #tpu.pipeline_mode<synchronous>, transform_indices = @transform_10, window_bounds = array<i64: 1, 128>}, {transform_indices = @transform_11, window_bounds = array<i64: 1, 8, 128>}]} {
    %c0 = arith.constant 0 : index
    %c0_0 = arith.constant 0 : index
    %0 = vector.load %arg3[%c0, %c0_0] : memref<1x128xf32, #tpu.memory_space<vmem>>, vector<1x128xf32>
    %c0_1 = arith.constant 0 : index
    %c0_2 = arith.constant 0 : index
    %1 = vector.load %arg5[%c0_1, %c0_2] : memref<1x128xf32, #tpu.memory_space<vmem>>, vector<1x128xf32>
    %c0_i32 = arith.constant 0 : i32
    %c15_i32 = arith.constant 15 : i32
    %2 = arith.addi %c0_i32, %c15_i32 : i32
    %c1_i32 = arith.constant 1 : i32
    scf.for %arg14 = %c0_i32 to %2 step %c1_i32  : i32 {
      %c2_i32 = arith.constant 2 : i32
      %28 = arith.muli %c2_i32, %arg14 : i32
      %cst_25 = arith.constant 0.000000e+00 : f32
      %29 = vector.broadcast %cst_25 : f32 to vector<240x128xf32>
      %c0_i32_26 = arith.constant 0 : i32
      %30 = arith.addi %28, %c0_i32_26 : i32
      %c0_27 = arith.constant 0 : index
      %31 = arith.index_cast %30 : i32 to index
      %c0_28 = arith.constant 0 : index
      %c0_29 = arith.constant 0 : index
      %32 = vector.load %arg1[%c0_27, %31, %c0_28, %c0_29] : memref<1x32x256x1xf32, #tpu.memory_space<vmem>>, vector<1x1x240x1xf32>
      %33 = vector.shape_cast %32 : vector<1x1x240x1xf32> to vector<240x1xf32>
      %c0_30 = arith.constant 0 : index
      %c0_31 = arith.constant 0 : index
      %34 = vector.load %arg2[%c0_30, %c0_31] : memref<9x128xf32, #tpu.memory_space<vmem>>, vector<1x128xf32>
      %35 = vector.broadcast %33 : vector<240x1xf32> to vector<240x128xf32>
      %36 = vector.broadcast %34 : vector<1x128xf32> to vector<240x128xf32>
      %37 = arith.mulf %35, %36 : vector<240x128xf32>
      %38 = arith.addf %29, %37 : vector<240x128xf32>
      %c0_i32_32 = arith.constant 0 : i32
      %39 = arith.addi %28, %c0_i32_32 : i32
      %c0_33 = arith.constant 0 : index
      %40 = arith.index_cast %39 : i32 to index
      %c8 = arith.constant 8 : index
      %c0_34 = arith.constant 0 : index
      %41 = vector.load %arg1[%c0_33, %40, %c8, %c0_34] : memref<1x32x256x1xf32, #tpu.memory_space<vmem>>, vector<1x1x240x1xf32>
      %42 = vector.shape_cast %41 : vector<1x1x240x1xf32> to vector<240x1xf32>
      %c1 = arith.constant 1 : index
      %c0_35 = arith.constant 0 : index
      %43 = vector.load %arg2[%c1, %c0_35] : memref<9x128xf32, #tpu.memory_space<vmem>>, vector<1x128xf32>
      %44 = vector.broadcast %42 : vector<240x1xf32> to vector<240x128xf32>
      %45 = vector.broadcast %43 : vector<1x128xf32> to vector<240x128xf32>
      %46 = arith.mulf %44, %45 : vector<240x128xf32>
      %47 = arith.addf %38, %46 : vector<240x128xf32>
      %c0_i32_36 = arith.constant 0 : i32
      %48 = arith.addi %28, %c0_i32_36 : i32
      %c0_37 = arith.constant 0 : index
      %49 = arith.index_cast %48 : i32 to index
      %c16 = arith.constant 16 : index
      %c0_38 = arith.constant 0 : index
      %50 = vector.load %arg1[%c0_37, %49, %c16, %c0_38] : memref<1x32x256x1xf32, #tpu.memory_space<vmem>>, vector<1x1x240x1xf32>
      %51 = vector.shape_cast %50 : vector<1x1x240x1xf32> to vector<240x1xf32>
      %c2 = arith.constant 2 : index
      %c0_39 = arith.constant 0 : index
      %52 = vector.load %arg2[%c2, %c0_39] : memref<9x128xf32, #tpu.memory_space<vmem>>, vector<1x128xf32>
      %53 = vector.broadcast %51 : vector<240x1xf32> to vector<240x128xf32>
      %54 = vector.broadcast %52 : vector<1x128xf32> to vector<240x128xf32>
      %55 = arith.mulf %53, %54 : vector<240x128xf32>
      %56 = arith.addf %47, %55 : vector<240x128xf32>
      %c1_i32_40 = arith.constant 1 : i32
      %57 = arith.addi %28, %c1_i32_40 : i32
      %c0_41 = arith.constant 0 : index
      %58 = arith.index_cast %57 : i32 to index
      %c0_42 = arith.constant 0 : index
      %c0_43 = arith.constant 0 : index
      %59 = vector.load %arg1[%c0_41, %58, %c0_42, %c0_43] : memref<1x32x256x1xf32, #tpu.memory_space<vmem>>, vector<1x1x240x1xf32>
      %60 = vector.shape_cast %59 : vector<1x1x240x1xf32> to vector<240x1xf32>
      %c3 = arith.constant 3 : index
      %c0_44 = arith.constant 0 : index
      %61 = vector.load %arg2[%c3, %c0_44] : memref<9x128xf32, #tpu.memory_space<vmem>>, vector<1x128xf32>
      %62 = vector.broadcast %60 : vector<240x1xf32> to vector<240x128xf32>
      %63 = vector.broadcast %61 : vector<1x128xf32> to vector<240x128xf32>
      %64 = arith.mulf %62, %63 : vector<240x128xf32>
      %65 = arith.addf %56, %64 : vector<240x128xf32>
      %c1_i32_45 = arith.constant 1 : i32
      %66 = arith.addi %28, %c1_i32_45 : i32
      %c0_46 = arith.constant 0 : index
      %67 = arith.index_cast %66 : i32 to index
      %c8_47 = arith.constant 8 : index
      %c0_48 = arith.constant 0 : index
      %68 = vector.load %arg1[%c0_46, %67, %c8_47, %c0_48] : memref<1x32x256x1xf32, #tpu.memory_space<vmem>>, vector<1x1x240x1xf32>
      %69 = vector.shape_cast %68 : vector<1x1x240x1xf32> to vector<240x1xf32>
      %c4 = arith.constant 4 : index
      %c0_49 = arith.constant 0 : index
      %70 = vector.load %arg2[%c4, %c0_49] : memref<9x128xf32, #tpu.memory_space<vmem>>, vector<1x128xf32>
      %71 = vector.broadcast %69 : vector<240x1xf32> to vector<240x128xf32>
      %72 = vector.broadcast %70 : vector<1x128xf32> to vector<240x128xf32>
      %73 = arith.mulf %71, %72 : vector<240x128xf32>
      %74 = arith.addf %65, %73 : vector<240x128xf32>
      %c1_i32_50 = arith.constant 1 : i32
      %75 = arith.addi %28, %c1_i32_50 : i32
      %c0_51 = arith.constant 0 : index
      %76 = arith.index_cast %75 : i32 to index
      %c16_52 = arith.constant 16 : index
      %c0_53 = arith.constant 0 : index
      %77 = vector.load %arg1[%c0_51, %76, %c16_52, %c0_53] : memref<1x32x256x1xf32, #tpu.memory_space<vmem>>, vector<1x1x240x1xf32>
      %78 = vector.shape_cast %77 : vector<1x1x240x1xf32> to vector<240x1xf32>
      %c5 = arith.constant 5 : index
      %c0_54 = arith.constant 0 : index
      %79 = vector.load %arg2[%c5, %c0_54] : memref<9x128xf32, #tpu.memory_space<vmem>>, vector<1x128xf32>
      %80 = vector.broadcast %78 : vector<240x1xf32> to vector<240x128xf32>
      %81 = vector.broadcast %79 : vector<1x128xf32> to vector<240x128xf32>
      %82 = arith.mulf %80, %81 : vector<240x128xf32>
      %83 = arith.addf %74, %82 : vector<240x128xf32>
      %c2_i32_55 = arith.constant 2 : i32
      %84 = arith.addi %28, %c2_i32_55 : i32
      %c0_56 = arith.constant 0 : index
      %85 = arith.index_cast %84 : i32 to index
      %c0_57 = arith.constant 0 : index
      %c0_58 = arith.constant 0 : index
      %86 = vector.load %arg1[%c0_56, %85, %c0_57, %c0_58] : memref<1x32x256x1xf32, #tpu.memory_space<vmem>>, vector<1x1x240x1xf32>
      %87 = vector.shape_cast %86 : vector<1x1x240x1xf32> to vector<240x1xf32>
      %c6 = arith.constant 6 : index
      %c0_59 = arith.constant 0 : index
      %88 = vector.load %arg2[%c6, %c0_59] : memref<9x128xf32, #tpu.memory_space<vmem>>, vector<1x128xf32>
      %89 = vector.broadcast %87 : vector<240x1xf32> to vector<240x128xf32>
      %90 = vector.broadcast %88 : vector<1x128xf32> to vector<240x128xf32>
      %91 = arith.mulf %89, %90 : vector<240x128xf32>
      %92 = arith.addf %83, %91 : vector<240x128xf32>
      %c2_i32_60 = arith.constant 2 : i32
      %93 = arith.addi %28, %c2_i32_60 : i32
      %c0_61 = arith.constant 0 : index
      %94 = arith.index_cast %93 : i32 to index
      %c8_62 = arith.constant 8 : index
      %c0_63 = arith.constant 0 : index
      %95 = vector.load %arg1[%c0_61, %94, %c8_62, %c0_63] : memref<1x32x256x1xf32, #tpu.memory_space<vmem>>, vector<1x1x240x1xf32>
      %96 = vector.shape_cast %95 : vector<1x1x240x1xf32> to vector<240x1xf32>
      %c7 = arith.constant 7 : index
      %c0_64 = arith.constant 0 : index
      %97 = vector.load %arg2[%c7, %c0_64] : memref<9x128xf32, #tpu.memory_space<vmem>>, vector<1x128xf32>
      %98 = vector.broadcast %96 : vector<240x1xf32> to vector<240x128xf32>
      %99 = vector.broadcast %97 : vector<1x128xf32> to vector<240x128xf32>
      %100 = arith.mulf %98, %99 : vector<240x128xf32>
      %101 = arith.addf %92, %100 : vector<240x128xf32>
      %c2_i32_65 = arith.constant 2 : i32
      %102 = arith.addi %28, %c2_i32_65 : i32
      %c0_66 = arith.constant 0 : index
      %103 = arith.index_cast %102 : i32 to index
      %c16_67 = arith.constant 16 : index
      %c0_68 = arith.constant 0 : index
      %104 = vector.load %arg1[%c0_66, %103, %c16_67, %c0_68] : memref<1x32x256x1xf32, #tpu.memory_space<vmem>>, vector<1x1x240x1xf32>
      %105 = vector.shape_cast %104 : vector<1x1x240x1xf32> to vector<240x1xf32>
      %c8_69 = arith.constant 8 : index
      %c0_70 = arith.constant 0 : index
      %106 = vector.load %arg2[%c8_69, %c0_70] : memref<9x128xf32, #tpu.memory_space<vmem>>, vector<1x128xf32>
      %107 = vector.broadcast %105 : vector<240x1xf32> to vector<240x128xf32>
      %108 = vector.broadcast %106 : vector<1x128xf32> to vector<240x128xf32>
      %109 = arith.mulf %107, %108 : vector<240x128xf32>
      %110 = arith.addf %101, %109 : vector<240x128xf32>
      %111 = vector.extract_strided_slice %110 {offsets = [0, 0], sizes = [8, 128], strides = [1, 1]} : vector<240x128xf32> to vector<8x128xf32>
      %112 = vector.extract_strided_slice %110 {offsets = [8, 0], sizes = [8, 128], strides = [1, 1]} : vector<240x128xf32> to vector<8x128xf32>
      %113 = arith.maximumf %111, %112 : vector<8x128xf32>
      %114 = vector.extract_strided_slice %110 {offsets = [16, 0], sizes = [8, 128], strides = [1, 1]} : vector<240x128xf32> to vector<8x128xf32>
      %115 = vector.extract_strided_slice %110 {offsets = [24, 0], sizes = [8, 128], strides = [1, 1]} : vector<240x128xf32> to vector<8x128xf32>
      %116 = arith.maximumf %114, %115 : vector<8x128xf32>
      %117 = vector.extract_strided_slice %110 {offsets = [32, 0], sizes = [8, 128], strides = [1, 1]} : vector<240x128xf32> to vector<8x128xf32>
      %118 = vector.extract_strided_slice %110 {offsets = [40, 0], sizes = [8, 128], strides = [1, 1]} : vector<240x128xf32> to vector<8x128xf32>
      %119 = arith.maximumf %117, %118 : vector<8x128xf32>
      %120 = vector.extract_strided_slice %110 {offsets = [48, 0], sizes = [8, 128], strides = [1, 1]} : vector<240x128xf32> to vector<8x128xf32>
      %121 = vector.extract_strided_slice %110 {offsets = [56, 0], sizes = [8, 128], strides = [1, 1]} : vector<240x128xf32> to vector<8x128xf32>
      %122 = arith.maximumf %120, %121 : vector<8x128xf32>
      %123 = vector.extract_strided_slice %110 {offsets = [64, 0], sizes = [8, 128], strides = [1, 1]} : vector<240x128xf32> to vector<8x128xf32>
      %124 = vector.extract_strided_slice %110 {offsets = [72, 0], sizes = [8, 128], strides = [1, 1]} : vector<240x128xf32> to vector<8x128xf32>
      %125 = arith.maximumf %123, %124 : vector<8x128xf32>
      %126 = vector.extract_strided_slice %110 {offsets = [80, 0], sizes = [8, 128], strides = [1, 1]} : vector<240x128xf32> to vector<8x128xf32>
      %127 = vector.extract_strided_slice %110 {offsets = [88, 0], sizes = [8, 128], strides = [1, 1]} : vector<240x128xf32> to vector<8x128xf32>
      %128 = arith.maximumf %126, %127 : vector<8x128xf32>
      %129 = vector.extract_strided_slice %110 {offsets = [96, 0], sizes = [8, 128], strides = [1, 1]} : vector<240x128xf32> to vector<8x128xf32>
      %130 = vector.extract_strided_slice %110 {offsets = [104, 0], sizes = [8, 128], strides = [1, 1]} : vector<240x128xf32> to vector<8x128xf32>
      %131 = arith.maximumf %129, %130 : vector<8x128xf32>
      %132 = vector.extract_strided_slice %110 {offsets = [112, 0], sizes = [8, 128], strides = [1, 1]} : vector<240x128xf32> to vector<8x128xf32>
      %133 = vector.extract_strided_slice %110 {offsets = [120, 0], sizes = [8, 128], strides = [1, 1]} : vector<240x128xf32> to vector<8x128xf32>
      %134 = arith.maximumf %132, %133 : vector<8x128xf32>
      %135 = vector.extract_strided_slice %110 {offsets = [128, 0], sizes = [8, 128], strides = [1, 1]} : vector<240x128xf32> to vector<8x128xf32>
      %136 = vector.extract_strided_slice %110 {offsets = [136, 0], sizes = [8, 128], strides = [1, 1]} : vector<240x128xf32> to vector<8x128xf32>
      %137 = arith.maximumf %135, %136 : vector<8x128xf32>
      %138 = vector.extract_strided_slice %110 {offsets = [144, 0], sizes = [8, 128], strides = [1, 1]} : vector<240x128xf32> to vector<8x128xf32>
      %139 = vector.extract_strided_slice %110 {offsets = [152, 0], sizes = [8, 128], strides = [1, 1]} : vector<240x128xf32> to vector<8x128xf32>
      %140 = arith.maximumf %138, %139 : vector<8x128xf32>
      %141 = vector.extract_strided_slice %110 {offsets = [160, 0], sizes = [8, 128], strides = [1, 1]} : vector<240x128xf32> to vector<8x128xf32>
      %142 = vector.extract_strided_slice %110 {offsets = [168, 0], sizes = [8, 128], strides = [1, 1]} : vector<240x128xf32> to vector<8x128xf32>
      %143 = arith.maximumf %141, %142 : vector<8x128xf32>
      %144 = vector.extract_strided_slice %110 {offsets = [176, 0], sizes = [8, 128], strides = [1, 1]} : vector<240x128xf32> to vector<8x128xf32>
      %145 = vector.extract_strided_slice %110 {offsets = [184, 0], sizes = [8, 128], strides = [1, 1]} : vector<240x128xf32> to vector<8x128xf32>
      %146 = arith.maximumf %144, %145 : vector<8x128xf32>
      %147 = vector.extract_strided_slice %110 {offsets = [192, 0], sizes = [8, 128], strides = [1, 1]} : vector<240x128xf32> to vector<8x128xf32>
      %148 = vector.extract_strided_slice %110 {offsets = [200, 0], sizes = [8, 128], strides = [1, 1]} : vector<240x128xf32> to vector<8x128xf32>
      %149 = arith.maximumf %147, %148 : vector<8x128xf32>
      %150 = vector.extract_strided_slice %110 {offsets = [208, 0], sizes = [8, 128], strides = [1, 1]} : vector<240x128xf32> to vector<8x128xf32>
      %151 = vector.extract_strided_slice %110 {offsets = [216, 0], sizes = [8, 128], strides = [1, 1]} : vector<240x128xf32> to vector<8x128xf32>
      %152 = arith.maximumf %150, %151 : vector<8x128xf32>
      %153 = vector.extract_strided_slice %110 {offsets = [224, 0], sizes = [8, 128], strides = [1, 1]} : vector<240x128xf32> to vector<8x128xf32>
      %154 = vector.extract_strided_slice %110 {offsets = [232, 0], sizes = [8, 128], strides = [1, 1]} : vector<240x128xf32> to vector<8x128xf32>
      %155 = arith.maximumf %153, %154 : vector<8x128xf32>
      %c2_i32_71 = arith.constant 2 : i32
      %156 = arith.muli %c2_i32_71, %arg14 : i32
      %c1_i32_72 = arith.constant 1 : i32
      %157 = arith.addi %156, %c1_i32_72 : i32
      %cst_73 = arith.constant 0.000000e+00 : f32
      %158 = vector.broadcast %cst_73 : f32 to vector<240x128xf32>
      %c0_i32_74 = arith.constant 0 : i32
      %159 = arith.addi %157, %c0_i32_74 : i32
      %c0_75 = arith.constant 0 : index
      %160 = arith.index_cast %159 : i32 to index
      %c0_76 = arith.constant 0 : index
      %c0_77 = arith.constant 0 : index
      %161 = vector.load %arg1[%c0_75, %160, %c0_76, %c0_77] : memref<1x32x256x1xf32, #tpu.memory_space<vmem>>, vector<1x1x240x1xf32>
      %162 = vector.shape_cast %161 : vector<1x1x240x1xf32> to vector<240x1xf32>
      %c0_78 = arith.constant 0 : index
      %c0_79 = arith.constant 0 : index
      %163 = vector.load %arg2[%c0_78, %c0_79] : memref<9x128xf32, #tpu.memory_space<vmem>>, vector<1x128xf32>
      %164 = vector.broadcast %162 : vector<240x1xf32> to vector<240x128xf32>
      %165 = vector.broadcast %163 : vector<1x128xf32> to vector<240x128xf32>
      %166 = arith.mulf %164, %165 : vector<240x128xf32>
      %167 = arith.addf %158, %166 : vector<240x128xf32>
      %c0_i32_80 = arith.constant 0 : i32
      %168 = arith.addi %157, %c0_i32_80 : i32
      %c0_81 = arith.constant 0 : index
      %169 = arith.index_cast %168 : i32 to index
      %c8_82 = arith.constant 8 : index
      %c0_83 = arith.constant 0 : index
      %170 = vector.load %arg1[%c0_81, %169, %c8_82, %c0_83] : memref<1x32x256x1xf32, #tpu.memory_space<vmem>>, vector<1x1x240x1xf32>
      %171 = vector.shape_cast %170 : vector<1x1x240x1xf32> to vector<240x1xf32>
      %c1_84 = arith.constant 1 : index
      %c0_85 = arith.constant 0 : index
      %172 = vector.load %arg2[%c1_84, %c0_85] : memref<9x128xf32, #tpu.memory_space<vmem>>, vector<1x128xf32>
      %173 = vector.broadcast %171 : vector<240x1xf32> to vector<240x128xf32>
      %174 = vector.broadcast %172 : vector<1x128xf32> to vector<240x128xf32>
      %175 = arith.mulf %173, %174 : vector<240x128xf32>
      %176 = arith.addf %167, %175 : vector<240x128xf32>
      %c0_i32_86 = arith.constant 0 : i32
      %177 = arith.addi %157, %c0_i32_86 : i32
      %c0_87 = arith.constant 0 : index
      %178 = arith.index_cast %177 : i32 to index
      %c16_88 = arith.constant 16 : index
      %c0_89 = arith.constant 0 : index
      %179 = vector.load %arg1[%c0_87, %178, %c16_88, %c0_89] : memref<1x32x256x1xf32, #tpu.memory_space<vmem>>, vector<1x1x240x1xf32>
      %180 = vector.shape_cast %179 : vector<1x1x240x1xf32> to vector<240x1xf32>
      %c2_90 = arith.constant 2 : index
      %c0_91 = arith.constant 0 : index
      %181 = vector.load %arg2[%c2_90, %c0_91] : memref<9x128xf32, #tpu.memory_space<vmem>>, vector<1x128xf32>
      %182 = vector.broadcast %180 : vector<240x1xf32> to vector<240x128xf32>
      %183 = vector.broadcast %181 : vector<1x128xf32> to vector<240x128xf32>
      %184 = arith.mulf %182, %183 : vector<240x128xf32>
      %185 = arith.addf %176, %184 : vector<240x128xf32>
      %c1_i32_92 = arith.constant 1 : i32
      %186 = arith.addi %157, %c1_i32_92 : i32
      %c0_93 = arith.constant 0 : index
      %187 = arith.index_cast %186 : i32 to index
      %c0_94 = arith.constant 0 : index
      %c0_95 = arith.constant 0 : index
      %188 = vector.load %arg1[%c0_93, %187, %c0_94, %c0_95] : memref<1x32x256x1xf32, #tpu.memory_space<vmem>>, vector<1x1x240x1xf32>
      %189 = vector.shape_cast %188 : vector<1x1x240x1xf32> to vector<240x1xf32>
      %c3_96 = arith.constant 3 : index
      %c0_97 = arith.constant 0 : index
      %190 = vector.load %arg2[%c3_96, %c0_97] : memref<9x128xf32, #tpu.memory_space<vmem>>, vector<1x128xf32>
      %191 = vector.broadcast %189 : vector<240x1xf32> to vector<240x128xf32>
      %192 = vector.broadcast %190 : vector<1x128xf32> to vector<240x128xf32>
      %193 = arith.mulf %191, %192 : vector<240x128xf32>
      %194 = arith.addf %185, %193 : vector<240x128xf32>
      %c1_i32_98 = arith.constant 1 : i32
      %195 = arith.addi %157, %c1_i32_98 : i32
      %c0_99 = arith.constant 0 : index
      %196 = arith.index_cast %195 : i32 to index
      %c8_100 = arith.constant 8 : index
      %c0_101 = arith.constant 0 : index
      %197 = vector.load %arg1[%c0_99, %196, %c8_100, %c0_101] : memref<1x32x256x1xf32, #tpu.memory_space<vmem>>, vector<1x1x240x1xf32>
      %198 = vector.shape_cast %197 : vector<1x1x240x1xf32> to vector<240x1xf32>
      %c4_102 = arith.constant 4 : index
      %c0_103 = arith.constant 0 : index
      %199 = vector.load %arg2[%c4_102, %c0_103] : memref<9x128xf32, #tpu.memory_space<vmem>>, vector<1x128xf32>
      %200 = vector.broadcast %198 : vector<240x1xf32> to vector<240x128xf32>
      %201 = vector.broadcast %199 : vector<1x128xf32> to vector<240x128xf32>
      %202 = arith.mulf %200, %201 : vector<240x128xf32>
      %203 = arith.addf %194, %202 : vector<240x128xf32>
      %c1_i32_104 = arith.constant 1 : i32
      %204 = arith.addi %157, %c1_i32_104 : i32
      %c0_105 = arith.constant 0 : index
      %205 = arith.index_cast %204 : i32 to index
      %c16_106 = arith.constant 16 : index
      %c0_107 = arith.constant 0 : index
      %206 = vector.load %arg1[%c0_105, %205, %c16_106, %c0_107] : memref<1x32x256x1xf32, #tpu.memory_space<vmem>>, vector<1x1x240x1xf32>
      %207 = vector.shape_cast %206 : vector<1x1x240x1xf32> to vector<240x1xf32>
      %c5_108 = arith.constant 5 : index
      %c0_109 = arith.constant 0 : index
      %208 = vector.load %arg2[%c5_108, %c0_109] : memref<9x128xf32, #tpu.memory_space<vmem>>, vector<1x128xf32>
      %209 = vector.broadcast %207 : vector<240x1xf32> to vector<240x128xf32>
      %210 = vector.broadcast %208 : vector<1x128xf32> to vector<240x128xf32>
      %211 = arith.mulf %209, %210 : vector<240x128xf32>
      %212 = arith.addf %203, %211 : vector<240x128xf32>
      %c2_i32_110 = arith.constant 2 : i32
      %213 = arith.addi %157, %c2_i32_110 : i32
      %c0_111 = arith.constant 0 : index
      %214 = arith.index_cast %213 : i32 to index
      %c0_112 = arith.constant 0 : index
      %c0_113 = arith.constant 0 : index
      %215 = vector.load %arg1[%c0_111, %214, %c0_112, %c0_113] : memref<1x32x256x1xf32, #tpu.memory_space<vmem>>, vector<1x1x240x1xf32>
      %216 = vector.shape_cast %215 : vector<1x1x240x1xf32> to vector<240x1xf32>
      %c6_114 = arith.constant 6 : index
      %c0_115 = arith.constant 0 : index
      %217 = vector.load %arg2[%c6_114, %c0_115] : memref<9x128xf32, #tpu.memory_space<vmem>>, vector<1x128xf32>
      %218 = vector.broadcast %216 : vector<240x1xf32> to vector<240x128xf32>
      %219 = vector.broadcast %217 : vector<1x128xf32> to vector<240x128xf32>
      %220 = arith.mulf %218, %219 : vector<240x128xf32>
      %221 = arith.addf %212, %220 : vector<240x128xf32>
      %c2_i32_116 = arith.constant 2 : i32
      %222 = arith.addi %157, %c2_i32_116 : i32
      %c0_117 = arith.constant 0 : index
      %223 = arith.index_cast %222 : i32 to index
      %c8_118 = arith.constant 8 : index
      %c0_119 = arith.constant 0 : index
      %224 = vector.load %arg1[%c0_117, %223, %c8_118, %c0_119] : memref<1x32x256x1xf32, #tpu.memory_space<vmem>>, vector<1x1x240x1xf32>
      %225 = vector.shape_cast %224 : vector<1x1x240x1xf32> to vector<240x1xf32>
      %c7_120 = arith.constant 7 : index
      %c0_121 = arith.constant 0 : index
      %226 = vector.load %arg2[%c7_120, %c0_121] : memref<9x128xf32, #tpu.memory_space<vmem>>, vector<1x128xf32>
      %227 = vector.broadcast %225 : vector<240x1xf32> to vector<240x128xf32>
      %228 = vector.broadcast %226 : vector<1x128xf32> to vector<240x128xf32>
      %229 = arith.mulf %227, %228 : vector<240x128xf32>
      %230 = arith.addf %221, %229 : vector<240x128xf32>
      %c2_i32_122 = arith.constant 2 : i32
      %231 = arith.addi %157, %c2_i32_122 : i32
      %c0_123 = arith.constant 0 : index
      %232 = arith.index_cast %231 : i32 to index
      %c16_124 = arith.constant 16 : index
      %c0_125 = arith.constant 0 : index
      %233 = vector.load %arg1[%c0_123, %232, %c16_124, %c0_125] : memref<1x32x256x1xf32, #tpu.memory_space<vmem>>, vector<1x1x240x1xf32>
      %234 = vector.shape_cast %233 : vector<1x1x240x1xf32> to vector<240x1xf32>
      %c8_126 = arith.constant 8 : index
      %c0_127 = arith.constant 0 : index
      %235 = vector.load %arg2[%c8_126, %c0_127] : memref<9x128xf32, #tpu.memory_space<vmem>>, vector<1x128xf32>
      %236 = vector.broadcast %234 : vector<240x1xf32> to vector<240x128xf32>
      %237 = vector.broadcast %235 : vector<1x128xf32> to vector<240x128xf32>
      %238 = arith.mulf %236, %237 : vector<240x128xf32>
      %239 = arith.addf %230, %238 : vector<240x128xf32>
      %240 = vector.extract_strided_slice %239 {offsets = [0, 0], sizes = [8, 128], strides = [1, 1]} : vector<240x128xf32> to vector<8x128xf32>
      %241 = vector.extract_strided_slice %239 {offsets = [8, 0], sizes = [8, 128], strides = [1, 1]} : vector<240x128xf32> to vector<8x128xf32>
      %242 = arith.maximumf %240, %241 : vector<8x128xf32>
      %243 = arith.maximumf %113, %242 : vector<8x128xf32>
      %244 = vector.broadcast %0 : vector<1x128xf32> to vector<8x128xf32>
      %245 = arith.addf %243, %244 : vector<8x128xf32>
      %cst_128 = arith.constant 0.000000e+00 : f32
      %246 = vector.broadcast %cst_128 : f32 to vector<8x128xf32>
      %247 = arith.maximumf %245, %246 : vector<8x128xf32>
      %248 = arith.index_cast %arg14 : i32 to index
      %c0_129 = arith.constant 0 : index
      %c0_130 = arith.constant 0 : index
      %249 = vector.load %arg13[%248, %c0_129, %c0_130] : memref<15x120x128xf32, #tpu.memory_space<vmem>>, vector<1x8x128xf32>
      %250 = vector.shape_cast %249 : vector<1x8x128xf32> to vector<8x128xf32>
      %251 = vector.shape_cast %247 : vector<8x128xf32> to vector<1x8x128xf32>
      tpu.vector_store %arg13[%248, %c0_129, %c0_130], %251 {strides = array<i32>} : memref<15x120x128xf32, #tpu.memory_space<vmem>>, vector<1x8x128xf32>,
      %252 = vector.extract_strided_slice %239 {offsets = [16, 0], sizes = [8, 128], strides = [1, 1]} : vector<240x128xf32> to vector<8x128xf32>
      %253 = vector.extract_strided_slice %239 {offsets = [24, 0], sizes = [8, 128], strides = [1, 1]} : vector<240x128xf32> to vector<8x128xf32>
      %254 = arith.maximumf %252, %253 : vector<8x128xf32>
      %255 = arith.maximumf %116, %254 : vector<8x128xf32>
      %256 = vector.broadcast %0 : vector<1x128xf32> to vector<8x128xf32>
      %257 = arith.addf %255, %256 : vector<8x128xf32>
      %cst_131 = arith.constant 0.000000e+00 : f32
      %258 = vector.broadcast %cst_131 : f32 to vector<8x128xf32>
      %259 = arith.maximumf %257, %258 : vector<8x128xf32>
      %260 = arith.index_cast %arg14 : i32 to index
      %c8_132 = arith.constant 8 : index
      %c0_133 = arith.constant 0 : index
      %261 = vector.load %arg13[%260, %c8_132, %c0_133] : memref<15x120x128xf32, #tpu.memory_space<vmem>>, vector<1x8x128xf32>
      %262 = vector.shape_cast %261 : vector<1x8x128xf32> to vector<8x128xf32>
      %263 = vector.shape_cast %259 : vector<8x128xf32> to vector<1x8x128xf32>
      tpu.vector_store %arg13[%260, %c8_132, %c0_133], %263 {strides = array<i32>} : memref<15x120x128xf32, #tpu.memory_space<vmem>>, vector<1x8x128xf32>,
      %264 = vector.extract_strided_slice %239 {offsets = [32, 0], sizes = [8, 128], strides = [1, 1]} : vector<240x128xf32> to vector<8x128xf32>
      %265 = vector.extract_strided_slice %239 {offsets = [40, 0], sizes = [8, 128], strides = [1, 1]} : vector<240x128xf32> to vector<8x128xf32>
      %266 = arith.maximumf %264, %265 : vector<8x128xf32>
      %267 = arith.maximumf %119, %266 : vector<8x128xf32>
      %268 = vector.broadcast %0 : vector<1x128xf32> to vector<8x128xf32>
      %269 = arith.addf %267, %268 : vector<8x128xf32>
      %cst_134 = arith.constant 0.000000e+00 : f32
      %270 = vector.broadcast %cst_134 : f32 to vector<8x128xf32>
      %271 = arith.maximumf %269, %270 : vector<8x128xf32>
      %272 = arith.index_cast %arg14 : i32 to index
      %c16_135 = arith.constant 16 : index
      %c0_136 = arith.constant 0 : index
      %273 = vector.load %arg13[%272, %c16_135, %c0_136] : memref<15x120x128xf32, #tpu.memory_space<vmem>>, vector<1x8x128xf32>
      %274 = vector.shape_cast %273 : vector<1x8x128xf32> to vector<8x128xf32>
      %275 = vector.shape_cast %271 : vector<8x128xf32> to vector<1x8x128xf32>
      tpu.vector_store %arg13[%272, %c16_135, %c0_136], %275 {strides = array<i32>} : memref<15x120x128xf32, #tpu.memory_space<vmem>>, vector<1x8x128xf32>,
      %276 = vector.extract_strided_slice %239 {offsets = [48, 0], sizes = [8, 128], strides = [1, 1]} : vector<240x128xf32> to vector<8x128xf32>
      %277 = vector.extract_strided_slice %239 {offsets = [56, 0], sizes = [8, 128], strides = [1, 1]} : vector<240x128xf32> to vector<8x128xf32>
      %278 = arith.maximumf %276, %277 : vector<8x128xf32>
      %279 = arith.maximumf %122, %278 : vector<8x128xf32>
      %280 = vector.broadcast %0 : vector<1x128xf32> to vector<8x128xf32>
      %281 = arith.addf %279, %280 : vector<8x128xf32>
      %cst_137 = arith.constant 0.000000e+00 : f32
      %282 = vector.broadcast %cst_137 : f32 to vector<8x128xf32>
      %283 = arith.maximumf %281, %282 : vector<8x128xf32>
      %284 = arith.index_cast %arg14 : i32 to index
      %c24 = arith.constant 24 : index
      %c0_138 = arith.constant 0 : index
      %285 = vector.load %arg13[%284, %c24, %c0_138] : memref<15x120x128xf32, #tpu.memory_space<vmem>>, vector<1x8x128xf32>
      %286 = vector.shape_cast %285 : vector<1x8x128xf32> to vector<8x128xf32>
      %287 = vector.shape_cast %283 : vector<8x128xf32> to vector<1x8x128xf32>
      tpu.vector_store %arg13[%284, %c24, %c0_138], %287 {strides = array<i32>} : memref<15x120x128xf32, #tpu.memory_space<vmem>>, vector<1x8x128xf32>,
      %288 = vector.extract_strided_slice %239 {offsets = [64, 0], sizes = [8, 128], strides = [1, 1]} : vector<240x128xf32> to vector<8x128xf32>
      %289 = vector.extract_strided_slice %239 {offsets = [72, 0], sizes = [8, 128], strides = [1, 1]} : vector<240x128xf32> to vector<8x128xf32>
      %290 = arith.maximumf %288, %289 : vector<8x128xf32>
      %291 = arith.maximumf %125, %290 : vector<8x128xf32>
      %292 = vector.broadcast %0 : vector<1x128xf32> to vector<8x128xf32>
      %293 = arith.addf %291, %292 : vector<8x128xf32>
      %cst_139 = arith.constant 0.000000e+00 : f32
      %294 = vector.broadcast %cst_139 : f32 to vector<8x128xf32>
      %295 = arith.maximumf %293, %294 : vector<8x128xf32>
      %296 = arith.index_cast %arg14 : i32 to index
      %c32 = arith.constant 32 : index
      %c0_140 = arith.constant 0 : index
      %297 = vector.load %arg13[%296, %c32, %c0_140] : memref<15x120x128xf32, #tpu.memory_space<vmem>>, vector<1x8x128xf32>
      %298 = vector.shape_cast %297 : vector<1x8x128xf32> to vector<8x128xf32>
      %299 = vector.shape_cast %295 : vector<8x128xf32> to vector<1x8x128xf32>
      tpu.vector_store %arg13[%296, %c32, %c0_140], %299 {strides = array<i32>} : memref<15x120x128xf32, #tpu.memory_space<vmem>>, vector<1x8x128xf32>,
      %300 = vector.extract_strided_slice %239 {offsets = [80, 0], sizes = [8, 128], strides = [1, 1]} : vector<240x128xf32> to vector<8x128xf32>
      %301 = vector.extract_strided_slice %239 {offsets = [88, 0], sizes = [8, 128], strides = [1, 1]} : vector<240x128xf32> to vector<8x128xf32>
      %302 = arith.maximumf %300, %301 : vector<8x128xf32>
      %303 = arith.maximumf %128, %302 : vector<8x128xf32>
      %304 = vector.broadcast %0 : vector<1x128xf32> to vector<8x128xf32>
      %305 = arith.addf %303, %304 : vector<8x128xf32>
      %cst_141 = arith.constant 0.000000e+00 : f32
      %306 = vector.broadcast %cst_141 : f32 to vector<8x128xf32>
      %307 = arith.maximumf %305, %306 : vector<8x128xf32>
      %308 = arith.index_cast %arg14 : i32 to index
      %c40 = arith.constant 40 : index
      %c0_142 = arith.constant 0 : index
      %309 = vector.load %arg13[%308, %c40, %c0_142] : memref<15x120x128xf32, #tpu.memory_space<vmem>>, vector<1x8x128xf32>
      %310 = vector.shape_cast %309 : vector<1x8x128xf32> to vector<8x128xf32>
      %311 = vector.shape_cast %307 : vector<8x128xf32> to vector<1x8x128xf32>
      tpu.vector_store %arg13[%308, %c40, %c0_142], %311 {strides = array<i32>} : memref<15x120x128xf32, #tpu.memory_space<vmem>>, vector<1x8x128xf32>,
      %312 = vector.extract_strided_slice %239 {offsets = [96, 0], sizes = [8, 128], strides = [1, 1]} : vector<240x128xf32> to vector<8x128xf32>
      %313 = vector.extract_strided_slice %239 {offsets = [104, 0], sizes = [8, 128], strides = [1, 1]} : vector<240x128xf32> to vector<8x128xf32>
      %314 = arith.maximumf %312, %313 : vector<8x128xf32>
      %315 = arith.maximumf %131, %314 : vector<8x128xf32>
      %316 = vector.broadcast %0 : vector<1x128xf32> to vector<8x128xf32>
      %317 = arith.addf %315, %316 : vector<8x128xf32>
      %cst_143 = arith.constant 0.000000e+00 : f32
      %318 = vector.broadcast %cst_143 : f32 to vector<8x128xf32>
      %319 = arith.maximumf %317, %318 : vector<8x128xf32>
      %320 = arith.index_cast %arg14 : i32 to index
      %c48 = arith.constant 48 : index
      %c0_144 = arith.constant 0 : index
      %321 = vector.load %arg13[%320, %c48, %c0_144] : memref<15x120x128xf32, #tpu.memory_space<vmem>>, vector<1x8x128xf32>
      %322 = vector.shape_cast %321 : vector<1x8x128xf32> to vector<8x128xf32>
      %323 = vector.shape_cast %319 : vector<8x128xf32> to vector<1x8x128xf32>
      tpu.vector_store %arg13[%320, %c48, %c0_144], %323 {strides = array<i32>} : memref<15x120x128xf32, #tpu.memory_space<vmem>>, vector<1x8x128xf32>,
      %324 = vector.extract_strided_slice %239 {offsets = [112, 0], sizes = [8, 128], strides = [1, 1]} : vector<240x128xf32> to vector<8x128xf32>
      %325 = vector.extract_strided_slice %239 {offsets = [120, 0], sizes = [8, 128], strides = [1, 1]} : vector<240x128xf32> to vector<8x128xf32>
      %326 = arith.maximumf %324, %325 : vector<8x128xf32>
      %327 = arith.maximumf %134, %326 : vector<8x128xf32>
      %328 = vector.broadcast %0 : vector<1x128xf32> to vector<8x128xf32>
      %329 = arith.addf %327, %328 : vector<8x128xf32>
      %cst_145 = arith.constant 0.000000e+00 : f32
      %330 = vector.broadcast %cst_145 : f32 to vector<8x128xf32>
      %331 = arith.maximumf %329, %330 : vector<8x128xf32>
      %332 = arith.index_cast %arg14 : i32 to index
      %c56 = arith.constant 56 : index
      %c0_146 = arith.constant 0 : index
      %333 = vector.load %arg13[%332, %c56, %c0_146] : memref<15x120x128xf32, #tpu.memory_space<vmem>>, vector<1x8x128xf32>
      %334 = vector.shape_cast %333 : vector<1x8x128xf32> to vector<8x128xf32>
      %335 = vector.shape_cast %331 : vector<8x128xf32> to vector<1x8x128xf32>
      tpu.vector_store %arg13[%332, %c56, %c0_146], %335 {strides = array<i32>} : memref<15x120x128xf32, #tpu.memory_space<vmem>>, vector<1x8x128xf32>,
      %336 = vector.extract_strided_slice %239 {offsets = [128, 0], sizes = [8, 128], strides = [1, 1]} : vector<240x128xf32> to vector<8x128xf32>
      %337 = vector.extract_strided_slice %239 {offsets = [136, 0], sizes = [8, 128], strides = [1, 1]} : vector<240x128xf32> to vector<8x128xf32>
      %338 = arith.maximumf %336, %337 : vector<8x128xf32>
      %339 = arith.maximumf %137, %338 : vector<8x128xf32>
      %340 = vector.broadcast %0 : vector<1x128xf32> to vector<8x128xf32>
      %341 = arith.addf %339, %340 : vector<8x128xf32>
      %cst_147 = arith.constant 0.000000e+00 : f32
      %342 = vector.broadcast %cst_147 : f32 to vector<8x128xf32>
      %343 = arith.maximumf %341, %342 : vector<8x128xf32>
      %344 = arith.index_cast %arg14 : i32 to index
      %c64 = arith.constant 64 : index
      %c0_148 = arith.constant 0 : index
      %345 = vector.load %arg13[%344, %c64, %c0_148] : memref<15x120x128xf32, #tpu.memory_space<vmem>>, vector<1x8x128xf32>
      %346 = vector.shape_cast %345 : vector<1x8x128xf32> to vector<8x128xf32>
      %347 = vector.shape_cast %343 : vector<8x128xf32> to vector<1x8x128xf32>
      tpu.vector_store %arg13[%344, %c64, %c0_148], %347 {strides = array<i32>} : memref<15x120x128xf32, #tpu.memory_space<vmem>>, vector<1x8x128xf32>,
      %348 = vector.extract_strided_slice %239 {offsets = [144, 0], sizes = [8, 128], strides = [1, 1]} : vector<240x128xf32> to vector<8x128xf32>
      %349 = vector.extract_strided_slice %239 {offsets = [152, 0], sizes = [8, 128], strides = [1, 1]} : vector<240x128xf32> to vector<8x128xf32>
      %350 = arith.maximumf %348, %349 : vector<8x128xf32>
      %351 = arith.maximumf %140, %350 : vector<8x128xf32>
      %352 = vector.broadcast %0 : vector<1x128xf32> to vector<8x128xf32>
      %353 = arith.addf %351, %352 : vector<8x128xf32>
      %cst_149 = arith.constant 0.000000e+00 : f32
      %354 = vector.broadcast %cst_149 : f32 to vector<8x128xf32>
      %355 = arith.maximumf %353, %354 : vector<8x128xf32>
      %356 = arith.index_cast %arg14 : i32 to index
      %c72 = arith.constant 72 : index
      %c0_150 = arith.constant 0 : index
      %357 = vector.load %arg13[%356, %c72, %c0_150] : memref<15x120x128xf32, #tpu.memory_space<vmem>>, vector<1x8x128xf32>
      %358 = vector.shape_cast %357 : vector<1x8x128xf32> to vector<8x128xf32>
      %359 = vector.shape_cast %355 : vector<8x128xf32> to vector<1x8x128xf32>
      tpu.vector_store %arg13[%356, %c72, %c0_150], %359 {strides = array<i32>} : memref<15x120x128xf32, #tpu.memory_space<vmem>>, vector<1x8x128xf32>,
      %360 = vector.extract_strided_slice %239 {offsets = [160, 0], sizes = [8, 128], strides = [1, 1]} : vector<240x128xf32> to vector<8x128xf32>
      %361 = vector.extract_strided_slice %239 {offsets = [168, 0], sizes = [8, 128], strides = [1, 1]} : vector<240x128xf32> to vector<8x128xf32>
      %362 = arith.maximumf %360, %361 : vector<8x128xf32>
      %363 = arith.maximumf %143, %362 : vector<8x128xf32>
      %364 = vector.broadcast %0 : vector<1x128xf32> to vector<8x128xf32>
      %365 = arith.addf %363, %364 : vector<8x128xf32>
      %cst_151 = arith.constant 0.000000e+00 : f32
      %366 = vector.broadcast %cst_151 : f32 to vector<8x128xf32>
      %367 = arith.maximumf %365, %366 : vector<8x128xf32>
      %368 = arith.index_cast %arg14 : i32 to index
      %c80 = arith.constant 80 : index
      %c0_152 = arith.constant 0 : index
      %369 = vector.load %arg13[%368, %c80, %c0_152] : memref<15x120x128xf32, #tpu.memory_space<vmem>>, vector<1x8x128xf32>
      %370 = vector.shape_cast %369 : vector<1x8x128xf32> to vector<8x128xf32>
      %371 = vector.shape_cast %367 : vector<8x128xf32> to vector<1x8x128xf32>
      tpu.vector_store %arg13[%368, %c80, %c0_152], %371 {strides = array<i32>} : memref<15x120x128xf32, #tpu.memory_space<vmem>>, vector<1x8x128xf32>,
      %372 = vector.extract_strided_slice %239 {offsets = [176, 0], sizes = [8, 128], strides = [1, 1]} : vector<240x128xf32> to vector<8x128xf32>
      %373 = vector.extract_strided_slice %239 {offsets = [184, 0], sizes = [8, 128], strides = [1, 1]} : vector<240x128xf32> to vector<8x128xf32>
      %374 = arith.maximumf %372, %373 : vector<8x128xf32>
      %375 = arith.maximumf %146, %374 : vector<8x128xf32>
      %376 = vector.broadcast %0 : vector<1x128xf32> to vector<8x128xf32>
      %377 = arith.addf %375, %376 : vector<8x128xf32>
      %cst_153 = arith.constant 0.000000e+00 : f32
      %378 = vector.broadcast %cst_153 : f32 to vector<8x128xf32>
      %379 = arith.maximumf %377, %378 : vector<8x128xf32>
      %380 = arith.index_cast %arg14 : i32 to index
      %c88 = arith.constant 88 : index
      %c0_154 = arith.constant 0 : index
      %381 = vector.load %arg13[%380, %c88, %c0_154] : memref<15x120x128xf32, #tpu.memory_space<vmem>>, vector<1x8x128xf32>
      %382 = vector.shape_cast %381 : vector<1x8x128xf32> to vector<8x128xf32>
      %383 = vector.shape_cast %379 : vector<8x128xf32> to vector<1x8x128xf32>
      tpu.vector_store %arg13[%380, %c88, %c0_154], %383 {strides = array<i32>} : memref<15x120x128xf32, #tpu.memory_space<vmem>>, vector<1x8x128xf32>,
      %384 = vector.extract_strided_slice %239 {offsets = [192, 0], sizes = [8, 128], strides = [1, 1]} : vector<240x128xf32> to vector<8x128xf32>
      %385 = vector.extract_strided_slice %239 {offsets = [200, 0], sizes = [8, 128], strides = [1, 1]} : vector<240x128xf32> to vector<8x128xf32>
      %386 = arith.maximumf %384, %385 : vector<8x128xf32>
      %387 = arith.maximumf %149, %386 : vector<8x128xf32>
      %388 = vector.broadcast %0 : vector<1x128xf32> to vector<8x128xf32>
      %389 = arith.addf %387, %388 : vector<8x128xf32>
      %cst_155 = arith.constant 0.000000e+00 : f32
      %390 = vector.broadcast %cst_155 : f32 to vector<8x128xf32>
      %391 = arith.maximumf %389, %390 : vector<8x128xf32>
      %392 = arith.index_cast %arg14 : i32 to index
      %c96 = arith.constant 96 : index
      %c0_156 = arith.constant 0 : index
      %393 = vector.load %arg13[%392, %c96, %c0_156] : memref<15x120x128xf32, #tpu.memory_space<vmem>>, vector<1x8x128xf32>
      %394 = vector.shape_cast %393 : vector<1x8x128xf32> to vector<8x128xf32>
      %395 = vector.shape_cast %391 : vector<8x128xf32> to vector<1x8x128xf32>
      tpu.vector_store %arg13[%392, %c96, %c0_156], %395 {strides = array<i32>} : memref<15x120x128xf32, #tpu.memory_space<vmem>>, vector<1x8x128xf32>,
      %396 = vector.extract_strided_slice %239 {offsets = [208, 0], sizes = [8, 128], strides = [1, 1]} : vector<240x128xf32> to vector<8x128xf32>
      %397 = vector.extract_strided_slice %239 {offsets = [216, 0], sizes = [8, 128], strides = [1, 1]} : vector<240x128xf32> to vector<8x128xf32>
      %398 = arith.maximumf %396, %397 : vector<8x128xf32>
      %399 = arith.maximumf %152, %398 : vector<8x128xf32>
      %400 = vector.broadcast %0 : vector<1x128xf32> to vector<8x128xf32>
      %401 = arith.addf %399, %400 : vector<8x128xf32>
      %cst_157 = arith.constant 0.000000e+00 : f32
      %402 = vector.broadcast %cst_157 : f32 to vector<8x128xf32>
      %403 = arith.maximumf %401, %402 : vector<8x128xf32>
      %404 = arith.index_cast %arg14 : i32 to index
      %c104 = arith.constant 104 : index
      %c0_158 = arith.constant 0 : index
      %405 = vector.load %arg13[%404, %c104, %c0_158] : memref<15x120x128xf32, #tpu.memory_space<vmem>>, vector<1x8x128xf32>
      %406 = vector.shape_cast %405 : vector<1x8x128xf32> to vector<8x128xf32>
      %407 = vector.shape_cast %403 : vector<8x128xf32> to vector<1x8x128xf32>
      tpu.vector_store %arg13[%404, %c104, %c0_158], %407 {strides = array<i32>} : memref<15x120x128xf32, #tpu.memory_space<vmem>>, vector<1x8x128xf32>,
      %408 = vector.extract_strided_slice %239 {offsets = [224, 0], sizes = [8, 128], strides = [1, 1]} : vector<240x128xf32> to vector<8x128xf32>
      %409 = vector.extract_strided_slice %239 {offsets = [232, 0], sizes = [8, 128], strides = [1, 1]} : vector<240x128xf32> to vector<8x128xf32>
      %410 = arith.maximumf %408, %409 : vector<8x128xf32>
      %411 = arith.maximumf %155, %410 : vector<8x128xf32>
      %412 = vector.broadcast %0 : vector<1x128xf32> to vector<8x128xf32>
      %413 = arith.addf %411, %412 : vector<8x128xf32>
      %cst_159 = arith.constant 0.000000e+00 : f32
      %414 = vector.broadcast %cst_159 : f32 to vector<8x128xf32>
      %415 = arith.maximumf %413, %414 : vector<8x128xf32>
      %416 = arith.index_cast %arg14 : i32 to index
      %c112 = arith.constant 112 : index
      %c0_160 = arith.constant 0 : index
      %417 = vector.load %arg13[%416, %c112, %c0_160] : memref<15x120x128xf32, #tpu.memory_space<vmem>>, vector<1x8x128xf32>
      %418 = vector.shape_cast %417 : vector<1x8x128xf32> to vector<8x128xf32>
      %419 = vector.shape_cast %415 : vector<8x128xf32> to vector<1x8x128xf32>
      tpu.vector_store %arg13[%416, %c112, %c0_160], %419 {strides = array<i32>} : memref<15x120x128xf32, #tpu.memory_space<vmem>>, vector<1x8x128xf32>,
    }
    %c15_i32_3 = arith.constant 15 : i32
    %cst = arith.constant 0.000000e+00 : f32
    %3 = vector.broadcast %cst : f32 to vector<8x128xf32>
    %c0_i32_4 = arith.constant 0 : i32
    %c6_i32 = arith.constant 6 : i32
    %4 = arith.addi %c0_i32_4, %c6_i32 : i32
    %c1_i32_5 = arith.constant 1 : i32
    %5 = scf.for %arg14 = %c0_i32_4 to %4 step %c1_i32_5 iter_args(%arg15 = %3) -> (vector<8x128xf32>)  : i32 {
      %c2_i32 = arith.constant 2 : i32
      %28 = arith.muli %c2_i32, %arg14 : i32
      %cst_25 = arith.constant 0.000000e+00 : f32
      %29 = vector.broadcast %cst_25 : f32 to vector<104x128xf32>
      %c0_i32_26 = arith.constant 0 : i32
      %30 = arith.addi %28, %c0_i32_26 : i32
      %31 = arith.index_cast %30 : i32 to index
      %c0_27 = arith.constant 0 : index
      %c0_28 = arith.constant 0 : index
      %32 = vector.load %arg13[%31, %c0_27, %c0_28] : memref<15x120x128xf32, #tpu.memory_space<vmem>>, vector<1x104x128xf32>
      %33 = vector.shape_cast %32 : vector<1x104x128xf32> to vector<104x128xf32>
      %c0_29 = arith.constant 0 : index
      %c0_30 = arith.constant 0 : index
      %c0_31 = arith.constant 0 : index
      %34 = vector.load %arg4[%c0_29, %c0_30, %c0_31] : memref<9x128x128xf32, #tpu.memory_space<vmem>>, vector<1x128x128xf32>
      %35 = vector.shape_cast %34 : vector<1x128x128xf32> to vector<128x128xf32>
      %cst_32 = arith.constant dense<0.000000e+00> : vector<104x128xf32>
      %36 = tpu.matmul %33, %35, %cst_32 {dimension_numbers = #tpu.dot_dimension_numbers<[1], [0], [0], [1], [0, 0, 1, 1], [], []>} : vector<104x128xf32>, vector<128x128xf32>, vector<104x128xf32> -> vector<104x128xf32>
      %37 = arith.addf %29, %36 : vector<104x128xf32>
      %c0_i32_33 = arith.constant 0 : i32
      %38 = arith.addi %28, %c0_i32_33 : i32
      %39 = arith.index_cast %38 : i32 to index
      %c8 = arith.constant 8 : index
      %c0_34 = arith.constant 0 : index
      %40 = vector.load %arg13[%39, %c8, %c0_34] : memref<15x120x128xf32, #tpu.memory_space<vmem>>, vector<1x104x128xf32>
      %41 = vector.shape_cast %40 : vector<1x104x128xf32> to vector<104x128xf32>
      %c1 = arith.constant 1 : index
      %c0_35 = arith.constant 0 : index
      %c0_36 = arith.constant 0 : index
      %42 = vector.load %arg4[%c1, %c0_35, %c0_36] : memref<9x128x128xf32, #tpu.memory_space<vmem>>, vector<1x128x128xf32>
      %43 = vector.shape_cast %42 : vector<1x128x128xf32> to vector<128x128xf32>
      %cst_37 = arith.constant dense<0.000000e+00> : vector<104x128xf32>
      %44 = tpu.matmul %41, %43, %cst_37 {dimension_numbers = #tpu.dot_dimension_numbers<[1], [0], [0], [1], [0, 0, 1, 1], [], []>} : vector<104x128xf32>, vector<128x128xf32>, vector<104x128xf32> -> vector<104x128xf32>
      %45 = arith.addf %37, %44 : vector<104x128xf32>
      %c0_i32_38 = arith.constant 0 : i32
      %46 = arith.addi %28, %c0_i32_38 : i32
      %47 = arith.index_cast %46 : i32 to index
      %c16 = arith.constant 16 : index
      %c0_39 = arith.constant 0 : index
      %48 = vector.load %arg13[%47, %c16, %c0_39] : memref<15x120x128xf32, #tpu.memory_space<vmem>>, vector<1x104x128xf32>
      %49 = vector.shape_cast %48 : vector<1x104x128xf32> to vector<104x128xf32>
      %c2 = arith.constant 2 : index
      %c0_40 = arith.constant 0 : index
      %c0_41 = arith.constant 0 : index
      %50 = vector.load %arg4[%c2, %c0_40, %c0_41] : memref<9x128x128xf32, #tpu.memory_space<vmem>>, vector<1x128x128xf32>
      %51 = vector.shape_cast %50 : vector<1x128x128xf32> to vector<128x128xf32>
      %cst_42 = arith.constant dense<0.000000e+00> : vector<104x128xf32>
      %52 = tpu.matmul %49, %51, %cst_42 {dimension_numbers = #tpu.dot_dimension_numbers<[1], [0], [0], [1], [0, 0, 1, 1], [], []>} : vector<104x128xf32>, vector<128x128xf32>, vector<104x128xf32> -> vector<104x128xf32>
      %53 = arith.addf %45, %52 : vector<104x128xf32>
      %c1_i32_43 = arith.constant 1 : i32
      %54 = arith.addi %28, %c1_i32_43 : i32
      %55 = arith.index_cast %54 : i32 to index
      %c0_44 = arith.constant 0 : index
      %c0_45 = arith.constant 0 : index
      %56 = vector.load %arg13[%55, %c0_44, %c0_45] : memref<15x120x128xf32, #tpu.memory_space<vmem>>, vector<1x104x128xf32>
      %57 = vector.shape_cast %56 : vector<1x104x128xf32> to vector<104x128xf32>
      %c3 = arith.constant 3 : index
      %c0_46 = arith.constant 0 : index
      %c0_47 = arith.constant 0 : index
      %58 = vector.load %arg4[%c3, %c0_46, %c0_47] : memref<9x128x128xf32, #tpu.memory_space<vmem>>, vector<1x128x128xf32>
      %59 = vector.shape_cast %58 : vector<1x128x128xf32> to vector<128x128xf32>
      %cst_48 = arith.constant dense<0.000000e+00> : vector<104x128xf32>
      %60 = tpu.matmul %57, %59, %cst_48 {dimension_numbers = #tpu.dot_dimension_numbers<[1], [0], [0], [1], [0, 0, 1, 1], [], []>} : vector<104x128xf32>, vector<128x128xf32>, vector<104x128xf32> -> vector<104x128xf32>
      %61 = arith.addf %53, %60 : vector<104x128xf32>
      %c1_i32_49 = arith.constant 1 : i32
      %62 = arith.addi %28, %c1_i32_49 : i32
      %63 = arith.index_cast %62 : i32 to index
      %c8_50 = arith.constant 8 : index
      %c0_51 = arith.constant 0 : index
      %64 = vector.load %arg13[%63, %c8_50, %c0_51] : memref<15x120x128xf32, #tpu.memory_space<vmem>>, vector<1x104x128xf32>
      %65 = vector.shape_cast %64 : vector<1x104x128xf32> to vector<104x128xf32>
      %c4 = arith.constant 4 : index
      %c0_52 = arith.constant 0 : index
      %c0_53 = arith.constant 0 : index
      %66 = vector.load %arg4[%c4, %c0_52, %c0_53] : memref<9x128x128xf32, #tpu.memory_space<vmem>>, vector<1x128x128xf32>
      %67 = vector.shape_cast %66 : vector<1x128x128xf32> to vector<128x128xf32>
      %cst_54 = arith.constant dense<0.000000e+00> : vector<104x128xf32>
      %68 = tpu.matmul %65, %67, %cst_54 {dimension_numbers = #tpu.dot_dimension_numbers<[1], [0], [0], [1], [0, 0, 1, 1], [], []>} : vector<104x128xf32>, vector<128x128xf32>, vector<104x128xf32> -> vector<104x128xf32>
      %69 = arith.addf %61, %68 : vector<104x128xf32>
      %c1_i32_55 = arith.constant 1 : i32
      %70 = arith.addi %28, %c1_i32_55 : i32
      %71 = arith.index_cast %70 : i32 to index
      %c16_56 = arith.constant 16 : index
      %c0_57 = arith.constant 0 : index
      %72 = vector.load %arg13[%71, %c16_56, %c0_57] : memref<15x120x128xf32, #tpu.memory_space<vmem>>, vector<1x104x128xf32>
      %73 = vector.shape_cast %72 : vector<1x104x128xf32> to vector<104x128xf32>
      %c5 = arith.constant 5 : index
      %c0_58 = arith.constant 0 : index
      %c0_59 = arith.constant 0 : index
      %74 = vector.load %arg4[%c5, %c0_58, %c0_59] : memref<9x128x128xf32, #tpu.memory_space<vmem>>, vector<1x128x128xf32>
      %75 = vector.shape_cast %74 : vector<1x128x128xf32> to vector<128x128xf32>
      %cst_60 = arith.constant dense<0.000000e+00> : vector<104x128xf32>
      %76 = tpu.matmul %73, %75, %cst_60 {dimension_numbers = #tpu.dot_dimension_numbers<[1], [0], [0], [1], [0, 0, 1, 1], [], []>} : vector<104x128xf32>, vector<128x128xf32>, vector<104x128xf32> -> vector<104x128xf32>
      %77 = arith.addf %69, %76 : vector<104x128xf32>
      %c2_i32_61 = arith.constant 2 : i32
      %78 = arith.addi %28, %c2_i32_61 : i32
      %79 = arith.index_cast %78 : i32 to index
      %c0_62 = arith.constant 0 : index
      %c0_63 = arith.constant 0 : index
      %80 = vector.load %arg13[%79, %c0_62, %c0_63] : memref<15x120x128xf32, #tpu.memory_space<vmem>>, vector<1x104x128xf32>
      %81 = vector.shape_cast %80 : vector<1x104x128xf32> to vector<104x128xf32>
      %c6 = arith.constant 6 : index
      %c0_64 = arith.constant 0 : index
      %c0_65 = arith.constant 0 : index
      %82 = vector.load %arg4[%c6, %c0_64, %c0_65] : memref<9x128x128xf32, #tpu.memory_space<vmem>>, vector<1x128x128xf32>
      %83 = vector.shape_cast %82 : vector<1x128x128xf32> to vector<128x128xf32>
      %cst_66 = arith.constant dense<0.000000e+00> : vector<104x128xf32>
      %84 = tpu.matmul %81, %83, %cst_66 {dimension_numbers = #tpu.dot_dimension_numbers<[1], [0], [0], [1], [0, 0, 1, 1], [], []>} : vector<104x128xf32>, vector<128x128xf32>, vector<104x128xf32> -> vector<104x128xf32>
      %85 = arith.addf %77, %84 : vector<104x128xf32>
      %c2_i32_67 = arith.constant 2 : i32
      %86 = arith.addi %28, %c2_i32_67 : i32
      %87 = arith.index_cast %86 : i32 to index
      %c8_68 = arith.constant 8 : index
      %c0_69 = arith.constant 0 : index
      %88 = vector.load %arg13[%87, %c8_68, %c0_69] : memref<15x120x128xf32, #tpu.memory_space<vmem>>, vector<1x104x128xf32>
      %89 = vector.shape_cast %88 : vector<1x104x128xf32> to vector<104x128xf32>
      %c7 = arith.constant 7 : index
      %c0_70 = arith.constant 0 : index
      %c0_71 = arith.constant 0 : index
      %90 = vector.load %arg4[%c7, %c0_70, %c0_71] : memref<9x128x128xf32, #tpu.memory_space<vmem>>, vector<1x128x128xf32>
      %91 = vector.shape_cast %90 : vector<1x128x128xf32> to vector<128x128xf32>
      %cst_72 = arith.constant dense<0.000000e+00> : vector<104x128xf32>
      %92 = tpu.matmul %89, %91, %cst_72 {dimension_numbers = #tpu.dot_dimension_numbers<[1], [0], [0], [1], [0, 0, 1, 1], [], []>} : vector<104x128xf32>, vector<128x128xf32>, vector<104x128xf32> -> vector<104x128xf32>
      %93 = arith.addf %85, %92 : vector<104x128xf32>
      %c2_i32_73 = arith.constant 2 : i32
      %94 = arith.addi %28, %c2_i32_73 : i32
      %95 = arith.index_cast %94 : i32 to index
      %c16_74 = arith.constant 16 : index
      %c0_75 = arith.constant 0 : index
      %96 = vector.load %arg13[%95, %c16_74, %c0_75] : memref<15x120x128xf32, #tpu.memory_space<vmem>>, vector<1x104x128xf32>
      %97 = vector.shape_cast %96 : vector<1x104x128xf32> to vector<104x128xf32>
      %c8_76 = arith.constant 8 : index
      %c0_77 = arith.constant 0 : index
      %c0_78 = arith.constant 0 : index
      %98 = vector.load %arg4[%c8_76, %c0_77, %c0_78] : memref<9x128x128xf32, #tpu.memory_space<vmem>>, vector<1x128x128xf32>
      %99 = vector.shape_cast %98 : vector<1x128x128xf32> to vector<128x128xf32>
      %cst_79 = arith.constant dense<0.000000e+00> : vector<104x128xf32>
      %100 = tpu.matmul %97, %99, %cst_79 {dimension_numbers = #tpu.dot_dimension_numbers<[1], [0], [0], [1], [0, 0, 1, 1], [], []>} : vector<104x128xf32>, vector<128x128xf32>, vector<104x128xf32> -> vector<104x128xf32>
      %101 = arith.addf %93, %100 : vector<104x128xf32>
      %c2_i32_80 = arith.constant 2 : i32
      %102 = arith.muli %c2_i32_80, %arg14 : i32
      %c1_i32_81 = arith.constant 1 : i32
      %103 = arith.addi %102, %c1_i32_81 : i32
      %cst_82 = arith.constant 0.000000e+00 : f32
      %104 = vector.broadcast %cst_82 : f32 to vector<104x128xf32>
      %c0_i32_83 = arith.constant 0 : i32
      %105 = arith.addi %103, %c0_i32_83 : i32
      %106 = arith.index_cast %105 : i32 to index
      %c0_84 = arith.constant 0 : index
      %c0_85 = arith.constant 0 : index
      %107 = vector.load %arg13[%106, %c0_84, %c0_85] : memref<15x120x128xf32, #tpu.memory_space<vmem>>, vector<1x104x128xf32>
      %108 = vector.shape_cast %107 : vector<1x104x128xf32> to vector<104x128xf32>
      %c0_86 = arith.constant 0 : index
      %c0_87 = arith.constant 0 : index
      %c0_88 = arith.constant 0 : index
      %109 = vector.load %arg4[%c0_86, %c0_87, %c0_88] : memref<9x128x128xf32, #tpu.memory_space<vmem>>, vector<1x128x128xf32>
      %110 = vector.shape_cast %109 : vector<1x128x128xf32> to vector<128x128xf32>
      %cst_89 = arith.constant dense<0.000000e+00> : vector<104x128xf32>
      %111 = tpu.matmul %108, %110, %cst_89 {dimension_numbers = #tpu.dot_dimension_numbers<[1], [0], [0], [1], [0, 0, 1, 1], [], []>} : vector<104x128xf32>, vector<128x128xf32>, vector<104x128xf32> -> vector<104x128xf32>
      %112 = arith.addf %104, %111 : vector<104x128xf32>
      %c0_i32_90 = arith.constant 0 : i32
      %113 = arith.addi %103, %c0_i32_90 : i32
      %114 = arith.index_cast %113 : i32 to index
      %c8_91 = arith.constant 8 : index
      %c0_92 = arith.constant 0 : index
      %115 = vector.load %arg13[%114, %c8_91, %c0_92] : memref<15x120x128xf32, #tpu.memory_space<vmem>>, vector<1x104x128xf32>
      %116 = vector.shape_cast %115 : vector<1x104x128xf32> to vector<104x128xf32>
      %c1_93 = arith.constant 1 : index
      %c0_94 = arith.constant 0 : index
      %c0_95 = arith.constant 0 : index
      %117 = vector.load %arg4[%c1_93, %c0_94, %c0_95] : memref<9x128x128xf32, #tpu.memory_space<vmem>>, vector<1x128x128xf32>
      %118 = vector.shape_cast %117 : vector<1x128x128xf32> to vector<128x128xf32>
      %cst_96 = arith.constant dense<0.000000e+00> : vector<104x128xf32>
      %119 = tpu.matmul %116, %118, %cst_96 {dimension_numbers = #tpu.dot_dimension_numbers<[1], [0], [0], [1], [0, 0, 1, 1], [], []>} : vector<104x128xf32>, vector<128x128xf32>, vector<104x128xf32> -> vector<104x128xf32>
      %120 = arith.addf %112, %119 : vector<104x128xf32>
      %c0_i32_97 = arith.constant 0 : i32
      %121 = arith.addi %103, %c0_i32_97 : i32
      %122 = arith.index_cast %121 : i32 to index
      %c16_98 = arith.constant 16 : index
      %c0_99 = arith.constant 0 : index
      %123 = vector.load %arg13[%122, %c16_98, %c0_99] : memref<15x120x128xf32, #tpu.memory_space<vmem>>, vector<1x104x128xf32>
      %124 = vector.shape_cast %123 : vector<1x104x128xf32> to vector<104x128xf32>
      %c2_100 = arith.constant 2 : index
      %c0_101 = arith.constant 0 : index
      %c0_102 = arith.constant 0 : index
      %125 = vector.load %arg4[%c2_100, %c0_101, %c0_102] : memref<9x128x128xf32, #tpu.memory_space<vmem>>, vector<1x128x128xf32>
      %126 = vector.shape_cast %125 : vector<1x128x128xf32> to vector<128x128xf32>
      %cst_103 = arith.constant dense<0.000000e+00> : vector<104x128xf32>
      %127 = tpu.matmul %124, %126, %cst_103 {dimension_numbers = #tpu.dot_dimension_numbers<[1], [0], [0], [1], [0, 0, 1, 1], [], []>} : vector<104x128xf32>, vector<128x128xf32>, vector<104x128xf32> -> vector<104x128xf32>
      %128 = arith.addf %120, %127 : vector<104x128xf32>
      %c1_i32_104 = arith.constant 1 : i32
      %129 = arith.addi %103, %c1_i32_104 : i32
      %130 = arith.index_cast %129 : i32 to index
      %c0_105 = arith.constant 0 : index
      %c0_106 = arith.constant 0 : index
      %131 = vector.load %arg13[%130, %c0_105, %c0_106] : memref<15x120x128xf32, #tpu.memory_space<vmem>>, vector<1x104x128xf32>
      %132 = vector.shape_cast %131 : vector<1x104x128xf32> to vector<104x128xf32>
      %c3_107 = arith.constant 3 : index
      %c0_108 = arith.constant 0 : index
      %c0_109 = arith.constant 0 : index
      %133 = vector.load %arg4[%c3_107, %c0_108, %c0_109] : memref<9x128x128xf32, #tpu.memory_space<vmem>>, vector<1x128x128xf32>
      %134 = vector.shape_cast %133 : vector<1x128x128xf32> to vector<128x128xf32>
      %cst_110 = arith.constant dense<0.000000e+00> : vector<104x128xf32>
      %135 = tpu.matmul %132, %134, %cst_110 {dimension_numbers = #tpu.dot_dimension_numbers<[1], [0], [0], [1], [0, 0, 1, 1], [], []>} : vector<104x128xf32>, vector<128x128xf32>, vector<104x128xf32> -> vector<104x128xf32>
      %136 = arith.addf %128, %135 : vector<104x128xf32>
      %c1_i32_111 = arith.constant 1 : i32
      %137 = arith.addi %103, %c1_i32_111 : i32
      %138 = arith.index_cast %137 : i32 to index
      %c8_112 = arith.constant 8 : index
      %c0_113 = arith.constant 0 : index
      %139 = vector.load %arg13[%138, %c8_112, %c0_113] : memref<15x120x128xf32, #tpu.memory_space<vmem>>, vector<1x104x128xf32>
      %140 = vector.shape_cast %139 : vector<1x104x128xf32> to vector<104x128xf32>
      %c4_114 = arith.constant 4 : index
      %c0_115 = arith.constant 0 : index
      %c0_116 = arith.constant 0 : index
      %141 = vector.load %arg4[%c4_114, %c0_115, %c0_116] : memref<9x128x128xf32, #tpu.memory_space<vmem>>, vector<1x128x128xf32>
      %142 = vector.shape_cast %141 : vector<1x128x128xf32> to vector<128x128xf32>
      %cst_117 = arith.constant dense<0.000000e+00> : vector<104x128xf32>
      %143 = tpu.matmul %140, %142, %cst_117 {dimension_numbers = #tpu.dot_dimension_numbers<[1], [0], [0], [1], [0, 0, 1, 1], [], []>} : vector<104x128xf32>, vector<128x128xf32>, vector<104x128xf32> -> vector<104x128xf32>
      %144 = arith.addf %136, %143 : vector<104x128xf32>
      %c1_i32_118 = arith.constant 1 : i32
      %145 = arith.addi %103, %c1_i32_118 : i32
      %146 = arith.index_cast %145 : i32 to index
      %c16_119 = arith.constant 16 : index
      %c0_120 = arith.constant 0 : index
      %147 = vector.load %arg13[%146, %c16_119, %c0_120] : memref<15x120x128xf32, #tpu.memory_space<vmem>>, vector<1x104x128xf32>
      %148 = vector.shape_cast %147 : vector<1x104x128xf32> to vector<104x128xf32>
      %c5_121 = arith.constant 5 : index
      %c0_122 = arith.constant 0 : index
      %c0_123 = arith.constant 0 : index
      %149 = vector.load %arg4[%c5_121, %c0_122, %c0_123] : memref<9x128x128xf32, #tpu.memory_space<vmem>>, vector<1x128x128xf32>
      %150 = vector.shape_cast %149 : vector<1x128x128xf32> to vector<128x128xf32>
      %cst_124 = arith.constant dense<0.000000e+00> : vector<104x128xf32>
      %151 = tpu.matmul %148, %150, %cst_124 {dimension_numbers = #tpu.dot_dimension_numbers<[1], [0], [0], [1], [0, 0, 1, 1], [], []>} : vector<104x128xf32>, vector<128x128xf32>, vector<104x128xf32> -> vector<104x128xf32>
      %152 = arith.addf %144, %151 : vector<104x128xf32>
      %c2_i32_125 = arith.constant 2 : i32
      %153 = arith.addi %103, %c2_i32_125 : i32
      %154 = arith.index_cast %153 : i32 to index
      %c0_126 = arith.constant 0 : index
      %c0_127 = arith.constant 0 : index
      %155 = vector.load %arg13[%154, %c0_126, %c0_127] : memref<15x120x128xf32, #tpu.memory_space<vmem>>, vector<1x104x128xf32>
      %156 = vector.shape_cast %155 : vector<1x104x128xf32> to vector<104x128xf32>
      %c6_128 = arith.constant 6 : index
      %c0_129 = arith.constant 0 : index
      %c0_130 = arith.constant 0 : index
      %157 = vector.load %arg4[%c6_128, %c0_129, %c0_130] : memref<9x128x128xf32, #tpu.memory_space<vmem>>, vector<1x128x128xf32>
      %158 = vector.shape_cast %157 : vector<1x128x128xf32> to vector<128x128xf32>
      %cst_131 = arith.constant dense<0.000000e+00> : vector<104x128xf32>
      %159 = tpu.matmul %156, %158, %cst_131 {dimension_numbers = #tpu.dot_dimension_numbers<[1], [0], [0], [1], [0, 0, 1, 1], [], []>} : vector<104x128xf32>, vector<128x128xf32>, vector<104x128xf32> -> vector<104x128xf32>
      %160 = arith.addf %152, %159 : vector<104x128xf32>
      %c2_i32_132 = arith.constant 2 : i32
      %161 = arith.addi %103, %c2_i32_132 : i32
      %162 = arith.index_cast %161 : i32 to index
      %c8_133 = arith.constant 8 : index
      %c0_134 = arith.constant 0 : index
      %163 = vector.load %arg13[%162, %c8_133, %c0_134] : memref<15x120x128xf32, #tpu.memory_space<vmem>>, vector<1x104x128xf32>
      %164 = vector.shape_cast %163 : vector<1x104x128xf32> to vector<104x128xf32>
      %c7_135 = arith.constant 7 : index
      %c0_136 = arith.constant 0 : index
      %c0_137 = arith.constant 0 : index
      %165 = vector.load %arg4[%c7_135, %c0_136, %c0_137] : memref<9x128x128xf32, #tpu.memory_space<vmem>>, vector<1x128x128xf32>
      %166 = vector.shape_cast %165 : vector<1x128x128xf32> to vector<128x128xf32>
      %cst_138 = arith.constant dense<0.000000e+00> : vector<104x128xf32>
      %167 = tpu.matmul %164, %166, %cst_138 {dimension_numbers = #tpu.dot_dimension_numbers<[1], [0], [0], [1], [0, 0, 1, 1], [], []>} : vector<104x128xf32>, vector<128x128xf32>, vector<104x128xf32> -> vector<104x128xf32>
      %168 = arith.addf %160, %167 : vector<104x128xf32>
      %c2_i32_139 = arith.constant 2 : i32
      %169 = arith.addi %103, %c2_i32_139 : i32
      %170 = arith.index_cast %169 : i32 to index
      %c16_140 = arith.constant 16 : index
      %c0_141 = arith.constant 0 : index
      %171 = vector.load %arg13[%170, %c16_140, %c0_141] : memref<15x120x128xf32, #tpu.memory_space<vmem>>, vector<1x104x128xf32>
      %172 = vector.shape_cast %171 : vector<1x104x128xf32> to vector<104x128xf32>
      %c8_142 = arith.constant 8 : index
      %c0_143 = arith.constant 0 : index
      %c0_144 = arith.constant 0 : index
      %173 = vector.load %arg4[%c8_142, %c0_143, %c0_144] : memref<9x128x128xf32, #tpu.memory_space<vmem>>, vector<1x128x128xf32>
      %174 = vector.shape_cast %173 : vector<1x128x128xf32> to vector<128x128xf32>
      %cst_145 = arith.constant dense<0.000000e+00> : vector<104x128xf32>
      %175 = tpu.matmul %172, %174, %cst_145 {dimension_numbers = #tpu.dot_dimension_numbers<[1], [0], [0], [1], [0, 0, 1, 1], [], []>} : vector<104x128xf32>, vector<128x128xf32>, vector<104x128xf32> -> vector<104x128xf32>
      %176 = arith.addf %168, %175 : vector<104x128xf32>
      %177 = vector.extract_strided_slice %101 {offsets = [0, 0], sizes = [8, 128], strides = [1, 1]} : vector<104x128xf32> to vector<8x128xf32>
      %178 = vector.extract_strided_slice %101 {offsets = [8, 0], sizes = [8, 128], strides = [1, 1]} : vector<104x128xf32> to vector<8x128xf32>
      %179 = arith.maximumf %177, %178 : vector<8x128xf32>
      %180 = vector.extract_strided_slice %176 {offsets = [0, 0], sizes = [8, 128], strides = [1, 1]} : vector<104x128xf32> to vector<8x128xf32>
      %181 = vector.extract_strided_slice %176 {offsets = [8, 0], sizes = [8, 128], strides = [1, 1]} : vector<104x128xf32> to vector<8x128xf32>
      %182 = arith.maximumf %180, %181 : vector<8x128xf32>
      %183 = arith.maximumf %179, %182 : vector<8x128xf32>
      %184 = vector.broadcast %1 : vector<1x128xf32> to vector<8x128xf32>
      %185 = arith.addf %183, %184 : vector<8x128xf32>
      %cst_146 = arith.constant 0.000000e+00 : f32
      %186 = vector.broadcast %cst_146 : f32 to vector<8x128xf32>
      %187 = arith.maximumf %185, %186 : vector<8x128xf32>
      %c6_i32_147 = arith.constant 6 : i32
      %188 = arith.muli %arg14, %c6_i32_147 : i32
      %c0_i32_148 = arith.constant 0 : i32
      %189 = arith.addi %188, %c0_i32_148 : i32
      %190 = arith.index_cast %189 : i32 to index
      %c0_149 = arith.constant 0 : index
      %c0_150 = arith.constant 0 : index
      %191 = vector.load %arg6[%190, %c0_149, %c0_150] : memref<36x128x128xf32, #tpu.memory_space<vmem>>, vector<1x128x128xf32>
      %192 = vector.shape_cast %191 : vector<1x128x128xf32> to vector<128x128xf32>
      %cst_151 = arith.constant dense<0.000000e+00> : vector<8x128xf32>
      %193 = tpu.matmul %187, %192, %cst_151 {dimension_numbers = #tpu.dot_dimension_numbers<[1], [0], [0], [1], [0, 0, 1, 1], [], []>} : vector<8x128xf32>, vector<128x128xf32>, vector<8x128xf32> -> vector<8x128xf32>
      %194 = arith.addf %arg15, %193 : vector<8x128xf32>
      %195 = vector.extract_strided_slice %101 {offsets = [16, 0], sizes = [8, 128], strides = [1, 1]} : vector<104x128xf32> to vector<8x128xf32>
      %196 = vector.extract_strided_slice %101 {offsets = [24, 0], sizes = [8, 128], strides = [1, 1]} : vector<104x128xf32> to vector<8x128xf32>
      %197 = arith.maximumf %195, %196 : vector<8x128xf32>
      %198 = vector.extract_strided_slice %176 {offsets = [16, 0], sizes = [8, 128], strides = [1, 1]} : vector<104x128xf32> to vector<8x128xf32>
      %199 = vector.extract_strided_slice %176 {offsets = [24, 0], sizes = [8, 128], strides = [1, 1]} : vector<104x128xf32> to vector<8x128xf32>
      %200 = arith.maximumf %198, %199 : vector<8x128xf32>
      %201 = arith.maximumf %197, %200 : vector<8x128xf32>
      %202 = vector.broadcast %1 : vector<1x128xf32> to vector<8x128xf32>
      %203 = arith.addf %201, %202 : vector<8x128xf32>
      %cst_152 = arith.constant 0.000000e+00 : f32
      %204 = vector.broadcast %cst_152 : f32 to vector<8x128xf32>
      %205 = arith.maximumf %203, %204 : vector<8x128xf32>
      %c6_i32_153 = arith.constant 6 : i32
      %206 = arith.muli %arg14, %c6_i32_153 : i32
      %c1_i32_154 = arith.constant 1 : i32
      %207 = arith.addi %206, %c1_i32_154 : i32
      %208 = arith.index_cast %207 : i32 to index
      %c0_155 = arith.constant 0 : index
      %c0_156 = arith.constant 0 : index
      %209 = vector.load %arg6[%208, %c0_155, %c0_156] : memref<36x128x128xf32, #tpu.memory_space<vmem>>, vector<1x128x128xf32>
      %210 = vector.shape_cast %209 : vector<1x128x128xf32> to vector<128x128xf32>
      %cst_157 = arith.constant dense<0.000000e+00> : vector<8x128xf32>
      %211 = tpu.matmul %205, %210, %cst_157 {dimension_numbers = #tpu.dot_dimension_numbers<[1], [0], [0], [1], [0, 0, 1, 1], [], []>} : vector<8x128xf32>, vector<128x128xf32>, vector<8x128xf32> -> vector<8x128xf32>
      %212 = arith.addf %194, %211 : vector<8x128xf32>
      %213 = vector.extract_strided_slice %101 {offsets = [32, 0], sizes = [8, 128], strides = [1, 1]} : vector<104x128xf32> to vector<8x128xf32>
      %214 = vector.extract_strided_slice %101 {offsets = [40, 0], sizes = [8, 128], strides = [1, 1]} : vector<104x128xf32> to vector<8x128xf32>
      %215 = arith.maximumf %213, %214 : vector<8x128xf32>
      %216 = vector.extract_strided_slice %176 {offsets = [32, 0], sizes = [8, 128], strides = [1, 1]} : vector<104x128xf32> to vector<8x128xf32>
      %217 = vector.extract_strided_slice %176 {offsets = [40, 0], sizes = [8, 128], strides = [1, 1]} : vector<104x128xf32> to vector<8x128xf32>
      %218 = arith.maximumf %216, %217 : vector<8x128xf32>
      %219 = arith.maximumf %215, %218 : vector<8x128xf32>
      %220 = vector.broadcast %1 : vector<1x128xf32> to vector<8x128xf32>
      %221 = arith.addf %219, %220 : vector<8x128xf32>
      %cst_158 = arith.constant 0.000000e+00 : f32
      %222 = vector.broadcast %cst_158 : f32 to vector<8x128xf32>
      %223 = arith.maximumf %221, %222 : vector<8x128xf32>
      %c6_i32_159 = arith.constant 6 : i32
      %224 = arith.muli %arg14, %c6_i32_159 : i32
      %c2_i32_160 = arith.constant 2 : i32
      %225 = arith.addi %224, %c2_i32_160 : i32
      %226 = arith.index_cast %225 : i32 to index
      %c0_161 = arith.constant 0 : index
      %c0_162 = arith.constant 0 : index
      %227 = vector.load %arg6[%226, %c0_161, %c0_162] : memref<36x128x128xf32, #tpu.memory_space<vmem>>, vector<1x128x128xf32>
      %228 = vector.shape_cast %227 : vector<1x128x128xf32> to vector<128x128xf32>
      %cst_163 = arith.constant dense<0.000000e+00> : vector<8x128xf32>
      %229 = tpu.matmul %223, %228, %cst_163 {dimension_numbers = #tpu.dot_dimension_numbers<[1], [0], [0], [1], [0, 0, 1, 1], [], []>} : vector<8x128xf32>, vector<128x128xf32>, vector<8x128xf32> -> vector<8x128xf32>
      %230 = arith.addf %212, %229 : vector<8x128xf32>
      %231 = vector.extract_strided_slice %101 {offsets = [48, 0], sizes = [8, 128], strides = [1, 1]} : vector<104x128xf32> to vector<8x128xf32>
      %232 = vector.extract_strided_slice %101 {offsets = [56, 0], sizes = [8, 128], strides = [1, 1]} : vector<104x128xf32> to vector<8x128xf32>
      %233 = arith.maximumf %231, %232 : vector<8x128xf32>
      %234 = vector.extract_strided_slice %176 {offsets = [48, 0], sizes = [8, 128], strides = [1, 1]} : vector<104x128xf32> to vector<8x128xf32>
      %235 = vector.extract_strided_slice %176 {offsets = [56, 0], sizes = [8, 128], strides = [1, 1]} : vector<104x128xf32> to vector<8x128xf32>
      %236 = arith.maximumf %234, %235 : vector<8x128xf32>
      %237 = arith.maximumf %233, %236 : vector<8x128xf32>
      %238 = vector.broadcast %1 : vector<1x128xf32> to vector<8x128xf32>
      %239 = arith.addf %237, %238 : vector<8x128xf32>
      %cst_164 = arith.constant 0.000000e+00 : f32
      %240 = vector.broadcast %cst_164 : f32 to vector<8x128xf32>
      %241 = arith.maximumf %239, %240 : vector<8x128xf32>
      %c6_i32_165 = arith.constant 6 : i32
      %242 = arith.muli %arg14, %c6_i32_165 : i32
      %c3_i32 = arith.constant 3 : i32
      %243 = arith.addi %242, %c3_i32 : i32
      %244 = arith.index_cast %243 : i32 to index
      %c0_166 = arith.constant 0 : index
      %c0_167 = arith.constant 0 : index
      %245 = vector.load %arg6[%244, %c0_166, %c0_167] : memref<36x128x128xf32, #tpu.memory_space<vmem>>, vector<1x128x128xf32>
      %246 = vector.shape_cast %245 : vector<1x128x128xf32> to vector<128x128xf32>
      %cst_168 = arith.constant dense<0.000000e+00> : vector<8x128xf32>
      %247 = tpu.matmul %241, %246, %cst_168 {dimension_numbers = #tpu.dot_dimension_numbers<[1], [0], [0], [1], [0, 0, 1, 1], [], []>} : vector<8x128xf32>, vector<128x128xf32>, vector<8x128xf32> -> vector<8x128xf32>
      %248 = arith.addf %230, %247 : vector<8x128xf32>
      %249 = vector.extract_strided_slice %101 {offsets = [64, 0], sizes = [8, 128], strides = [1, 1]} : vector<104x128xf32> to vector<8x128xf32>
      %250 = vector.extract_strided_slice %101 {offsets = [72, 0], sizes = [8, 128], strides = [1, 1]} : vector<104x128xf32> to vector<8x128xf32>
      %251 = arith.maximumf %249, %250 : vector<8x128xf32>
      %252 = vector.extract_strided_slice %176 {offsets = [64, 0], sizes = [8, 128], strides = [1, 1]} : vector<104x128xf32> to vector<8x128xf32>
      %253 = vector.extract_strided_slice %176 {offsets = [72, 0], sizes = [8, 128], strides = [1, 1]} : vector<104x128xf32> to vector<8x128xf32>
      %254 = arith.maximumf %252, %253 : vector<8x128xf32>
      %255 = arith.maximumf %251, %254 : vector<8x128xf32>
      %256 = vector.broadcast %1 : vector<1x128xf32> to vector<8x128xf32>
      %257 = arith.addf %255, %256 : vector<8x128xf32>
      %cst_169 = arith.constant 0.000000e+00 : f32
      %258 = vector.broadcast %cst_169 : f32 to vector<8x128xf32>
      %259 = arith.maximumf %257, %258 : vector<8x128xf32>
      %c6_i32_170 = arith.constant 6 : i32
      %260 = arith.muli %arg14, %c6_i32_170 : i32
      %c4_i32 = arith.constant 4 : i32
      %261 = arith.addi %260, %c4_i32 : i32
      %262 = arith.index_cast %261 : i32 to index
      %c0_171 = arith.constant 0 : index
      %c0_172 = arith.constant 0 : index
      %263 = vector.load %arg6[%262, %c0_171, %c0_172] : memref<36x128x128xf32, #tpu.memory_space<vmem>>, vector<1x128x128xf32>
      %264 = vector.shape_cast %263 : vector<1x128x128xf32> to vector<128x128xf32>
      %cst_173 = arith.constant dense<0.000000e+00> : vector<8x128xf32>
      %265 = tpu.matmul %259, %264, %cst_173 {dimension_numbers = #tpu.dot_dimension_numbers<[1], [0], [0], [1], [0, 0, 1, 1], [], []>} : vector<8x128xf32>, vector<128x128xf32>, vector<8x128xf32> -> vector<8x128xf32>
      %266 = arith.addf %248, %265 : vector<8x128xf32>
      %267 = vector.extract_strided_slice %101 {offsets = [80, 0], sizes = [8, 128], strides = [1, 1]} : vector<104x128xf32> to vector<8x128xf32>
      %268 = vector.extract_strided_slice %101 {offsets = [88, 0], sizes = [8, 128], strides = [1, 1]} : vector<104x128xf32> to vector<8x128xf32>
      %269 = arith.maximumf %267, %268 : vector<8x128xf32>
      %270 = vector.extract_strided_slice %176 {offsets = [80, 0], sizes = [8, 128], strides = [1, 1]} : vector<104x128xf32> to vector<8x128xf32>
      %271 = vector.extract_strided_slice %176 {offsets = [88, 0], sizes = [8, 128], strides = [1, 1]} : vector<104x128xf32> to vector<8x128xf32>
      %272 = arith.maximumf %270, %271 : vector<8x128xf32>
      %273 = arith.maximumf %269, %272 : vector<8x128xf32>
      %274 = vector.broadcast %1 : vector<1x128xf32> to vector<8x128xf32>
      %275 = arith.addf %273, %274 : vector<8x128xf32>
      %cst_174 = arith.constant 0.000000e+00 : f32
      %276 = vector.broadcast %cst_174 : f32 to vector<8x128xf32>
      %277 = arith.maximumf %275, %276 : vector<8x128xf32>
      %c6_i32_175 = arith.constant 6 : i32
      %278 = arith.muli %arg14, %c6_i32_175 : i32
      %c5_i32 = arith.constant 5 : i32
      %279 = arith.addi %278, %c5_i32 : i32
      %280 = arith.index_cast %279 : i32 to index
      %c0_176 = arith.constant 0 : index
      %c0_177 = arith.constant 0 : index
      %281 = vector.load %arg6[%280, %c0_176, %c0_177] : memref<36x128x128xf32, #tpu.memory_space<vmem>>, vector<1x128x128xf32>
      %282 = vector.shape_cast %281 : vector<1x128x128xf32> to vector<128x128xf32>
      %cst_178 = arith.constant dense<0.000000e+00> : vector<8x128xf32>
      %283 = tpu.matmul %277, %282, %cst_178 {dimension_numbers = #tpu.dot_dimension_numbers<[1], [0], [0], [1], [0, 0, 1, 1], [], []>} : vector<8x128xf32>, vector<128x128xf32>, vector<8x128xf32> -> vector<8x128xf32>
      %284 = arith.addf %266, %283 : vector<8x128xf32>
      scf.yield %284 : vector<8x128xf32>
    }
    %c6_i32_6 = arith.constant 6 : i32
    %c0_7 = arith.constant 0 : index
    %c0_8 = arith.constant 0 : index
    %6 = vector.load %arg7[%c0_7, %c0_8] : memref<1x128xf32, #tpu.memory_space<vmem>>, vector<1x128xf32>
    %7 = vector.broadcast %6 : vector<1x128xf32> to vector<8x128xf32>
    %8 = arith.addf %5, %7 : vector<8x128xf32>
    %cst_9 = arith.constant 0.000000e+00 : f32
    %9 = vector.broadcast %cst_9 : f32 to vector<8x128xf32>
    %10 = arith.maximumf %8, %9 : vector<8x128xf32>
    %c0_10 = arith.constant 0 : index
    %c0_11 = arith.constant 0 : index
    %11 = vector.load %arg8[%c0_10, %c0_11] : memref<128x128xf32, #tpu.memory_space<vmem>>, vector<128x128xf32>
    %cst_12 = arith.constant dense<0.000000e+00> : vector<8x128xf32>
    %12 = tpu.matmul %10, %11, %cst_12 {dimension_numbers = #tpu.dot_dimension_numbers<[1], [0], [0], [1], [0, 0, 1, 1], [], []>} : vector<8x128xf32>, vector<128x128xf32>, vector<8x128xf32> -> vector<8x128xf32>
    %c0_13 = arith.constant 0 : index
    %c0_14 = arith.constant 0 : index
    %13 = vector.load %arg9[%c0_13, %c0_14] : memref<1x128xf32, #tpu.memory_space<vmem>>, vector<1x128xf32>
    %14 = vector.broadcast %13 : vector<1x128xf32> to vector<8x128xf32>
    %15 = arith.addf %12, %14 : vector<8x128xf32>
    %cst_15 = arith.constant 0.000000e+00 : f32
    %16 = vector.broadcast %cst_15 : f32 to vector<8x128xf32>
    %17 = arith.maximumf %15, %16 : vector<8x128xf32>
    %c0_16 = arith.constant 0 : index
    %c0_17 = arith.constant 0 : index
    %18 = vector.load %arg10[%c0_16, %c0_17] : memref<128x128xf32, #tpu.memory_space<vmem>>, vector<128x128xf32>
    %cst_18 = arith.constant dense<0.000000e+00> : vector<8x128xf32>
    %19 = tpu.matmul %17, %18, %cst_18 {dimension_numbers = #tpu.dot_dimension_numbers<[1], [0], [0], [1], [0, 0, 1, 1], [], []>} : vector<8x128xf32>, vector<128x128xf32>, vector<8x128xf32> -> vector<8x128xf32>
    %c0_19 = arith.constant 0 : index
    %c0_20 = arith.constant 0 : index
    %20 = vector.load %arg11[%c0_19, %c0_20] : memref<1x128xf32, #tpu.memory_space<vmem>>, vector<1x128xf32>
    %21 = vector.broadcast %20 : vector<1x128xf32> to vector<8x128xf32>
    %22 = arith.addf %19, %21 : vector<8x128xf32>
    %cst_21 = arith.constant 0.000000e+00 : f32
    %23 = vector.broadcast %cst_21 : f32 to vector<8x128xf32>
    %24 = arith.maximumf %22, %23 : vector<8x128xf32>
    %c0_22 = arith.constant 0 : index
    %c0_23 = arith.constant 0 : index
    %c0_24 = arith.constant 0 : index
    %25 = vector.load %arg12[%c0_22, %c0_23, %c0_24] : memref<1x8x128xf32, #tpu.memory_space<vmem>>, vector<1x8x128xf32>
    %26 = vector.shape_cast %25 : vector<1x8x128xf32> to vector<8x128xf32>
    %27 = vector.shape_cast %24 : vector<8x128xf32> to vector<1x8x128xf32>
    tpu.vector_store %arg12[%c0_22, %c0_23, %c0_24], %27 {strides = array<i32>} : memref<1x8x128xf32, #tpu.memory_space<vmem>>, vector<1x8x128xf32>,
    return
  }
  func.func @transform_0(%arg0: i32) -> (i32, i32, i32, i32) {
    %c0_i32 = arith.constant 0 : i32
    %c0_i32_0 = arith.constant 0 : i32
    %c0_i32_1 = arith.constant 0 : i32
    %c0_i32_2 = arith.constant 0 : i32
    return %arg0, %c0_i32, %c0_i32_0, %c0_i32_1 : i32, i32, i32, i32
  }
  func.func @transform_1(%arg0: i32) -> (i32, i32) {
    %c0_i32 = arith.constant 0 : i32
    %c0_i32_0 = arith.constant 0 : i32
    %c0_i32_1 = arith.constant 0 : i32
    return %c0_i32, %c0_i32_0 : i32, i32
  }
  func.func @transform_2(%arg0: i32) -> (i32, i32) {
    %c0_i32 = arith.constant 0 : i32
    %c0_i32_0 = arith.constant 0 : i32
    %c0_i32_1 = arith.constant 0 : i32
    return %c0_i32, %c0_i32_0 : i32, i32
  }
  func.func @transform_3(%arg0: i32) -> (i32, i32, i32) {
    %c0_i32 = arith.constant 0 : i32
    %c0_i32_0 = arith.constant 0 : i32
    %c0_i32_1 = arith.constant 0 : i32
    %c0_i32_2 = arith.constant 0 : i32
    return %c0_i32, %c0_i32_0, %c0_i32_1 : i32, i32, i32
  }
  func.func @transform_4(%arg0: i32) -> (i32, i32) {
    %c0_i32 = arith.constant 0 : i32
    %c0_i32_0 = arith.constant 0 : i32
    %c0_i32_1 = arith.constant 0 : i32
    return %c0_i32, %c0_i32_0 : i32, i32
  }
  func.func @transform_5(%arg0: i32) -> (i32, i32, i32) {
    %c0_i32 = arith.constant 0 : i32
    %c0_i32_0 = arith.constant 0 : i32
    %c0_i32_1 = arith.constant 0 : i32
    %c0_i32_2 = arith.constant 0 : i32
    return %c0_i32, %c0_i32_0, %c0_i32_1 : i32, i32, i32
  }
  func.func @transform_6(%arg0: i32) -> (i32, i32) {
    %c0_i32 = arith.constant 0 : i32
    %c0_i32_0 = arith.constant 0 : i32
    %c0_i32_1 = arith.constant 0 : i32
    return %c0_i32, %c0_i32_0 : i32, i32
  }
  func.func @transform_7(%arg0: i32) -> (i32, i32) {
    %c0_i32 = arith.constant 0 : i32
    %c0_i32_0 = arith.constant 0 : i32
    %c0_i32_1 = arith.constant 0 : i32
    return %c0_i32, %c0_i32_0 : i32, i32
  }
  func.func @transform_8(%arg0: i32) -> (i32, i32) {
    %c0_i32 = arith.constant 0 : i32
    %c0_i32_0 = arith.constant 0 : i32
    %c0_i32_1 = arith.constant 0 : i32
    return %c0_i32, %c0_i32_0 : i32, i32
  }
  func.func @transform_9(%arg0: i32) -> (i32, i32) {
    %c0_i32 = arith.constant 0 : i32
    %c0_i32_0 = arith.constant 0 : i32
    %c0_i32_1 = arith.constant 0 : i32
    return %c0_i32, %c0_i32_0 : i32, i32
  }
  func.func @transform_10(%arg0: i32) -> (i32, i32) {
    %c0_i32 = arith.constant 0 : i32
    %c0_i32_0 = arith.constant 0 : i32
    %c0_i32_1 = arith.constant 0 : i32
    return %c0_i32, %c0_i32_0 : i32, i32
  }
  func.func @transform_11(%arg0: i32) -> (i32, i32, i32) {
    %c0_i32 = arith.constant 0 : i32
    %c0_i32_0 = arith.constant 0 : i32
    %c0_i32_1 = arith.constant 0 : i32
    return %arg0, %c0_i32, %c0_i32_0 : i32, i32, i32
  }
}

</mosaic_0001>

<llo_original>
// kernel: lenet_forward.1
$region0: #{lenet_forward.1}
  #allocation0 [shape = 'u32[]', space=smem, size = 0x4, offset = 0x4, fixed_abs, tag = 'smem constant byte address 0x4 - core index']
  #allocation1 [shape = 'u32[144,128]{1,0:T(1,128)}', space=vmem, size = 0x12000, scoped, tag = 'internal scratch']
  #allocation2 [shape = 'f32[15,120,128]{2,1,0:T(8,128)}', space=vmem, size = 0xe1000, scoped, tag = 'scratch operand']
  %s0 = inlined_call_operand.vmem [shape: f32[1,32,256,1], index: 0, kind: input, shape index: {}]
  %s1 = inlined_call_operand.vmem [shape: f32[9,128], index: 1, kind: input, shape index: {}]
  %s2 = inlined_call_operand.vmem [shape: f32[1,128], index: 2, kind: input, shape index: {}]
  %s3 = inlined_call_operand.vmem [shape: f32[9,128,128], index: 3, kind: input, shape index: {}]
  %s4 = inlined_call_operand.vmem [shape: f32[1,128], index: 4, kind: input, shape index: {}]
  %s5 = inlined_call_operand.vmem [shape: f32[36,128,128], index: 5, kind: input, shape index: {}]
  %s6 = inlined_call_operand.vmem [shape: f32[1,128], index: 6, kind: input, shape index: {}]
  %s7 = inlined_call_operand.vmem [shape: f32[128,128], index: 7, kind: input, shape index: {}]
  %s8 = inlined_call_operand.vmem [shape: f32[1,128], index: 8, kind: input, shape index: {}]
  %s9 = inlined_call_operand.vmem [shape: f32[128,128], index: 9, kind: input, shape index: {}]
  %s10 = inlined_call_operand.vmem [shape: f32[1,128], index: 10, kind: input, shape index: {}]
  %s11 = inlined_call_operand.vmem [shape: f32[1,8,128], index: 11, kind: output, shape index: {}]
  %s12 = sld [smem:[#allocation0]]
  $region68: #{lenet_forward.1} parent=0
    _
  %s14 = ssub.s32 1, %s12
  %s15 = scalar_select 0, %s14, %s12
  // Predicated region
  $region2: #{lenet_forward.1} parent=0 // pred_check
    _
  $region3: #{lenet_forward.1} parent=0 // pred_check_branch
    %17 = sbr.rel (0) target = $region5
  $region4: #{lenet_forward.1} parent=0 // pred_region
    _
  $region5: #{lenet_forward.1} parent=0 // pred_fallthru
    _
  // Predicated region
  $region6: #{lenet_forward.1} parent=0 // pred_check
    _
  $region7: #{lenet_forward.1} parent=0 // pred_check_branch
    %19 = sbr.rel (0) target = $region9
  $region8: #{lenet_forward.1} parent=0 // pred_region
    _
  $region9: #{lenet_forward.1} parent=0 // pred_fallthru
    _
  // Predicated region
  $region10: #{lenet_forward.1} parent=0 // pred_check
    _
  $region11: #{lenet_forward.1} parent=0 // pred_check_branch
    %21 = sbr.rel (0) target = $region13
  $region12: #{lenet_forward.1} parent=0 // pred_region
    _
  $region13: #{lenet_forward.1} parent=0 // pred_fallthru
    _
  // Predicated region
  $region14: #{lenet_forward.1} parent=0 // pred_check
    _
  $region15: #{lenet_forward.1} parent=0 // pred_check_branch
    %23 = sbr.rel (0) target = $region17
  $region16: #{lenet_forward.1} parent=0 // pred_region
    _
  $region17: #{lenet_forward.1} parent=0 // pred_fallthru
    _
  // Predicated region
  $region18: #{lenet_forward.1} parent=0 // pred_check
    _
  $region19: #{lenet_forward.1} parent=0 // pred_check_branch
    %25 = sbr.rel (0) target = $region21
  $region20: #{lenet_forward.1} parent=0 // pred_region
    _
  $region21: #{lenet_forward.1} parent=0 // pred_fallthru
    _
  // Predicated region
  $region22: #{lenet_forward.1} parent=0 // pred_check
    _
  $region23: #{lenet_forward.1} parent=0 // pred_check_branch
    %27 = sbr.rel (0) target = $region25
  $region24: #{lenet_forward.1} parent=0 // pred_region
    _
  $region25: #{lenet_forward.1} parent=0 // pred_fallthru
    _
  // Predicated region
  $region26: #{lenet_forward.1} parent=0 // pred_check
    _
  $region27: #{lenet_forward.1} parent=0 // pred_check_branch
    %29 = sbr.rel (0) target = $region29
  $region28: #{lenet_forward.1} parent=0 // pred_region
    _
  $region29: #{lenet_forward.1} parent=0 // pred_fallthru
    _
  // Predicated region
  $region30: #{lenet_forward.1} parent=0 // pred_check
    _
  $region31: #{lenet_forward.1} parent=0 // pred_check_branch
    %31 = sbr.rel (0) target = $region33
  $region32: #{lenet_forward.1} parent=0 // pred_region
    _
  $region33: #{lenet_forward.1} parent=0 // pred_fallthru
    _
  // Predicated region
  $region34: #{lenet_forward.1} parent=0 // pred_check
    _
  $region35: #{lenet_forward.1} parent=0 // pred_check_branch
    %33 = sbr.rel (0) target = $region37
  $region36: #{lenet_forward.1} parent=0 // pred_region
    _
  $region37: #{lenet_forward.1} parent=0 // pred_fallthru
    _
  // Predicated region
  $region38: #{lenet_forward.1} parent=0 // pred_check
    _
  $region39: #{lenet_forward.1} parent=0 // pred_check_branch
    %35 = sbr.rel (0) target = $region41
  $region40: #{lenet_forward.1} parent=0 // pred_region
    _
  $region41: #{lenet_forward.1} parent=0 // pred_fallthru
    _
  // Predicated region
  $region42: #{lenet_forward.1} parent=0 // pred_check
    _
  $region43: #{lenet_forward.1} parent=0 // pred_check_branch
    %37 = sbr.rel (0) target = $region45
  $region44: #{lenet_forward.1} parent=0 // pred_region
    _
  $region45: #{lenet_forward.1} parent=0 // pred_fallthru
    _
  %v38 = vld [vmem:[%s2] sm:$0x1]
  %v39 = vld [vmem:[%s4] sm:$0x1]
  loop: start=0, step=1, limit=15
  $region46: #{lenet_forward.1} parent=0 // loop_pre_header
    _
  $region47: #{lenet_forward.1} parent=0 // loop_header
    %s41 = sphi 0, %s45
    %p42 = scmp.ge.s32.totalorder %s41, 15
  $region48: #{lenet_forward.1} parent=0 // loop_header_branch
    %44 = sbr.rel (%p42) target = $region52
  $region49: #{lenet_forward.1} parent=0 // loop_body
    %s46 = smul.u32 %s41, 2
    %s47 = smul.u32 %s46, 256
    %s48 = scalar_lea.vmem %s0, %s47
    %v49 = vld [vmem:[%s48] sm:$0xff]
    %v50 = vld [vmem:[%s48 + $0x8] sm:$0xff]
    %v51 = vld [vmem:[%s48 + $0x10] sm:$0xff]
    %v52 = vld [vmem:[%s48 + $0x18] sm:$0xff]
    %v53 = vld [vmem:[%s48 + $0x20] sm:$0xff]
    %v54 = vld [vmem:[%s48 + $0x28] sm:$0xff]
    %v55 = vld [vmem:[%s48 + $0x30] sm:$0xff]
    %v56 = vld [vmem:[%s48 + $0x38] sm:$0xff]
    %v57 = vld [vmem:[%s48 + $0x40] sm:$0xff]
    %v58 = vld [vmem:[%s48 + $0x48] sm:$0xff]
    %v59 = vld [vmem:[%s48 + $0x50] sm:$0xff]
    %v60 = vld [vmem:[%s48 + $0x58] sm:$0xff]
    %v61 = vld [vmem:[%s48 + $0x60] sm:$0xff]
    %v62 = vld [vmem:[%s48 + $0x68] sm:$0xff]
    %v63 = vld [vmem:[%s48 + $0x70] sm:$0xff]
    %v64 = vld [vmem:[%s48 + $0x78] sm:$0xff]
    %v65 = vld [vmem:[%s48 + $0x80] sm:$0xff]
    %v66 = vld [vmem:[%s48 + $0x88] sm:$0xff]
    %v67 = vld [vmem:[%s48 + $0x90] sm:$0xff]
    %v68 = vld [vmem:[%s48 + $0x98] sm:$0xff]
    %v69 = vld [vmem:[%s48 + $0xa0] sm:$0xff]
    %v70 = vld [vmem:[%s48 + $0xa8] sm:$0xff]
    %v71 = vld [vmem:[%s48 + $0xb0] sm:$0xff]
    %v72 = vld [vmem:[%s48 + $0xb8] sm:$0xff]
    %v73 = vld [vmem:[%s48 + $0xc0] sm:$0xff]
    %v74 = vld [vmem:[%s48 + $0xc8] sm:$0xff]
    %v75 = vld [vmem:[%s48 + $0xd0] sm:$0xff]
    %v76 = vld [vmem:[%s48 + $0xd8] sm:$0xff]
    %v77 = vld [vmem:[%s48 + $0xe0] sm:$0xff]
    %v78 = vld [vmem:[%s48 + $0xe8] sm:$0xff]
    %v79 = vld [vmem:[%s1] sm:$0x1]
    %81 = vset.pattern.permute.xlu0 0
    %82 = vperm.xlu0 %81, %v49
    %v83 = vpop.permute.xlu0 %82
    %86 = vset.pattern.permute.xlu0 0
    %87 = vperm.xlu0 %86, %v50
    %v88 = vpop.permute.xlu0 %87
    %91 = vset.pattern.permute.xlu0 0
    %92 = vperm.xlu0 %91, %v51
    %v93 = vpop.permute.xlu0 %92
    %96 = vset.pattern.permute.xlu0 0
    %97 = vperm.xlu0 %96, %v52
    %v98 = vpop.permute.xlu0 %97
    %101 = vset.pattern.permute.xlu0 0
    %102 = vperm.xlu0 %101, %v53
    %v103 = vpop.permute.xlu0 %102
    %106 = vset.pattern.permute.xlu0 0
    %107 = vperm.xlu0 %106, %v54
    %v108 = vpop.permute.xlu0 %107
    %111 = vset.pattern.permute.xlu0 0
    %112 = vperm.xlu0 %111, %v55
    %v113 = vpop.permute.xlu0 %112
    %116 = vset.pattern.permute.xlu0 0
    %117 = vperm.xlu0 %116, %v56
    %v118 = vpop.permute.xlu0 %117
    %121 = vset.pattern.permute.xlu0 0
    %122 = vperm.xlu0 %121, %v57
    %v123 = vpop.permute.xlu0 %122
    %126 = vset.pattern.permute.xlu0 0
    %127 = vperm.xlu0 %126, %v58
    %v128 = vpop.permute.xlu0 %127
    %131 = vset.pattern.permute.xlu0 0
    %132 = vperm.xlu0 %131, %v59
    %v133 = vpop.permute.xlu0 %132
    %136 = vset.pattern.permute.xlu0 0
    %137 = vperm.xlu0 %136, %v60
    %v138 = vpop.permute.xlu0 %137
    %141 = vset.pattern.permute.xlu0 0
    %142 = vperm.xlu0 %141, %v61
    %v143 = vpop.permute.xlu0 %142
    %146 = vset.pattern.permute.xlu0 0
    %147 = vperm.xlu0 %146, %v62
    %v148 = vpop.permute.xlu0 %147
    %151 = vset.pattern.permute.xlu0 0
    %152 = vperm.xlu0 %151, %v63
    %v153 = vpop.permute.xlu0 %152
    %156 = vset.pattern.permute.xlu0 0
    %157 = vperm.xlu0 %156, %v64
    %v158 = vpop.permute.xlu0 %157
    %161 = vset.pattern.permute.xlu0 0
    %162 = vperm.xlu0 %161, %v65
    %v163 = vpop.permute.xlu0 %162
    %166 = vset.pattern.permute.xlu0 0
    %167 = vperm.xlu0 %166, %v66
    %v168 = vpop.permute.xlu0 %167
    %171 = vset.pattern.permute.xlu0 0
    %172 = vperm.xlu0 %171, %v67
    %v173 = vpop.permute.xlu0 %172
    %176 = vset.pattern.permute.xlu0 0
    %177 = vperm.xlu0 %176, %v68
    %v178 = vpop.permute.xlu0 %177
    %181 = vset.pattern.permute.xlu0 0
    %182 = vperm.xlu0 %181, %v69
    %v183 = vpop.permute.xlu0 %182
    %186 = vset.pattern.permute.xlu0 0
    %187 = vperm.xlu0 %186, %v70
    %v188 = vpop.permute.xlu0 %187
    %191 = vset.pattern.permute.xlu0 0
    %192 = vperm.xlu0 %191, %v71
    %v193 = vpop.permute.xlu0 %192
    %196 = vset.pattern.permute.xlu0 0
    %197 = vperm.xlu0 %196, %v72
    %v198 = vpop.permute.xlu0 %197
    %201 = vset.pattern.permute.xlu0 0
    %202 = vperm.xlu0 %201, %v73
    %v203 = vpop.permute.xlu0 %202
    %206 = vset.pattern.permute.xlu0 0
    %207 = vperm.xlu0 %206, %v74
    %v208 = vpop.permute.xlu0 %207
    %211 = vset.pattern.permute.xlu0 0
    %212 = vperm.xlu0 %211, %v75
    %v213 = vpop.permute.xlu0 %212
    %216 = vset.pattern.permute.xlu0 0
    %217 = vperm.xlu0 %216, %v76
    %v218 = vpop.permute.xlu0 %217
    %221 = vset.pattern.permute.xlu0 0
    %222 = vperm.xlu0 %221, %v77
    %v223 = vpop.permute.xlu0 %222
    %226 = vset.pattern.permute.xlu0 0
    %227 = vperm.xlu0 %226, %v78
    %v228 = vpop.permute.xlu0 %227
    %v230 = vlaneseq
    %v231 = vshrl.u32 %v230, 7
    %v232 = vsub.s32 0, %v231
    %v233 = vrot.slane %v79, %v232
    %v234 = vmul.f32 %v83, %v233
    %v235 = vmul.f32 %v88, %v233
    %v236 = vmul.f32 %v93, %v233
    %v237 = vmul.f32 %v98, %v233
    %v238 = vmul.f32 %v103, %v233
    %v239 = vmul.f32 %v108, %v233
    %v240 = vmul.f32 %v113, %v233
    %v241 = vmul.f32 %v118, %v233
    %v242 = vmul.f32 %v123, %v233
    %v243 = vmul.f32 %v128, %v233
    %v244 = vmul.f32 %v133, %v233
    %v245 = vmul.f32 %v138, %v233
    %v246 = vmul.f32 %v143, %v233
    %v247 = vmul.f32 %v148, %v233
    %v248 = vmul.f32 %v153, %v233
    %v249 = vmul.f32 %v158, %v233
    %v250 = vmul.f32 %v163, %v233
    %v251 = vmul.f32 %v168, %v233
    %v252 = vmul.f32 %v173, %v233
    %v253 = vmul.f32 %v178, %v233
    %v254 = vmul.f32 %v183, %v233
    %v255 = vmul.f32 %v188, %v233
    %v256 = vmul.f32 %v193, %v233
    %v257 = vmul.f32 %v198, %v233
    %v258 = vmul.f32 %v203, %v233
    %v259 = vmul.f32 %v208, %v233
    %v260 = vmul.f32 %v213, %v233
    %v261 = vmul.f32 %v218, %v233
    %v262 = vmul.f32 %v223, %v233
    %v263 = vmul.f32 %v228, %v233
    %v264 = vadd.f32 %v234, 0.0
    %v265 = vadd.f32 %v235, 0.0
    %v266 = vadd.f32 %v236, 0.0
    %v267 = vadd.f32 %v237, 0.0
    %v268 = vadd.f32 %v238, 0.0
    %v269 = vadd.f32 %v239, 0.0
    %v270 = vadd.f32 %v240, 0.0
    %v271 = vadd.f32 %v241, 0.0
    %v272 = vadd.f32 %v242, 0.0
    %v273 = vadd.f32 %v243, 0.0
    %v274 = vadd.f32 %v244, 0.0
    %v275 = vadd.f32 %v245, 0.0
    %v276 = vadd.f32 %v246, 0.0
    %v277 = vadd.f32 %v247, 0.0
    %v278 = vadd.f32 %v248, 0.0
    %v279 = vadd.f32 %v249, 0.0
    %v280 = vadd.f32 %v250, 0.0
    %v281 = vadd.f32 %v251, 0.0
    %v282 = vadd.f32 %v252, 0.0
    %v283 = vadd.f32 %v253, 0.0
    %v284 = vadd.f32 %v254, 0.0
    %v285 = vadd.f32 %v255, 0.0
    %v286 = vadd.f32 %v256, 0.0
    %v287 = vadd.f32 %v257, 0.0
    %v288 = vadd.f32 %v258, 0.0
    %v289 = vadd.f32 %v259, 0.0
    %v290 = vadd.f32 %v260, 0.0
    %v291 = vadd.f32 %v261, 0.0
    %v292 = vadd.f32 %v262, 0.0
    %v293 = vadd.f32 %v263, 0.0
    %v294 = vld [vmem:[%s48 + $0x8] sm:$0xff]
    %v295 = vld [vmem:[%s48 + $0x10] sm:$0xff]
    %v296 = vld [vmem:[%s48 + $0x18] sm:$0xff]
    %v297 = vld [vmem:[%s48 + $0x20] sm:$0xff]
    %v298 = vld [vmem:[%s48 + $0x28] sm:$0xff]
    %v299 = vld [vmem:[%s48 + $0x30] sm:$0xff]
    %v300 = vld [vmem:[%s48 + $0x38] sm:$0xff]
    %v301 = vld [vmem:[%s48 + $0x40] sm:$0xff]
    %v302 = vld [vmem:[%s48 + $0x48] sm:$0xff]
    %v303 = vld [vmem:[%s48 + $0x50] sm:$0xff]
    %v304 = vld [vmem:[%s48 + $0x58] sm:$0xff]
    %v305 = vld [vmem:[%s48 + $0x60] sm:$0xff]
    %v306 = vld [vmem:[%s48 + $0x68] sm:$0xff]
    %v307 = vld [vmem:[%s48 + $0x70] sm:$0xff]
    %v308 = vld [vmem:[%s48 + $0x78] sm:$0xff]
    %v309 = vld [vmem:[%s48 + $0x80] sm:$0xff]
    %v310 = vld [vmem:[%s48 + $0x88] sm:$0xff]
    %v311 = vld [vmem:[%s48 + $0x90] sm:$0xff]
    %v312 = vld [vmem:[%s48 + $0x98] sm:$0xff]
    %v313 = vld [vmem:[%s48 + $0xa0] sm:$0xff]
    %v314 = vld [vmem:[%s48 + $0xa8] sm:$0xff]
    %v315 = vld [vmem:[%s48 + $0xb0] sm:$0xff]
    %v316 = vld [vmem:[%s48 + $0xb8] sm:$0xff]
    %v317 = vld [vmem:[%s48 + $0xc0] sm:$0xff]
    %v318 = vld [vmem:[%s48 + $0xc8] sm:$0xff]
    %v319 = vld [vmem:[%s48 + $0xd0] sm:$0xff]
    %v320 = vld [vmem:[%s48 + $0xd8] sm:$0xff]
    %v321 = vld [vmem:[%s48 + $0xe0] sm:$0xff]
    %v322 = vld [vmem:[%s48 + $0xe8] sm:$0xff]
    %v323 = vld [vmem:[%s48 + $0xf0] sm:$0xff]
    %v324 = vld [vmem:[%s1 + $0x1] sm:$0x1]
    %326 = vset.pattern.permute.xlu0 0
    %327 = vperm.xlu0 %326, %v294
    %v328 = vpop.permute.xlu0 %327
    %331 = vset.pattern.permute.xlu0 0
    %332 = vperm.xlu0 %331, %v295
    %v333 = vpop.permute.xlu0 %332
    %336 = vset.pattern.permute.xlu0 0
    %337 = vperm.xlu0 %336, %v296
    %v338 = vpop.permute.xlu0 %337
    %341 = vset.pattern.permute.xlu0 0
    %342 = vperm.xlu0 %341, %v297
    %v343 = vpop.permute.xlu0 %342
    %346 = vset.pattern.permute.xlu0 0
    %347 = vperm.xlu0 %346, %v298
    %v348 = vpop.permute.xlu0 %347
    %351 = vset.pattern.permute.xlu0 0
    %352 = vperm.xlu0 %351, %v299
    %v353 = vpop.permute.xlu0 %352
    %356 = vset.pattern.permute.xlu0 0
    %357 = vperm.xlu0 %356, %v300
    %v358 = vpop.permute.xlu0 %357
    %361 = vset.pattern.permute.xlu0 0
    %362 = vperm.xlu0 %361, %v301
    %v363 = vpop.permute.xlu0 %362
    %366 = vset.pattern.permute.xlu0 0
    %367 = vperm.xlu0 %366, %v302
    %v368 = vpop.permute.xlu0 %367
    %371 = vset.pattern.permute.xlu0 0
    %372 = vperm.xlu0 %371, %v303
    %v373 = vpop.permute.xlu0 %372
    %376 = vset.pattern.permute.xlu0 0
    %377 = vperm.xlu0 %376, %v304
    %v378 = vpop.permute.xlu0 %377
    %381 = vset.pattern.permute.xlu0 0
    %382 = vperm.xlu0 %381, %v305
    %v383 = vpop.permute.xlu0 %382
    %386 = vset.pattern.permute.xlu0 0
    %387 = vperm.xlu0 %386, %v306
    %v388 = vpop.permute.xlu0 %387
    %391 = vset.pattern.permute.xlu0 0
    %392 = vperm.xlu0 %391, %v307
    %v393 = vpop.permute.xlu0 %392
    %396 = vset.pattern.permute.xlu0 0
    %397 = vperm.xlu0 %396, %v308
    %v398 = vpop.permute.xlu0 %397
    %401 = vset.pattern.permute.xlu0 0
    %402 = vperm.xlu0 %401, %v309
    %v403 = vpop.permute.xlu0 %402
    %406 = vset.pattern.permute.xlu0 0
    %407 = vperm.xlu0 %406, %v310
    %v408 = vpop.permute.xlu0 %407
    %411 = vset.pattern.permute.xlu0 0
    %412 = vperm.xlu0 %411, %v311
    %v413 = vpop.permute.xlu0 %412
    %416 = vset.pattern.permute.xlu0 0
    %417 = vperm.xlu0 %416, %v312
    %v418 = vpop.permute.xlu0 %417
    %421 = vset.pattern.permute.xlu0 0
    %422 = vperm.xlu0 %421, %v313
    %v423 = vpop.permute.xlu0 %422
    %426 = vset.pattern.permute.xlu0 0
    %427 = vperm.xlu0 %426, %v314
    %v428 = vpop.permute.xlu0 %427
    %431 = vset.pattern.permute.xlu0 0
    %432 = vperm.xlu0 %431, %v315
    %v433 = vpop.permute.xlu0 %432
    %436 = vset.pattern.permute.xlu0 0
    %437 = vperm.xlu0 %436, %v316
    %v438 = vpop.permute.xlu0 %437
    %441 = vset.pattern.permute.xlu0 0
    %442 = vperm.xlu0 %441, %v317
    %v443 = vpop.permute.xlu0 %442
    %446 = vset.pattern.permute.xlu0 0
    %447 = vperm.xlu0 %446, %v318
    %v448 = vpop.permute.xlu0 %447
    %451 = vset.pattern.permute.xlu0 0
    %452 = vperm.xlu0 %451, %v319
    %v453 = vpop.permute.xlu0 %452
    %456 = vset.pattern.permute.xlu0 0
    %457 = vperm.xlu0 %456, %v320
    %v458 = vpop.permute.xlu0 %457
    %461 = vset.pattern.permute.xlu0 0
    %462 = vperm.xlu0 %461, %v321
    %v463 = vpop.permute.xlu0 %462
    %466 = vset.pattern.permute.xlu0 0
    %467 = vperm.xlu0 %466, %v322
    %v468 = vpop.permute.xlu0 %467
    %471 = vset.pattern.permute.xlu0 0
    %472 = vperm.xlu0 %471, %v323
    %v473 = vpop.permute.xlu0 %472
    %v475 = vlaneseq
    %v476 = vshrl.u32 %v475, 7
    %v477 = vsub.s32 0, %v476
    %v478 = vrot.slane %v324, %v477
    %v479 = vmul.f32 %v328, %v478
    %v480 = vmul.f32 %v333, %v478
    %v481 = vmul.f32 %v338, %v478
    %v482 = vmul.f32 %v343, %v478
    %v483 = vmul.f32 %v348, %v478
    %v484 = vmul.f32 %v353, %v478
    %v485 = vmul.f32 %v358, %v478
    %v486 = vmul.f32 %v363, %v478
    %v487 = vmul.f32 %v368, %v478
    %v488 = vmul.f32 %v373, %v478
    %v489 = vmul.f32 %v378, %v478
    %v490 = vmul.f32 %v383, %v478
    %v491 = vmul.f32 %v388, %v478
    %v492 = vmul.f32 %v393, %v478
    %v493 = vmul.f32 %v398, %v478
    %v494 = vmul.f32 %v403, %v478
    %v495 = vmul.f32 %v408, %v478
    %v496 = vmul.f32 %v413, %v478
    %v497 = vmul.f32 %v418, %v478
    %v498 = vmul.f32 %v423, %v478
    %v499 = vmul.f32 %v428, %v478
    %v500 = vmul.f32 %v433, %v478
    %v501 = vmul.f32 %v438, %v478
    %v502 = vmul.f32 %v443, %v478
    %v503 = vmul.f32 %v448, %v478
    %v504 = vmul.f32 %v453, %v478
    %v505 = vmul.f32 %v458, %v478
    %v506 = vmul.f32 %v463, %v478
    %v507 = vmul.f32 %v468, %v478
    %v508 = vmul.f32 %v473, %v478
    %v509 = vadd.f32 %v264, %v479
    %v510 = vadd.f32 %v265, %v480
    %v511 = vadd.f32 %v266, %v481
    %v512 = vadd.f32 %v267, %v482
    %v513 = vadd.f32 %v268, %v483
    %v514 = vadd.f32 %v269, %v484
    %v515 = vadd.f32 %v270, %v485
    %v516 = vadd.f32 %v271, %v486
    %v517 = vadd.f32 %v272, %v487
    %v518 = vadd.f32 %v273, %v488
    %v519 = vadd.f32 %v274, %v489
    %v520 = vadd.f32 %v275, %v490
    %v521 = vadd.f32 %v276, %v491
    %v522 = vadd.f32 %v277, %v492
    %v523 = vadd.f32 %v278, %v493
    %v524 = vadd.f32 %v279, %v494
    %v525 = vadd.f32 %v280, %v495
    %v526 = vadd.f32 %v281, %v496
    %v527 = vadd.f32 %v282, %v497
    %v528 = vadd.f32 %v283, %v498
    %v529 = vadd.f32 %v284, %v499
    %v530 = vadd.f32 %v285, %v500
    %v531 = vadd.f32 %v286, %v501
    %v532 = vadd.f32 %v287, %v502
    %v533 = vadd.f32 %v288, %v503
    %v534 = vadd.f32 %v289, %v504
    %v535 = vadd.f32 %v290, %v505
    %v536 = vadd.f32 %v291, %v506
    %v537 = vadd.f32 %v292, %v507
    %v538 = vadd.f32 %v293, %v508
    %v539 = vld [vmem:[%s48 + $0x10] sm:$0xff]
    %v540 = vld [vmem:[%s48 + $0x18] sm:$0xff]
    %v541 = vld [vmem:[%s48 + $0x20] sm:$0xff]
    %v542 = vld [vmem:[%s48 + $0x28] sm:$0xff]
    %v543 = vld [vmem:[%s48 + $0x30] sm:$0xff]
    %v544 = vld [vmem:[%s48 + $0x38] sm:$0xff]
    %v545 = vld [vmem:[%s48 + $0x40] sm:$0xff]
    %v546 = vld [vmem:[%s48 + $0x48] sm:$0xff]
    %v547 = vld [vmem:[%s48 + $0x50] sm:$0xff]
    %v548 = vld [vmem:[%s48 + $0x58] sm:$0xff]
    %v549 = vld [vmem:[%s48 + $0x60] sm:$0xff]
    %v550 = vld [vmem:[%s48 + $0x68] sm:$0xff]
    %v551 = vld [vmem:[%s48 + $0x70] sm:$0xff]
    %v552 = vld [vmem:[%s48 + $0x78] sm:$0xff]
    %v553 = vld [vmem:[%s48 + $0x80] sm:$0xff]
    %v554 = vld [vmem:[%s48 + $0x88] sm:$0xff]
    %v555 = vld [vmem:[%s48 + $0x90] sm:$0xff]
    %v556 = vld [vmem:[%s48 + $0x98] sm:$0xff]
    %v557 = vld [vmem:[%s48 + $0xa0] sm:$0xff]
    %v558 = vld [vmem:[%s48 + $0xa8] sm:$0xff]
    %v559 = vld [vmem:[%s48 + $0xb0] sm:$0xff]
    %v560 = vld [vmem:[%s48 + $0xb8] sm:$0xff]
    %v561 = vld [vmem:[%s48 + $0xc0] sm:$0xff]
    %v562 = vld [vmem:[%s48 + $0xc8] sm:$0xff]
    %v563 = vld [vmem:[%s48 + $0xd0] sm:$0xff]
    %v564 = vld [vmem:[%s48 + $0xd8] sm:$0xff]
    %v565 = vld [vmem:[%s48 + $0xe0] sm:$0xff]
    %v566 = vld [vmem:[%s48 + $0xe8] sm:$0xff]
    %v567 = vld [vmem:[%s48 + $0xf0] sm:$0xff]
    %v568 = vld [vmem:[%s48 + $0xf8] sm:$0xff]
    %v569 = vld [vmem:[%s1 + $0x2] sm:$0x1]
    %571 = vset.pattern.permute.xlu0 0
    %572 = vperm.xlu0 %571, %v539
    %v573 = vpop.permute.xlu0 %572
    %576 = vset.pattern.permute.xlu0 0
    %577 = vperm.xlu0 %576, %v540
    %v578 = vpop.permute.xlu0 %577
    %581 = vset.pattern.permute.xlu0 0
    %582 = vperm.xlu0 %581, %v541
    %v583 = vpop.permute.xlu0 %582
    %586 = vset.pattern.permute.xlu0 0
    %587 = vperm.xlu0 %586, %v542
    %v588 = vpop.permute.xlu0 %587
    %591 = vset.pattern.permute.xlu0 0
    %592 = vperm.xlu0 %591, %v543
    %v593 = vpop.permute.xlu0 %592
    %596 = vset.pattern.permute.xlu0 0
    %597 = vperm.xlu0 %596, %v544
    %v598 = vpop.permute.xlu0 %597
    %601 = vset.pattern.permute.xlu0 0
    %602 = vperm.xlu0 %601, %v545
    %v603 = vpop.permute.xlu0 %602
    %606 = vset.pattern.permute.xlu0 0
    %607 = vperm.xlu0 %606, %v546
    %v608 = vpop.permute.xlu0 %607
    %611 = vset.pattern.permute.xlu0 0
    %612 = vperm.xlu0 %611, %v547
    %v613 = vpop.permute.xlu0 %612
    %616 = vset.pattern.permute.xlu0 0
    %617 = vperm.xlu0 %616, %v548
    %v618 = vpop.permute.xlu0 %617
    %621 = vset.pattern.permute.xlu0 0
    %622 = vperm.xlu0 %621, %v549
    %v623 = vpop.permute.xlu0 %622
    %626 = vset.pattern.permute.xlu0 0
    %627 = vperm.xlu0 %626, %v550
    %v628 = vpop.permute.xlu0 %627
    %631 = vset.pattern.permute.xlu0 0
    %632 = vperm.xlu0 %631, %v551
    %v633 = vpop.permute.xlu0 %632
    %636 = vset.pattern.permute.xlu0 0
    %637 = vperm.xlu0 %636, %v552
    %v638 = vpop.permute.xlu0 %637
    %641 = vset.pattern.permute.xlu0 0
    %642 = vperm.xlu0 %641, %v553
    %v643 = vpop.permute.xlu0 %642
    %646 = vset.pattern.permute.xlu0 0
    %647 = vperm.xlu0 %646, %v554
    %v648 = vpop.permute.xlu0 %647
    %651 = vset.pattern.permute.xlu0 0
    %652 = vperm.xlu0 %651, %v555
    %v653 = vpop.permute.xlu0 %652
    %656 = vset.pattern.permute.xlu0 0
    %657 = vperm.xlu0 %656, %v556
    %v658 = vpop.permute.xlu0 %657
    %661 = vset.pattern.permute.xlu0 0
    %662 = vperm.xlu0 %661, %v557
    %v663 = vpop.permute.xlu0 %662
    %666 = vset.pattern.permute.xlu0 0
    %667 = vperm.xlu0 %666, %v558
    %v668 = vpop.permute.xlu0 %667
    %671 = vset.pattern.permute.xlu0 0
    %672 = vperm.xlu0 %671, %v559
    %v673 = vpop.permute.xlu0 %672
    %676 = vset.pattern.permute.xlu0 0
    %677 = vperm.xlu0 %676, %v560
    %v678 = vpop.permute.xlu0 %677
    %681 = vset.pattern.permute.xlu0 0
    %682 = vperm.xlu0 %681, %v561
    %v683 = vpop.permute.xlu0 %682
    %686 = vset.pattern.permute.xlu0 0
    %687 = vperm.xlu0 %686, %v562
    %v688 = vpop.permute.xlu0 %687
    %691 = vset.pattern.permute.xlu0 0
    %692 = vperm.xlu0 %691, %v563
    %v693 = vpop.permute.xlu0 %692
    %696 = vset.pattern.permute.xlu0 0
    %697 = vperm.xlu0 %696, %v564
    %v698 = vpop.permute.xlu0 %697
    %701 = vset.pattern.permute.xlu0 0
    %702 = vperm.xlu0 %701, %v565
    %v703 = vpop.permute.xlu0 %702
    %706 = vset.pattern.permute.xlu0 0
    %707 = vperm.xlu0 %706, %v566
    %v708 = vpop.permute.xlu0 %707
    %711 = vset.pattern.permute.xlu0 0
    %712 = vperm.xlu0 %711, %v567
    %v713 = vpop.permute.xlu0 %712
    %716 = vset.pattern.permute.xlu0 0
    %717 = vperm.xlu0 %716, %v568
    %v718 = vpop.permute.xlu0 %717
    %v720 = vlaneseq
    %v721 = vshrl.u32 %v720, 7
    %v722 = vsub.s32 0, %v721
    %v723 = vrot.slane %v569, %v722
    %v724 = vmul.f32 %v573, %v723
    %v725 = vmul.f32 %v578, %v723
    %v726 = vmul.f32 %v583, %v723
    %v727 = vmul.f32 %v588, %v723
    %v728 = vmul.f32 %v593, %v723
    %v729 = vmul.f32 %v598, %v723
    %v730 = vmul.f32 %v603, %v723
    %v731 = vmul.f32 %v608, %v723
    %v732 = vmul.f32 %v613, %v723
    %v733 = vmul.f32 %v618, %v723
    %v734 = vmul.f32 %v623, %v723
    %v735 = vmul.f32 %v628, %v723
    %v736 = vmul.f32 %v633, %v723
    %v737 = vmul.f32 %v638, %v723
    %v738 = vmul.f32 %v643, %v723
    %v739 = vmul.f32 %v648, %v723
    %v740 = vmul.f32 %v653, %v723
    %v741 = vmul.f32 %v658, %v723
    %v742 = vmul.f32 %v663, %v723
    %v743 = vmul.f32 %v668, %v723
    %v744 = vmul.f32 %v673, %v723
    %v745 = vmul.f32 %v678, %v723
    %v746 = vmul.f32 %v683, %v723
    %v747 = vmul.f32 %v688, %v723
    %v748 = vmul.f32 %v693, %v723
    %v749 = vmul.f32 %v698, %v723
    %v750 = vmul.f32 %v703, %v723
    %v751 = vmul.f32 %v708, %v723
    %v752 = vmul.f32 %v713, %v723
    %v753 = vmul.f32 %v718, %v723
    %v754 = vadd.f32 %v509, %v724
    %v755 = vadd.f32 %v510, %v725
    %v756 = vadd.f32 %v511, %v726
    %v757 = vadd.f32 %v512, %v727
    %v758 = vadd.f32 %v513, %v728
    %v759 = vadd.f32 %v514, %v729
    %v760 = vadd.f32 %v515, %v730
    %v761 = vadd.f32 %v516, %v731
    %v762 = vadd.f32 %v517, %v732
    %v763 = vadd.f32 %v518, %v733
    %v764 = vadd.f32 %v519, %v734
    %v765 = vadd.f32 %v520, %v735
    %v766 = vadd.f32 %v521, %v736
    %v767 = vadd.f32 %v522, %v737
    %v768 = vadd.f32 %v523, %v738
    %v769 = vadd.f32 %v524, %v739
    %v770 = vadd.f32 %v525, %v740
    %v771 = vadd.f32 %v526, %v741
    %v772 = vadd.f32 %v527, %v742
    %v773 = vadd.f32 %v528, %v743
    %v774 = vadd.f32 %v529, %v744
    %v775 = vadd.f32 %v530, %v745
    %v776 = vadd.f32 %v531, %v746
    %v777 = vadd.f32 %v532, %v747
    %v778 = vadd.f32 %v533, %v748
    %v779 = vadd.f32 %v534, %v749
    %v780 = vadd.f32 %v535, %v750
    %v781 = vadd.f32 %v536, %v751
    %v782 = vadd.f32 %v537, %v752
    %v783 = vadd.f32 %v538, %v753
    %s784 = sadd.s32 %s46, 1
    %s785 = smul.u32 %s784, 256
    %s786 = scalar_lea.vmem %s0, %s785
    %v787 = vld [vmem:[%s786] sm:$0xff]
    %v788 = vld [vmem:[%s786 + $0x8] sm:$0xff]
    %v789 = vld [vmem:[%s786 + $0x10] sm:$0xff]
    %v790 = vld [vmem:[%s786 + $0x18] sm:$0xff]
    %v791 = vld [vmem:[%s786 + $0x20] sm:$0xff]
    %v792 = vld [vmem:[%s786 + $0x28] sm:$0xff]
    %v793 = vld [vmem:[%s786 + $0x30] sm:$0xff]
    %v794 = vld [vmem:[%s786 + $0x38] sm:$0xff]
    %v795 = vld [vmem:[%s786 + $0x40] sm:$0xff]
    %v796 = vld [vmem:[%s786 + $0x48] sm:$0xff]
    %v797 = vld [vmem:[%s786 + $0x50] sm:$0xff]
    %v798 = vld [vmem:[%s786 + $0x58] sm:$0xff]
    %v799 = vld [vmem:[%s786 + $0x60] sm:$0xff]
    %v800 = vld [vmem:[%s786 + $0x68] sm:$0xff]
    %v801 = vld [vmem:[%s786 + $0x70] sm:$0xff]
    %v802 = vld [vmem:[%s786 + $0x78] sm:$0xff]
    %v803 = vld [vmem:[%s786 + $0x80] sm:$0xff]
    %v804 = vld [vmem:[%s786 + $0x88] sm:$0xff]
    %v805 = vld [vmem:[%s786 + $0x90] sm:$0xff]
    %v806 = vld [vmem:[%s786 + $0x98] sm:$0xff]
    %v807 = vld [vmem:[%s786 + $0xa0] sm:$0xff]
    %v808 = vld [vmem:[%s786 + $0xa8] sm:$0xff]
    %v809 = vld [vmem:[%s786 + $0xb0] sm:$0xff]
    %v810 = vld [vmem:[%s786 + $0xb8] sm:$0xff]
    %v811 = vld [vmem:[%s786 + $0xc0] sm:$0xff]
    %v812 = vld [vmem:[%s786 + $0xc8] sm:$0xff]
    %v813 = vld [vmem:[%s786 + $0xd0] sm:$0xff]
    %v814 = vld [vmem:[%s786 + $0xd8] sm:$0xff]
    %v815 = vld [vmem:[%s786 + $0xe0] sm:$0xff]
    %v816 = vld [vmem:[%s786 + $0xe8] sm:$0xff]
    %v817 = vld [vmem:[%s1 + $0x3] sm:$0x1]
    %819 = vset.pattern.permute.xlu0 0
    %820 = vperm.xlu0 %819, %v787
    %v821 = vpop.permute.xlu0 %820
    %824 = vset.pattern.permute.xlu0 0
    %825 = vperm.xlu0 %824, %v788
    %v826 = vpop.permute.xlu0 %825
    %829 = vset.pattern.permute.xlu0 0
    %830 = vperm.xlu0 %829, %v789
    %v831 = vpop.permute.xlu0 %830
    %834 = vset.pattern.permute.xlu0 0
    %835 = vperm.xlu0 %834, %v790
    %v836 = vpop.permute.xlu0 %835
    %839 = vset.pattern.permute.xlu0 0
    %840 = vperm.xlu0 %839, %v791
    %v841 = vpop.permute.xlu0 %840
    %844 = vset.pattern.permute.xlu0 0
    %845 = vperm.xlu0 %844, %v792
    %v846 = vpop.permute.xlu0 %845
    %849 = vset.pattern.permute.xlu0 0
    %850 = vperm.xlu0 %849, %v793
    %v851 = vpop.permute.xlu0 %850
    %854 = vset.pattern.permute.xlu0 0
    %855 = vperm.xlu0 %854, %v794
    %v856 = vpop.permute.xlu0 %855
    %859 = vset.pattern.permute.xlu0 0
    %860 = vperm.xlu0 %859, %v795
    %v861 = vpop.permute.xlu0 %860
    %864 = vset.pattern.permute.xlu0 0
    %865 = vperm.xlu0 %864, %v796
    %v866 = vpop.permute.xlu0 %865
    %869 = vset.pattern.permute.xlu0 0
    %870 = vperm.xlu0 %869, %v797
    %v871 = vpop.permute.xlu0 %870
    %874 = vset.pattern.permute.xlu0 0
    %875 = vperm.xlu0 %874, %v798
    %v876 = vpop.permute.xlu0 %875
    %879 = vset.pattern.permute.xlu0 0
    %880 = vperm.xlu0 %879, %v799
    %v881 = vpop.permute.xlu0 %880
    %884 = vset.pattern.permute.xlu0 0
    %885 = vperm.xlu0 %884, %v800
    %v886 = vpop.permute.xlu0 %885
    %889 = vset.pattern.permute.xlu0 0
    %890 = vperm.xlu0 %889, %v801
    %v891 = vpop.permute.xlu0 %890
    %894 = vset.pattern.permute.xlu0 0
    %895 = vperm.xlu0 %894, %v802
    %v896 = vpop.permute.xlu0 %895
    %899 = vset.pattern.permute.xlu0 0
    %900 = vperm.xlu0 %899, %v803
    %v901 = vpop.permute.xlu0 %900
    %904 = vset.pattern.permute.xlu0 0
    %905 = vperm.xlu0 %904, %v804
    %v906 = vpop.permute.xlu0 %905
    %909 = vset.pattern.permute.xlu0 0
    %910 = vperm.xlu0 %909, %v805
    %v911 = vpop.permute.xlu0 %910
    %914 = vset.pattern.permute.xlu0 0
    %915 = vperm.xlu0 %914, %v806
    %v916 = vpop.permute.xlu0 %915
    %919 = vset.pattern.permute.xlu0 0
    %920 = vperm.xlu0 %919, %v807
    %v921 = vpop.permute.xlu0 %920
    %924 = vset.pattern.permute.xlu0 0
    %925 = vperm.xlu0 %924, %v808
    %v926 = vpop.permute.xlu0 %925
    %929 = vset.pattern.permute.xlu0 0
    %930 = vperm.xlu0 %929, %v809
    %v931 = vpop.permute.xlu0 %930
    %934 = vset.pattern.permute.xlu0 0
    %935 = vperm.xlu0 %934, %v810
    %v936 = vpop.permute.xlu0 %935
    %939 = vset.pattern.permute.xlu0 0
    %940 = vperm.xlu0 %939, %v811
    %v941 = vpop.permute.xlu0 %940
    %944 = vset.pattern.permute.xlu0 0
    %945 = vperm.xlu0 %944, %v812
    %v946 = vpop.permute.xlu0 %945
    %949 = vset.pattern.permute.xlu0 0
    %950 = vperm.xlu0 %949, %v813
    %v951 = vpop.permute.xlu0 %950
    %954 = vset.pattern.permute.xlu0 0
    %955 = vperm.xlu0 %954, %v814
    %v956 = vpop.permute.xlu0 %955
    %959 = vset.pattern.permute.xlu0 0
    %960 = vperm.xlu0 %959, %v815
    %v961 = vpop.permute.xlu0 %960
    %964 = vset.pattern.permute.xlu0 0
    %965 = vperm.xlu0 %964, %v816
    %v966 = vpop.permute.xlu0 %965
    %v968 = vlaneseq
    %v969 = vshrl.u32 %v968, 7
    %v970 = vsub.s32 0, %v969
    %v971 = vrot.slane %v817, %v970
    %v972 = vmul.f32 %v821, %v971
    %v973 = vmul.f32 %v826, %v971
    %v974 = vmul.f32 %v831, %v971
    %v975 = vmul.f32 %v836, %v971
    %v976 = vmul.f32 %v841, %v971
    %v977 = vmul.f32 %v846, %v971
    %v978 = vmul.f32 %v851, %v971
    %v979 = vmul.f32 %v856, %v971
    %v980 = vmul.f32 %v861, %v971
    %v981 = vmul.f32 %v866, %v971
    %v982 = vmul.f32 %v871, %v971
    %v983 = vmul.f32 %v876, %v971
    %v984 = vmul.f32 %v881, %v971
    %v985 = vmul.f32 %v886, %v971
    %v986 = vmul.f32 %v891, %v971
    %v987 = vmul.f32 %v896, %v971
    %v988 = vmul.f32 %v901, %v971
    %v989 = vmul.f32 %v906, %v971
    %v990 = vmul.f32 %v911, %v971
    %v991 = vmul.f32 %v916, %v971
    %v992 = vmul.f32 %v921, %v971
    %v993 = vmul.f32 %v926, %v971
    %v994 = vmul.f32 %v931, %v971
    %v995 = vmul.f32 %v936, %v971
    %v996 = vmul.f32 %v941, %v971
    %v997 = vmul.f32 %v946, %v971
    %v998 = vmul.f32 %v951, %v971
    %v999 = vmul.f32 %v956, %v971
    %v1000 = vmul.f32 %v961, %v971
    %v1001 = vmul.f32 %v966, %v971
    %v1002 = vadd.f32 %v754, %v972
    %v1003 = vadd.f32 %v755, %v973
    %v1004 = vadd.f32 %v756, %v974
    %v1005 = vadd.f32 %v757, %v975
    %v1006 = vadd.f32 %v758, %v976
    %v1007 = vadd.f32 %v759, %v977
    %v1008 = vadd.f32 %v760, %v978
    %v1009 = vadd.f32 %v761, %v979
    %v1010 = vadd.f32 %v762, %v980
    %v1011 = vadd.f32 %v763, %v981
    %v1012 = vadd.f32 %v764, %v982
    %v1013 = vadd.f32 %v765, %v983
    %v1014 = vadd.f32 %v766, %v984
    %v1015 = vadd.f32 %v767, %v985
    %v1016 = vadd.f32 %v768, %v986
    %v1017 = vadd.f32 %v769, %v987
    %v1018 = vadd.f32 %v770, %v988
    %v1019 = vadd.f32 %v771, %v989
    %v1020 = vadd.f32 %v772, %v990
    %v1021 = vadd.f32 %v773, %v991
    %v1022 = vadd.f32 %v774, %v992
    %v1023 = vadd.f32 %v775, %v993
    %v1024 = vadd.f32 %v776, %v994
    %v1025 = vadd.f32 %v777, %v995
    %v1026 = vadd.f32 %v778, %v996
    %v1027 = vadd.f32 %v779, %v997
    %v1028 = vadd.f32 %v780, %v998
    %v1029 = vadd.f32 %v781, %v999
    %v1030 = vadd.f32 %v782, %v1000
    %v1031 = vadd.f32 %v783, %v1001
    %v1032 = vld [vmem:[%s786 + $0x8] sm:$0xff]
    %v1033 = vld [vmem:[%s786 + $0x10] sm:$0xff]
    %v1034 = vld [vmem:[%s786 + $0x18] sm:$0xff]
    %v1035 = vld [vmem:[%s786 + $0x20] sm:$0xff]
    %v1036 = vld [vmem:[%s786 + $0x28] sm:$0xff]
    %v1037 = vld [vmem:[%s786 + $0x30] sm:$0xff]
    %v1038 = vld [vmem:[%s786 + $0x38] sm:$0xff]
    %v1039 = vld [vmem:[%s786 + $0x40] sm:$0xff]
    %v1040 = vld [vmem:[%s786 + $0x48] sm:$0xff]
    %v1041 = vld [vmem:[%s786 + $0x50] sm:$0xff]
    %v1042 = vld [vmem:[%s786 + $0x58] sm:$0xff]
    %v1043 = vld [vmem:[%s786 + $0x60] sm:$0xff]
    %v1044 = vld [vmem:[%s786 + $0x68] sm:$0xff]
    %v1045 = vld [vmem:[%s786 + $0x70] sm:$0xff]
    %v1046 = vld [vmem:[%s786 + $0x78] sm:$0xff]
    %v1047 = vld [vmem:[%s786 + $0x80] sm:$0xff]
    %v1048 = vld [vmem:[%s786 + $0x88] sm:$0xff]
    %v1049 = vld [vmem:[%s786 + $0x90] sm:$0xff]
    %v1050 = vld [vmem:[%s786 + $0x98] sm:$0xff]
    %v1051 = vld [vmem:[%s786 + $0xa0] sm:$0xff]
    %v1052 = vld [vmem:[%s786 + $0xa8] sm:$0xff]
    %v1053 = vld [vmem:[%s786 + $0xb0] sm:$0xff]
    %v1054 = vld [vmem:[%s786 + $0xb8] sm:$0xff]
    %v1055 = vld [vmem:[%s786 + $0xc0] sm:$0xff]
    %v1056 = vld [vmem:[%s786 + $0xc8] sm:$0xff]
    %v1057 = vld [vmem:[%s786 + $0xd0] sm:$0xff]
    %v1058 = vld [vmem:[%s786 + $0xd8] sm:$0xff]
    %v1059 = vld [vmem:[%s786 + $0xe0] sm:$0xff]
    %v1060 = vld [vmem:[%s786 + $0xe8] sm:$0xff]
    %v1061 = vld [vmem:[%s786 + $0xf0] sm:$0xff]
    %v1062 = vld [vmem:[%s1 + $0x4] sm:$0x1]
    %1064 = vset.pattern.permute.xlu0 0
    %1065 = vperm.xlu0 %1064, %v1032
    %v1066 = vpop.permute.xlu0 %1065
    %1069 = vset.pattern.permute.xlu0 0
    %1070 = vperm.xlu0 %1069, %v1033
    %v1071 = vpop.permute.xlu0 %1070
    %1074 = vset.pattern.permute.xlu0 0
    %1075 = vperm.xlu0 %1074, %v1034
    %v1076 = vpop.permute.xlu0 %1075
    %1079 = vset.pattern.permute.xlu0 0
    %1080 = vperm.xlu0 %1079, %v1035
    %v1081 = vpop.permute.xlu0 %1080
    %1084 = vset.pattern.permute.xlu0 0
    %1085 = vperm.xlu0 %1084, %v1036
    %v1086 = vpop.permute.xlu0 %1085
    %1089 = vset.pattern.permute.xlu0 0
    %1090 = vperm.xlu0 %1089, %v1037
    %v1091 = vpop.permute.xlu0 %1090
    %1094 = vset.pattern.permute.xlu0 0
    %1095 = vperm.xlu0 %1094, %v1038
    %v1096 = vpop.permute.xlu0 %1095
    %1099 = vset.pattern.permute.xlu0 0
    %1100 = vperm.xlu0 %1099, %v1039
    %v1101 = vpop.permute.xlu0 %1100
    %1104 = vset.pattern.permute.xlu0 0
    %1105 = vperm.xlu0 %1104, %v1040
    %v1106 = vpop.permute.xlu0 %1105
    %1109 = vset.pattern.permute.xlu0 0
    %1110 = vperm.xlu0 %1109, %v1041
    %v1111 = vpop.permute.xlu0 %1110
    %1114 = vset.pattern.permute.xlu0 0
    %1115 = vperm.xlu0 %1114, %v1042
    %v1116 = vpop.permute.xlu0 %1115
    %1119 = vset.pattern.permute.xlu0 0
    %1120 = vperm.xlu0 %1119, %v1043
    %v1121 = vpop.permute.xlu0 %1120
    %1124 = vset.pattern.permute.xlu0 0
    %1125 = vperm.xlu0 %1124, %v1044
    %v1126 = vpop.permute.xlu0 %1125
    %1129 = vset.pattern.permute.xlu0 0
    %1130 = vperm.xlu0 %1129, %v1045
    %v1131 = vpop.permute.xlu0 %1130
    %1134 = vset.pattern.permute.xlu0 0
    %1135 = vperm.xlu0 %1134, %v1046
    %v1136 = vpop.permute.xlu0 %1135
    %1139 = vset.pattern.permute.xlu0 0
    %1140 = vperm.xlu0 %1139, %v1047
    %v1141 = vpop.permute.xlu0 %1140
    %1144 = vset.pattern.permute.xlu0 0
    %1145 = vperm.xlu0 %1144, %v1048
    %v1146 = vpop.permute.xlu0 %1145
    %1149 = vset.pattern.permute.xlu0 0
    %1150 = vperm.xlu0 %1149, %v1049
    %v1151 = vpop.permute.xlu0 %1150
    %1154 = vset.pattern.permute.xlu0 0
    %1155 = vperm.xlu0 %1154, %v1050
    %v1156 = vpop.permute.xlu0 %1155
    %1159 = vset.pattern.permute.xlu0 0
    %1160 = vperm.xlu0 %1159, %v1051
    %v1161 = vpop.permute.xlu0 %1160
    %1164 = vset.pattern.permute.xlu0 0
    %1165 = vperm.xlu0 %1164, %v1052
    %v1166 = vpop.permute.xlu0 %1165
    %1169 = vset.pattern.permute.xlu0 0
    %1170 = vperm.xlu0 %1169, %v1053
    %v1171 = vpop.permute.xlu0 %1170
    %1174 = vset.pattern.permute.xlu0 0
    %1175 = vperm.xlu0 %1174, %v1054
    %v1176 = vpop.permute.xlu0 %1175
    %1179 = vset.pattern.permute.xlu0 0
    %1180 = vperm.xlu0 %1179, %v1055
    %v1181 = vpop.permute.xlu0 %1180
    %1184 = vset.pattern.permute.xlu0 0
    %1185 = vperm.xlu0 %1184, %v1056
    %v1186 = vpop.permute.xlu0 %1185
    %1189 = vset.pattern.permute.xlu0 0
    %1190 = vperm.xlu0 %1189, %v1057
    %v1191 = vpop.permute.xlu0 %1190
    %1194 = vset.pattern.permute.xlu0 0
    %1195 = vperm.xlu0 %1194, %v1058
    %v1196 = vpop.permute.xlu0 %1195
    %1199 = vset.pattern.permute.xlu0 0
    %1200 = vperm.xlu0 %1199, %v1059
    %v1201 = vpop.permute.xlu0 %1200
    %1204 = vset.pattern.permute.xlu0 0
    %1205 = vperm.xlu0 %1204, %v1060
    %v1206 = vpop.permute.xlu0 %1205
    %1209 = vset.pattern.permute.xlu0 0
    %1210 = vperm.xlu0 %1209, %v1061
    %v1211 = vpop.permute.xlu0 %1210
    %v1213 = vlaneseq
    %v1214 = vshrl.u32 %v1213, 7
    %v1215 = vsub.s32 0, %v1214
    %v1216 = vrot.slane %v1062, %v1215
    %v1217 = vmul.f32 %v1066, %v1216
    %v1218 = vmul.f32 %v1071, %v1216
    %v1219 = vmul.f32 %v1076, %v1216
    %v1220 = vmul.f32 %v1081, %v1216
    %v1221 = vmul.f32 %v1086, %v1216
    %v1222 = vmul.f32 %v1091, %v1216
    %v1223 = vmul.f32 %v1096, %v1216
    %v1224 = vmul.f32 %v1101, %v1216
    %v1225 = vmul.f32 %v1106, %v1216
    %v1226 = vmul.f32 %v1111, %v1216
    %v1227 = vmul.f32 %v1116, %v1216
    %v1228 = vmul.f32 %v1121, %v1216
    %v1229 = vmul.f32 %v1126, %v1216
    %v1230 = vmul.f32 %v1131, %v1216
    %v1231 = vmul.f32 %v1136, %v1216
    %v1232 = vmul.f32 %v1141, %v1216
    %v1233 = vmul.f32 %v1146, %v1216
    %v1234 = vmul.f32 %v1151, %v1216
    %v1235 = vmul.f32 %v1156, %v1216
    %v1236 = vmul.f32 %v1161, %v1216
    %v1237 = vmul.f32 %v1166, %v1216
    %v1238 = vmul.f32 %v1171, %v1216
    %v1239 = vmul.f32 %v1176, %v1216
    %v1240 = vmul.f32 %v1181, %v1216
    %v1241 = vmul.f32 %v1186, %v1216
    %v1242 = vmul.f32 %v1191, %v1216
    %v1243 = vmul.f32 %v1196, %v1216
    %v1244 = vmul.f32 %v1201, %v1216
    %v1245 = vmul.f32 %v1206, %v1216
    %v1246 = vmul.f32 %v1211, %v1216
    %v1247 = vadd.f32 %v1002, %v1217
    %v1248 = vadd.f32 %v1003, %v1218
    %v1249 = vadd.f32 %v1004, %v1219
    %v1250 = vadd.f32 %v1005, %v1220
    %v1251 = vadd.f32 %v1006, %v1221
    %v1252 = vadd.f32 %v1007, %v1222
    %v1253 = vadd.f32 %v1008, %v1223
    %v1254 = vadd.f32 %v1009, %v1224
    %v1255 = vadd.f32 %v1010, %v1225
    %v1256 = vadd.f32 %v1011, %v1226
    %v1257 = vadd.f32 %v1012, %v1227
    %v1258 = vadd.f32 %v1013, %v1228
    %v1259 = vadd.f32 %v1014, %v1229
    %v1260 = vadd.f32 %v1015, %v1230
    %v1261 = vadd.f32 %v1016, %v1231
    %v1262 = vadd.f32 %v1017, %v1232
    %v1263 = vadd.f32 %v1018, %v1233
    %v1264 = vadd.f32 %v1019, %v1234
    %v1265 = vadd.f32 %v1020, %v1235
    %v1266 = vadd.f32 %v1021, %v1236
    %v1267 = vadd.f32 %v1022, %v1237
    %v1268 = vadd.f32 %v1023, %v1238
    %v1269 = vadd.f32 %v1024, %v1239
    %v1270 = vadd.f32 %v1025, %v1240
    %v1271 = vadd.f32 %v1026, %v1241
    %v1272 = vadd.f32 %v1027, %v1242
    %v1273 = vadd.f32 %v1028, %v1243
    %v1274 = vadd.f32 %v1029, %v1244
    %v1275 = vadd.f32 %v1030, %v1245
    %v1276 = vadd.f32 %v1031, %v1246
    %v1277 = vld [vmem:[%s786 + $0x10] sm:$0xff]
    %v1278 = vld [vmem:[%s786 + $0x18] sm:$0xff]
    %v1279 = vld [vmem:[%s786 + $0x20] sm:$0xff]
    %v1280 = vld [vmem:[%s786 + $0x28] sm:$0xff]
    %v1281 = vld [vmem:[%s786 + $0x30] sm:$0xff]
    %v1282 = vld [vmem:[%s786 + $0x38] sm:$0xff]
    %v1283 = vld [vmem:[%s786 + $0x40] sm:$0xff]
    %v1284 = vld [vmem:[%s786 + $0x48] sm:$0xff]
    %v1285 = vld [vmem:[%s786 + $0x50] sm:$0xff]
    %v1286 = vld [vmem:[%s786 + $0x58] sm:$0xff]
    %v1287 = vld [vmem:[%s786 + $0x60] sm:$0xff]
    %v1288 = vld [vmem:[%s786 + $0x68] sm:$0xff]
    %v1289 = vld [vmem:[%s786 + $0x70] sm:$0xff]
    %v1290 = vld [vmem:[%s786 + $0x78] sm:$0xff]
    %v1291 = vld [vmem:[%s786 + $0x80] sm:$0xff]
    %v1292 = vld [vmem:[%s786 + $0x88] sm:$0xff]
    %v1293 = vld [vmem:[%s786 + $0x90] sm:$0xff]
    %v1294 = vld [vmem:[%s786 + $0x98] sm:$0xff]
    %v1295 = vld [vmem:[%s786 + $0xa0] sm:$0xff]
    %v1296 = vld [vmem:[%s786 + $0xa8] sm:$0xff]
    %v1297 = vld [vmem:[%s786 + $0xb0] sm:$0xff]
    %v1298 = vld [vmem:[%s786 + $0xb8] sm:$0xff]
    %v1299 = vld [vmem:[%s786 + $0xc0] sm:$0xff]
    %v1300 = vld [vmem:[%s786 + $0xc8] sm:$0xff]
    %v1301 = vld [vmem:[%s786 + $0xd0] sm:$0xff]
    %v1302 = vld [vmem:[%s786 + $0xd8] sm:$0xff]
    %v1303 = vld [vmem:[%s786 + $0xe0] sm:$0xff]
    %v1304 = vld [vmem:[%s786 + $0xe8] sm:$0xff]
    %v1305 = vld [vmem:[%s786 + $0xf0] sm:$0xff]
    %v1306 = vld [vmem:[%s786 + $0xf8] sm:$0xff]
    %v1307 = vld [vmem:[%s1 + $0x5] sm:$0x1]
    %1309 = vset.pattern.permute.xlu0 0
    %1310 = vperm.xlu0 %1309, %v1277
    %v1311 = vpop.permute.xlu0 %1310
    %1314 = vset.pattern.permute.xlu0 0
    %1315 = vperm.xlu0 %1314, %v1278
    %v1316 = vpop.permute.xlu0 %1315
    %1319 = vset.pattern.permute.xlu0 0
    %1320 = vperm.xlu0 %1319, %v1279
    %v1321 = vpop.permute.xlu0 %1320
    %1324 = vset.pattern.permute.xlu0 0
    %1325 = vperm.xlu0 %1324, %v1280
    %v1326 = vpop.permute.xlu0 %1325
    %1329 = vset.pattern.permute.xlu0 0
    %1330 = vperm.xlu0 %1329, %v1281
    %v1331 = vpop.permute.xlu0 %1330
    %1334 = vset.pattern.permute.xlu0 0
    %1335 = vperm.xlu0 %1334, %v1282
    %v1336 = vpop.permute.xlu0 %1335
    %1339 = vset.pattern.permute.xlu0 0
    %1340 = vperm.xlu0 %1339, %v1283
    %v1341 = vpop.permute.xlu0 %1340
    %1344 = vset.pattern.permute.xlu0 0
    %1345 = vperm.xlu0 %1344, %v1284
    %v1346 = vpop.permute.xlu0 %1345
    %1349 = vset.pattern.permute.xlu0 0
    %1350 = vperm.xlu0 %1349, %v1285
    %v1351 = vpop.permute.xlu0 %1350
    %1354 = vset.pattern.permute.xlu0 0
    %1355 = vperm.xlu0 %1354, %v1286
    %v1356 = vpop.permute.xlu0 %1355
    %1359 = vset.pattern.permute.xlu0 0
    %1360 = vperm.xlu0 %1359, %v1287
    %v1361 = vpop.permute.xlu0 %1360
    %1364 = vset.pattern.permute.xlu0 0
    %1365 = vperm.xlu0 %1364, %v1288
    %v1366 = vpop.permute.xlu0 %1365
    %1369 = vset.pattern.permute.xlu0 0
    %1370 = vperm.xlu0 %1369, %v1289
    %v1371 = vpop.permute.xlu0 %1370
    %1374 = vset.pattern.permute.xlu0 0
    %1375 = vperm.xlu0 %1374, %v1290
    %v1376 = vpop.permute.xlu0 %1375
    %1379 = vset.pattern.permute.xlu0 0
    %1380 = vperm.xlu0 %1379, %v1291
    %v1381 = vpop.permute.xlu0 %1380
    %1384 = vset.pattern.permute.xlu0 0
    %1385 = vperm.xlu0 %1384, %v1292
    %v1386 = vpop.permute.xlu0 %1385
    %1389 = vset.pattern.permute.xlu0 0
    %1390 = vperm.xlu0 %1389, %v1293
    %v1391 = vpop.permute.xlu0 %1390
    %1394 = vset.pattern.permute.xlu0 0
    %1395 = vperm.xlu0 %1394, %v1294
    %v1396 = vpop.permute.xlu0 %1395
    %1399 = vset.pattern.permute.xlu0 0
    %1400 = vperm.xlu0 %1399, %v1295
    %v1401 = vpop.permute.xlu0 %1400
    %1404 = vset.pattern.permute.xlu0 0
    %1405 = vperm.xlu0 %1404, %v1296
    %v1406 = vpop.permute.xlu0 %1405
    %1409 = vset.pattern.permute.xlu0 0
    %1410 = vperm.xlu0 %1409, %v1297
    %v1411 = vpop.permute.xlu0 %1410
    %1414 = vset.pattern.permute.xlu0 0
    %1415 = vperm.xlu0 %1414, %v1298
    %v1416 = vpop.permute.xlu0 %1415
    %1419 = vset.pattern.permute.xlu0 0
    %1420 = vperm.xlu0 %1419, %v1299
    %v1421 = vpop.permute.xlu0 %1420
    %1424 = vset.pattern.permute.xlu0 0
    %1425 = vperm.xlu0 %1424, %v1300
    %v1426 = vpop.permute.xlu0 %1425
    %1429 = vset.pattern.permute.xlu0 0
    %1430 = vperm.xlu0 %1429, %v1301
    %v1431 = vpop.permute.xlu0 %1430
    %1434 = vset.pattern.permute.xlu0 0
    %1435 = vperm.xlu0 %1434, %v1302
    %v1436 = vpop.permute.xlu0 %1435
    %1439 = vset.pattern.permute.xlu0 0
    %1440 = vperm.xlu0 %1439, %v1303
    %v1441 = vpop.permute.xlu0 %1440
    %1444 = vset.pattern.permute.xlu0 0
    %1445 = vperm.xlu0 %1444, %v1304
    %v1446 = vpop.permute.xlu0 %1445
    %1449 = vset.pattern.permute.xlu0 0
    %1450 = vperm.xlu0 %1449, %v1305
    %v1451 = vpop.permute.xlu0 %1450
    %1454 = vset.pattern.permute.xlu0 0
    %1455 = vperm.xlu0 %1454, %v1306
    %v1456 = vpop.permute.xlu0 %1455
    %v1458 = vlaneseq
    %v1459 = vshrl.u32 %v1458, 7
    %v1460 = vsub.s32 0, %v1459
    %v1461 = vrot.slane %v1307, %v1460
    %v1462 = vmul.f32 %v1311, %v1461
    %v1463 = vmul.f32 %v1316, %v1461
    %v1464 = vmul.f32 %v1321, %v1461
    %v1465 = vmul.f32 %v1326, %v1461
    %v1466 = vmul.f32 %v1331, %v1461
    %v1467 = vmul.f32 %v1336, %v1461
    %v1468 = vmul.f32 %v1341, %v1461
    %v1469 = vmul.f32 %v1346, %v1461
    %v1470 = vmul.f32 %v1351, %v1461
    %v1471 = vmul.f32 %v1356, %v1461
    %v1472 = vmul.f32 %v1361, %v1461
    %v1473 = vmul.f32 %v1366, %v1461
    %v1474 = vmul.f32 %v1371, %v1461
    %v1475 = vmul.f32 %v1376, %v1461
    %v1476 = vmul.f32 %v1381, %v1461
    %v1477 = vmul.f32 %v1386, %v1461
    %v1478 = vmul.f32 %v1391, %v1461
    %v1479 = vmul.f32 %v1396, %v1461
    %v1480 = vmul.f32 %v1401, %v1461
    %v1481 = vmul.f32 %v1406, %v1461
    %v1482 = vmul.f32 %v1411, %v1461
    %v1483 = vmul.f32 %v1416, %v1461
    %v1484 = vmul.f32 %v1421, %v1461
    %v1485 = vmul.f32 %v1426, %v1461
    %v1486 = vmul.f32 %v1431, %v1461
    %v1487 = vmul.f32 %v1436, %v1461
    %v1488 = vmul.f32 %v1441, %v1461
    %v1489 = vmul.f32 %v1446, %v1461
    %v1490 = vmul.f32 %v1451, %v1461
    %v1491 = vmul.f32 %v1456, %v1461
    %v1492 = vadd.f32 %v1247, %v1462
    %v1493 = vadd.f32 %v1248, %v1463
    %v1494 = vadd.f32 %v1249, %v1464
    %v1495 = vadd.f32 %v1250, %v1465
    %v1496 = vadd.f32 %v1251, %v1466
    %v1497 = vadd.f32 %v1252, %v1467
    %v1498 = vadd.f32 %v1253, %v1468
    %v1499 = vadd.f32 %v1254, %v1469
    %v1500 = vadd.f32 %v1255, %v1470
    %v1501 = vadd.f32 %v1256, %v1471
    %v1502 = vadd.f32 %v1257, %v1472
    %v1503 = vadd.f32 %v1258, %v1473
    %v1504 = vadd.f32 %v1259, %v1474
    %v1505 = vadd.f32 %v1260, %v1475
    %v1506 = vadd.f32 %v1261, %v1476
    %v1507 = vadd.f32 %v1262, %v1477
    %v1508 = vadd.f32 %v1263, %v1478
    %v1509 = vadd.f32 %v1264, %v1479
    %v1510 = vadd.f32 %v1265, %v1480
    %v1511 = vadd.f32 %v1266, %v1481
    %v1512 = vadd.f32 %v1267, %v1482
    %v1513 = vadd.f32 %v1268, %v1483
    %v1514 = vadd.f32 %v1269, %v1484
    %v1515 = vadd.f32 %v1270, %v1485
    %v1516 = vadd.f32 %v1271, %v1486
    %v1517 = vadd.f32 %v1272, %v1487
    %v1518 = vadd.f32 %v1273, %v1488
    %v1519 = vadd.f32 %v1274, %v1489
    %v1520 = vadd.f32 %v1275, %v1490
    %v1521 = vadd.f32 %v1276, %v1491
    %s1522 = sadd.s32 %s46, 2
    %s1523 = smul.u32 %s1522, 256
    %s1524 = scalar_lea.vmem %s0, %s1523
    %v1525 = vld [vmem:[%s1524] sm:$0xff]
    %v1526 = vld [vmem:[%s1524 + $0x8] sm:$0xff]
    %v1527 = vld [vmem:[%s1524 + $0x10] sm:$0xff]
    %v1528 = vld [vmem:[%s1524 + $0x18] sm:$0xff]
    %v1529 = vld [vmem:[%s1524 + $0x20] sm:$0xff]
    %v1530 = vld [vmem:[%s1524 + $0x28] sm:$0xff]
    %v1531 = vld [vmem:[%s1524 + $0x30] sm:$0xff]
    %v1532 = vld [vmem:[%s1524 + $0x38] sm:$0xff]
    %v1533 = vld [vmem:[%s1524 + $0x40] sm:$0xff]
    %v1534 = vld [vmem:[%s1524 + $0x48] sm:$0xff]
    %v1535 = vld [vmem:[%s1524 + $0x50] sm:$0xff]
    %v1536 = vld [vmem:[%s1524 + $0x58] sm:$0xff]
    %v1537 = vld [vmem:[%s1524 + $0x60] sm:$0xff]
    %v1538 = vld [vmem:[%s1524 + $0x68] sm:$0xff]
    %v1539 = vld [vmem:[%s1524 + $0x70] sm:$0xff]
    %v1540 = vld [vmem:[%s1524 + $0x78] sm:$0xff]
    %v1541 = vld [vmem:[%s1524 + $0x80] sm:$0xff]
    %v1542 = vld [vmem:[%s1524 + $0x88] sm:$0xff]
    %v1543 = vld [vmem:[%s1524 + $0x90] sm:$0xff]
    %v1544 = vld [vmem:[%s1524 + $0x98] sm:$0xff]
    %v1545 = vld [vmem:[%s1524 + $0xa0] sm:$0xff]
    %v1546 = vld [vmem:[%s1524 + $0xa8] sm:$0xff]
    %v1547 = vld [vmem:[%s1524 + $0xb0] sm:$0xff]
    %v1548 = vld [vmem:[%s1524 + $0xb8] sm:$0xff]
    %v1549 = vld [vmem:[%s1524 + $0xc0] sm:$0xff]
    %v1550 = vld [vmem:[%s1524 + $0xc8] sm:$0xff]
    %v1551 = vld [vmem:[%s1524 + $0xd0] sm:$0xff]
    %v1552 = vld [vmem:[%s1524 + $0xd8] sm:$0xff]
    %v1553 = vld [vmem:[%s1524 + $0xe0] sm:$0xff]
    %v1554 = vld [vmem:[%s1524 + $0xe8] sm:$0xff]
    %v1555 = vld [vmem:[%s1 + $0x6] sm:$0x1]
    %1557 = vset.pattern.permute.xlu0 0
    %1558 = vperm.xlu0 %1557, %v1525
    %v1559 = vpop.permute.xlu0 %1558
    %1562 = vset.pattern.permute.xlu0 0
    %1563 = vperm.xlu0 %1562, %v1526
    %v1564 = vpop.permute.xlu0 %1563
    %1567 = vset.pattern.permute.xlu0 0
    %1568 = vperm.xlu0 %1567, %v1527
    %v1569 = vpop.permute.xlu0 %1568
    %1572 = vset.pattern.permute.xlu0 0
    %1573 = vperm.xlu0 %1572, %v1528
    %v1574 = vpop.permute.xlu0 %1573
    %1577 = vset.pattern.permute.xlu0 0
    %1578 = vperm.xlu0 %1577, %v1529
    %v1579 = vpop.permute.xlu0 %1578
    %1582 = vset.pattern.permute.xlu0 0
    %1583 = vperm.xlu0 %1582, %v1530
    %v1584 = vpop.permute.xlu0 %1583
    %1587 = vset.pattern.permute.xlu0 0
    %1588 = vperm.xlu0 %1587, %v1531
    %v1589 = vpop.permute.xlu0 %1588
    %1592 = vset.pattern.permute.xlu0 0
    %1593 = vperm.xlu0 %1592, %v1532
    %v1594 = vpop.permute.xlu0 %1593
    %1597 = vset.pattern.permute.xlu0 0
    %1598 = vperm.xlu0 %1597, %v1533
    %v1599 = vpop.permute.xlu0 %1598
    %1602 = vset.pattern.permute.xlu0 0
    %1603 = vperm.xlu0 %1602, %v1534
    %v1604 = vpop.permute.xlu0 %1603
    %1607 = vset.pattern.permute.xlu0 0
    %1608 = vperm.xlu0 %1607, %v1535
    %v1609 = vpop.permute.xlu0 %1608
    %1612 = vset.pattern.permute.xlu0 0
    %1613 = vperm.xlu0 %1612, %v1536
    %v1614 = vpop.permute.xlu0 %1613
    %1617 = vset.pattern.permute.xlu0 0
    %1618 = vperm.xlu0 %1617, %v1537
    %v1619 = vpop.permute.xlu0 %1618
    %1622 = vset.pattern.permute.xlu0 0
    %1623 = vperm.xlu0 %1622, %v1538
    %v1624 = vpop.permute.xlu0 %1623
    %1627 = vset.pattern.permute.xlu0 0
    %1628 = vperm.xlu0 %1627, %v1539
    %v1629 = vpop.permute.xlu0 %1628
    %1632 = vset.pattern.permute.xlu0 0
    %1633 = vperm.xlu0 %1632, %v1540
    %v1634 = vpop.permute.xlu0 %1633
    %1637 = vset.pattern.permute.xlu0 0
    %1638 = vperm.xlu0 %1637, %v1541
    %v1639 = vpop.permute.xlu0 %1638
    %1642 = vset.pattern.permute.xlu0 0
    %1643 = vperm.xlu0 %1642, %v1542
    %v1644 = vpop.permute.xlu0 %1643
    %1647 = vset.pattern.permute.xlu0 0
    %1648 = vperm.xlu0 %1647, %v1543
    %v1649 = vpop.permute.xlu0 %1648
    %1652 = vset.pattern.permute.xlu0 0
    %1653 = vperm.xlu0 %1652, %v1544
    %v1654 = vpop.permute.xlu0 %1653
    %1657 = vset.pattern.permute.xlu0 0
    %1658 = vperm.xlu0 %1657, %v1545
    %v1659 = vpop.permute.xlu0 %1658
    %1662 = vset.pattern.permute.xlu0 0
    %1663 = vperm.xlu0 %1662, %v1546
    %v1664 = vpop.permute.xlu0 %1663
    %1667 = vset.pattern.permute.xlu0 0
    %1668 = vperm.xlu0 %1667, %v1547
    %v1669 = vpop.permute.xlu0 %1668
    %1672 = vset.pattern.permute.xlu0 0
    %1673 = vperm.xlu0 %1672, %v1548
    %v1674 = vpop.permute.xlu0 %1673
    %1677 = vset.pattern.permute.xlu0 0
    %1678 = vperm.xlu0 %1677, %v1549
    %v1679 = vpop.permute.xlu0 %1678
    %1682 = vset.pattern.permute.xlu0 0
    %1683 = vperm.xlu0 %1682, %v1550
    %v1684 = vpop.permute.xlu0 %1683
    %1687 = vset.pattern.permute.xlu0 0
    %1688 = vperm.xlu0 %1687, %v1551
    %v1689 = vpop.permute.xlu0 %1688
    %1692 = vset.pattern.permute.xlu0 0
    %1693 = vperm.xlu0 %1692, %v1552
    %v1694 = vpop.permute.xlu0 %1693
    %1697 = vset.pattern.permute.xlu0 0
    %1698 = vperm.xlu0 %1697, %v1553
    %v1699 = vpop.permute.xlu0 %1698
    %1702 = vset.pattern.permute.xlu0 0
    %1703 = vperm.xlu0 %1702, %v1554
    %v1704 = vpop.permute.xlu0 %1703
    %v1706 = vlaneseq
    %v1707 = vshrl.u32 %v1706, 7
    %v1708 = vsub.s32 0, %v1707
    %v1709 = vrot.slane %v1555, %v1708
    %v1710 = vmul.f32 %v1559, %v1709
    %v1711 = vmul.f32 %v1564, %v1709
    %v1712 = vmul.f32 %v1569, %v1709
    %v1713 = vmul.f32 %v1574, %v1709
    %v1714 = vmul.f32 %v1579, %v1709
    %v1715 = vmul.f32 %v1584, %v1709
    %v1716 = vmul.f32 %v1589, %v1709
    %v1717 = vmul.f32 %v1594, %v1709
    %v1718 = vmul.f32 %v1599, %v1709
    %v1719 = vmul.f32 %v1604, %v1709
    %v1720 = vmul.f32 %v1609, %v1709
    %v1721 = vmul.f32 %v1614, %v1709
    %v1722 = vmul.f32 %v1619, %v1709
    %v1723 = vmul.f32 %v1624, %v1709
    %v1724 = vmul.f32 %v1629, %v1709
    %v1725 = vmul.f32 %v1634, %v1709
    %v1726 = vmul.f32 %v1639, %v1709
    %v1727 = vmul.f32 %v1644, %v1709
    %v1728 = vmul.f32 %v1649, %v1709
    %v1729 = vmul.f32 %v1654, %v1709
    %v1730 = vmul.f32 %v1659, %v1709
    %v1731 = vmul.f32 %v1664, %v1709
    %v1732 = vmul.f32 %v1669, %v1709
    %v1733 = vmul.f32 %v1674, %v1709
    %v1734 = vmul.f32 %v1679, %v1709
    %v1735 = vmul.f32 %v1684, %v1709
    %v1736 = vmul.f32 %v1689, %v1709
    %v1737 = vmul.f32 %v1694, %v1709
    %v1738 = vmul.f32 %v1699, %v1709
    %v1739 = vmul.f32 %v1704, %v1709
    %v1740 = vadd.f32 %v1492, %v1710
    %v1741 = vadd.f32 %v1493, %v1711
    %v1742 = vadd.f32 %v1494, %v1712
    %v1743 = vadd.f32 %v1495, %v1713
    %v1744 = vadd.f32 %v1496, %v1714
    %v1745 = vadd.f32 %v1497, %v1715
    %v1746 = vadd.f32 %v1498, %v1716
    %v1747 = vadd.f32 %v1499, %v1717
    %v1748 = vadd.f32 %v1500, %v1718
    %v1749 = vadd.f32 %v1501, %v1719
    %v1750 = vadd.f32 %v1502, %v1720
    %v1751 = vadd.f32 %v1503, %v1721
    %v1752 = vadd.f32 %v1504, %v1722
    %v1753 = vadd.f32 %v1505, %v1723
    %v1754 = vadd.f32 %v1506, %v1724
    %v1755 = vadd.f32 %v1507, %v1725
    %v1756 = vadd.f32 %v1508, %v1726
    %v1757 = vadd.f32 %v1509, %v1727
    %v1758 = vadd.f32 %v1510, %v1728
    %v1759 = vadd.f32 %v1511, %v1729
    %v1760 = vadd.f32 %v1512, %v1730
    %v1761 = vadd.f32 %v1513, %v1731
    %v1762 = vadd.f32 %v1514, %v1732
    %v1763 = vadd.f32 %v1515, %v1733
    %v1764 = vadd.f32 %v1516, %v1734
    %v1765 = vadd.f32 %v1517, %v1735
    %v1766 = vadd.f32 %v1518, %v1736
    %v1767 = vadd.f32 %v1519, %v1737
    %v1768 = vadd.f32 %v1520, %v1738
    %v1769 = vadd.f32 %v1521, %v1739
    %v1770 = vld [vmem:[%s1524 + $0x8] sm:$0xff]
    %v1771 = vld [vmem:[%s1524 + $0x10] sm:$0xff]
    %v1772 = vld [vmem:[%s1524 + $0x18] sm:$0xff]
    %v1773 = vld [vmem:[%s1524 + $0x20] sm:$0xff]
    %v1774 = vld [vmem:[%s1524 + $0x28] sm:$0xff]
    %v1775 = vld [vmem:[%s1524 + $0x30] sm:$0xff]
    %v1776 = vld [vmem:[%s1524 + $0x38] sm:$0xff]
    %v1777 = vld [vmem:[%s1524 + $0x40] sm:$0xff]
    %v1778 = vld [vmem:[%s1524 + $0x48] sm:$0xff]
    %v1779 = vld [vmem:[%s1524 + $0x50] sm:$0xff]
    %v1780 = vld [vmem:[%s1524 + $0x58] sm:$0xff]
    %v1781 = vld [vmem:[%s1524 + $0x60] sm:$0xff]
    %v1782 = vld [vmem:[%s1524 + $0x68] sm:$0xff]
    %v1783 = vld [vmem:[%s1524 + $0x70] sm:$0xff]
    %v1784 = vld [vmem:[%s1524 + $0x78] sm:$0xff]
    %v1785 = vld [vmem:[%s1524 + $0x80] sm:$0xff]
    %v1786 = vld [vmem:[%s1524 + $0x88] sm:$0xff]
    %v1787 = vld [vmem:[%s1524 + $0x90] sm:$0xff]
    %v1788 = vld [vmem:[%s1524 + $0x98] sm:$0xff]
    %v1789 = vld [vmem:[%s1524 + $0xa0] sm:$0xff]
    %v1790 = vld [vmem:[%s1524 + $0xa8] sm:$0xff]
    %v1791 = vld [vmem:[%s1524 + $0xb0] sm:$0xff]
    %v1792 = vld [vmem:[%s1524 + $0xb8] sm:$0xff]
    %v1793 = vld [vmem:[%s1524 + $0xc0] sm:$0xff]
    %v1794 = vld [vmem:[%s1524 + $0xc8] sm:$0xff]
    %v1795 = vld [vmem:[%s1524 + $0xd0] sm:$0xff]
    %v1796 = vld [vmem:[%s1524 + $0xd8] sm:$0xff]
    %v1797 = vld [vmem:[%s1524 + $0xe0] sm:$0xff]
    %v1798 = vld [vmem:[%s1524 + $0xe8] sm:$0xff]
    %v1799 = vld [vmem:[%s1524 + $0xf0] sm:$0xff]
    %v1800 = vld [vmem:[%s1 + $0x7] sm:$0x1]
    %1802 = vset.pattern.permute.xlu0 0
    %1803 = vperm.xlu0 %1802, %v1770
    %v1804 = vpop.permute.xlu0 %1803
    %1807 = vset.pattern.permute.xlu0 0
    %1808 = vperm.xlu0 %1807, %v1771
    %v1809 = vpop.permute.xlu0 %1808
    %1812 = vset.pattern.permute.xlu0 0
    %1813 = vperm.xlu0 %1812, %v1772
    %v1814 = vpop.permute.xlu0 %1813
    %1817 = vset.pattern.permute.xlu0 0
    %1818 = vperm.xlu0 %1817, %v1773
    %v1819 = vpop.permute.xlu0 %1818
    %1822 = vset.pattern.permute.xlu0 0
    %1823 = vperm.xlu0 %1822, %v1774
    %v1824 = vpop.permute.xlu0 %1823
    %1827 = vset.pattern.permute.xlu0 0
    %1828 = vperm.xlu0 %1827, %v1775
    %v1829 = vpop.permute.xlu0 %1828
    %1832 = vset.pattern.permute.xlu0 0
    %1833 = vperm.xlu0 %1832, %v1776
    %v1834 = vpop.permute.xlu0 %1833
    %1837 = vset.pattern.permute.xlu0 0
    %1838 = vperm.xlu0 %1837, %v1777
    %v1839 = vpop.permute.xlu0 %1838
    %1842 = vset.pattern.permute.xlu0 0
    %1843 = vperm.xlu0 %1842, %v1778
    %v1844 = vpop.permute.xlu0 %1843
    %1847 = vset.pattern.permute.xlu0 0
    %1848 = vperm.xlu0 %1847, %v1779
    %v1849 = vpop.permute.xlu0 %1848
    %1852 = vset.pattern.permute.xlu0 0
    %1853 = vperm.xlu0 %1852, %v1780
    %v1854 = vpop.permute.xlu0 %1853
    %1857 = vset.pattern.permute.xlu0 0
    %1858 = vperm.xlu0 %1857, %v1781
    %v1859 = vpop.permute.xlu0 %1858
    %1862 = vset.pattern.permute.xlu0 0
    %1863 = vperm.xlu0 %1862, %v1782
    %v1864 = vpop.permute.xlu0 %1863
    %1867 = vset.pattern.permute.xlu0 0
    %1868 = vperm.xlu0 %1867, %v1783
    %v1869 = vpop.permute.xlu0 %1868
    %1872 = vset.pattern.permute.xlu0 0
    %1873 = vperm.xlu0 %1872, %v1784
    %v1874 = vpop.permute.xlu0 %1873
    %1877 = vset.pattern.permute.xlu0 0
    %1878 = vperm.xlu0 %1877, %v1785
    %v1879 = vpop.permute.xlu0 %1878
    %1882 = vset.pattern.permute.xlu0 0
    %1883 = vperm.xlu0 %1882, %v1786
    %v1884 = vpop.permute.xlu0 %1883
    %1887 = vset.pattern.permute.xlu0 0
    %1888 = vperm.xlu0 %1887, %v1787
    %v1889 = vpop.permute.xlu0 %1888
    %1892 = vset.pattern.permute.xlu0 0
    %1893 = vperm.xlu0 %1892, %v1788
    %v1894 = vpop.permute.xlu0 %1893
    %1897 = vset.pattern.permute.xlu0 0
    %1898 = vperm.xlu0 %1897, %v1789
    %v1899 = vpop.permute.xlu0 %1898
    %1902 = vset.pattern.permute.xlu0 0
    %1903 = vperm.xlu0 %1902, %v1790
    %v1904 = vpop.permute.xlu0 %1903
    %1907 = vset.pattern.permute.xlu0 0
    %1908 = vperm.xlu0 %1907, %v1791
    %v1909 = vpop.permute.xlu0 %1908
    %1912 = vset.pattern.permute.xlu0 0
    %1913 = vperm.xlu0 %1912, %v1792
    %v1914 = vpop.permute.xlu0 %1913
    %1917 = vset.pattern.permute.xlu0 0
    %1918 = vperm.xlu0 %1917, %v1793
    %v1919 = vpop.permute.xlu0 %1918
    %1922 = vset.pattern.permute.xlu0 0
    %1923 = vperm.xlu0 %1922, %v1794
    %v1924 = vpop.permute.xlu0 %1923
    %1927 = vset.pattern.permute.xlu0 0
    %1928 = vperm.xlu0 %1927, %v1795
    %v1929 = vpop.permute.xlu0 %1928
    %1932 = vset.pattern.permute.xlu0 0
    %1933 = vperm.xlu0 %1932, %v1796
    %v1934 = vpop.permute.xlu0 %1933
    %1937 = vset.pattern.permute.xlu0 0
    %1938 = vperm.xlu0 %1937, %v1797
    %v1939 = vpop.permute.xlu0 %1938
    %1942 = vset.pattern.permute.xlu0 0
    %1943 = vperm.xlu0 %1942, %v1798
    %v1944 = vpop.permute.xlu0 %1943
    %1947 = vset.pattern.permute.xlu0 0
    %1948 = vperm.xlu0 %1947, %v1799
    %v1949 = vpop.permute.xlu0 %1948
    %v1951 = vlaneseq
    %v1952 = vshrl.u32 %v1951, 7
    %v1953 = vsub.s32 0, %v1952
    %v1954 = vrot.slane %v1800, %v1953
    %v1955 = vmul.f32 %v1804, %v1954
    %v1956 = vmul.f32 %v1809, %v1954
    %v1957 = vmul.f32 %v1814, %v1954
    %v1958 = vmul.f32 %v1819, %v1954
    %v1959 = vmul.f32 %v1824, %v1954
    %v1960 = vmul.f32 %v1829, %v1954
    %v1961 = vmul.f32 %v1834, %v1954
    %v1962 = vmul.f32 %v1839, %v1954
    %v1963 = vmul.f32 %v1844, %v1954
    %v1964 = vmul.f32 %v1849, %v1954
    %v1965 = vmul.f32 %v1854, %v1954
    %v1966 = vmul.f32 %v1859, %v1954
    %v1967 = vmul.f32 %v1864, %v1954
    %v1968 = vmul.f32 %v1869, %v1954
    %v1969 = vmul.f32 %v1874, %v1954
    %v1970 = vmul.f32 %v1879, %v1954
    %v1971 = vmul.f32 %v1884, %v1954
    %v1972 = vmul.f32 %v1889, %v1954
    %v1973 = vmul.f32 %v1894, %v1954
    %v1974 = vmul.f32 %v1899, %v1954
    %v1975 = vmul.f32 %v1904, %v1954
    %v1976 = vmul.f32 %v1909, %v1954
    %v1977 = vmul.f32 %v1914, %v1954
    %v1978 = vmul.f32 %v1919, %v1954
    %v1979 = vmul.f32 %v1924, %v1954
    %v1980 = vmul.f32 %v1929, %v1954
    %v1981 = vmul.f32 %v1934, %v1954
    %v1982 = vmul.f32 %v1939, %v1954
    %v1983 = vmul.f32 %v1944, %v1954
    %v1984 = vmul.f32 %v1949, %v1954
    %v1985 = vadd.f32 %v1740, %v1955
    %v1986 = vadd.f32 %v1741, %v1956
    %v1987 = vadd.f32 %v1742, %v1957
    %v1988 = vadd.f32 %v1743, %v1958
    %v1989 = vadd.f32 %v1744, %v1959
    %v1990 = vadd.f32 %v1745, %v1960
    %v1991 = vadd.f32 %v1746, %v1961
    %v1992 = vadd.f32 %v1747, %v1962
    %v1993 = vadd.f32 %v1748, %v1963
    %v1994 = vadd.f32 %v1749, %v1964
    %v1995 = vadd.f32 %v1750, %v1965
    %v1996 = vadd.f32 %v1751, %v1966
    %v1997 = vadd.f32 %v1752, %v1967
    %v1998 = vadd.f32 %v1753, %v1968
    %v1999 = vadd.f32 %v1754, %v1969
    %v2000 = vadd.f32 %v1755, %v1970
    %v2001 = vadd.f32 %v1756, %v1971
    %v2002 = vadd.f32 %v1757, %v1972
    %v2003 = vadd.f32 %v1758, %v1973
    %v2004 = vadd.f32 %v1759, %v1974
    %v2005 = vadd.f32 %v1760, %v1975
    %v2006 = vadd.f32 %v1761, %v1976
    %v2007 = vadd.f32 %v1762, %v1977
    %v2008 = vadd.f32 %v1763, %v1978
    %v2009 = vadd.f32 %v1764, %v1979
    %v2010 = vadd.f32 %v1765, %v1980
    %v2011 = vadd.f32 %v1766, %v1981
    %v2012 = vadd.f32 %v1767, %v1982
    %v2013 = vadd.f32 %v1768, %v1983
    %v2014 = vadd.f32 %v1769, %v1984
    %v2015 = vld [vmem:[%s1524 + $0x10] sm:$0xff]
    %v2016 = vld [vmem:[%s1524 + $0x18] sm:$0xff]
    %v2017 = vld [vmem:[%s1524 + $0x20] sm:$0xff]
    %v2018 = vld [vmem:[%s1524 + $0x28] sm:$0xff]
    %v2019 = vld [vmem:[%s1524 + $0x30] sm:$0xff]
    %v2020 = vld [vmem:[%s1524 + $0x38] sm:$0xff]
    %v2021 = vld [vmem:[%s1524 + $0x40] sm:$0xff]
    %v2022 = vld [vmem:[%s1524 + $0x48] sm:$0xff]
    %v2023 = vld [vmem:[%s1524 + $0x50] sm:$0xff]
    %v2024 = vld [vmem:[%s1524 + $0x58] sm:$0xff]
    %v2025 = vld [vmem:[%s1524 + $0x60] sm:$0xff]
    %v2026 = vld [vmem:[%s1524 + $0x68] sm:$0xff]
    %v2027 = vld [vmem:[%s1524 + $0x70] sm:$0xff]
    %v2028 = vld [vmem:[%s1524 + $0x78] sm:$0xff]
    %v2029 = vld [vmem:[%s1524 + $0x80] sm:$0xff]
    %v2030 = vld [vmem:[%s1524 + $0x88] sm:$0xff]
    %v2031 = vld [vmem:[%s1524 + $0x90] sm:$0xff]
    %v2032 = vld [vmem:[%s1524 + $0x98] sm:$0xff]
    %v2033 = vld [vmem:[%s1524 + $0xa0] sm:$0xff]
    %v2034 = vld [vmem:[%s1524 + $0xa8] sm:$0xff]
    %v2035 = vld [vmem:[%s1524 + $0xb0] sm:$0xff]
    %v2036 = vld [vmem:[%s1524 + $0xb8] sm:$0xff]
    %v2037 = vld [vmem:[%s1524 + $0xc0] sm:$0xff]
    %v2038 = vld [vmem:[%s1524 + $0xc8] sm:$0xff]
    %v2039 = vld [vmem:[%s1524 + $0xd0] sm:$0xff]
    %v2040 = vld [vmem:[%s1524 + $0xd8] sm:$0xff]
    %v2041 = vld [vmem:[%s1524 + $0xe0] sm:$0xff]
    %v2042 = vld [vmem:[%s1524 + $0xe8] sm:$0xff]
    %v2043 = vld [vmem:[%s1524 + $0xf0] sm:$0xff]
    %v2044 = vld [vmem:[%s1524 + $0xf8] sm:$0xff]
    %v2045 = vld [vmem:[%s1 + $0x8] sm:$0x1]
    %2047 = vset.pattern.permute.xlu0 0
    %2048 = vperm.xlu0 %2047, %v2015
    %v2049 = vpop.permute.xlu0 %2048
    %2052 = vset.pattern.permute.xlu0 0
    %2053 = vperm.xlu0 %2052, %v2016
    %v2054 = vpop.permute.xlu0 %2053
    %2057 = vset.pattern.permute.xlu0 0
    %2058 = vperm.xlu0 %2057, %v2017
    %v2059 = vpop.permute.xlu0 %2058
    %2062 = vset.pattern.permute.xlu0 0
    %2063 = vperm.xlu0 %2062, %v2018
    %v2064 = vpop.permute.xlu0 %2063
    %2067 = vset.pattern.permute.xlu0 0
    %2068 = vperm.xlu0 %2067, %v2019
    %v2069 = vpop.permute.xlu0 %2068
    %2072 = vset.pattern.permute.xlu0 0
    %2073 = vperm.xlu0 %2072, %v2020
    %v2074 = vpop.permute.xlu0 %2073
    %2077 = vset.pattern.permute.xlu0 0
    %2078 = vperm.xlu0 %2077, %v2021
    %v2079 = vpop.permute.xlu0 %2078
    %2082 = vset.pattern.permute.xlu0 0
    %2083 = vperm.xlu0 %2082, %v2022
    %v2084 = vpop.permute.xlu0 %2083
    %2087 = vset.pattern.permute.xlu0 0
    %2088 = vperm.xlu0 %2087, %v2023
    %v2089 = vpop.permute.xlu0 %2088
    %2092 = vset.pattern.permute.xlu0 0
    %2093 = vperm.xlu0 %2092, %v2024
    %v2094 = vpop.permute.xlu0 %2093
    %2097 = vset.pattern.permute.xlu0 0
    %2098 = vperm.xlu0 %2097, %v2025
    %v2099 = vpop.permute.xlu0 %2098
    %2102 = vset.pattern.permute.xlu0 0
    %2103 = vperm.xlu0 %2102, %v2026
    %v2104 = vpop.permute.xlu0 %2103
    %2107 = vset.pattern.permute.xlu0 0
    %2108 = vperm.xlu0 %2107, %v2027
    %v2109 = vpop.permute.xlu0 %2108
    %2112 = vset.pattern.permute.xlu0 0
    %2113 = vperm.xlu0 %2112, %v2028
    %v2114 = vpop.permute.xlu0 %2113
    %2117 = vset.pattern.permute.xlu0 0
    %2118 = vperm.xlu0 %2117, %v2029
    %v2119 = vpop.permute.xlu0 %2118
    %2122 = vset.pattern.permute.xlu0 0
    %2123 = vperm.xlu0 %2122, %v2030
    %v2124 = vpop.permute.xlu0 %2123
    %2127 = vset.pattern.permute.xlu0 0
    %2128 = vperm.xlu0 %2127, %v2031
    %v2129 = vpop.permute.xlu0 %2128
    %2132 = vset.pattern.permute.xlu0 0
    %2133 = vperm.xlu0 %2132, %v2032
    %v2134 = vpop.permute.xlu0 %2133
    %2137 = vset.pattern.permute.xlu0 0
    %2138 = vperm.xlu0 %2137, %v2033
    %v2139 = vpop.permute.xlu0 %2138
    %2142 = vset.pattern.permute.xlu0 0
    %2143 = vperm.xlu0 %2142, %v2034
    %v2144 = vpop.permute.xlu0 %2143
    %2147 = vset.pattern.permute.xlu0 0
    %2148 = vperm.xlu0 %2147, %v2035
    %v2149 = vpop.permute.xlu0 %2148
    %2152 = vset.pattern.permute.xlu0 0
    %2153 = vperm.xlu0 %2152, %v2036
    %v2154 = vpop.permute.xlu0 %2153
    %2157 = vset.pattern.permute.xlu0 0
    %2158 = vperm.xlu0 %2157, %v2037
    %v2159 = vpop.permute.xlu0 %2158
    %2162 = vset.pattern.permute.xlu0 0
    %2163 = vperm.xlu0 %2162, %v2038
    %v2164 = vpop.permute.xlu0 %2163
    %2167 = vset.pattern.permute.xlu0 0
    %2168 = vperm.xlu0 %2167, %v2039
    %v2169 = vpop.permute.xlu0 %2168
    %2172 = vset.pattern.permute.xlu0 0
    %2173 = vperm.xlu0 %2172, %v2040
    %v2174 = vpop.permute.xlu0 %2173
    %2177 = vset.pattern.permute.xlu0 0
    %2178 = vperm.xlu0 %2177, %v2041
    %v2179 = vpop.permute.xlu0 %2178
    %2182 = vset.pattern.permute.xlu0 0
    %2183 = vperm.xlu0 %2182, %v2042
    %v2184 = vpop.permute.xlu0 %2183
    %2187 = vset.pattern.permute.xlu0 0
    %2188 = vperm.xlu0 %2187, %v2043
    %v2189 = vpop.permute.xlu0 %2188
    %2192 = vset.pattern.permute.xlu0 0
    %2193 = vperm.xlu0 %2192, %v2044
    %v2194 = vpop.permute.xlu0 %2193
    %v2196 = vlaneseq
    %v2197 = vshrl.u32 %v2196, 7
    %v2198 = vsub.s32 0, %v2197
    %v2199 = vrot.slane %v2045, %v2198
    %v2200 = vmul.f32 %v2049, %v2199
    %v2201 = vmul.f32 %v2054, %v2199
    %v2202 = vmul.f32 %v2059, %v2199
    %v2203 = vmul.f32 %v2064, %v2199
    %v2204 = vmul.f32 %v2069, %v2199
    %v2205 = vmul.f32 %v2074, %v2199
    %v2206 = vmul.f32 %v2079, %v2199
    %v2207 = vmul.f32 %v2084, %v2199
    %v2208 = vmul.f32 %v2089, %v2199
    %v2209 = vmul.f32 %v2094, %v2199
    %v2210 = vmul.f32 %v2099, %v2199
    %v2211 = vmul.f32 %v2104, %v2199
    %v2212 = vmul.f32 %v2109, %v2199
    %v2213 = vmul.f32 %v2114, %v2199
    %v2214 = vmul.f32 %v2119, %v2199
    %v2215 = vmul.f32 %v2124, %v2199
    %v2216 = vmul.f32 %v2129, %v2199
    %v2217 = vmul.f32 %v2134, %v2199
    %v2218 = vmul.f32 %v2139, %v2199
    %v2219 = vmul.f32 %v2144, %v2199
    %v2220 = vmul.f32 %v2149, %v2199
    %v2221 = vmul.f32 %v2154, %v2199
    %v2222 = vmul.f32 %v2159, %v2199
    %v2223 = vmul.f32 %v2164, %v2199
    %v2224 = vmul.f32 %v2169, %v2199
    %v2225 = vmul.f32 %v2174, %v2199
    %v2226 = vmul.f32 %v2179, %v2199
    %v2227 = vmul.f32 %v2184, %v2199
    %v2228 = vmul.f32 %v2189, %v2199
    %v2229 = vmul.f32 %v2194, %v2199
    %v2230 = vadd.f32 %v1985, %v2200
    %v2231 = vadd.f32 %v1986, %v2201
    %v2232 = vadd.f32 %v1987, %v2202
    %v2233 = vadd.f32 %v1988, %v2203
    %v2234 = vadd.f32 %v1989, %v2204
    %v2235 = vadd.f32 %v1990, %v2205
    %v2236 = vadd.f32 %v1991, %v2206
    %v2237 = vadd.f32 %v1992, %v2207
    %v2238 = vadd.f32 %v1993, %v2208
    %v2239 = vadd.f32 %v1994, %v2209
    %v2240 = vadd.f32 %v1995, %v2210
    %v2241 = vadd.f32 %v1996, %v2211
    %v2242 = vadd.f32 %v1997, %v2212
    %v2243 = vadd.f32 %v1998, %v2213
    %v2244 = vadd.f32 %v1999, %v2214
    %v2245 = vadd.f32 %v2000, %v2215
    %v2246 = vadd.f32 %v2001, %v2216
    %v2247 = vadd.f32 %v2002, %v2217
    %v2248 = vadd.f32 %v2003, %v2218
    %v2249 = vadd.f32 %v2004, %v2219
    %v2250 = vadd.f32 %v2005, %v2220
    %v2251 = vadd.f32 %v2006, %v2221
    %v2252 = vadd.f32 %v2007, %v2222
    %v2253 = vadd.f32 %v2008, %v2223
    %v2254 = vadd.f32 %v2009, %v2224
    %v2255 = vadd.f32 %v2010, %v2225
    %v2256 = vadd.f32 %v2011, %v2226
    %v2257 = vadd.f32 %v2012, %v2227
    %v2258 = vadd.f32 %v2013, %v2228
    %v2259 = vadd.f32 %v2014, %v2229
    %v2260 = vmax.f32 %v2230, %v2231
    %v2261 = vmax.f32 %v2232, %v2233
    %v2262 = vmax.f32 %v2234, %v2235
    %v2263 = vmax.f32 %v2236, %v2237
    %v2264 = vmax.f32 %v2238, %v2239
    %v2265 = vmax.f32 %v2240, %v2241
    %v2266 = vmax.f32 %v2242, %v2243
    %v2267 = vmax.f32 %v2244, %v2245
    %v2268 = vmax.f32 %v2246, %v2247
    %v2269 = vmax.f32 %v2248, %v2249
    %v2270 = vmax.f32 %v2250, %v2251
    %v2271 = vmax.f32 %v2252, %v2253
    %v2272 = vmax.f32 %v2254, %v2255
    %v2273 = vmax.f32 %v2256, %v2257
    %v2274 = vmax.f32 %v2258, %v2259
    %v2275 = vmul.f32 %v821, %v233
    %v2276 = vmul.f32 %v826, %v233
    %v2277 = vmul.f32 %v831, %v233
    %v2278 = vmul.f32 %v836, %v233
    %v2279 = vmul.f32 %v841, %v233
    %v2280 = vmul.f32 %v846, %v233
    %v2281 = vmul.f32 %v851, %v233
    %v2282 = vmul.f32 %v856, %v233
    %v2283 = vmul.f32 %v861, %v233
    %v2284 = vmul.f32 %v866, %v233
    %v2285 = vmul.f32 %v871, %v233
    %v2286 = vmul.f32 %v876, %v233
    %v2287 = vmul.f32 %v881, %v233
    %v2288 = vmul.f32 %v886, %v233
    %v2289 = vmul.f32 %v891, %v233
    %v2290 = vmul.f32 %v896, %v233
    %v2291 = vmul.f32 %v901, %v233
    %v2292 = vmul.f32 %v906, %v233
    %v2293 = vmul.f32 %v911, %v233
    %v2294 = vmul.f32 %v916, %v233
    %v2295 = vmul.f32 %v921, %v233
    %v2296 = vmul.f32 %v926, %v233
    %v2297 = vmul.f32 %v931, %v233
    %v2298 = vmul.f32 %v936, %v233
    %v2299 = vmul.f32 %v941, %v233
    %v2300 = vmul.f32 %v946, %v233
    %v2301 = vmul.f32 %v951, %v233
    %v2302 = vmul.f32 %v956, %v233
    %v2303 = vmul.f32 %v961, %v233
    %v2304 = vmul.f32 %v966, %v233
    %v2305 = vadd.f32 %v2275, 0.0
    %v2306 = vadd.f32 %v2276, 0.0
    %v2307 = vadd.f32 %v2277, 0.0
    %v2308 = vadd.f32 %v2278, 0.0
    %v2309 = vadd.f32 %v2279, 0.0
    %v2310 = vadd.f32 %v2280, 0.0
    %v2311 = vadd.f32 %v2281, 0.0
    %v2312 = vadd.f32 %v2282, 0.0
    %v2313 = vadd.f32 %v2283, 0.0
    %v2314 = vadd.f32 %v2284, 0.0
    %v2315 = vadd.f32 %v2285, 0.0
    %v2316 = vadd.f32 %v2286, 0.0
    %v2317 = vadd.f32 %v2287, 0.0
    %v2318 = vadd.f32 %v2288, 0.0
    %v2319 = vadd.f32 %v2289, 0.0
    %v2320 = vadd.f32 %v2290, 0.0
    %v2321 = vadd.f32 %v2291, 0.0
    %v2322 = vadd.f32 %v2292, 0.0
    %v2323 = vadd.f32 %v2293, 0.0
    %v2324 = vadd.f32 %v2294, 0.0
    %v2325 = vadd.f32 %v2295, 0.0
    %v2326 = vadd.f32 %v2296, 0.0
    %v2327 = vadd.f32 %v2297, 0.0
    %v2328 = vadd.f32 %v2298, 0.0
    %v2329 = vadd.f32 %v2299, 0.0
    %v2330 = vadd.f32 %v2300, 0.0
    %v2331 = vadd.f32 %v2301, 0.0
    %v2332 = vadd.f32 %v2302, 0.0
    %v2333 = vadd.f32 %v2303, 0.0
    %v2334 = vadd.f32 %v2304, 0.0
    %v2335 = vmul.f32 %v1066, %v478
    %v2336 = vmul.f32 %v1071, %v478
    %v2337 = vmul.f32 %v1076, %v478
    %v2338 = vmul.f32 %v1081, %v478
    %v2339 = vmul.f32 %v1086, %v478
    %v2340 = vmul.f32 %v1091, %v478
    %v2341 = vmul.f32 %v1096, %v478
    %v2342 = vmul.f32 %v1101, %v478
    %v2343 = vmul.f32 %v1106, %v478
    %v2344 = vmul.f32 %v1111, %v478
    %v2345 = vmul.f32 %v1116, %v478
    %v2346 = vmul.f32 %v1121, %v478
    %v2347 = vmul.f32 %v1126, %v478
    %v2348 = vmul.f32 %v1131, %v478
    %v2349 = vmul.f32 %v1136, %v478
    %v2350 = vmul.f32 %v1141, %v478
    %v2351 = vmul.f32 %v1146, %v478
    %v2352 = vmul.f32 %v1151, %v478
    %v2353 = vmul.f32 %v1156, %v478
    %v2354 = vmul.f32 %v1161, %v478
    %v2355 = vmul.f32 %v1166, %v478
    %v2356 = vmul.f32 %v1171, %v478
    %v2357 = vmul.f32 %v1176, %v478
    %v2358 = vmul.f32 %v1181, %v478
    %v2359 = vmul.f32 %v1186, %v478
    %v2360 = vmul.f32 %v1191, %v478
    %v2361 = vmul.f32 %v1196, %v478
    %v2362 = vmul.f32 %v1201, %v478
    %v2363 = vmul.f32 %v1206, %v478
    %v2364 = vmul.f32 %v1211, %v478
    %v2365 = vadd.f32 %v2305, %v2335
    %v2366 = vadd.f32 %v2306, %v2336
    %v2367 = vadd.f32 %v2307, %v2337
    %v2368 = vadd.f32 %v2308, %v2338
    %v2369 = vadd.f32 %v2309, %v2339
    %v2370 = vadd.f32 %v2310, %v2340
    %v2371 = vadd.f32 %v2311, %v2341
    %v2372 = vadd.f32 %v2312, %v2342
    %v2373 = vadd.f32 %v2313, %v2343
    %v2374 = vadd.f32 %v2314, %v2344
    %v2375 = vadd.f32 %v2315, %v2345
    %v2376 = vadd.f32 %v2316, %v2346
    %v2377 = vadd.f32 %v2317, %v2347
    %v2378 = vadd.f32 %v2318, %v2348
    %v2379 = vadd.f32 %v2319, %v2349
    %v2380 = vadd.f32 %v2320, %v2350
    %v2381 = vadd.f32 %v2321, %v2351
    %v2382 = vadd.f32 %v2322, %v2352
    %v2383 = vadd.f32 %v2323, %v2353
    %v2384 = vadd.f32 %v2324, %v2354
    %v2385 = vadd.f32 %v2325, %v2355
    %v2386 = vadd.f32 %v2326, %v2356
    %v2387 = vadd.f32 %v2327, %v2357
    %v2388 = vadd.f32 %v2328, %v2358
    %v2389 = vadd.f32 %v2329, %v2359
    %v2390 = vadd.f32 %v2330, %v2360
    %v2391 = vadd.f32 %v2331, %v2361
    %v2392 = vadd.f32 %v2332, %v2362
    %v2393 = vadd.f32 %v2333, %v2363
    %v2394 = vadd.f32 %v2334, %v2364
    %v2395 = vmul.f32 %v1311, %v723
    %v2396 = vmul.f32 %v1316, %v723
    %v2397 = vmul.f32 %v1321, %v723
    %v2398 = vmul.f32 %v1326, %v723
    %v2399 = vmul.f32 %v1331, %v723
    %v2400 = vmul.f32 %v1336, %v723
    %v2401 = vmul.f32 %v1341, %v723
    %v2402 = vmul.f32 %v1346, %v723
    %v2403 = vmul.f32 %v1351, %v723
    %v2404 = vmul.f32 %v1356, %v723
    %v2405 = vmul.f32 %v1361, %v723
    %v2406 = vmul.f32 %v1366, %v723
    %v2407 = vmul.f32 %v1371, %v723
    %v2408 = vmul.f32 %v1376, %v723
    %v2409 = vmul.f32 %v1381, %v723
    %v2410 = vmul.f32 %v1386, %v723
    %v2411 = vmul.f32 %v1391, %v723
    %v2412 = vmul.f32 %v1396, %v723
    %v2413 = vmul.f32 %v1401, %v723
    %v2414 = vmul.f32 %v1406, %v723
    %v2415 = vmul.f32 %v1411, %v723
    %v2416 = vmul.f32 %v1416, %v723
    %v2417 = vmul.f32 %v1421, %v723
    %v2418 = vmul.f32 %v1426, %v723
    %v2419 = vmul.f32 %v1431, %v723
    %v2420 = vmul.f32 %v1436, %v723
    %v2421 = vmul.f32 %v1441, %v723
    %v2422 = vmul.f32 %v1446, %v723
    %v2423 = vmul.f32 %v1451, %v723
    %v2424 = vmul.f32 %v1456, %v723
    %v2425 = vadd.f32 %v2365, %v2395
    %v2426 = vadd.f32 %v2366, %v2396
    %v2427 = vadd.f32 %v2367, %v2397
    %v2428 = vadd.f32 %v2368, %v2398
    %v2429 = vadd.f32 %v2369, %v2399
    %v2430 = vadd.f32 %v2370, %v2400
    %v2431 = vadd.f32 %v2371, %v2401
    %v2432 = vadd.f32 %v2372, %v2402
    %v2433 = vadd.f32 %v2373, %v2403
    %v2434 = vadd.f32 %v2374, %v2404
    %v2435 = vadd.f32 %v2375, %v2405
    %v2436 = vadd.f32 %v2376, %v2406
    %v2437 = vadd.f32 %v2377, %v2407
    %v2438 = vadd.f32 %v2378, %v2408
    %v2439 = vadd.f32 %v2379, %v2409
    %v2440 = vadd.f32 %v2380, %v2410
    %v2441 = vadd.f32 %v2381, %v2411
    %v2442 = vadd.f32 %v2382, %v2412
    %v2443 = vadd.f32 %v2383, %v2413
    %v2444 = vadd.f32 %v2384, %v2414
    %v2445 = vadd.f32 %v2385, %v2415
    %v2446 = vadd.f32 %v2386, %v2416
    %v2447 = vadd.f32 %v2387, %v2417
    %v2448 = vadd.f32 %v2388, %v2418
    %v2449 = vadd.f32 %v2389, %v2419
    %v2450 = vadd.f32 %v2390, %v2420
    %v2451 = vadd.f32 %v2391, %v2421
    %v2452 = vadd.f32 %v2392, %v2422
    %v2453 = vadd.f32 %v2393, %v2423
    %v2454 = vadd.f32 %v2394, %v2424
    %v2455 = vmul.f32 %v1559, %v971
    %v2456 = vmul.f32 %v1564, %v971
    %v2457 = vmul.f32 %v1569, %v971
    %v2458 = vmul.f32 %v1574, %v971
    %v2459 = vmul.f32 %v1579, %v971
    %v2460 = vmul.f32 %v1584, %v971
    %v2461 = vmul.f32 %v1589, %v971
    %v2462 = vmul.f32 %v1594, %v971
    %v2463 = vmul.f32 %v1599, %v971
    %v2464 = vmul.f32 %v1604, %v971
    %v2465 = vmul.f32 %v1609, %v971
    %v2466 = vmul.f32 %v1614, %v971
    %v2467 = vmul.f32 %v1619, %v971
    %v2468 = vmul.f32 %v1624, %v971
    %v2469 = vmul.f32 %v1629, %v971
    %v2470 = vmul.f32 %v1634, %v971
    %v2471 = vmul.f32 %v1639, %v971
    %v2472 = vmul.f32 %v1644, %v971
    %v2473 = vmul.f32 %v1649, %v971
    %v2474 = vmul.f32 %v1654, %v971
    %v2475 = vmul.f32 %v1659, %v971
    %v2476 = vmul.f32 %v1664, %v971
    %v2477 = vmul.f32 %v1669, %v971
    %v2478 = vmul.f32 %v1674, %v971
    %v2479 = vmul.f32 %v1679, %v971
    %v2480 = vmul.f32 %v1684, %v971
    %v2481 = vmul.f32 %v1689, %v971
    %v2482 = vmul.f32 %v1694, %v971
    %v2483 = vmul.f32 %v1699, %v971
    %v2484 = vmul.f32 %v1704, %v971
    %v2485 = vadd.f32 %v2425, %v2455
    %v2486 = vadd.f32 %v2426, %v2456
    %v2487 = vadd.f32 %v2427, %v2457
    %v2488 = vadd.f32 %v2428, %v2458
    %v2489 = vadd.f32 %v2429, %v2459
    %v2490 = vadd.f32 %v2430, %v2460
    %v2491 = vadd.f32 %v2431, %v2461
    %v2492 = vadd.f32 %v2432, %v2462
    %v2493 = vadd.f32 %v2433, %v2463
    %v2494 = vadd.f32 %v2434, %v2464
    %v2495 = vadd.f32 %v2435, %v2465
    %v2496 = vadd.f32 %v2436, %v2466
    %v2497 = vadd.f32 %v2437, %v2467
    %v2498 = vadd.f32 %v2438, %v2468
    %v2499 = vadd.f32 %v2439, %v2469
    %v2500 = vadd.f32 %v2440, %v2470
    %v2501 = vadd.f32 %v2441, %v2471
    %v2502 = vadd.f32 %v2442, %v2472
    %v2503 = vadd.f32 %v2443, %v2473
    %v2504 = vadd.f32 %v2444, %v2474
    %v2505 = vadd.f32 %v2445, %v2475
    %v2506 = vadd.f32 %v2446, %v2476
    %v2507 = vadd.f32 %v2447, %v2477
    %v2508 = vadd.f32 %v2448, %v2478
    %v2509 = vadd.f32 %v2449, %v2479
    %v2510 = vadd.f32 %v2450, %v2480
    %v2511 = vadd.f32 %v2451, %v2481
    %v2512 = vadd.f32 %v2452, %v2482
    %v2513 = vadd.f32 %v2453, %v2483
    %v2514 = vadd.f32 %v2454, %v2484
    %v2515 = vmul.f32 %v1804, %v1216
    %v2516 = vmul.f32 %v1809, %v1216
    %v2517 = vmul.f32 %v1814, %v1216
    %v2518 = vmul.f32 %v1819, %v1216
    %v2519 = vmul.f32 %v1824, %v1216
    %v2520 = vmul.f32 %v1829, %v1216
    %v2521 = vmul.f32 %v1834, %v1216
    %v2522 = vmul.f32 %v1839, %v1216
    %v2523 = vmul.f32 %v1844, %v1216
    %v2524 = vmul.f32 %v1849, %v1216
    %v2525 = vmul.f32 %v1854, %v1216
    %v2526 = vmul.f32 %v1859, %v1216
    %v2527 = vmul.f32 %v1864, %v1216
    %v2528 = vmul.f32 %v1869, %v1216
    %v2529 = vmul.f32 %v1874, %v1216
    %v2530 = vmul.f32 %v1879, %v1216
    %v2531 = vmul.f32 %v1884, %v1216
    %v2532 = vmul.f32 %v1889, %v1216
    %v2533 = vmul.f32 %v1894, %v1216
    %v2534 = vmul.f32 %v1899, %v1216
    %v2535 = vmul.f32 %v1904, %v1216
    %v2536 = vmul.f32 %v1909, %v1216
    %v2537 = vmul.f32 %v1914, %v1216
    %v2538 = vmul.f32 %v1919, %v1216
    %v2539 = vmul.f32 %v1924, %v1216
    %v2540 = vmul.f32 %v1929, %v1216
    %v2541 = vmul.f32 %v1934, %v1216
    %v2542 = vmul.f32 %v1939, %v1216
    %v2543 = vmul.f32 %v1944, %v1216
    %v2544 = vmul.f32 %v1949, %v1216
    %v2545 = vadd.f32 %v2485, %v2515
    %v2546 = vadd.f32 %v2486, %v2516
    %v2547 = vadd.f32 %v2487, %v2517
    %v2548 = vadd.f32 %v2488, %v2518
    %v2549 = vadd.f32 %v2489, %v2519
    %v2550 = vadd.f32 %v2490, %v2520
    %v2551 = vadd.f32 %v2491, %v2521
    %v2552 = vadd.f32 %v2492, %v2522
    %v2553 = vadd.f32 %v2493, %v2523
    %v2554 = vadd.f32 %v2494, %v2524
    %v2555 = vadd.f32 %v2495, %v2525
    %v2556 = vadd.f32 %v2496, %v2526
    %v2557 = vadd.f32 %v2497, %v2527
    %v2558 = vadd.f32 %v2498, %v2528
    %v2559 = vadd.f32 %v2499, %v2529
    %v2560 = vadd.f32 %v2500, %v2530
    %v2561 = vadd.f32 %v2501, %v2531
    %v2562 = vadd.f32 %v2502, %v2532
    %v2563 = vadd.f32 %v2503, %v2533
    %v2564 = vadd.f32 %v2504, %v2534
    %v2565 = vadd.f32 %v2505, %v2535
    %v2566 = vadd.f32 %v2506, %v2536
    %v2567 = vadd.f32 %v2507, %v2537
    %v2568 = vadd.f32 %v2508, %v2538
    %v2569 = vadd.f32 %v2509, %v2539
    %v2570 = vadd.f32 %v2510, %v2540
    %v2571 = vadd.f32 %v2511, %v2541
    %v2572 = vadd.f32 %v2512, %v2542
    %v2573 = vadd.f32 %v2513, %v2543
    %v2574 = vadd.f32 %v2514, %v2544
    %v2575 = vmul.f32 %v2049, %v1461
    %v2576 = vmul.f32 %v2054, %v1461
    %v2577 = vmul.f32 %v2059, %v1461
    %v2578 = vmul.f32 %v2064, %v1461
    %v2579 = vmul.f32 %v2069, %v1461
    %v2580 = vmul.f32 %v2074, %v1461
    %v2581 = vmul.f32 %v2079, %v1461
    %v2582 = vmul.f32 %v2084, %v1461
    %v2583 = vmul.f32 %v2089, %v1461
    %v2584 = vmul.f32 %v2094, %v1461
    %v2585 = vmul.f32 %v2099, %v1461
    %v2586 = vmul.f32 %v2104, %v1461
    %v2587 = vmul.f32 %v2109, %v1461
    %v2588 = vmul.f32 %v2114, %v1461
    %v2589 = vmul.f32 %v2119, %v1461
    %v2590 = vmul.f32 %v2124, %v1461
    %v2591 = vmul.f32 %v2129, %v1461
    %v2592 = vmul.f32 %v2134, %v1461
    %v2593 = vmul.f32 %v2139, %v1461
    %v2594 = vmul.f32 %v2144, %v1461
    %v2595 = vmul.f32 %v2149, %v1461
    %v2596 = vmul.f32 %v2154, %v1461
    %v2597 = vmul.f32 %v2159, %v1461
    %v2598 = vmul.f32 %v2164, %v1461
    %v2599 = vmul.f32 %v2169, %v1461
    %v2600 = vmul.f32 %v2174, %v1461
    %v2601 = vmul.f32 %v2179, %v1461
    %v2602 = vmul.f32 %v2184, %v1461
    %v2603 = vmul.f32 %v2189, %v1461
    %v2604 = vmul.f32 %v2194, %v1461
    %v2605 = vadd.f32 %v2545, %v2575
    %v2606 = vadd.f32 %v2546, %v2576
    %v2607 = vadd.f32 %v2547, %v2577
    %v2608 = vadd.f32 %v2548, %v2578
    %v2609 = vadd.f32 %v2549, %v2579
    %v2610 = vadd.f32 %v2550, %v2580
    %v2611 = vadd.f32 %v2551, %v2581
    %v2612 = vadd.f32 %v2552, %v2582
    %v2613 = vadd.f32 %v2553, %v2583
    %v2614 = vadd.f32 %v2554, %v2584
    %v2615 = vadd.f32 %v2555, %v2585
    %v2616 = vadd.f32 %v2556, %v2586
    %v2617 = vadd.f32 %v2557, %v2587
    %v2618 = vadd.f32 %v2558, %v2588
    %v2619 = vadd.f32 %v2559, %v2589
    %v2620 = vadd.f32 %v2560, %v2590
    %v2621 = vadd.f32 %v2561, %v2591
    %v2622 = vadd.f32 %v2562, %v2592
    %v2623 = vadd.f32 %v2563, %v2593
    %v2624 = vadd.f32 %v2564, %v2594
    %v2625 = vadd.f32 %v2565, %v2595
    %v2626 = vadd.f32 %v2566, %v2596
    %v2627 = vadd.f32 %v2567, %v2597
    %v2628 = vadd.f32 %v2568, %v2598
    %v2629 = vadd.f32 %v2569, %v2599
    %v2630 = vadd.f32 %v2570, %v2600
    %v2631 = vadd.f32 %v2571, %v2601
    %v2632 = vadd.f32 %v2572, %v2602
    %v2633 = vadd.f32 %v2573, %v2603
    %v2634 = vadd.f32 %v2574, %v2604
    %s2635 = sadd.s32 %s46, 3
    %s2636 = smul.u32 %s2635, 256
    %s2637 = scalar_lea.vmem %s0, %s2636
    %v2638 = vld [vmem:[%s2637] sm:$0xff]
    %v2639 = vld [vmem:[%s2637 + $0x8] sm:$0xff]
    %v2640 = vld [vmem:[%s2637 + $0x10] sm:$0xff]
    %v2641 = vld [vmem:[%s2637 + $0x18] sm:$0xff]
    %v2642 = vld [vmem:[%s2637 + $0x20] sm:$0xff]
    %v2643 = vld [vmem:[%s2637 + $0x28] sm:$0xff]
    %v2644 = vld [vmem:[%s2637 + $0x30] sm:$0xff]
    %v2645 = vld [vmem:[%s2637 + $0x38] sm:$0xff]
    %v2646 = vld [vmem:[%s2637 + $0x40] sm:$0xff]
    %v2647 = vld [vmem:[%s2637 + $0x48] sm:$0xff]
    %v2648 = vld [vmem:[%s2637 + $0x50] sm:$0xff]
    %v2649 = vld [vmem:[%s2637 + $0x58] sm:$0xff]
    %v2650 = vld [vmem:[%s2637 + $0x60] sm:$0xff]
    %v2651 = vld [vmem:[%s2637 + $0x68] sm:$0xff]
    %v2652 = vld [vmem:[%s2637 + $0x70] sm:$0xff]
    %v2653 = vld [vmem:[%s2637 + $0x78] sm:$0xff]
    %v2654 = vld [vmem:[%s2637 + $0x80] sm:$0xff]
    %v2655 = vld [vmem:[%s2637 + $0x88] sm:$0xff]
    %v2656 = vld [vmem:[%s2637 + $0x90] sm:$0xff]
    %v2657 = vld [vmem:[%s2637 + $0x98] sm:$0xff]
    %v2658 = vld [vmem:[%s2637 + $0xa0] sm:$0xff]
    %v2659 = vld [vmem:[%s2637 + $0xa8] sm:$0xff]
    %v2660 = vld [vmem:[%s2637 + $0xb0] sm:$0xff]
    %v2661 = vld [vmem:[%s2637 + $0xb8] sm:$0xff]
    %v2662 = vld [vmem:[%s2637 + $0xc0] sm:$0xff]
    %v2663 = vld [vmem:[%s2637 + $0xc8] sm:$0xff]
    %v2664 = vld [vmem:[%s2637 + $0xd0] sm:$0xff]
    %v2665 = vld [vmem:[%s2637 + $0xd8] sm:$0xff]
    %v2666 = vld [vmem:[%s2637 + $0xe0] sm:$0xff]
    %v2667 = vld [vmem:[%s2637 + $0xe8] sm:$0xff]
    %2669 = vset.pattern.permute.xlu0 0
    %2670 = vperm.xlu0 %2669, %v2638
    %v2671 = vpop.permute.xlu0 %2670
    %2674 = vset.pattern.permute.xlu0 0
    %2675 = vperm.xlu0 %2674, %v2639
    %v2676 = vpop.permute.xlu0 %2675
    %2679 = vset.pattern.permute.xlu0 0
    %2680 = vperm.xlu0 %2679, %v2640
    %v2681 = vpop.permute.xlu0 %2680
    %2684 = vset.pattern.permute.xlu0 0
    %2685 = vperm.xlu0 %2684, %v2641
    %v2686 = vpop.permute.xlu0 %2685
    %2689 = vset.pattern.permute.xlu0 0
    %2690 = vperm.xlu0 %2689, %v2642
    %v2691 = vpop.permute.xlu0 %2690
    %2694 = vset.pattern.permute.xlu0 0
    %2695 = vperm.xlu0 %2694, %v2643
    %v2696 = vpop.permute.xlu0 %2695
    %2699 = vset.pattern.permute.xlu0 0
    %2700 = vperm.xlu0 %2699, %v2644
    %v2701 = vpop.permute.xlu0 %2700
    %2704 = vset.pattern.permute.xlu0 0
    %2705 = vperm.xlu0 %2704, %v2645
    %v2706 = vpop.permute.xlu0 %2705
    %2709 = vset.pattern.permute.xlu0 0
    %2710 = vperm.xlu0 %2709, %v2646
    %v2711 = vpop.permute.xlu0 %2710
    %2714 = vset.pattern.permute.xlu0 0
    %2715 = vperm.xlu0 %2714, %v2647
    %v2716 = vpop.permute.xlu0 %2715
    %2719 = vset.pattern.permute.xlu0 0
    %2720 = vperm.xlu0 %2719, %v2648
    %v2721 = vpop.permute.xlu0 %2720
    %2724 = vset.pattern.permute.xlu0 0
    %2725 = vperm.xlu0 %2724, %v2649
    %v2726 = vpop.permute.xlu0 %2725
    %2729 = vset.pattern.permute.xlu0 0
    %2730 = vperm.xlu0 %2729, %v2650
    %v2731 = vpop.permute.xlu0 %2730
    %2734 = vset.pattern.permute.xlu0 0
    %2735 = vperm.xlu0 %2734, %v2651
    %v2736 = vpop.permute.xlu0 %2735
    %2739 = vset.pattern.permute.xlu0 0
    %2740 = vperm.xlu0 %2739, %v2652
    %v2741 = vpop.permute.xlu0 %2740
    %2744 = vset.pattern.permute.xlu0 0
    %2745 = vperm.xlu0 %2744, %v2653
    %v2746 = vpop.permute.xlu0 %2745
    %2749 = vset.pattern.permute.xlu0 0
    %2750 = vperm.xlu0 %2749, %v2654
    %v2751 = vpop.permute.xlu0 %2750
    %2754 = vset.pattern.permute.xlu0 0
    %2755 = vperm.xlu0 %2754, %v2655
    %v2756 = vpop.permute.xlu0 %2755
    %2759 = vset.pattern.permute.xlu0 0
    %2760 = vperm.xlu0 %2759, %v2656
    %v2761 = vpop.permute.xlu0 %2760
    %2764 = vset.pattern.permute.xlu0 0
    %2765 = vperm.xlu0 %2764, %v2657
    %v2766 = vpop.permute.xlu0 %2765
    %2769 = vset.pattern.permute.xlu0 0
    %2770 = vperm.xlu0 %2769, %v2658
    %v2771 = vpop.permute.xlu0 %2770
    %2774 = vset.pattern.permute.xlu0 0
    %2775 = vperm.xlu0 %2774, %v2659
    %v2776 = vpop.permute.xlu0 %2775
    %2779 = vset.pattern.permute.xlu0 0
    %2780 = vperm.xlu0 %2779, %v2660
    %v2781 = vpop.permute.xlu0 %2780
    %2784 = vset.pattern.permute.xlu0 0
    %2785 = vperm.xlu0 %2784, %v2661
    %v2786 = vpop.permute.xlu0 %2785
    %2789 = vset.pattern.permute.xlu0 0
    %2790 = vperm.xlu0 %2789, %v2662
    %v2791 = vpop.permute.xlu0 %2790
    %2794 = vset.pattern.permute.xlu0 0
    %2795 = vperm.xlu0 %2794, %v2663
    %v2796 = vpop.permute.xlu0 %2795
    %2799 = vset.pattern.permute.xlu0 0
    %2800 = vperm.xlu0 %2799, %v2664
    %v2801 = vpop.permute.xlu0 %2800
    %2804 = vset.pattern.permute.xlu0 0
    %2805 = vperm.xlu0 %2804, %v2665
    %v2806 = vpop.permute.xlu0 %2805
    %2809 = vset.pattern.permute.xlu0 0
    %2810 = vperm.xlu0 %2809, %v2666
    %v2811 = vpop.permute.xlu0 %2810
    %2814 = vset.pattern.permute.xlu0 0
    %2815 = vperm.xlu0 %2814, %v2667
    %v2816 = vpop.permute.xlu0 %2815
    %v2818 = vmul.f32 %v2671, %v1709
    %v2819 = vmul.f32 %v2676, %v1709
    %v2820 = vmul.f32 %v2681, %v1709
    %v2821 = vmul.f32 %v2686, %v1709
    %v2822 = vmul.f32 %v2691, %v1709
    %v2823 = vmul.f32 %v2696, %v1709
    %v2824 = vmul.f32 %v2701, %v1709
    %v2825 = vmul.f32 %v2706, %v1709
    %v2826 = vmul.f32 %v2711, %v1709
    %v2827 = vmul.f32 %v2716, %v1709
    %v2828 = vmul.f32 %v2721, %v1709
    %v2829 = vmul.f32 %v2726, %v1709
    %v2830 = vmul.f32 %v2731, %v1709
    %v2831 = vmul.f32 %v2736, %v1709
    %v2832 = vmul.f32 %v2741, %v1709
    %v2833 = vmul.f32 %v2746, %v1709
    %v2834 = vmul.f32 %v2751, %v1709
    %v2835 = vmul.f32 %v2756, %v1709
    %v2836 = vmul.f32 %v2761, %v1709
    %v2837 = vmul.f32 %v2766, %v1709
    %v2838 = vmul.f32 %v2771, %v1709
    %v2839 = vmul.f32 %v2776, %v1709
    %v2840 = vmul.f32 %v2781, %v1709
    %v2841 = vmul.f32 %v2786, %v1709
    %v2842 = vmul.f32 %v2791, %v1709
    %v2843 = vmul.f32 %v2796, %v1709
    %v2844 = vmul.f32 %v2801, %v1709
    %v2845 = vmul.f32 %v2806, %v1709
    %v2846 = vmul.f32 %v2811, %v1709
    %v2847 = vmul.f32 %v2816, %v1709
    %v2848 = vadd.f32 %v2605, %v2818
    %v2849 = vadd.f32 %v2606, %v2819
    %v2850 = vadd.f32 %v2607, %v2820
    %v2851 = vadd.f32 %v2608, %v2821
    %v2852 = vadd.f32 %v2609, %v2822
    %v2853 = vadd.f32 %v2610, %v2823
    %v2854 = vadd.f32 %v2611, %v2824
    %v2855 = vadd.f32 %v2612, %v2825
    %v2856 = vadd.f32 %v2613, %v2826
    %v2857 = vadd.f32 %v2614, %v2827
    %v2858 = vadd.f32 %v2615, %v2828
    %v2859 = vadd.f32 %v2616, %v2829
    %v2860 = vadd.f32 %v2617, %v2830
    %v2861 = vadd.f32 %v2618, %v2831
    %v2862 = vadd.f32 %v2619, %v2832
    %v2863 = vadd.f32 %v2620, %v2833
    %v2864 = vadd.f32 %v2621, %v2834
    %v2865 = vadd.f32 %v2622, %v2835
    %v2866 = vadd.f32 %v2623, %v2836
    %v2867 = vadd.f32 %v2624, %v2837
    %v2868 = vadd.f32 %v2625, %v2838
    %v2869 = vadd.f32 %v2626, %v2839
    %v2870 = vadd.f32 %v2627, %v2840
    %v2871 = vadd.f32 %v2628, %v2841
    %v2872 = vadd.f32 %v2629, %v2842
    %v2873 = vadd.f32 %v2630, %v2843
    %v2874 = vadd.f32 %v2631, %v2844
    %v2875 = vadd.f32 %v2632, %v2845
    %v2876 = vadd.f32 %v2633, %v2846
    %v2877 = vadd.f32 %v2634, %v2847
    %v2878 = vld [vmem:[%s2637 + $0x8] sm:$0xff]
    %v2879 = vld [vmem:[%s2637 + $0x10] sm:$0xff]
    %v2880 = vld [vmem:[%s2637 + $0x18] sm:$0xff]
    %v2881 = vld [vmem:[%s2637 + $0x20] sm:$0xff]
    %v2882 = vld [vmem:[%s2637 + $0x28] sm:$0xff]
    %v2883 = vld [vmem:[%s2637 + $0x30] sm:$0xff]
    %v2884 = vld [vmem:[%s2637 + $0x38] sm:$0xff]
    %v2885 = vld [vmem:[%s2637 + $0x40] sm:$0xff]
    %v2886 = vld [vmem:[%s2637 + $0x48] sm:$0xff]
    %v2887 = vld [vmem:[%s2637 + $0x50] sm:$0xff]
    %v2888 = vld [vmem:[%s2637 + $0x58] sm:$0xff]
    %v2889 = vld [vmem:[%s2637 + $0x60] sm:$0xff]
    %v2890 = vld [vmem:[%s2637 + $0x68] sm:$0xff]
    %v2891 = vld [vmem:[%s2637 + $0x70] sm:$0xff]
    %v2892 = vld [vmem:[%s2637 + $0x78] sm:$0xff]
    %v2893 = vld [vmem:[%s2637 + $0x80] sm:$0xff]
    %v2894 = vld [vmem:[%s2637 + $0x88] sm:$0xff]
    %v2895 = vld [vmem:[%s2637 + $0x90] sm:$0xff]
    %v2896 = vld [vmem:[%s2637 + $0x98] sm:$0xff]
    %v2897 = vld [vmem:[%s2637 + $0xa0] sm:$0xff]
    %v2898 = vld [vmem:[%s2637 + $0xa8] sm:$0xff]
    %v2899 = vld [vmem:[%s2637 + $0xb0] sm:$0xff]
    %v2900 = vld [vmem:[%s2637 + $0xb8] sm:$0xff]
    %v2901 = vld [vmem:[%s2637 + $0xc0] sm:$0xff]
    %v2902 = vld [vmem:[%s2637 + $0xc8] sm:$0xff]
    %v2903 = vld [vmem:[%s2637 + $0xd0] sm:$0xff]
    %v2904 = vld [vmem:[%s2637 + $0xd8] sm:$0xff]
    %v2905 = vld [vmem:[%s2637 + $0xe0] sm:$0xff]
    %v2906 = vld [vmem:[%s2637 + $0xe8] sm:$0xff]
    %v2907 = vld [vmem:[%s2637 + $0xf0] sm:$0xff]
    %2909 = vset.pattern.permute.xlu0 0
    %2910 = vperm.xlu0 %2909, %v2878
    %v2911 = vpop.permute.xlu0 %2910
    %2914 = vset.pattern.permute.xlu0 0
    %2915 = vperm.xlu0 %2914, %v2879
    %v2916 = vpop.permute.xlu0 %2915
    %2919 = vset.pattern.permute.xlu0 0
    %2920 = vperm.xlu0 %2919, %v2880
    %v2921 = vpop.permute.xlu0 %2920
    %2924 = vset.pattern.permute.xlu0 0
    %2925 = vperm.xlu0 %2924, %v2881
    %v2926 = vpop.permute.xlu0 %2925
    %2929 = vset.pattern.permute.xlu0 0
    %2930 = vperm.xlu0 %2929, %v2882
    %v2931 = vpop.permute.xlu0 %2930
    %2934 = vset.pattern.permute.xlu0 0
    %2935 = vperm.xlu0 %2934, %v2883
    %v2936 = vpop.permute.xlu0 %2935
    %2939 = vset.pattern.permute.xlu0 0
    %2940 = vperm.xlu0 %2939, %v2884
    %v2941 = vpop.permute.xlu0 %2940
    %2944 = vset.pattern.permute.xlu0 0
    %2945 = vperm.xlu0 %2944, %v2885
    %v2946 = vpop.permute.xlu0 %2945
    %2949 = vset.pattern.permute.xlu0 0
    %2950 = vperm.xlu0 %2949, %v2886
    %v2951 = vpop.permute.xlu0 %2950
    %2954 = vset.pattern.permute.xlu0 0
    %2955 = vperm.xlu0 %2954, %v2887
    %v2956 = vpop.permute.xlu0 %2955
    %2959 = vset.pattern.permute.xlu0 0
    %2960 = vperm.xlu0 %2959, %v2888
    %v2961 = vpop.permute.xlu0 %2960
    %2964 = vset.pattern.permute.xlu0 0
    %2965 = vperm.xlu0 %2964, %v2889
    %v2966 = vpop.permute.xlu0 %2965
    %2969 = vset.pattern.permute.xlu0 0
    %2970 = vperm.xlu0 %2969, %v2890
    %v2971 = vpop.permute.xlu0 %2970
    %2974 = vset.pattern.permute.xlu0 0
    %2975 = vperm.xlu0 %2974, %v2891
    %v2976 = vpop.permute.xlu0 %2975
    %2979 = vset.pattern.permute.xlu0 0
    %2980 = vperm.xlu0 %2979, %v2892
    %v2981 = vpop.permute.xlu0 %2980
    %2984 = vset.pattern.permute.xlu0 0
    %2985 = vperm.xlu0 %2984, %v2893
    %v2986 = vpop.permute.xlu0 %2985
    %2989 = vset.pattern.permute.xlu0 0
    %2990 = vperm.xlu0 %2989, %v2894
    %v2991 = vpop.permute.xlu0 %2990
    %2994 = vset.pattern.permute.xlu0 0
    %2995 = vperm.xlu0 %2994, %v2895
    %v2996 = vpop.permute.xlu0 %2995
    %2999 = vset.pattern.permute.xlu0 0
    %3000 = vperm.xlu0 %2999, %v2896
    %v3001 = vpop.permute.xlu0 %3000
    %3004 = vset.pattern.permute.xlu0 0
    %3005 = vperm.xlu0 %3004, %v2897
    %v3006 = vpop.permute.xlu0 %3005
    %3009 = vset.pattern.permute.xlu0 0
    %3010 = vperm.xlu0 %3009, %v2898
    %v3011 = vpop.permute.xlu0 %3010
    %3014 = vset.pattern.permute.xlu0 0
    %3015 = vperm.xlu0 %3014, %v2899
    %v3016 = vpop.permute.xlu0 %3015
    %3019 = vset.pattern.permute.xlu0 0
    %3020 = vperm.xlu0 %3019, %v2900
    %v3021 = vpop.permute.xlu0 %3020
    %3024 = vset.pattern.permute.xlu0 0
    %3025 = vperm.xlu0 %3024, %v2901
    %v3026 = vpop.permute.xlu0 %3025
    %3029 = vset.pattern.permute.xlu0 0
    %3030 = vperm.xlu0 %3029, %v2902
    %v3031 = vpop.permute.xlu0 %3030
    %3034 = vset.pattern.permute.xlu0 0
    %3035 = vperm.xlu0 %3034, %v2903
    %v3036 = vpop.permute.xlu0 %3035
    %3039 = vset.pattern.permute.xlu0 0
    %3040 = vperm.xlu0 %3039, %v2904
    %v3041 = vpop.permute.xlu0 %3040
    %3044 = vset.pattern.permute.xlu0 0
    %3045 = vperm.xlu0 %3044, %v2905
    %v3046 = vpop.permute.xlu0 %3045
    %3049 = vset.pattern.permute.xlu0 0
    %3050 = vperm.xlu0 %3049, %v2906
    %v3051 = vpop.permute.xlu0 %3050
    %3054 = vset.pattern.permute.xlu0 0
    %3055 = vperm.xlu0 %3054, %v2907
    %v3056 = vpop.permute.xlu0 %3055
    %v3058 = vmul.f32 %v2911, %v1954
    %v3059 = vmul.f32 %v2916, %v1954
    %v3060 = vmul.f32 %v2921, %v1954
    %v3061 = vmul.f32 %v2926, %v1954
    %v3062 = vmul.f32 %v2931, %v1954
    %v3063 = vmul.f32 %v2936, %v1954
    %v3064 = vmul.f32 %v2941, %v1954
    %v3065 = vmul.f32 %v2946, %v1954
    %v3066 = vmul.f32 %v2951, %v1954
    %v3067 = vmul.f32 %v2956, %v1954
    %v3068 = vmul.f32 %v2961, %v1954
    %v3069 = vmul.f32 %v2966, %v1954
    %v3070 = vmul.f32 %v2971, %v1954
    %v3071 = vmul.f32 %v2976, %v1954
    %v3072 = vmul.f32 %v2981, %v1954
    %v3073 = vmul.f32 %v2986, %v1954
    %v3074 = vmul.f32 %v2991, %v1954
    %v3075 = vmul.f32 %v2996, %v1954
    %v3076 = vmul.f32 %v3001, %v1954
    %v3077 = vmul.f32 %v3006, %v1954
    %v3078 = vmul.f32 %v3011, %v1954
    %v3079 = vmul.f32 %v3016, %v1954
    %v3080 = vmul.f32 %v3021, %v1954
    %v3081 = vmul.f32 %v3026, %v1954
    %v3082 = vmul.f32 %v3031, %v1954
    %v3083 = vmul.f32 %v3036, %v1954
    %v3084 = vmul.f32 %v3041, %v1954
    %v3085 = vmul.f32 %v3046, %v1954
    %v3086 = vmul.f32 %v3051, %v1954
    %v3087 = vmul.f32 %v3056, %v1954
    %v3088 = vadd.f32 %v2848, %v3058
    %v3089 = vadd.f32 %v2849, %v3059
    %v3090 = vadd.f32 %v2850, %v3060
    %v3091 = vadd.f32 %v2851, %v3061
    %v3092 = vadd.f32 %v2852, %v3062
    %v3093 = vadd.f32 %v2853, %v3063
    %v3094 = vadd.f32 %v2854, %v3064
    %v3095 = vadd.f32 %v2855, %v3065
    %v3096 = vadd.f32 %v2856, %v3066
    %v3097 = vadd.f32 %v2857, %v3067
    %v3098 = vadd.f32 %v2858, %v3068
    %v3099 = vadd.f32 %v2859, %v3069
    %v3100 = vadd.f32 %v2860, %v3070
    %v3101 = vadd.f32 %v2861, %v3071
    %v3102 = vadd.f32 %v2862, %v3072
    %v3103 = vadd.f32 %v2863, %v3073
    %v3104 = vadd.f32 %v2864, %v3074
    %v3105 = vadd.f32 %v2865, %v3075
    %v3106 = vadd.f32 %v2866, %v3076
    %v3107 = vadd.f32 %v2867, %v3077
    %v3108 = vadd.f32 %v2868, %v3078
    %v3109 = vadd.f32 %v2869, %v3079
    %v3110 = vadd.f32 %v2870, %v3080
    %v3111 = vadd.f32 %v2871, %v3081
    %v3112 = vadd.f32 %v2872, %v3082
    %v3113 = vadd.f32 %v2873, %v3083
    %v3114 = vadd.f32 %v2874, %v3084
    %v3115 = vadd.f32 %v2875, %v3085
    %v3116 = vadd.f32 %v2876, %v3086
    %v3117 = vadd.f32 %v2877, %v3087
    %v3118 = vld [vmem:[%s2637 + $0x10] sm:$0xff]
    %v3119 = vld [vmem:[%s2637 + $0x18] sm:$0xff]
    %v3120 = vld [vmem:[%s2637 + $0x20] sm:$0xff]
    %v3121 = vld [vmem:[%s2637 + $0x28] sm:$0xff]
    %v3122 = vld [vmem:[%s2637 + $0x30] sm:$0xff]
    %v3123 = vld [vmem:[%s2637 + $0x38] sm:$0xff]
    %v3124 = vld [vmem:[%s2637 + $0x40] sm:$0xff]
    %v3125 = vld [vmem:[%s2637 + $0x48] sm:$0xff]
    %v3126 = vld [vmem:[%s2637 + $0x50] sm:$0xff]
    %v3127 = vld [vmem:[%s2637 + $0x58] sm:$0xff]
    %v3128 = vld [vmem:[%s2637 + $0x60] sm:$0xff]
    %v3129 = vld [vmem:[%s2637 + $0x68] sm:$0xff]
    %v3130 = vld [vmem:[%s2637 + $0x70] sm:$0xff]
    %v3131 = vld [vmem:[%s2637 + $0x78] sm:$0xff]
    %v3132 = vld [vmem:[%s2637 + $0x80] sm:$0xff]
    %v3133 = vld [vmem:[%s2637 + $0x88] sm:$0xff]
    %v3134 = vld [vmem:[%s2637 + $0x90] sm:$0xff]
    %v3135 = vld [vmem:[%s2637 + $0x98] sm:$0xff]
    %v3136 = vld [vmem:[%s2637 + $0xa0] sm:$0xff]
    %v3137 = vld [vmem:[%s2637 + $0xa8] sm:$0xff]
    %v3138 = vld [vmem:[%s2637 + $0xb0] sm:$0xff]
    %v3139 = vld [vmem:[%s2637 + $0xb8] sm:$0xff]
    %v3140 = vld [vmem:[%s2637 + $0xc0] sm:$0xff]
    %v3141 = vld [vmem:[%s2637 + $0xc8] sm:$0xff]
    %v3142 = vld [vmem:[%s2637 + $0xd0] sm:$0xff]
    %v3143 = vld [vmem:[%s2637 + $0xd8] sm:$0xff]
    %v3144 = vld [vmem:[%s2637 + $0xe0] sm:$0xff]
    %v3145 = vld [vmem:[%s2637 + $0xe8] sm:$0xff]
    %v3146 = vld [vmem:[%s2637 + $0xf0] sm:$0xff]
    %v3147 = vld [vmem:[%s2637 + $0xf8] sm:$0xff]
    %3149 = vset.pattern.permute.xlu0 0
    %3150 = vperm.xlu0 %3149, %v3118
    %v3151 = vpop.permute.xlu0 %3150
    %3154 = vset.pattern.permute.xlu0 0
    %3155 = vperm.xlu0 %3154, %v3119
    %v3156 = vpop.permute.xlu0 %3155
    %3159 = vset.pattern.permute.xlu0 0
    %3160 = vperm.xlu0 %3159, %v3120
    %v3161 = vpop.permute.xlu0 %3160
    %3164 = vset.pattern.permute.xlu0 0
    %3165 = vperm.xlu0 %3164, %v3121
    %v3166 = vpop.permute.xlu0 %3165
    %3169 = vset.pattern.permute.xlu0 0
    %3170 = vperm.xlu0 %3169, %v3122
    %v3171 = vpop.permute.xlu0 %3170
    %3174 = vset.pattern.permute.xlu0 0
    %3175 = vperm.xlu0 %3174, %v3123
    %v3176 = vpop.permute.xlu0 %3175
    %3179 = vset.pattern.permute.xlu0 0
    %3180 = vperm.xlu0 %3179, %v3124
    %v3181 = vpop.permute.xlu0 %3180
    %3184 = vset.pattern.permute.xlu0 0
    %3185 = vperm.xlu0 %3184, %v3125
    %v3186 = vpop.permute.xlu0 %3185
    %3189 = vset.pattern.permute.xlu0 0
    %3190 = vperm.xlu0 %3189, %v3126
    %v3191 = vpop.permute.xlu0 %3190
    %3194 = vset.pattern.permute.xlu0 0
    %3195 = vperm.xlu0 %3194, %v3127
    %v3196 = vpop.permute.xlu0 %3195
    %3199 = vset.pattern.permute.xlu0 0
    %3200 = vperm.xlu0 %3199, %v3128
    %v3201 = vpop.permute.xlu0 %3200
    %3204 = vset.pattern.permute.xlu0 0
    %3205 = vperm.xlu0 %3204, %v3129
    %v3206 = vpop.permute.xlu0 %3205
    %3209 = vset.pattern.permute.xlu0 0
    %3210 = vperm.xlu0 %3209, %v3130
    %v3211 = vpop.permute.xlu0 %3210
    %3214 = vset.pattern.permute.xlu0 0
    %3215 = vperm.xlu0 %3214, %v3131
    %v3216 = vpop.permute.xlu0 %3215
    %3219 = vset.pattern.permute.xlu0 0
    %3220 = vperm.xlu0 %3219, %v3132
    %v3221 = vpop.permute.xlu0 %3220
    %3224 = vset.pattern.permute.xlu0 0
    %3225 = vperm.xlu0 %3224, %v3133
    %v3226 = vpop.permute.xlu0 %3225
    %3229 = vset.pattern.permute.xlu0 0
    %3230 = vperm.xlu0 %3229, %v3134
    %v3231 = vpop.permute.xlu0 %3230
    %3234 = vset.pattern.permute.xlu0 0
    %3235 = vperm.xlu0 %3234, %v3135
    %v3236 = vpop.permute.xlu0 %3235
    %3239 = vset.pattern.permute.xlu0 0
    %3240 = vperm.xlu0 %3239, %v3136
    %v3241 = vpop.permute.xlu0 %3240
    %3244 = vset.pattern.permute.xlu0 0
    %3245 = vperm.xlu0 %3244, %v3137
    %v3246 = vpop.permute.xlu0 %3245
    %3249 = vset.pattern.permute.xlu0 0
    %3250 = vperm.xlu0 %3249, %v3138
    %v3251 = vpop.permute.xlu0 %3250
    %3254 = vset.pattern.permute.xlu0 0
    %3255 = vperm.xlu0 %3254, %v3139
    %v3256 = vpop.permute.xlu0 %3255
    %3259 = vset.pattern.permute.xlu0 0
    %3260 = vperm.xlu0 %3259, %v3140
    %v3261 = vpop.permute.xlu0 %3260
    %3264 = vset.pattern.permute.xlu0 0
    %3265 = vperm.xlu0 %3264, %v3141
    %v3266 = vpop.permute.xlu0 %3265
    %3269 = vset.pattern.permute.xlu0 0
    %3270 = vperm.xlu0 %3269, %v3142
    %v3271 = vpop.permute.xlu0 %3270
    %3274 = vset.pattern.permute.xlu0 0
    %3275 = vperm.xlu0 %3274, %v3143
    %v3276 = vpop.permute.xlu0 %3275
    %3279 = vset.pattern.permute.xlu0 0
    %3280 = vperm.xlu0 %3279, %v3144
    %v3281 = vpop.permute.xlu0 %3280
    %3284 = vset.pattern.permute.xlu0 0
    %3285 = vperm.xlu0 %3284, %v3145
    %v3286 = vpop.permute.xlu0 %3285
    %3289 = vset.pattern.permute.xlu0 0
    %3290 = vperm.xlu0 %3289, %v3146
    %v3291 = vpop.permute.xlu0 %3290
    %3294 = vset.pattern.permute.xlu0 0
    %3295 = vperm.xlu0 %3294, %v3147
    %v3296 = vpop.permute.xlu0 %3295
    %v3298 = vmul.f32 %v3151, %v2199
    %v3299 = vmul.f32 %v3156, %v2199
    %v3300 = vmul.f32 %v3161, %v2199
    %v3301 = vmul.f32 %v3166, %v2199
    %v3302 = vmul.f32 %v3171, %v2199
    %v3303 = vmul.f32 %v3176, %v2199
    %v3304 = vmul.f32 %v3181, %v2199
    %v3305 = vmul.f32 %v3186, %v2199
    %v3306 = vmul.f32 %v3191, %v2199
    %v3307 = vmul.f32 %v3196, %v2199
    %v3308 = vmul.f32 %v3201, %v2199
    %v3309 = vmul.f32 %v3206, %v2199
    %v3310 = vmul.f32 %v3211, %v2199
    %v3311 = vmul.f32 %v3216, %v2199
    %v3312 = vmul.f32 %v3221, %v2199
    %v3313 = vmul.f32 %v3226, %v2199
    %v3314 = vmul.f32 %v3231, %v2199
    %v3315 = vmul.f32 %v3236, %v2199
    %v3316 = vmul.f32 %v3241, %v2199
    %v3317 = vmul.f32 %v3246, %v2199
    %v3318 = vmul.f32 %v3251, %v2199
    %v3319 = vmul.f32 %v3256, %v2199
    %v3320 = vmul.f32 %v3261, %v2199
    %v3321 = vmul.f32 %v3266, %v2199
    %v3322 = vmul.f32 %v3271, %v2199
    %v3323 = vmul.f32 %v3276, %v2199
    %v3324 = vmul.f32 %v3281, %v2199
    %v3325 = vmul.f32 %v3286, %v2199
    %v3326 = vmul.f32 %v3291, %v2199
    %v3327 = vmul.f32 %v3296, %v2199
    %v3328 = vadd.f32 %v3088, %v3298
    %v3329 = vadd.f32 %v3089, %v3299
    %v3330 = vadd.f32 %v3090, %v3300
    %v3331 = vadd.f32 %v3091, %v3301
    %v3332 = vadd.f32 %v3092, %v3302
    %v3333 = vadd.f32 %v3093, %v3303
    %v3334 = vadd.f32 %v3094, %v3304
    %v3335 = vadd.f32 %v3095, %v3305
    %v3336 = vadd.f32 %v3096, %v3306
    %v3337 = vadd.f32 %v3097, %v3307
    %v3338 = vadd.f32 %v3098, %v3308
    %v3339 = vadd.f32 %v3099, %v3309
    %v3340 = vadd.f32 %v3100, %v3310
    %v3341 = vadd.f32 %v3101, %v3311
    %v3342 = vadd.f32 %v3102, %v3312
    %v3343 = vadd.f32 %v3103, %v3313
    %v3344 = vadd.f32 %v3104, %v3314
    %v3345 = vadd.f32 %v3105, %v3315
    %v3346 = vadd.f32 %v3106, %v3316
    %v3347 = vadd.f32 %v3107, %v3317
    %v3348 = vadd.f32 %v3108, %v3318
    %v3349 = vadd.f32 %v3109, %v3319
    %v3350 = vadd.f32 %v3110, %v3320
    %v3351 = vadd.f32 %v3111, %v3321
    %v3352 = vadd.f32 %v3112, %v3322
    %v3353 = vadd.f32 %v3113, %v3323
    %v3354 = vadd.f32 %v3114, %v3324
    %v3355 = vadd.f32 %v3115, %v3325
    %v3356 = vadd.f32 %v3116, %v3326
    %v3357 = vadd.f32 %v3117, %v3327
    %v3358 = vmax.f32 %v3328, %v3329
    %v3359 = vmax.f32 %v2260, %v3358
    %v3361 = vlaneseq
    %v3362 = vshrl.u32 %v3361, 7
    %v3363 = vsub.s32 0, %v3362
    %v3364 = vrot.slane %v38, %v3363
    %v3366 = vadd.f32 %v3359, %v3364
    %v3367 = vmax.f32 %v3366, 0.0
    %s3368 = smul.u32 %s41, 120
    %s3369 = scalar_lea.vmem [#allocation2], %s3368
    %3370 = vst [vmem:[%s3369] sm:$0xff] %v3367
    %v3371 = vmax.f32 %v3330, %v3331
    %v3372 = vmax.f32 %v2261, %v3371
    %v3373 = vadd.f32 %v3372, %v3364
    %v3374 = vmax.f32 %v3373, 0.0
    %3375 = vst [vmem:[%s3369 + $0x8] sm:$0xff] %v3374
    %v3376 = vmax.f32 %v3332, %v3333
    %v3377 = vmax.f32 %v2262, %v3376
    %v3378 = vadd.f32 %v3377, %v3364
    %v3379 = vmax.f32 %v3378, 0.0
    %3380 = vst [vmem:[%s3369 + $0x10] sm:$0xff] %v3379
    %v3381 = vmax.f32 %v3334, %v3335
    %v3382 = vmax.f32 %v2263, %v3381
    %v3383 = vadd.f32 %v3382, %v3364
    %v3384 = vmax.f32 %v3383, 0.0
    %3385 = vst [vmem:[%s3369 + $0x18] sm:$0xff] %v3384
    %v3386 = vmax.f32 %v3336, %v3337
    %v3387 = vmax.f32 %v2264, %v3386
    %v3388 = vadd.f32 %v3387, %v3364
    %v3389 = vmax.f32 %v3388, 0.0
    %3390 = vst [vmem:[%s3369 + $0x20] sm:$0xff] %v3389
    %v3391 = vmax.f32 %v3338, %v3339
    %v3392 = vmax.f32 %v2265, %v3391
    %v3393 = vadd.f32 %v3392, %v3364
    %v3394 = vmax.f32 %v3393, 0.0
    %3395 = vst [vmem:[%s3369 + $0x28] sm:$0xff] %v3394
    %v3396 = vmax.f32 %v3340, %v3341
    %v3397 = vmax.f32 %v2266, %v3396
    %v3398 = vadd.f32 %v3397, %v3364
    %v3399 = vmax.f32 %v3398, 0.0
    %3400 = vst [vmem:[%s3369 + $0x30] sm:$0xff] %v3399
    %v3401 = vmax.f32 %v3342, %v3343
    %v3402 = vmax.f32 %v2267, %v3401
    %v3403 = vadd.f32 %v3402, %v3364
    %v3404 = vmax.f32 %v3403, 0.0
    %3405 = vst [vmem:[%s3369 + $0x38] sm:$0xff] %v3404
    %v3406 = vmax.f32 %v3344, %v3345
    %v3407 = vmax.f32 %v2268, %v3406
    %v3408 = vadd.f32 %v3407, %v3364
    %v3409 = vmax.f32 %v3408, 0.0
    %3410 = vst [vmem:[%s3369 + $0x40] sm:$0xff] %v3409
    %v3411 = vmax.f32 %v3346, %v3347
    %v3412 = vmax.f32 %v2269, %v3411
    %v3413 = vadd.f32 %v3412, %v3364
    %v3414 = vmax.f32 %v3413, 0.0
    %3415 = vst [vmem:[%s3369 + $0x48] sm:$0xff] %v3414
    %v3416 = vmax.f32 %v3348, %v3349
    %v3417 = vmax.f32 %v2270, %v3416
    %v3418 = vadd.f32 %v3417, %v3364
    %v3419 = vmax.f32 %v3418, 0.0
    %3420 = vst [vmem:[%s3369 + $0x50] sm:$0xff] %v3419
    %v3421 = vmax.f32 %v3350, %v3351
    %v3422 = vmax.f32 %v2271, %v3421
    %v3423 = vadd.f32 %v3422, %v3364
    %v3424 = vmax.f32 %v3423, 0.0
    %3425 = vst [vmem:[%s3369 + $0x58] sm:$0xff] %v3424
    %v3426 = vmax.f32 %v3352, %v3353
    %v3427 = vmax.f32 %v2272, %v3426
    %v3428 = vadd.f32 %v3427, %v3364
    %v3429 = vmax.f32 %v3428, 0.0
    %3430 = vst [vmem:[%s3369 + $0x60] sm:$0xff] %v3429
    %v3431 = vmax.f32 %v3354, %v3355
    %v3432 = vmax.f32 %v2273, %v3431
    %v3433 = vadd.f32 %v3432, %v3364
    %v3434 = vmax.f32 %v3433, 0.0
    %3435 = vst [vmem:[%s3369 + $0x68] sm:$0xff] %v3434
    %v3436 = vmax.f32 %v3356, %v3357
    %v3437 = vmax.f32 %v2274, %v3436
    %v3438 = vadd.f32 %v3437, %v3364
    %v3439 = vmax.f32 %v3438, 0.0
    %3440 = vst [vmem:[%s3369 + $0x70] sm:$0xff] %v3439
  $region50: #{lenet_forward.1} parent=0 // loop_footer
    %s45 = sadd.s32 1, %s41
  $region51: #{lenet_forward.1} parent=0 // loop_footer_branch
    %40 = sbr.rel target = $region47
  $region52: #{lenet_forward.1} parent=0 // loop_exit
    _
  loop: start=0, step=1, limit=6
  $region53: #{lenet_forward.1} parent=0 // loop_pre_header
    _
  $region54: #{lenet_forward.1} parent=0 // loop_header
    %s3442 = sphi 0, %s3446
    %p3443 = scmp.ge.s32.totalorder %s3442, 6
    %v3447 = vphi 0.0, %v6821
  $region55: #{lenet_forward.1} parent=0 // loop_header_branch
    %3445 = sbr.rel (%p3443) target = $region59
  $region56: #{lenet_forward.1} parent=0 // loop_body
    %s3448 = smul.u32 %s3442, 2
    %s3449 = smul.u32 %s3448, 120
    %s3450 = scalar_lea.vmem [#allocation2], %s3449
    %v3451 = vld [vmem:[%s3450] sm:$0xff]
    %v3452 = vld [vmem:[%s3450 + $0x8] sm:$0xff]
    %v3453 = vld [vmem:[%s3450 + $0x10] sm:$0xff]
    %v3454 = vld [vmem:[%s3450 + $0x18] sm:$0xff]
    %v3455 = vld [vmem:[%s3450 + $0x20] sm:$0xff]
    %v3456 = vld [vmem:[%s3450 + $0x28] sm:$0xff]
    %v3457 = vld [vmem:[%s3450 + $0x30] sm:$0xff]
    %v3458 = vld [vmem:[%s3450 + $0x38] sm:$0xff]
    %v3459 = vld [vmem:[%s3450 + $0x40] sm:$0xff]
    %v3460 = vld [vmem:[%s3450 + $0x48] sm:$0xff]
    %v3461 = vld [vmem:[%s3450 + $0x50] sm:$0xff]
    %v3462 = vld [vmem:[%s3450 + $0x58] sm:$0xff]
    %v3463 = vld [vmem:[%s3450 + $0x60] sm:$0xff]
    %v3464 = vld [vmem:[%s3] sm:$0xff]
    %v3465 = vld [vmem:[%s3 + $0x8] sm:$0xff]
    %v3466 = vld [vmem:[%s3 + $0x10] sm:$0xff]
    %v3467 = vld [vmem:[%s3 + $0x18] sm:$0xff]
    %v3468 = vld [vmem:[%s3 + $0x20] sm:$0xff]
    %v3469 = vld [vmem:[%s3 + $0x28] sm:$0xff]
    %v3470 = vld [vmem:[%s3 + $0x30] sm:$0xff]
    %v3471 = vld [vmem:[%s3 + $0x38] sm:$0xff]
    %v3472 = vld [vmem:[%s3 + $0x40] sm:$0xff]
    %v3473 = vld [vmem:[%s3 + $0x48] sm:$0xff]
    %v3474 = vld [vmem:[%s3 + $0x50] sm:$0xff]
    %v3475 = vld [vmem:[%s3 + $0x58] sm:$0xff]
    %v3476 = vld [vmem:[%s3 + $0x60] sm:$0xff]
    %v3477 = vld [vmem:[%s3 + $0x68] sm:$0xff]
    %v3478 = vld [vmem:[%s3 + $0x70] sm:$0xff]
    %v3479 = vld [vmem:[%s3 + $0x78] sm:$0xff]
    %v3480 = vld [vmem:[%s3450 + $0x68] sm:$0xff]
    %s3481 = scalar_lea.vmem %s3, 128
    %v3482 = vld [vmem:[%s3481] sm:$0xff]
    %v3483 = vld [vmem:[%s3481 + $0x8] sm:$0xff]
    %v3484 = vld [vmem:[%s3481 + $0x10] sm:$0xff]
    %v3485 = vld [vmem:[%s3481 + $0x18] sm:$0xff]
    %v3486 = vld [vmem:[%s3481 + $0x20] sm:$0xff]
    %v3487 = vld [vmem:[%s3481 + $0x28] sm:$0xff]
    %v3488 = vld [vmem:[%s3481 + $0x30] sm:$0xff]
    %v3489 = vld [vmem:[%s3481 + $0x38] sm:$0xff]
    %v3490 = vld [vmem:[%s3481 + $0x40] sm:$0xff]
    %v3491 = vld [vmem:[%s3481 + $0x48] sm:$0xff]
    %v3492 = vld [vmem:[%s3481 + $0x50] sm:$0xff]
    %v3493 = vld [vmem:[%s3481 + $0x58] sm:$0xff]
    %v3494 = vld [vmem:[%s3481 + $0x60] sm:$0xff]
    %v3495 = vld [vmem:[%s3481 + $0x68] sm:$0xff]
    %v3496 = vld [vmem:[%s3481 + $0x70] sm:$0xff]
    %v3497 = vld [vmem:[%s3481 + $0x78] sm:$0xff]
    %3498 = vmatprep.subr.mxu0 0.0
    %3499 = vmatpush1.msra.mxu0 %v3482
    %3500 = vmatprep.subr.mxu0 0.0
    %3501 = vmatpush1.msra.mxu0 %v3483
    %3502 = vmatprep.subr.mxu0 0.0
    %3503 = vmatpush1.msra.mxu0 %v3484
    %3504 = vmatprep.subr.mxu0 0.0
    %3505 = vmatpush1.msra.mxu0 %v3485
    %3506 = vmatprep.subr.mxu0 0.0
    %3507 = vmatpush1.msra.mxu0 %v3486
    %3508 = vmatprep.subr.mxu0 0.0
    %3509 = vmatpush1.msra.mxu0 %v3487
    %3510 = vmatprep.subr.mxu0 0.0
    %3511 = vmatpush1.msra.mxu0 %v3488
    %3512 = vmatprep.subr.mxu0 0.0
    %3513 = vmatpush1.msra.mxu0 %v3489
    %3514 = vmatprep.subr.mxu0 0.0
    %3515 = vmatpush1.msra.mxu0 %v3490
    %3516 = vmatprep.subr.mxu0 0.0
    %3517 = vmatpush1.msra.mxu0 %v3491
    %3518 = vmatprep.subr.mxu0 0.0
    %3519 = vmatpush1.msra.mxu0 %v3492
    %3520 = vmatprep.subr.mxu0 0.0
    %3521 = vmatpush1.msra.mxu0 %v3493
    %3522 = vmatprep.subr.mxu0 0.0
    %3523 = vmatpush1.msra.mxu0 %v3494
    %3524 = vmatprep.subr.mxu0 0.0
    %3525 = vmatpush1.msra.mxu0 %v3495
    %3526 = vmatprep.subr.mxu0 0.0
    %3527 = vmatpush1.msra.mxu0 %v3496
    %3528 = vmatprep.subr.mxu0 0.0
    %3529 = vmatpush1.msra.mxu0 %v3497
    %3530 = vmatprep.subr.mxu0 0.0
    %3531 = vmatpush1.msra.mxu0 0.0
    %3532 = vmatprep.subr.mxu0 0.0
    %3533 = vmatpush1.msra.mxu0 0.0
    %3534 = vmatprep.subr.mxu0 0.0
    %3535 = vmatpush1.msra.mxu0 0.0
    %3536 = vmatprep.subr.mxu0 0.0
    %3537 = vmatpush1.msra.mxu0 0.0
    %3538 = vmatprep.subr.mxu0 0.0
    %3539 = vmatpush1.msra.mxu0 0.0
    %3540 = vmatprep.subr.mxu0 0.0
    %3541 = vmatpush1.msra.mxu0 0.0
    %3542 = vmatprep.subr.mxu0 0.0
    %3543 = vmatpush1.msra.mxu0 0.0
    %3544 = vmatprep.subr.mxu0 0.0
    %3545 = vmatpush1.msra.mxu0 0.0
    %3546 = vmatprep.subr.mxu0 0.0
    %3547 = vmatpush1.msra.mxu0 0.0
    %3548 = vmatprep.subr.mxu0 0.0
    %3549 = vmatpush1.msra.mxu0 0.0
    %3550 = vmatprep.subr.mxu0 0.0
    %3551 = vmatpush1.msra.mxu0 0.0
    %3552 = vmatprep.subr.mxu0 0.0
    %3553 = vmatpush1.msra.mxu0 0.0
    %3554 = vmatprep.subr.mxu0 0.0
    %3555 = vmatpush1.msra.mxu0 0.0
    %3556 = vmatprep.subr.mxu0 0.0
    %3557 = vmatpush1.msra.mxu0 0.0
    %3558 = vmatprep.subr.mxu0 0.0
    %3559 = vmatpush1.msra.mxu0 0.0
    %3560 = vmatprep.subr.mxu0 0.0
    %3561 = vmatpush1.msra.mxu0 0.0
    %3562 = vmatprep.mubr.f32.mxu0 0.0
    %3563 = vmatmul.mubr.f32.gmra.mrb[0].mxu0 %v3452
    %v3564 = vpop.f32.mrb[0].mxu0
    %v3565 = vadd.f32 0.0, %v3564
    %v3566 = vpop.f32.mrb[0].mxu0
    %3567 = vmatprep.mubr.f32.mxu0 0.0
    %3568 = vmatmul.mubr.f32.gmra.mrb[0].mxu0 %v3453
    %v3569 = vpop.f32.mrb[0].mxu0
    %v3570 = vadd.f32 0.0, %v3569
    %v3571 = vpop.f32.mrb[0].mxu0
    %3572 = vmatprep.mubr.f32.mxu0 0.0
    %3573 = vmatmul.mubr.f32.gmra.mrb[0].mxu0 %v3454
    %v3574 = vpop.f32.mrb[0].mxu0
    %v3575 = vadd.f32 0.0, %v3574
    %v3576 = vpop.f32.mrb[0].mxu0
    %3577 = vmatprep.mubr.f32.mxu0 0.0
    %3578 = vmatmul.mubr.f32.gmra.mrb[0].mxu0 %v3455
    %v3579 = vpop.f32.mrb[0].mxu0
    %v3580 = vadd.f32 0.0, %v3579
    %v3581 = vpop.f32.mrb[0].mxu0
    %3582 = vmatprep.mubr.f32.mxu0 0.0
    %3583 = vmatmul.mubr.f32.gmra.mrb[0].mxu0 %v3456
    %v3584 = vpop.f32.mrb[0].mxu0
    %v3585 = vadd.f32 0.0, %v3584
    %v3586 = vpop.f32.mrb[0].mxu0
    %3587 = vmatprep.mubr.f32.mxu0 0.0
    %3588 = vmatmul.mubr.f32.gmra.mrb[0].mxu0 %v3457
    %v3589 = vpop.f32.mrb[0].mxu0
    %v3590 = vadd.f32 0.0, %v3589
    %v3591 = vpop.f32.mrb[0].mxu0
    %3592 = vmatprep.mubr.f32.mxu0 0.0
    %3593 = vmatmul.mubr.f32.gmra.mrb[0].mxu0 %v3458
    %v3594 = vpop.f32.mrb[0].mxu0
    %v3595 = vadd.f32 0.0, %v3594
    %v3596 = vpop.f32.mrb[0].mxu0
    %3597 = vmatprep.mubr.f32.mxu0 0.0
    %3598 = vmatmul.mubr.f32.gmra.mrb[0].mxu0 %v3459
    %v3599 = vpop.f32.mrb[0].mxu0
    %v3600 = vadd.f32 0.0, %v3599
    %v3601 = vpop.f32.mrb[0].mxu0
    %3602 = vmatprep.mubr.f32.mxu0 0.0
    %3603 = vmatmul.mubr.f32.gmra.mrb[0].mxu0 %v3460
    %v3604 = vpop.f32.mrb[0].mxu0
    %v3605 = vadd.f32 0.0, %v3604
    %v3606 = vpop.f32.mrb[0].mxu0
    %3607 = vmatprep.mubr.f32.mxu0 0.0
    %3608 = vmatmul.mubr.f32.gmra.mrb[0].mxu0 %v3461
    %v3609 = vpop.f32.mrb[0].mxu0
    %v3610 = vadd.f32 0.0, %v3609
    %v3611 = vpop.f32.mrb[0].mxu0
    %3612 = vmatprep.mubr.f32.mxu0 0.0
    %3613 = vmatmul.mubr.f32.gmra.mrb[0].mxu0 %v3462
    %v3614 = vpop.f32.mrb[0].mxu0
    %v3615 = vadd.f32 0.0, %v3614
    %v3616 = vpop.f32.mrb[0].mxu0
    %3617 = vmatprep.mubr.f32.mxu0 0.0
    %3618 = vmatmul.mubr.f32.gmra.mrb[0].mxu0 %v3463
    %v3619 = vpop.f32.mrb[0].mxu0
    %v3620 = vadd.f32 0.0, %v3619
    %v3621 = vpop.f32.mrb[0].mxu0
    %3622 = vmatprep.mubr.f32.mxu0 0.0
    %3623 = vmatmul.mubr.f32.gmra.mrb[0].mxu0 %v3480
    %v3624 = vpop.f32.mrb[0].mxu0
    %v3625 = vpop.f32.mrb[0].mxu0
    %3626 = vdwg.mxu0
    %3627 = vmatprep.subr.mxu0 0.0
    %3628 = vmatpush1.msra.mxu0 %v3464
    %3629 = vmatprep.subr.mxu0 0.0
    %3630 = vmatpush1.msra.mxu0 %v3465
    %3631 = vmatprep.subr.mxu0 0.0
    %3632 = vmatpush1.msra.mxu0 %v3466
    %3633 = vmatprep.subr.mxu0 0.0
    %3634 = vmatpush1.msra.mxu0 %v3467
    %3635 = vmatprep.subr.mxu0 0.0
    %3636 = vmatpush1.msra.mxu0 %v3468
    %3637 = vmatprep.subr.mxu0 0.0
    %3638 = vmatpush1.msra.mxu0 %v3469
    %3639 = vmatprep.subr.mxu0 0.0
    %3640 = vmatpush1.msra.mxu0 %v3470
    %3641 = vmatprep.subr.mxu0 0.0
    %3642 = vmatpush1.msra.mxu0 %v3471
    %3643 = vmatprep.subr.mxu0 0.0
    %3644 = vmatpush1.msra.mxu0 %v3472
    %3645 = vmatprep.subr.mxu0 0.0
    %3646 = vmatpush1.msra.mxu0 %v3473
    %3647 = vmatprep.subr.mxu0 0.0
    %3648 = vmatpush1.msra.mxu0 %v3474
    %3649 = vmatprep.subr.mxu0 0.0
    %3650 = vmatpush1.msra.mxu0 %v3475
    %3651 = vmatprep.subr.mxu0 0.0
    %3652 = vmatpush1.msra.mxu0 %v3476
    %3653 = vmatprep.subr.mxu0 0.0
    %3654 = vmatpush1.msra.mxu0 %v3477
    %3655 = vmatprep.subr.mxu0 0.0
    %3656 = vmatpush1.msra.mxu0 %v3478
    %3657 = vmatprep.subr.mxu0 0.0
    %3658 = vmatpush1.msra.mxu0 %v3479
    %3659 = vmatprep.subr.mxu0 0.0
    %3660 = vmatpush1.msra.mxu0 0.0
    %3661 = vmatprep.subr.mxu0 0.0
    %3662 = vmatpush1.msra.mxu0 0.0
    %3663 = vmatprep.subr.mxu0 0.0
    %3664 = vmatpush1.msra.mxu0 0.0
    %3665 = vmatprep.subr.mxu0 0.0
    %3666 = vmatpush1.msra.mxu0 0.0
    %3667 = vmatprep.subr.mxu0 0.0
    %3668 = vmatpush1.msra.mxu0 0.0
    %3669 = vmatprep.subr.mxu0 0.0
    %3670 = vmatpush1.msra.mxu0 0.0
    %3671 = vmatprep.subr.mxu0 0.0
    %3672 = vmatpush1.msra.mxu0 0.0
    %3673 = vmatprep.subr.mxu0 0.0
    %3674 = vmatpush1.msra.mxu0 0.0
    %3675 = vmatprep.subr.mxu0 0.0
    %3676 = vmatpush1.msra.mxu0 0.0
    %3677 = vmatprep.subr.mxu0 0.0
    %3678 = vmatpush1.msra.mxu0 0.0
    %3679 = vmatprep.subr.mxu0 0.0
    %3680 = vmatpush1.msra.mxu0 0.0
    %3681 = vmatprep.subr.mxu0 0.0
    %3682 = vmatpush1.msra.mxu0 0.0
    %3683 = vmatprep.subr.mxu0 0.0
    %3684 = vmatpush1.msra.mxu0 0.0
    %3685 = vmatprep.subr.mxu0 0.0
    %3686 = vmatpush1.msra.mxu0 0.0
    %3687 = vmatprep.subr.mxu0 0.0
    %3688 = vmatpush1.msra.mxu0 0.0
    %3689 = vmatprep.subr.mxu0 0.0
    %3690 = vmatpush1.msra.mxu0 0.0
    %3691 = vmatprep.mubr.f32.mxu0 0.0
    %3692 = vmatmul.mubr.f32.gmra.mrb[0].mxu0 %v3451
    %v3693 = vpop.f32.mrb[0].mxu0
    %v3694 = vadd.f32 %v3565, %v3693
    %v3695 = vpop.f32.mrb[0].mxu0
    %3696 = vmatprep.mubr.f32.mxu0 0.0
    %3697 = vmatmul.mubr.f32.gmra.mrb[0].mxu0 %v3452
    %v3698 = vpop.f32.mrb[0].mxu0
    %v3699 = vadd.f32 %v3570, %v3698
    %v3700 = vpop.f32.mrb[0].mxu0
    %3701 = vmatprep.mubr.f32.mxu0 0.0
    %3702 = vmatmul.mubr.f32.gmra.mrb[0].mxu0 %v3453
    %v3703 = vpop.f32.mrb[0].mxu0
    %v3704 = vadd.f32 %v3575, %v3703
    %v3705 = vpop.f32.mrb[0].mxu0
    %3706 = vmatprep.mubr.f32.mxu0 0.0
    %3707 = vmatmul.mubr.f32.gmra.mrb[0].mxu0 %v3454
    %v3708 = vpop.f32.mrb[0].mxu0
    %v3709 = vadd.f32 %v3580, %v3708
    %v3710 = vpop.f32.mrb[0].mxu0
    %3711 = vmatprep.mubr.f32.mxu0 0.0
    %3712 = vmatmul.mubr.f32.gmra.mrb[0].mxu0 %v3455
    %v3713 = vpop.f32.mrb[0].mxu0
    %v3714 = vadd.f32 %v3585, %v3713
    %v3715 = vpop.f32.mrb[0].mxu0
    %3716 = vmatprep.mubr.f32.mxu0 0.0
    %3717 = vmatmul.mubr.f32.gmra.mrb[0].mxu0 %v3456
    %v3718 = vpop.f32.mrb[0].mxu0
    %v3719 = vadd.f32 %v3590, %v3718
    %v3720 = vpop.f32.mrb[0].mxu0
    %3721 = vmatprep.mubr.f32.mxu0 0.0
    %3722 = vmatmul.mubr.f32.gmra.mrb[0].mxu0 %v3457
    %v3723 = vpop.f32.mrb[0].mxu0
    %v3724 = vadd.f32 %v3595, %v3723
    %v3725 = vpop.f32.mrb[0].mxu0
    %3726 = vmatprep.mubr.f32.mxu0 0.0
    %3727 = vmatmul.mubr.f32.gmra.mrb[0].mxu0 %v3458
    %v3728 = vpop.f32.mrb[0].mxu0
    %v3729 = vadd.f32 %v3600, %v3728
    %v3730 = vpop.f32.mrb[0].mxu0
    %3731 = vmatprep.mubr.f32.mxu0 0.0
    %3732 = vmatmul.mubr.f32.gmra.mrb[0].mxu0 %v3459
    %v3733 = vpop.f32.mrb[0].mxu0
    %v3734 = vadd.f32 %v3605, %v3733
    %v3735 = vpop.f32.mrb[0].mxu0
    %3736 = vmatprep.mubr.f32.mxu0 0.0
    %3737 = vmatmul.mubr.f32.gmra.mrb[0].mxu0 %v3460
    %v3738 = vpop.f32.mrb[0].mxu0
    %v3739 = vadd.f32 %v3610, %v3738
    %v3740 = vpop.f32.mrb[0].mxu0
    %3741 = vmatprep.mubr.f32.mxu0 0.0
    %3742 = vmatmul.mubr.f32.gmra.mrb[0].mxu0 %v3461
    %v3743 = vpop.f32.mrb[0].mxu0
    %v3744 = vadd.f32 %v3615, %v3743
    %v3745 = vpop.f32.mrb[0].mxu0
    %3746 = vmatprep.mubr.f32.mxu0 0.0
    %3747 = vmatmul.mubr.f32.gmra.mrb[0].mxu0 %v3462
    %v3748 = vpop.f32.mrb[0].mxu0
    %v3749 = vadd.f32 %v3620, %v3748
    %v3750 = vpop.f32.mrb[0].mxu0
    %3751 = vmatprep.mubr.f32.mxu0 0.0
    %3752 = vmatmul.mubr.f32.gmra.mrb[0].mxu0 %v3463
    %v3753 = vpop.f32.mrb[0].mxu0
    %v3754 = vpop.f32.mrb[0].mxu0
    %3755 = vdwg.mxu0
    %v3756 = vld [vmem:[%s3450 + $0x10] sm:$0xff]
    %v3757 = vld [vmem:[%s3450 + $0x18] sm:$0xff]
    %v3758 = vld [vmem:[%s3450 + $0x20] sm:$0xff]
    %v3759 = vld [vmem:[%s3450 + $0x28] sm:$0xff]
    %v3760 = vld [vmem:[%s3450 + $0x30] sm:$0xff]
    %v3761 = vld [vmem:[%s3450 + $0x38] sm:$0xff]
    %v3762 = vld [vmem:[%s3450 + $0x40] sm:$0xff]
    %v3763 = vld [vmem:[%s3450 + $0x48] sm:$0xff]
    %v3764 = vld [vmem:[%s3450 + $0x50] sm:$0xff]
    %v3765 = vld [vmem:[%s3450 + $0x58] sm:$0xff]
    %v3766 = vld [vmem:[%s3450 + $0x60] sm:$0xff]
    %v3767 = vld [vmem:[%s3450 + $0x68] sm:$0xff]
    %v3768 = vld [vmem:[%s3450 + $0x70] sm:$0xff]
    %s3769 = scalar_lea.vmem %s3, 256
    %v3770 = vld [vmem:[%s3769] sm:$0xff]
    %v3771 = vld [vmem:[%s3769 + $0x8] sm:$0xff]
    %v3772 = vld [vmem:[%s3769 + $0x10] sm:$0xff]
    %v3773 = vld [vmem:[%s3769 + $0x18] sm:$0xff]
    %v3774 = vld [vmem:[%s3769 + $0x20] sm:$0xff]
    %v3775 = vld [vmem:[%s3769 + $0x28] sm:$0xff]
    %v3776 = vld [vmem:[%s3769 + $0x30] sm:$0xff]
    %v3777 = vld [vmem:[%s3769 + $0x38] sm:$0xff]
    %v3778 = vld [vmem:[%s3769 + $0x40] sm:$0xff]
    %v3779 = vld [vmem:[%s3769 + $0x48] sm:$0xff]
    %v3780 = vld [vmem:[%s3769 + $0x50] sm:$0xff]
    %v3781 = vld [vmem:[%s3769 + $0x58] sm:$0xff]
    %v3782 = vld [vmem:[%s3769 + $0x60] sm:$0xff]
    %v3783 = vld [vmem:[%s3769 + $0x68] sm:$0xff]
    %v3784 = vld [vmem:[%s3769 + $0x70] sm:$0xff]
    %v3785 = vld [vmem:[%s3769 + $0x78] sm:$0xff]
    %3786 = vmatprep.subr.mxu0 0.0
    %3787 = vmatpush1.msra.mxu0 %v3770
    %3788 = vmatprep.subr.mxu0 0.0
    %3789 = vmatpush1.msra.mxu0 %v3771
    %3790 = vmatprep.subr.mxu0 0.0
    %3791 = vmatpush1.msra.mxu0 %v3772
    %3792 = vmatprep.subr.mxu0 0.0
    %3793 = vmatpush1.msra.mxu0 %v3773
    %3794 = vmatprep.subr.mxu0 0.0
    %3795 = vmatpush1.msra.mxu0 %v3774
    %3796 = vmatprep.subr.mxu0 0.0
    %3797 = vmatpush1.msra.mxu0 %v3775
    %3798 = vmatprep.subr.mxu0 0.0
    %3799 = vmatpush1.msra.mxu0 %v3776
    %3800 = vmatprep.subr.mxu0 0.0
    %3801 = vmatpush1.msra.mxu0 %v3777
    %3802 = vmatprep.subr.mxu0 0.0
    %3803 = vmatpush1.msra.mxu0 %v3778
    %3804 = vmatprep.subr.mxu0 0.0
    %3805 = vmatpush1.msra.mxu0 %v3779
    %3806 = vmatprep.subr.mxu0 0.0
    %3807 = vmatpush1.msra.mxu0 %v3780
    %3808 = vmatprep.subr.mxu0 0.0
    %3809 = vmatpush1.msra.mxu0 %v3781
    %3810 = vmatprep.subr.mxu0 0.0
    %3811 = vmatpush1.msra.mxu0 %v3782
    %3812 = vmatprep.subr.mxu0 0.0
    %3813 = vmatpush1.msra.mxu0 %v3783
    %3814 = vmatprep.subr.mxu0 0.0
    %3815 = vmatpush1.msra.mxu0 %v3784
    %3816 = vmatprep.subr.mxu0 0.0
    %3817 = vmatpush1.msra.mxu0 %v3785
    %3818 = vmatprep.subr.mxu0 0.0
    %3819 = vmatpush1.msra.mxu0 0.0
    %3820 = vmatprep.subr.mxu0 0.0
    %3821 = vmatpush1.msra.mxu0 0.0
    %3822 = vmatprep.subr.mxu0 0.0
    %3823 = vmatpush1.msra.mxu0 0.0
    %3824 = vmatprep.subr.mxu0 0.0
    %3825 = vmatpush1.msra.mxu0 0.0
    %3826 = vmatprep.subr.mxu0 0.0
    %3827 = vmatpush1.msra.mxu0 0.0
    %3828 = vmatprep.subr.mxu0 0.0
    %3829 = vmatpush1.msra.mxu0 0.0
    %3830 = vmatprep.subr.mxu0 0.0
    %3831 = vmatpush1.msra.mxu0 0.0
    %3832 = vmatprep.subr.mxu0 0.0
    %3833 = vmatpush1.msra.mxu0 0.0
    %3834 = vmatprep.subr.mxu0 0.0
    %3835 = vmatpush1.msra.mxu0 0.0
    %3836 = vmatprep.subr.mxu0 0.0
    %3837 = vmatpush1.msra.mxu0 0.0
    %3838 = vmatprep.subr.mxu0 0.0
    %3839 = vmatpush1.msra.mxu0 0.0
    %3840 = vmatprep.subr.mxu0 0.0
    %3841 = vmatpush1.msra.mxu0 0.0
    %3842 = vmatprep.subr.mxu0 0.0
    %3843 = vmatpush1.msra.mxu0 0.0
    %3844 = vmatprep.subr.mxu0 0.0
    %3845 = vmatpush1.msra.mxu0 0.0
    %3846 = vmatprep.subr.mxu0 0.0
    %3847 = vmatpush1.msra.mxu0 0.0
    %3848 = vmatprep.subr.mxu0 0.0
    %3849 = vmatpush1.msra.mxu0 0.0
    %3850 = vmatprep.mubr.f32.mxu0 0.0
    %3851 = vmatmul.mubr.f32.gmra.mrb[0].mxu0 %v3756
    %v3852 = vpop.f32.mrb[0].mxu0
    %v3853 = vadd.f32 0.0, %v3852
    %v3854 = vpop.f32.mrb[0].mxu0
    %3855 = vmatprep.mubr.f32.mxu0 0.0
    %3856 = vmatmul.mubr.f32.gmra.mrb[0].mxu0 %v3757
    %v3857 = vpop.f32.mrb[0].mxu0
    %v3858 = vadd.f32 0.0, %v3857
    %v3859 = vpop.f32.mrb[0].mxu0
    %3860 = vmatprep.mubr.f32.mxu0 0.0
    %3861 = vmatmul.mubr.f32.gmra.mrb[0].mxu0 %v3758
    %v3862 = vpop.f32.mrb[0].mxu0
    %v3863 = vadd.f32 0.0, %v3862
    %v3864 = vpop.f32.mrb[0].mxu0
    %3865 = vmatprep.mubr.f32.mxu0 0.0
    %3866 = vmatmul.mubr.f32.gmra.mrb[0].mxu0 %v3759
    %v3867 = vpop.f32.mrb[0].mxu0
    %v3868 = vadd.f32 0.0, %v3867
    %v3869 = vpop.f32.mrb[0].mxu0
    %3870 = vmatprep.mubr.f32.mxu0 0.0
    %3871 = vmatmul.mubr.f32.gmra.mrb[0].mxu0 %v3760
    %v3872 = vpop.f32.mrb[0].mxu0
    %v3873 = vadd.f32 0.0, %v3872
    %v3874 = vpop.f32.mrb[0].mxu0
    %3875 = vmatprep.mubr.f32.mxu0 0.0
    %3876 = vmatmul.mubr.f32.gmra.mrb[0].mxu0 %v3761
    %v3877 = vpop.f32.mrb[0].mxu0
    %v3878 = vadd.f32 0.0, %v3877
    %v3879 = vpop.f32.mrb[0].mxu0
    %3880 = vmatprep.mubr.f32.mxu0 0.0
    %3881 = vmatmul.mubr.f32.gmra.mrb[0].mxu0 %v3762
    %v3882 = vpop.f32.mrb[0].mxu0
    %v3883 = vadd.f32 0.0, %v3882
    %v3884 = vpop.f32.mrb[0].mxu0
    %3885 = vmatprep.mubr.f32.mxu0 0.0
    %3886 = vmatmul.mubr.f32.gmra.mrb[0].mxu0 %v3763
    %v3887 = vpop.f32.mrb[0].mxu0
    %v3888 = vadd.f32 0.0, %v3887
    %v3889 = vpop.f32.mrb[0].mxu0
    %3890 = vmatprep.mubr.f32.mxu0 0.0
    %3891 = vmatmul.mubr.f32.gmra.mrb[0].mxu0 %v3764
    %v3892 = vpop.f32.mrb[0].mxu0
    %v3893 = vadd.f32 0.0, %v3892
    %v3894 = vpop.f32.mrb[0].mxu0
    %3895 = vmatprep.mubr.f32.mxu0 0.0
    %3896 = vmatmul.mubr.f32.gmra.mrb[0].mxu0 %v3765
    %v3897 = vpop.f32.mrb[0].mxu0
    %v3898 = vadd.f32 0.0, %v3897
    %v3899 = vpop.f32.mrb[0].mxu0
    %3900 = vmatprep.mubr.f32.mxu0 0.0
    %3901 = vmatmul.mubr.f32.gmra.mrb[0].mxu0 %v3766
    %v3902 = vpop.f32.mrb[0].mxu0
    %v3903 = vadd.f32 0.0, %v3902
    %v3904 = vpop.f32.mrb[0].mxu0
    %3905 = vmatprep.mubr.f32.mxu0 0.0
    %3906 = vmatmul.mubr.f32.gmra.mrb[0].mxu0 %v3767
    %v3907 = vpop.f32.mrb[0].mxu0
    %v3908 = vadd.f32 0.0, %v3907
    %v3909 = vpop.f32.mrb[0].mxu0
    %3910 = vmatprep.mubr.f32.mxu0 0.0
    %3911 = vmatmul.mubr.f32.gmra.mrb[0].mxu0 %v3768
    %v3912 = vpop.f32.mrb[0].mxu0
    %v3913 = vpop.f32.mrb[0].mxu0
    %3914 = vdwg.mxu0
    %v3915 = vadd.f32 %v3694, %v3853
    %v3916 = vadd.f32 %v3699, %v3858
    %v3917 = vadd.f32 %v3704, %v3863
    %v3918 = vadd.f32 %v3709, %v3868
    %v3919 = vadd.f32 %v3714, %v3873
    %v3920 = vadd.f32 %v3719, %v3878
    %v3921 = vadd.f32 %v3724, %v3883
    %v3922 = vadd.f32 %v3729, %v3888
    %v3923 = vadd.f32 %v3734, %v3893
    %v3924 = vadd.f32 %v3739, %v3898
    %v3925 = vadd.f32 %v3744, %v3903
    %v3926 = vadd.f32 %v3749, %v3908
    %s3927 = sadd.s32 %s3448, 1
    %s3928 = smul.u32 %s3927, 120
    %s3929 = scalar_lea.vmem [#allocation2], %s3928
    %v3930 = vld [vmem:[%s3929] sm:$0xff]
    %v3931 = vld [vmem:[%s3929 + $0x8] sm:$0xff]
    %v3932 = vld [vmem:[%s3929 + $0x10] sm:$0xff]
    %v3933 = vld [vmem:[%s3929 + $0x18] sm:$0xff]
    %v3934 = vld [vmem:[%s3929 + $0x20] sm:$0xff]
    %v3935 = vld [vmem:[%s3929 + $0x28] sm:$0xff]
    %v3936 = vld [vmem:[%s3929 + $0x30] sm:$0xff]
    %v3937 = vld [vmem:[%s3929 + $0x38] sm:$0xff]
    %v3938 = vld [vmem:[%s3929 + $0x40] sm:$0xff]
    %v3939 = vld [vmem:[%s3929 + $0x48] sm:$0xff]
    %v3940 = vld [vmem:[%s3929 + $0x50] sm:$0xff]
    %v3941 = vld [vmem:[%s3929 + $0x58] sm:$0xff]
    %v3942 = vld [vmem:[%s3929 + $0x60] sm:$0xff]
    %s3943 = scalar_lea.vmem %s3, 384
    %v3944 = vld [vmem:[%s3943] sm:$0xff]
    %v3945 = vld [vmem:[%s3943 + $0x8] sm:$0xff]
    %v3946 = vld [vmem:[%s3943 + $0x10] sm:$0xff]
    %v3947 = vld [vmem:[%s3943 + $0x18] sm:$0xff]
    %v3948 = vld [vmem:[%s3943 + $0x20] sm:$0xff]
    %v3949 = vld [vmem:[%s3943 + $0x28] sm:$0xff]
    %v3950 = vld [vmem:[%s3943 + $0x30] sm:$0xff]
    %v3951 = vld [vmem:[%s3943 + $0x38] sm:$0xff]
    %v3952 = vld [vmem:[%s3943 + $0x40] sm:$0xff]
    %v3953 = vld [vmem:[%s3943 + $0x48] sm:$0xff]
    %v3954 = vld [vmem:[%s3943 + $0x50] sm:$0xff]
    %v3955 = vld [vmem:[%s3943 + $0x58] sm:$0xff]
    %v3956 = vld [vmem:[%s3943 + $0x60] sm:$0xff]
    %v3957 = vld [vmem:[%s3943 + $0x68] sm:$0xff]
    %v3958 = vld [vmem:[%s3943 + $0x70] sm:$0xff]
    %v3959 = vld [vmem:[%s3943 + $0x78] sm:$0xff]
    %3960 = vmatprep.subr.mxu0 0.0
    %3961 = vmatpush1.msra.mxu0 %v3944
    %3962 = vmatprep.subr.mxu0 0.0
    %3963 = vmatpush1.msra.mxu0 %v3945
    %3964 = vmatprep.subr.mxu0 0.0
    %3965 = vmatpush1.msra.mxu0 %v3946
    %3966 = vmatprep.subr.mxu0 0.0
    %3967 = vmatpush1.msra.mxu0 %v3947
    %3968 = vmatprep.subr.mxu0 0.0
    %3969 = vmatpush1.msra.mxu0 %v3948
    %3970 = vmatprep.subr.mxu0 0.0
    %3971 = vmatpush1.msra.mxu0 %v3949
    %3972 = vmatprep.subr.mxu0 0.0
    %3973 = vmatpush1.msra.mxu0 %v3950
    %3974 = vmatprep.subr.mxu0 0.0
    %3975 = vmatpush1.msra.mxu0 %v3951
    %3976 = vmatprep.subr.mxu0 0.0
    %3977 = vmatpush1.msra.mxu0 %v3952
    %3978 = vmatprep.subr.mxu0 0.0
    %3979 = vmatpush1.msra.mxu0 %v3953
    %3980 = vmatprep.subr.mxu0 0.0
    %3981 = vmatpush1.msra.mxu0 %v3954
    %3982 = vmatprep.subr.mxu0 0.0
    %3983 = vmatpush1.msra.mxu0 %v3955
    %3984 = vmatprep.subr.mxu0 0.0
    %3985 = vmatpush1.msra.mxu0 %v3956
    %3986 = vmatprep.subr.mxu0 0.0
    %3987 = vmatpush1.msra.mxu0 %v3957
    %3988 = vmatprep.subr.mxu0 0.0
    %3989 = vmatpush1.msra.mxu0 %v3958
    %3990 = vmatprep.subr.mxu0 0.0
    %3991 = vmatpush1.msra.mxu0 %v3959
    %3992 = vmatprep.subr.mxu0 0.0
    %3993 = vmatpush1.msra.mxu0 0.0
    %3994 = vmatprep.subr.mxu0 0.0
    %3995 = vmatpush1.msra.mxu0 0.0
    %3996 = vmatprep.subr.mxu0 0.0
    %3997 = vmatpush1.msra.mxu0 0.0
    %3998 = vmatprep.subr.mxu0 0.0
    %3999 = vmatpush1.msra.mxu0 0.0
    %4000 = vmatprep.subr.mxu0 0.0
    %4001 = vmatpush1.msra.mxu0 0.0
    %4002 = vmatprep.subr.mxu0 0.0
    %4003 = vmatpush1.msra.mxu0 0.0
    %4004 = vmatprep.subr.mxu0 0.0
    %4005 = vmatpush1.msra.mxu0 0.0
    %4006 = vmatprep.subr.mxu0 0.0
    %4007 = vmatpush1.msra.mxu0 0.0
    %4008 = vmatprep.subr.mxu0 0.0
    %4009 = vmatpush1.msra.mxu0 0.0
    %4010 = vmatprep.subr.mxu0 0.0
    %4011 = vmatpush1.msra.mxu0 0.0
    %4012 = vmatprep.subr.mxu0 0.0
    %4013 = vmatpush1.msra.mxu0 0.0
    %4014 = vmatprep.subr.mxu0 0.0
    %4015 = vmatpush1.msra.mxu0 0.0
    %4016 = vmatprep.subr.mxu0 0.0
    %4017 = vmatpush1.msra.mxu0 0.0
    %4018 = vmatprep.subr.mxu0 0.0
    %4019 = vmatpush1.msra.mxu0 0.0
    %4020 = vmatprep.subr.mxu0 0.0
    %4021 = vmatpush1.msra.mxu0 0.0
    %4022 = vmatprep.subr.mxu0 0.0
    %4023 = vmatpush1.msra.mxu0 0.0
    %4024 = vmatprep.mubr.f32.mxu0 0.0
    %4025 = vmatmul.mubr.f32.gmra.mrb[0].mxu0 %v3930
    %v4026 = vpop.f32.mrb[0].mxu0
    %v4027 = vadd.f32 0.0, %v4026
    %v4028 = vpop.f32.mrb[0].mxu0
    %4029 = vmatprep.mubr.f32.mxu0 0.0
    %4030 = vmatmul.mubr.f32.gmra.mrb[0].mxu0 %v3931
    %v4031 = vpop.f32.mrb[0].mxu0
    %v4032 = vadd.f32 0.0, %v4031
    %v4033 = vpop.f32.mrb[0].mxu0
    %4034 = vmatprep.mubr.f32.mxu0 0.0
    %4035 = vmatmul.mubr.f32.gmra.mrb[0].mxu0 %v3932
    %v4036 = vpop.f32.mrb[0].mxu0
    %v4037 = vadd.f32 0.0, %v4036
    %v4038 = vpop.f32.mrb[0].mxu0
    %4039 = vmatprep.mubr.f32.mxu0 0.0
    %4040 = vmatmul.mubr.f32.gmra.mrb[0].mxu0 %v3933
    %v4041 = vpop.f32.mrb[0].mxu0
    %v4042 = vadd.f32 0.0, %v4041
    %v4043 = vpop.f32.mrb[0].mxu0
    %4044 = vmatprep.mubr.f32.mxu0 0.0
    %4045 = vmatmul.mubr.f32.gmra.mrb[0].mxu0 %v3934
    %v4046 = vpop.f32.mrb[0].mxu0
    %v4047 = vadd.f32 0.0, %v4046
    %v4048 = vpop.f32.mrb[0].mxu0
    %4049 = vmatprep.mubr.f32.mxu0 0.0
    %4050 = vmatmul.mubr.f32.gmra.mrb[0].mxu0 %v3935
    %v4051 = vpop.f32.mrb[0].mxu0
    %v4052 = vadd.f32 0.0, %v4051
    %v4053 = vpop.f32.mrb[0].mxu0
    %4054 = vmatprep.mubr.f32.mxu0 0.0
    %4055 = vmatmul.mubr.f32.gmra.mrb[0].mxu0 %v3936
    %v4056 = vpop.f32.mrb[0].mxu0
    %v4057 = vadd.f32 0.0, %v4056
    %v4058 = vpop.f32.mrb[0].mxu0
    %4059 = vmatprep.mubr.f32.mxu0 0.0
    %4060 = vmatmul.mubr.f32.gmra.mrb[0].mxu0 %v3937
    %v4061 = vpop.f32.mrb[0].mxu0
    %v4062 = vadd.f32 0.0, %v4061
    %v4063 = vpop.f32.mrb[0].mxu0
    %4064 = vmatprep.mubr.f32.mxu0 0.0
    %4065 = vmatmul.mubr.f32.gmra.mrb[0].mxu0 %v3938
    %v4066 = vpop.f32.mrb[0].mxu0
    %v4067 = vadd.f32 0.0, %v4066
    %v4068 = vpop.f32.mrb[0].mxu0
    %4069 = vmatprep.mubr.f32.mxu0 0.0
    %4070 = vmatmul.mubr.f32.gmra.mrb[0].mxu0 %v3939
    %v4071 = vpop.f32.mrb[0].mxu0
    %v4072 = vadd.f32 0.0, %v4071
    %v4073 = vpop.f32.mrb[0].mxu0
    %4074 = vmatprep.mubr.f32.mxu0 0.0
    %4075 = vmatmul.mubr.f32.gmra.mrb[0].mxu0 %v3940
    %v4076 = vpop.f32.mrb[0].mxu0
    %v4077 = vadd.f32 0.0, %v4076
    %v4078 = vpop.f32.mrb[0].mxu0
    %4079 = vmatprep.mubr.f32.mxu0 0.0
    %4080 = vmatmul.mubr.f32.gmra.mrb[0].mxu0 %v3941
    %v4081 = vpop.f32.mrb[0].mxu0
    %v4082 = vadd.f32 0.0, %v4081
    %v4083 = vpop.f32.mrb[0].mxu0
    %4084 = vmatprep.mubr.f32.mxu0 0.0
    %4085 = vmatmul.mubr.f32.gmra.mrb[0].mxu0 %v3942
    %v4086 = vpop.f32.mrb[0].mxu0
    %v4087 = vpop.f32.mrb[0].mxu0
    %4088 = vdwg.mxu0
    %v4089 = vadd.f32 %v3915, %v4027
    %v4090 = vadd.f32 %v3916, %v4032
    %v4091 = vadd.f32 %v3917, %v4037
    %v4092 = vadd.f32 %v3918, %v4042
    %v4093 = vadd.f32 %v3919, %v4047
    %v4094 = vadd.f32 %v3920, %v4052
    %v4095 = vadd.f32 %v3921, %v4057
    %v4096 = vadd.f32 %v3922, %v4062
    %v4097 = vadd.f32 %v3923, %v4067
    %v4098 = vadd.f32 %v3924, %v4072
    %v4099 = vadd.f32 %v3925, %v4077
    %v4100 = vadd.f32 %v3926, %v4082
    %v4101 = vld [vmem:[%s3929 + $0x8] sm:$0xff]
    %v4102 = vld [vmem:[%s3929 + $0x10] sm:$0xff]
    %v4103 = vld [vmem:[%s3929 + $0x18] sm:$0xff]
    %v4104 = vld [vmem:[%s3929 + $0x20] sm:$0xff]
    %v4105 = vld [vmem:[%s3929 + $0x28] sm:$0xff]
    %v4106 = vld [vmem:[%s3929 + $0x30] sm:$0xff]
    %v4107 = vld [vmem:[%s3929 + $0x38] sm:$0xff]
    %v4108 = vld [vmem:[%s3929 + $0x40] sm:$0xff]
    %v4109 = vld [vmem:[%s3929 + $0x48] sm:$0xff]
    %v4110 = vld [vmem:[%s3929 + $0x50] sm:$0xff]
    %v4111 = vld [vmem:[%s3929 + $0x58] sm:$0xff]
    %v4112 = vld [vmem:[%s3929 + $0x60] sm:$0xff]
    %v4113 = vld [vmem:[%s3929 + $0x68] sm:$0xff]
    %s4114 = scalar_lea.vmem %s3, 512
    %v4115 = vld [vmem:[%s4114] sm:$0xff]
    %v4116 = vld [vmem:[%s4114 + $0x8] sm:$0xff]
    %v4117 = vld [vmem:[%s4114 + $0x10] sm:$0xff]
    %v4118 = vld [vmem:[%s4114 + $0x18] sm:$0xff]
    %v4119 = vld [vmem:[%s4114 + $0x20] sm:$0xff]
    %v4120 = vld [vmem:[%s4114 + $0x28] sm:$0xff]
    %v4121 = vld [vmem:[%s4114 + $0x30] sm:$0xff]
    %v4122 = vld [vmem:[%s4114 + $0x38] sm:$0xff]
    %v4123 = vld [vmem:[%s4114 + $0x40] sm:$0xff]
    %v4124 = vld [vmem:[%s4114 + $0x48] sm:$0xff]
    %v4125 = vld [vmem:[%s4114 + $0x50] sm:$0xff]
    %v4126 = vld [vmem:[%s4114 + $0x58] sm:$0xff]
    %v4127 = vld [vmem:[%s4114 + $0x60] sm:$0xff]
    %v4128 = vld [vmem:[%s4114 + $0x68] sm:$0xff]
    %v4129 = vld [vmem:[%s4114 + $0x70] sm:$0xff]
    %v4130 = vld [vmem:[%s4114 + $0x78] sm:$0xff]
    %4131 = vmatprep.subr.mxu0 0.0
    %4132 = vmatpush1.msra.mxu0 %v4115
    %4133 = vmatprep.subr.mxu0 0.0
    %4134 = vmatpush1.msra.mxu0 %v4116
    %4135 = vmatprep.subr.mxu0 0.0
    %4136 = vmatpush1.msra.mxu0 %v4117
    %4137 = vmatprep.subr.mxu0 0.0
    %4138 = vmatpush1.msra.mxu0 %v4118
    %4139 = vmatprep.subr.mxu0 0.0
    %4140 = vmatpush1.msra.mxu0 %v4119
    %4141 = vmatprep.subr.mxu0 0.0
    %4142 = vmatpush1.msra.mxu0 %v4120
    %4143 = vmatprep.subr.mxu0 0.0
    %4144 = vmatpush1.msra.mxu0 %v4121
    %4145 = vmatprep.subr.mxu0 0.0
    %4146 = vmatpush1.msra.mxu0 %v4122
    %4147 = vmatprep.subr.mxu0 0.0
    %4148 = vmatpush1.msra.mxu0 %v4123
    %4149 = vmatprep.subr.mxu0 0.0
    %4150 = vmatpush1.msra.mxu0 %v4124
    %4151 = vmatprep.subr.mxu0 0.0
    %4152 = vmatpush1.msra.mxu0 %v4125
    %4153 = vmatprep.subr.mxu0 0.0
    %4154 = vmatpush1.msra.mxu0 %v4126
    %4155 = vmatprep.subr.mxu0 0.0
    %4156 = vmatpush1.msra.mxu0 %v4127
    %4157 = vmatprep.subr.mxu0 0.0
    %4158 = vmatpush1.msra.mxu0 %v4128
    %4159 = vmatprep.subr.mxu0 0.0
    %4160 = vmatpush1.msra.mxu0 %v4129
    %4161 = vmatprep.subr.mxu0 0.0
    %4162 = vmatpush1.msra.mxu0 %v4130
    %4163 = vmatprep.subr.mxu0 0.0
    %4164 = vmatpush1.msra.mxu0 0.0
    %4165 = vmatprep.subr.mxu0 0.0
    %4166 = vmatpush1.msra.mxu0 0.0
    %4167 = vmatprep.subr.mxu0 0.0
    %4168 = vmatpush1.msra.mxu0 0.0
    %4169 = vmatprep.subr.mxu0 0.0
    %4170 = vmatpush1.msra.mxu0 0.0
    %4171 = vmatprep.subr.mxu0 0.0
    %4172 = vmatpush1.msra.mxu0 0.0
    %4173 = vmatprep.subr.mxu0 0.0
    %4174 = vmatpush1.msra.mxu0 0.0
    %4175 = vmatprep.subr.mxu0 0.0
    %4176 = vmatpush1.msra.mxu0 0.0
    %4177 = vmatprep.subr.mxu0 0.0
    %4178 = vmatpush1.msra.mxu0 0.0
    %4179 = vmatprep.subr.mxu0 0.0
    %4180 = vmatpush1.msra.mxu0 0.0
    %4181 = vmatprep.subr.mxu0 0.0
    %4182 = vmatpush1.msra.mxu0 0.0
    %4183 = vmatprep.subr.mxu0 0.0
    %4184 = vmatpush1.msra.mxu0 0.0
    %4185 = vmatprep.subr.mxu0 0.0
    %4186 = vmatpush1.msra.mxu0 0.0
    %4187 = vmatprep.subr.mxu0 0.0
    %4188 = vmatpush1.msra.mxu0 0.0
    %4189 = vmatprep.subr.mxu0 0.0
    %4190 = vmatpush1.msra.mxu0 0.0
    %4191 = vmatprep.subr.mxu0 0.0
    %4192 = vmatpush1.msra.mxu0 0.0
    %4193 = vmatprep.subr.mxu0 0.0
    %4194 = vmatpush1.msra.mxu0 0.0
    %4195 = vmatprep.mubr.f32.mxu0 0.0
    %4196 = vmatmul.mubr.f32.gmra.mrb[0].mxu0 %v4101
    %v4197 = vpop.f32.mrb[0].mxu0
    %v4198 = vadd.f32 0.0, %v4197
    %v4199 = vpop.f32.mrb[0].mxu0
    %4200 = vmatprep.mubr.f32.mxu0 0.0
    %4201 = vmatmul.mubr.f32.gmra.mrb[0].mxu0 %v4102
    %v4202 = vpop.f32.mrb[0].mxu0
    %v4203 = vadd.f32 0.0, %v4202
    %v4204 = vpop.f32.mrb[0].mxu0
    %4205 = vmatprep.mubr.f32.mxu0 0.0
    %4206 = vmatmul.mubr.f32.gmra.mrb[0].mxu0 %v4103
    %v4207 = vpop.f32.mrb[0].mxu0
    %v4208 = vadd.f32 0.0, %v4207
    %v4209 = vpop.f32.mrb[0].mxu0
    %4210 = vmatprep.mubr.f32.mxu0 0.0
    %4211 = vmatmul.mubr.f32.gmra.mrb[0].mxu0 %v4104
    %v4212 = vpop.f32.mrb[0].mxu0
    %v4213 = vadd.f32 0.0, %v4212
    %v4214 = vpop.f32.mrb[0].mxu0
    %4215 = vmatprep.mubr.f32.mxu0 0.0
    %4216 = vmatmul.mubr.f32.gmra.mrb[0].mxu0 %v4105
    %v4217 = vpop.f32.mrb[0].mxu0
    %v4218 = vadd.f32 0.0, %v4217
    %v4219 = vpop.f32.mrb[0].mxu0
    %4220 = vmatprep.mubr.f32.mxu0 0.0
    %4221 = vmatmul.mubr.f32.gmra.mrb[0].mxu0 %v4106
    %v4222 = vpop.f32.mrb[0].mxu0
    %v4223 = vadd.f32 0.0, %v4222
    %v4224 = vpop.f32.mrb[0].mxu0
    %4225 = vmatprep.mubr.f32.mxu0 0.0
    %4226 = vmatmul.mubr.f32.gmra.mrb[0].mxu0 %v4107
    %v4227 = vpop.f32.mrb[0].mxu0
    %v4228 = vadd.f32 0.0, %v4227
    %v4229 = vpop.f32.mrb[0].mxu0
    %4230 = vmatprep.mubr.f32.mxu0 0.0
    %4231 = vmatmul.mubr.f32.gmra.mrb[0].mxu0 %v4108
    %v4232 = vpop.f32.mrb[0].mxu0
    %v4233 = vadd.f32 0.0, %v4232
    %v4234 = vpop.f32.mrb[0].mxu0
    %4235 = vmatprep.mubr.f32.mxu0 0.0
    %4236 = vmatmul.mubr.f32.gmra.mrb[0].mxu0 %v4109
    %v4237 = vpop.f32.mrb[0].mxu0
    %v4238 = vadd.f32 0.0, %v4237
    %v4239 = vpop.f32.mrb[0].mxu0
    %4240 = vmatprep.mubr.f32.mxu0 0.0
    %4241 = vmatmul.mubr.f32.gmra.mrb[0].mxu0 %v4110
    %v4242 = vpop.f32.mrb[0].mxu0
    %v4243 = vadd.f32 0.0, %v4242
    %v4244 = vpop.f32.mrb[0].mxu0
    %4245 = vmatprep.mubr.f32.mxu0 0.0
    %4246 = vmatmul.mubr.f32.gmra.mrb[0].mxu0 %v4111
    %v4247 = vpop.f32.mrb[0].mxu0
    %v4248 = vadd.f32 0.0, %v4247
    %v4249 = vpop.f32.mrb[0].mxu0
    %4250 = vmatprep.mubr.f32.mxu0 0.0
    %4251 = vmatmul.mubr.f32.gmra.mrb[0].mxu0 %v4112
    %v4252 = vpop.f32.mrb[0].mxu0
    %v4253 = vadd.f32 0.0, %v4252
    %v4254 = vpop.f32.mrb[0].mxu0
    %4255 = vmatprep.mubr.f32.mxu0 0.0
    %4256 = vmatmul.mubr.f32.gmra.mrb[0].mxu0 %v4113
    %v4257 = vpop.f32.mrb[0].mxu0
    %v4258 = vpop.f32.mrb[0].mxu0
    %4259 = vdwg.mxu0
    %v4260 = vadd.f32 %v4089, %v4198
    %v4261 = vadd.f32 %v4090, %v4203
    %v4262 = vadd.f32 %v4091, %v4208
    %v4263 = vadd.f32 %v4092, %v4213
    %v4264 = vadd.f32 %v4093, %v4218
    %v4265 = vadd.f32 %v4094, %v4223
    %v4266 = vadd.f32 %v4095, %v4228
    %v4267 = vadd.f32 %v4096, %v4233
    %v4268 = vadd.f32 %v4097, %v4238
    %v4269 = vadd.f32 %v4098, %v4243
    %v4270 = vadd.f32 %v4099, %v4248
    %v4271 = vadd.f32 %v4100, %v4253
    %v4272 = vld [vmem:[%s3929 + $0x10] sm:$0xff]
    %v4273 = vld [vmem:[%s3929 + $0x18] sm:$0xff]
    %v4274 = vld [vmem:[%s3929 + $0x20] sm:$0xff]
    %v4275 = vld [vmem:[%s3929 + $0x28] sm:$0xff]
    %v4276 = vld [vmem:[%s3929 + $0x30] sm:$0xff]
    %v4277 = vld [vmem:[%s3929 + $0x38] sm:$0xff]
    %v4278 = vld [vmem:[%s3929 + $0x40] sm:$0xff]
    %v4279 = vld [vmem:[%s3929 + $0x48] sm:$0xff]
    %v4280 = vld [vmem:[%s3929 + $0x50] sm:$0xff]
    %v4281 = vld [vmem:[%s3929 + $0x58] sm:$0xff]
    %v4282 = vld [vmem:[%s3929 + $0x60] sm:$0xff]
    %v4283 = vld [vmem:[%s3929 + $0x68] sm:$0xff]
    %v4284 = vld [vmem:[%s3929 + $0x70] sm:$0xff]
    %s4285 = scalar_lea.vmem %s3, 640
    %v4286 = vld [vmem:[%s4285] sm:$0xff]
    %v4287 = vld [vmem:[%s4285 + $0x8] sm:$0xff]
    %v4288 = vld [vmem:[%s4285 + $0x10] sm:$0xff]
    %v4289 = vld [vmem:[%s4285 + $0x18] sm:$0xff]
    %v4290 = vld [vmem:[%s4285 + $0x20] sm:$0xff]
    %v4291 = vld [vmem:[%s4285 + $0x28] sm:$0xff]
    %v4292 = vld [vmem:[%s4285 + $0x30] sm:$0xff]
    %v4293 = vld [vmem:[%s4285 + $0x38] sm:$0xff]
    %v4294 = vld [vmem:[%s4285 + $0x40] sm:$0xff]
    %v4295 = vld [vmem:[%s4285 + $0x48] sm:$0xff]
    %v4296 = vld [vmem:[%s4285 + $0x50] sm:$0xff]
    %v4297 = vld [vmem:[%s4285 + $0x58] sm:$0xff]
    %v4298 = vld [vmem:[%s4285 + $0x60] sm:$0xff]
    %v4299 = vld [vmem:[%s4285 + $0x68] sm:$0xff]
    %v4300 = vld [vmem:[%s4285 + $0x70] sm:$0xff]
    %v4301 = vld [vmem:[%s4285 + $0x78] sm:$0xff]
    %4302 = vmatprep.subr.mxu0 0.0
    %4303 = vmatpush1.msra.mxu0 %v4286
    %4304 = vmatprep.subr.mxu0 0.0
    %4305 = vmatpush1.msra.mxu0 %v4287
    %4306 = vmatprep.subr.mxu0 0.0
    %4307 = vmatpush1.msra.mxu0 %v4288
    %4308 = vmatprep.subr.mxu0 0.0
    %4309 = vmatpush1.msra.mxu0 %v4289
    %4310 = vmatprep.subr.mxu0 0.0
    %4311 = vmatpush1.msra.mxu0 %v4290
    %4312 = vmatprep.subr.mxu0 0.0
    %4313 = vmatpush1.msra.mxu0 %v4291
    %4314 = vmatprep.subr.mxu0 0.0
    %4315 = vmatpush1.msra.mxu0 %v4292
    %4316 = vmatprep.subr.mxu0 0.0
    %4317 = vmatpush1.msra.mxu0 %v4293
    %4318 = vmatprep.subr.mxu0 0.0
    %4319 = vmatpush1.msra.mxu0 %v4294
    %4320 = vmatprep.subr.mxu0 0.0
    %4321 = vmatpush1.msra.mxu0 %v4295
    %4322 = vmatprep.subr.mxu0 0.0
    %4323 = vmatpush1.msra.mxu0 %v4296
    %4324 = vmatprep.subr.mxu0 0.0
    %4325 = vmatpush1.msra.mxu0 %v4297
    %4326 = vmatprep.subr.mxu0 0.0
    %4327 = vmatpush1.msra.mxu0 %v4298
    %4328 = vmatprep.subr.mxu0 0.0
    %4329 = vmatpush1.msra.mxu0 %v4299
    %4330 = vmatprep.subr.mxu0 0.0
    %4331 = vmatpush1.msra.mxu0 %v4300
    %4332 = vmatprep.subr.mxu0 0.0
    %4333 = vmatpush1.msra.mxu0 %v4301
    %4334 = vmatprep.subr.mxu0 0.0
    %4335 = vmatpush1.msra.mxu0 0.0
    %4336 = vmatprep.subr.mxu0 0.0
    %4337 = vmatpush1.msra.mxu0 0.0
    %4338 = vmatprep.subr.mxu0 0.0
    %4339 = vmatpush1.msra.mxu0 0.0
    %4340 = vmatprep.subr.mxu0 0.0
    %4341 = vmatpush1.msra.mxu0 0.0
    %4342 = vmatprep.subr.mxu0 0.0
    %4343 = vmatpush1.msra.mxu0 0.0
    %4344 = vmatprep.subr.mxu0 0.0
    %4345 = vmatpush1.msra.mxu0 0.0
    %4346 = vmatprep.subr.mxu0 0.0
    %4347 = vmatpush1.msra.mxu0 0.0
    %4348 = vmatprep.subr.mxu0 0.0
    %4349 = vmatpush1.msra.mxu0 0.0
    %4350 = vmatprep.subr.mxu0 0.0
    %4351 = vmatpush1.msra.mxu0 0.0
    %4352 = vmatprep.subr.mxu0 0.0
    %4353 = vmatpush1.msra.mxu0 0.0
    %4354 = vmatprep.subr.mxu0 0.0
    %4355 = vmatpush1.msra.mxu0 0.0
    %4356 = vmatprep.subr.mxu0 0.0
    %4357 = vmatpush1.msra.mxu0 0.0
    %4358 = vmatprep.subr.mxu0 0.0
    %4359 = vmatpush1.msra.mxu0 0.0
    %4360 = vmatprep.subr.mxu0 0.0
    %4361 = vmatpush1.msra.mxu0 0.0
    %4362 = vmatprep.subr.mxu0 0.0
    %4363 = vmatpush1.msra.mxu0 0.0
    %4364 = vmatprep.subr.mxu0 0.0
    %4365 = vmatpush1.msra.mxu0 0.0
    %4366 = vmatprep.mubr.f32.mxu0 0.0
    %4367 = vmatmul.mubr.f32.gmra.mrb[0].mxu0 %v4272
    %v4368 = vpop.f32.mrb[0].mxu0
    %v4369 = vadd.f32 0.0, %v4368
    %v4370 = vpop.f32.mrb[0].mxu0
    %4371 = vmatprep.mubr.f32.mxu0 0.0
    %4372 = vmatmul.mubr.f32.gmra.mrb[0].mxu0 %v4273
    %v4373 = vpop.f32.mrb[0].mxu0
    %v4374 = vadd.f32 0.0, %v4373
    %v4375 = vpop.f32.mrb[0].mxu0
    %4376 = vmatprep.mubr.f32.mxu0 0.0
    %4377 = vmatmul.mubr.f32.gmra.mrb[0].mxu0 %v4274
    %v4378 = vpop.f32.mrb[0].mxu0
    %v4379 = vadd.f32 0.0, %v4378
    %v4380 = vpop.f32.mrb[0].mxu0
    %4381 = vmatprep.mubr.f32.mxu0 0.0
    %4382 = vmatmul.mubr.f32.gmra.mrb[0].mxu0 %v4275
    %v4383 = vpop.f32.mrb[0].mxu0
    %v4384 = vadd.f32 0.0, %v4383
    %v4385 = vpop.f32.mrb[0].mxu0
    %4386 = vmatprep.mubr.f32.mxu0 0.0
    %4387 = vmatmul.mubr.f32.gmra.mrb[0].mxu0 %v4276
    %v4388 = vpop.f32.mrb[0].mxu0
    %v4389 = vadd.f32 0.0, %v4388
    %v4390 = vpop.f32.mrb[0].mxu0
    %4391 = vmatprep.mubr.f32.mxu0 0.0
    %4392 = vmatmul.mubr.f32.gmra.mrb[0].mxu0 %v4277
    %v4393 = vpop.f32.mrb[0].mxu0
    %v4394 = vadd.f32 0.0, %v4393
    %v4395 = vpop.f32.mrb[0].mxu0
    %4396 = vmatprep.mubr.f32.mxu0 0.0
    %4397 = vmatmul.mubr.f32.gmra.mrb[0].mxu0 %v4278
    %v4398 = vpop.f32.mrb[0].mxu0
    %v4399 = vadd.f32 0.0, %v4398
    %v4400 = vpop.f32.mrb[0].mxu0
    %4401 = vmatprep.mubr.f32.mxu0 0.0
    %4402 = vmatmul.mubr.f32.gmra.mrb[0].mxu0 %v4279
    %v4403 = vpop.f32.mrb[0].mxu0
    %v4404 = vadd.f32 0.0, %v4403
    %v4405 = vpop.f32.mrb[0].mxu0
    %4406 = vmatprep.mubr.f32.mxu0 0.0
    %4407 = vmatmul.mubr.f32.gmra.mrb[0].mxu0 %v4280
    %v4408 = vpop.f32.mrb[0].mxu0
    %v4409 = vadd.f32 0.0, %v4408
    %v4410 = vpop.f32.mrb[0].mxu0
    %4411 = vmatprep.mubr.f32.mxu0 0.0
    %4412 = vmatmul.mubr.f32.gmra.mrb[0].mxu0 %v4281
    %v4413 = vpop.f32.mrb[0].mxu0
    %v4414 = vadd.f32 0.0, %v4413
    %v4415 = vpop.f32.mrb[0].mxu0
    %4416 = vmatprep.mubr.f32.mxu0 0.0
    %4417 = vmatmul.mubr.f32.gmra.mrb[0].mxu0 %v4282
    %v4418 = vpop.f32.mrb[0].mxu0
    %v4419 = vadd.f32 0.0, %v4418
    %v4420 = vpop.f32.mrb[0].mxu0
    %4421 = vmatprep.mubr.f32.mxu0 0.0
    %4422 = vmatmul.mubr.f32.gmra.mrb[0].mxu0 %v4283
    %v4423 = vpop.f32.mrb[0].mxu0
    %v4424 = vadd.f32 0.0, %v4423
    %v4425 = vpop.f32.mrb[0].mxu0
    %4426 = vmatprep.mubr.f32.mxu0 0.0
    %4427 = vmatmul.mubr.f32.gmra.mrb[0].mxu0 %v4284
    %v4428 = vpop.f32.mrb[0].mxu0
    %v4429 = vpop.f32.mrb[0].mxu0
    %4430 = vdwg.mxu0
    %v4431 = vadd.f32 %v4260, %v4369
    %v4432 = vadd.f32 %v4261, %v4374
    %v4433 = vadd.f32 %v4262, %v4379
    %v4434 = vadd.f32 %v4263, %v4384
    %v4435 = vadd.f32 %v4264, %v4389
    %v4436 = vadd.f32 %v4265, %v4394
    %v4437 = vadd.f32 %v4266, %v4399
    %v4438 = vadd.f32 %v4267, %v4404
    %v4439 = vadd.f32 %v4268, %v4409
    %v4440 = vadd.f32 %v4269, %v4414
    %v4441 = vadd.f32 %v4270, %v4419
    %v4442 = vadd.f32 %v4271, %v4424
    %s4443 = sadd.s32 %s3448, 2
    %s4444 = smul.u32 %s4443, 120
    %s4445 = scalar_lea.vmem [#allocation2], %s4444
    %v4446 = vld [vmem:[%s4445] sm:$0xff]
    %v4447 = vld [vmem:[%s4445 + $0x8] sm:$0xff]
    %v4448 = vld [vmem:[%s4445 + $0x10] sm:$0xff]
    %v4449 = vld [vmem:[%s4445 + $0x18] sm:$0xff]
    %v4450 = vld [vmem:[%s4445 + $0x20] sm:$0xff]
    %v4451 = vld [vmem:[%s4445 + $0x28] sm:$0xff]
    %v4452 = vld [vmem:[%s4445 + $0x30] sm:$0xff]
    %v4453 = vld [vmem:[%s4445 + $0x38] sm:$0xff]
    %v4454 = vld [vmem:[%s4445 + $0x40] sm:$0xff]
    %v4455 = vld [vmem:[%s4445 + $0x48] sm:$0xff]
    %v4456 = vld [vmem:[%s4445 + $0x50] sm:$0xff]
    %v4457 = vld [vmem:[%s4445 + $0x58] sm:$0xff]
    %v4458 = vld [vmem:[%s4445 + $0x60] sm:$0xff]
    %s4459 = scalar_lea.vmem %s3, 768
    %v4460 = vld [vmem:[%s4459] sm:$0xff]
    %v4461 = vld [vmem:[%s4459 + $0x8] sm:$0xff]
    %v4462 = vld [vmem:[%s4459 + $0x10] sm:$0xff]
    %v4463 = vld [vmem:[%s4459 + $0x18] sm:$0xff]
    %v4464 = vld [vmem:[%s4459 + $0x20] sm:$0xff]
    %v4465 = vld [vmem:[%s4459 + $0x28] sm:$0xff]
    %v4466 = vld [vmem:[%s4459 + $0x30] sm:$0xff]
    %v4467 = vld [vmem:[%s4459 + $0x38] sm:$0xff]
    %v4468 = vld [vmem:[%s4459 + $0x40] sm:$0xff]
    %v4469 = vld [vmem:[%s4459 + $0x48] sm:$0xff]
    %v4470 = vld [vmem:[%s4459 + $0x50] sm:$0xff]
    %v4471 = vld [vmem:[%s4459 + $0x58] sm:$0xff]
    %v4472 = vld [vmem:[%s4459 + $0x60] sm:$0xff]
    %v4473 = vld [vmem:[%s4459 + $0x68] sm:$0xff]
    %v4474 = vld [vmem:[%s4459 + $0x70] sm:$0xff]
    %v4475 = vld [vmem:[%s4459 + $0x78] sm:$0xff]
    %4476 = vmatprep.subr.mxu0 0.0
    %4477 = vmatpush1.msra.mxu0 %v4460
    %4478 = vmatprep.subr.mxu0 0.0
    %4479 = vmatpush1.msra.mxu0 %v4461
    %4480 = vmatprep.subr.mxu0 0.0
    %4481 = vmatpush1.msra.mxu0 %v4462
    %4482 = vmatprep.subr.mxu0 0.0
    %4483 = vmatpush1.msra.mxu0 %v4463
    %4484 = vmatprep.subr.mxu0 0.0
    %4485 = vmatpush1.msra.mxu0 %v4464
    %4486 = vmatprep.subr.mxu0 0.0
    %4487 = vmatpush1.msra.mxu0 %v4465
    %4488 = vmatprep.subr.mxu0 0.0
    %4489 = vmatpush1.msra.mxu0 %v4466
    %4490 = vmatprep.subr.mxu0 0.0
    %4491 = vmatpush1.msra.mxu0 %v4467
    %4492 = vmatprep.subr.mxu0 0.0
    %4493 = vmatpush1.msra.mxu0 %v4468
    %4494 = vmatprep.subr.mxu0 0.0
    %4495 = vmatpush1.msra.mxu0 %v4469
    %4496 = vmatprep.subr.mxu0 0.0
    %4497 = vmatpush1.msra.mxu0 %v4470
    %4498 = vmatprep.subr.mxu0 0.0
    %4499 = vmatpush1.msra.mxu0 %v4471
    %4500 = vmatprep.subr.mxu0 0.0
    %4501 = vmatpush1.msra.mxu0 %v4472
    %4502 = vmatprep.subr.mxu0 0.0
    %4503 = vmatpush1.msra.mxu0 %v4473
    %4504 = vmatprep.subr.mxu0 0.0
    %4505 = vmatpush1.msra.mxu0 %v4474
    %4506 = vmatprep.subr.mxu0 0.0
    %4507 = vmatpush1.msra.mxu0 %v4475
    %4508 = vmatprep.subr.mxu0 0.0
    %4509 = vmatpush1.msra.mxu0 0.0
    %4510 = vmatprep.subr.mxu0 0.0
    %4511 = vmatpush1.msra.mxu0 0.0
    %4512 = vmatprep.subr.mxu0 0.0
    %4513 = vmatpush1.msra.mxu0 0.0
    %4514 = vmatprep.subr.mxu0 0.0
    %4515 = vmatpush1.msra.mxu0 0.0
    %4516 = vmatprep.subr.mxu0 0.0
    %4517 = vmatpush1.msra.mxu0 0.0
    %4518 = vmatprep.subr.mxu0 0.0
    %4519 = vmatpush1.msra.mxu0 0.0
    %4520 = vmatprep.subr.mxu0 0.0
    %4521 = vmatpush1.msra.mxu0 0.0
    %4522 = vmatprep.subr.mxu0 0.0
    %4523 = vmatpush1.msra.mxu0 0.0
    %4524 = vmatprep.subr.mxu0 0.0
    %4525 = vmatpush1.msra.mxu0 0.0
    %4526 = vmatprep.subr.mxu0 0.0
    %4527 = vmatpush1.msra.mxu0 0.0
    %4528 = vmatprep.subr.mxu0 0.0
    %4529 = vmatpush1.msra.mxu0 0.0
    %4530 = vmatprep.subr.mxu0 0.0
    %4531 = vmatpush1.msra.mxu0 0.0
    %4532 = vmatprep.subr.mxu0 0.0
    %4533 = vmatpush1.msra.mxu0 0.0
    %4534 = vmatprep.subr.mxu0 0.0
    %4535 = vmatpush1.msra.mxu0 0.0
    %4536 = vmatprep.subr.mxu0 0.0
    %4537 = vmatpush1.msra.mxu0 0.0
    %4538 = vmatprep.subr.mxu0 0.0
    %4539 = vmatpush1.msra.mxu0 0.0
    %4540 = vmatprep.mubr.f32.mxu0 0.0
    %4541 = vmatmul.mubr.f32.gmra.mrb[0].mxu0 %v4446
    %v4542 = vpop.f32.mrb[0].mxu0
    %v4543 = vadd.f32 0.0, %v4542
    %v4544 = vpop.f32.mrb[0].mxu0
    %4545 = vmatprep.mubr.f32.mxu0 0.0
    %4546 = vmatmul.mubr.f32.gmra.mrb[0].mxu0 %v4447
    %v4547 = vpop.f32.mrb[0].mxu0
    %v4548 = vadd.f32 0.0, %v4547
    %v4549 = vpop.f32.mrb[0].mxu0
    %4550 = vmatprep.mubr.f32.mxu0 0.0
    %4551 = vmatmul.mubr.f32.gmra.mrb[0].mxu0 %v4448
    %v4552 = vpop.f32.mrb[0].mxu0
    %v4553 = vadd.f32 0.0, %v4552
    %v4554 = vpop.f32.mrb[0].mxu0
    %4555 = vmatprep.mubr.f32.mxu0 0.0
    %4556 = vmatmul.mubr.f32.gmra.mrb[0].mxu0 %v4449
    %v4557 = vpop.f32.mrb[0].mxu0
    %v4558 = vadd.f32 0.0, %v4557
    %v4559 = vpop.f32.mrb[0].mxu0
    %4560 = vmatprep.mubr.f32.mxu0 0.0
    %4561 = vmatmul.mubr.f32.gmra.mrb[0].mxu0 %v4450
    %v4562 = vpop.f32.mrb[0].mxu0
    %v4563 = vadd.f32 0.0, %v4562
    %v4564 = vpop.f32.mrb[0].mxu0
    %4565 = vmatprep.mubr.f32.mxu0 0.0
    %4566 = vmatmul.mubr.f32.gmra.mrb[0].mxu0 %v4451
    %v4567 = vpop.f32.mrb[0].mxu0
    %v4568 = vadd.f32 0.0, %v4567
    %v4569 = vpop.f32.mrb[0].mxu0
    %4570 = vmatprep.mubr.f32.mxu0 0.0
    %4571 = vmatmul.mubr.f32.gmra.mrb[0].mxu0 %v4452
    %v4572 = vpop.f32.mrb[0].mxu0
    %v4573 = vadd.f32 0.0, %v4572
    %v4574 = vpop.f32.mrb[0].mxu0
    %4575 = vmatprep.mubr.f32.mxu0 0.0
    %4576 = vmatmul.mubr.f32.gmra.mrb[0].mxu0 %v4453
    %v4577 = vpop.f32.mrb[0].mxu0
    %v4578 = vadd.f32 0.0, %v4577
    %v4579 = vpop.f32.mrb[0].mxu0
    %4580 = vmatprep.mubr.f32.mxu0 0.0
    %4581 = vmatmul.mubr.f32.gmra.mrb[0].mxu0 %v4454
    %v4582 = vpop.f32.mrb[0].mxu0
    %v4583 = vadd.f32 0.0, %v4582
    %v4584 = vpop.f32.mrb[0].mxu0
    %4585 = vmatprep.mubr.f32.mxu0 0.0
    %4586 = vmatmul.mubr.f32.gmra.mrb[0].mxu0 %v4455
    %v4587 = vpop.f32.mrb[0].mxu0
    %v4588 = vadd.f32 0.0, %v4587
    %v4589 = vpop.f32.mrb[0].mxu0
    %4590 = vmatprep.mubr.f32.mxu0 0.0
    %4591 = vmatmul.mubr.f32.gmra.mrb[0].mxu0 %v4456
    %v4592 = vpop.f32.mrb[0].mxu0
    %v4593 = vadd.f32 0.0, %v4592
    %v4594 = vpop.f32.mrb[0].mxu0
    %4595 = vmatprep.mubr.f32.mxu0 0.0
    %4596 = vmatmul.mubr.f32.gmra.mrb[0].mxu0 %v4457
    %v4597 = vpop.f32.mrb[0].mxu0
    %v4598 = vadd.f32 0.0, %v4597
    %v4599 = vpop.f32.mrb[0].mxu0
    %4600 = vmatprep.mubr.f32.mxu0 0.0
    %4601 = vmatmul.mubr.f32.gmra.mrb[0].mxu0 %v4458
    %v4602 = vpop.f32.mrb[0].mxu0
    %v4603 = vpop.f32.mrb[0].mxu0
    %4604 = vdwg.mxu0
    %v4605 = vadd.f32 %v4431, %v4543
    %v4606 = vadd.f32 %v4432, %v4548
    %v4607 = vadd.f32 %v4433, %v4553
    %v4608 = vadd.f32 %v4434, %v4558
    %v4609 = vadd.f32 %v4435, %v4563
    %v4610 = vadd.f32 %v4436, %v4568
    %v4611 = vadd.f32 %v4437, %v4573
    %v4612 = vadd.f32 %v4438, %v4578
    %v4613 = vadd.f32 %v4439, %v4583
    %v4614 = vadd.f32 %v4440, %v4588
    %v4615 = vadd.f32 %v4441, %v4593
    %v4616 = vadd.f32 %v4442, %v4598
    %v4617 = vld [vmem:[%s4445 + $0x8] sm:$0xff]
    %v4618 = vld [vmem:[%s4445 + $0x10] sm:$0xff]
    %v4619 = vld [vmem:[%s4445 + $0x18] sm:$0xff]
    %v4620 = vld [vmem:[%s4445 + $0x20] sm:$0xff]
    %v4621 = vld [vmem:[%s4445 + $0x28] sm:$0xff]
    %v4622 = vld [vmem:[%s4445 + $0x30] sm:$0xff]
    %v4623 = vld [vmem:[%s4445 + $0x38] sm:$0xff]
    %v4624 = vld [vmem:[%s4445 + $0x40] sm:$0xff]
    %v4625 = vld [vmem:[%s4445 + $0x48] sm:$0xff]
    %v4626 = vld [vmem:[%s4445 + $0x50] sm:$0xff]
    %v4627 = vld [vmem:[%s4445 + $0x58] sm:$0xff]
    %v4628 = vld [vmem:[%s4445 + $0x60] sm:$0xff]
    %v4629 = vld [vmem:[%s4445 + $0x68] sm:$0xff]
    %s4630 = scalar_lea.vmem %s3, 896
    %v4631 = vld [vmem:[%s4630] sm:$0xff]
    %v4632 = vld [vmem:[%s4630 + $0x8] sm:$0xff]
    %v4633 = vld [vmem:[%s4630 + $0x10] sm:$0xff]
    %v4634 = vld [vmem:[%s4630 + $0x18] sm:$0xff]
    %v4635 = vld [vmem:[%s4630 + $0x20] sm:$0xff]
    %v4636 = vld [vmem:[%s4630 + $0x28] sm:$0xff]
    %v4637 = vld [vmem:[%s4630 + $0x30] sm:$0xff]
    %v4638 = vld [vmem:[%s4630 + $0x38] sm:$0xff]
    %v4639 = vld [vmem:[%s4630 + $0x40] sm:$0xff]
    %v4640 = vld [vmem:[%s4630 + $0x48] sm:$0xff]
    %v4641 = vld [vmem:[%s4630 + $0x50] sm:$0xff]
    %v4642 = vld [vmem:[%s4630 + $0x58] sm:$0xff]
    %v4643 = vld [vmem:[%s4630 + $0x60] sm:$0xff]
    %v4644 = vld [vmem:[%s4630 + $0x68] sm:$0xff]
    %v4645 = vld [vmem:[%s4630 + $0x70] sm:$0xff]
    %v4646 = vld [vmem:[%s4630 + $0x78] sm:$0xff]
    %4647 = vmatprep.subr.mxu0 0.0
    %4648 = vmatpush1.msra.mxu0 %v4631
    %4649 = vmatprep.subr.mxu0 0.0
    %4650 = vmatpush1.msra.mxu0 %v4632
    %4651 = vmatprep.subr.mxu0 0.0
    %4652 = vmatpush1.msra.mxu0 %v4633
    %4653 = vmatprep.subr.mxu0 0.0
    %4654 = vmatpush1.msra.mxu0 %v4634
    %4655 = vmatprep.subr.mxu0 0.0
    %4656 = vmatpush1.msra.mxu0 %v4635
    %4657 = vmatprep.subr.mxu0 0.0
    %4658 = vmatpush1.msra.mxu0 %v4636
    %4659 = vmatprep.subr.mxu0 0.0
    %4660 = vmatpush1.msra.mxu0 %v4637
    %4661 = vmatprep.subr.mxu0 0.0
    %4662 = vmatpush1.msra.mxu0 %v4638
    %4663 = vmatprep.subr.mxu0 0.0
    %4664 = vmatpush1.msra.mxu0 %v4639
    %4665 = vmatprep.subr.mxu0 0.0
    %4666 = vmatpush1.msra.mxu0 %v4640
    %4667 = vmatprep.subr.mxu0 0.0
    %4668 = vmatpush1.msra.mxu0 %v4641
    %4669 = vmatprep.subr.mxu0 0.0
    %4670 = vmatpush1.msra.mxu0 %v4642
    %4671 = vmatprep.subr.mxu0 0.0
    %4672 = vmatpush1.msra.mxu0 %v4643
    %4673 = vmatprep.subr.mxu0 0.0
    %4674 = vmatpush1.msra.mxu0 %v4644
    %4675 = vmatprep.subr.mxu0 0.0
    %4676 = vmatpush1.msra.mxu0 %v4645
    %4677 = vmatprep.subr.mxu0 0.0
    %4678 = vmatpush1.msra.mxu0 %v4646
    %4679 = vmatprep.subr.mxu0 0.0
    %4680 = vmatpush1.msra.mxu0 0.0
    %4681 = vmatprep.subr.mxu0 0.0
    %4682 = vmatpush1.msra.mxu0 0.0
    %4683 = vmatprep.subr.mxu0 0.0
    %4684 = vmatpush1.msra.mxu0 0.0
    %4685 = vmatprep.subr.mxu0 0.0
    %4686 = vmatpush1.msra.mxu0 0.0
    %4687 = vmatprep.subr.mxu0 0.0
    %4688 = vmatpush1.msra.mxu0 0.0
    %4689 = vmatprep.subr.mxu0 0.0
    %4690 = vmatpush1.msra.mxu0 0.0
    %4691 = vmatprep.subr.mxu0 0.0
    %4692 = vmatpush1.msra.mxu0 0.0
    %4693 = vmatprep.subr.mxu0 0.0
    %4694 = vmatpush1.msra.mxu0 0.0
    %4695 = vmatprep.subr.mxu0 0.0
    %4696 = vmatpush1.msra.mxu0 0.0
    %4697 = vmatprep.subr.mxu0 0.0
    %4698 = vmatpush1.msra.mxu0 0.0
    %4699 = vmatprep.subr.mxu0 0.0
    %4700 = vmatpush1.msra.mxu0 0.0
    %4701 = vmatprep.subr.mxu0 0.0
    %4702 = vmatpush1.msra.mxu0 0.0
    %4703 = vmatprep.subr.mxu0 0.0
    %4704 = vmatpush1.msra.mxu0 0.0
    %4705 = vmatprep.subr.mxu0 0.0
    %4706 = vmatpush1.msra.mxu0 0.0
    %4707 = vmatprep.subr.mxu0 0.0
    %4708 = vmatpush1.msra.mxu0 0.0
    %4709 = vmatprep.subr.mxu0 0.0
    %4710 = vmatpush1.msra.mxu0 0.0
    %4711 = vmatprep.mubr.f32.mxu0 0.0
    %4712 = vmatmul.mubr.f32.gmra.mrb[0].mxu0 %v4617
    %v4713 = vpop.f32.mrb[0].mxu0
    %v4714 = vadd.f32 0.0, %v4713
    %v4715 = vpop.f32.mrb[0].mxu0
    %4716 = vmatprep.mubr.f32.mxu0 0.0
    %4717 = vmatmul.mubr.f32.gmra.mrb[0].mxu0 %v4618
    %v4718 = vpop.f32.mrb[0].mxu0
    %v4719 = vadd.f32 0.0, %v4718
    %v4720 = vpop.f32.mrb[0].mxu0
    %4721 = vmatprep.mubr.f32.mxu0 0.0
    %4722 = vmatmul.mubr.f32.gmra.mrb[0].mxu0 %v4619
    %v4723 = vpop.f32.mrb[0].mxu0
    %v4724 = vadd.f32 0.0, %v4723
    %v4725 = vpop.f32.mrb[0].mxu0
    %4726 = vmatprep.mubr.f32.mxu0 0.0
    %4727 = vmatmul.mubr.f32.gmra.mrb[0].mxu0 %v4620
    %v4728 = vpop.f32.mrb[0].mxu0
    %v4729 = vadd.f32 0.0, %v4728
    %v4730 = vpop.f32.mrb[0].mxu0
    %4731 = vmatprep.mubr.f32.mxu0 0.0
    %4732 = vmatmul.mubr.f32.gmra.mrb[0].mxu0 %v4621
    %v4733 = vpop.f32.mrb[0].mxu0
    %v4734 = vadd.f32 0.0, %v4733
    %v4735 = vpop.f32.mrb[0].mxu0
    %4736 = vmatprep.mubr.f32.mxu0 0.0
    %4737 = vmatmul.mubr.f32.gmra.mrb[0].mxu0 %v4622
    %v4738 = vpop.f32.mrb[0].mxu0
    %v4739 = vadd.f32 0.0, %v4738
    %v4740 = vpop.f32.mrb[0].mxu0
    %4741 = vmatprep.mubr.f32.mxu0 0.0
    %4742 = vmatmul.mubr.f32.gmra.mrb[0].mxu0 %v4623
    %v4743 = vpop.f32.mrb[0].mxu0
    %v4744 = vadd.f32 0.0, %v4743
    %v4745 = vpop.f32.mrb[0].mxu0
    %4746 = vmatprep.mubr.f32.mxu0 0.0
    %4747 = vmatmul.mubr.f32.gmra.mrb[0].mxu0 %v4624
    %v4748 = vpop.f32.mrb[0].mxu0
    %v4749 = vadd.f32 0.0, %v4748
    %v4750 = vpop.f32.mrb[0].mxu0
    %4751 = vmatprep.mubr.f32.mxu0 0.0
    %4752 = vmatmul.mubr.f32.gmra.mrb[0].mxu0 %v4625
    %v4753 = vpop.f32.mrb[0].mxu0
    %v4754 = vadd.f32 0.0, %v4753
    %v4755 = vpop.f32.mrb[0].mxu0
    %4756 = vmatprep.mubr.f32.mxu0 0.0
    %4757 = vmatmul.mubr.f32.gmra.mrb[0].mxu0 %v4626
    %v4758 = vpop.f32.mrb[0].mxu0
    %v4759 = vadd.f32 0.0, %v4758
    %v4760 = vpop.f32.mrb[0].mxu0
    %4761 = vmatprep.mubr.f32.mxu0 0.0
    %4762 = vmatmul.mubr.f32.gmra.mrb[0].mxu0 %v4627
    %v4763 = vpop.f32.mrb[0].mxu0
    %v4764 = vadd.f32 0.0, %v4763
    %v4765 = vpop.f32.mrb[0].mxu0
    %4766 = vmatprep.mubr.f32.mxu0 0.0
    %4767 = vmatmul.mubr.f32.gmra.mrb[0].mxu0 %v4628
    %v4768 = vpop.f32.mrb[0].mxu0
    %v4769 = vadd.f32 0.0, %v4768
    %v4770 = vpop.f32.mrb[0].mxu0
    %4771 = vmatprep.mubr.f32.mxu0 0.0
    %4772 = vmatmul.mubr.f32.gmra.mrb[0].mxu0 %v4629
    %v4773 = vpop.f32.mrb[0].mxu0
    %v4774 = vpop.f32.mrb[0].mxu0
    %4775 = vdwg.mxu0
    %v4776 = vadd.f32 %v4605, %v4714
    %v4777 = vadd.f32 %v4606, %v4719
    %v4778 = vadd.f32 %v4607, %v4724
    %v4779 = vadd.f32 %v4608, %v4729
    %v4780 = vadd.f32 %v4609, %v4734
    %v4781 = vadd.f32 %v4610, %v4739
    %v4782 = vadd.f32 %v4611, %v4744
    %v4783 = vadd.f32 %v4612, %v4749
    %v4784 = vadd.f32 %v4613, %v4754
    %v4785 = vadd.f32 %v4614, %v4759
    %v4786 = vadd.f32 %v4615, %v4764
    %v4787 = vadd.f32 %v4616, %v4769
    %v4788 = vld [vmem:[%s4445 + $0x10] sm:$0xff]
    %v4789 = vld [vmem:[%s4445 + $0x18] sm:$0xff]
    %v4790 = vld [vmem:[%s4445 + $0x20] sm:$0xff]
    %v4791 = vld [vmem:[%s4445 + $0x28] sm:$0xff]
    %v4792 = vld [vmem:[%s4445 + $0x30] sm:$0xff]
    %v4793 = vld [vmem:[%s4445 + $0x38] sm:$0xff]
    %v4794 = vld [vmem:[%s4445 + $0x40] sm:$0xff]
    %v4795 = vld [vmem:[%s4445 + $0x48] sm:$0xff]
    %v4796 = vld [vmem:[%s4445 + $0x50] sm:$0xff]
    %v4797 = vld [vmem:[%s4445 + $0x58] sm:$0xff]
    %v4798 = vld [vmem:[%s4445 + $0x60] sm:$0xff]
    %v4799 = vld [vmem:[%s4445 + $0x68] sm:$0xff]
    %v4800 = vld [vmem:[%s4445 + $0x70] sm:$0xff]
    %s4801 = scalar_lea.vmem %s3, 1024
    %v4802 = vld [vmem:[%s4801] sm:$0xff]
    %v4803 = vld [vmem:[%s4801 + $0x8] sm:$0xff]
    %v4804 = vld [vmem:[%s4801 + $0x10] sm:$0xff]
    %v4805 = vld [vmem:[%s4801 + $0x18] sm:$0xff]
    %v4806 = vld [vmem:[%s4801 + $0x20] sm:$0xff]
    %v4807 = vld [vmem:[%s4801 + $0x28] sm:$0xff]
    %v4808 = vld [vmem:[%s4801 + $0x30] sm:$0xff]
    %v4809 = vld [vmem:[%s4801 + $0x38] sm:$0xff]
    %v4810 = vld [vmem:[%s4801 + $0x40] sm:$0xff]
    %v4811 = vld [vmem:[%s4801 + $0x48] sm:$0xff]
    %v4812 = vld [vmem:[%s4801 + $0x50] sm:$0xff]
    %v4813 = vld [vmem:[%s4801 + $0x58] sm:$0xff]
    %v4814 = vld [vmem:[%s4801 + $0x60] sm:$0xff]
    %v4815 = vld [vmem:[%s4801 + $0x68] sm:$0xff]
    %v4816 = vld [vmem:[%s4801 + $0x70] sm:$0xff]
    %v4817 = vld [vmem:[%s4801 + $0x78] sm:$0xff]
    %4818 = vmatprep.subr.mxu0 0.0
    %4819 = vmatpush1.msra.mxu0 %v4802
    %4820 = vmatprep.subr.mxu0 0.0
    %4821 = vmatpush1.msra.mxu0 %v4803
    %4822 = vmatprep.subr.mxu0 0.0
    %4823 = vmatpush1.msra.mxu0 %v4804
    %4824 = vmatprep.subr.mxu0 0.0
    %4825 = vmatpush1.msra.mxu0 %v4805
    %4826 = vmatprep.subr.mxu0 0.0
    %4827 = vmatpush1.msra.mxu0 %v4806
    %4828 = vmatprep.subr.mxu0 0.0
    %4829 = vmatpush1.msra.mxu0 %v4807
    %4830 = vmatprep.subr.mxu0 0.0
    %4831 = vmatpush1.msra.mxu0 %v4808
    %4832 = vmatprep.subr.mxu0 0.0
    %4833 = vmatpush1.msra.mxu0 %v4809
    %4834 = vmatprep.subr.mxu0 0.0
    %4835 = vmatpush1.msra.mxu0 %v4810
    %4836 = vmatprep.subr.mxu0 0.0
    %4837 = vmatpush1.msra.mxu0 %v4811
    %4838 = vmatprep.subr.mxu0 0.0
    %4839 = vmatpush1.msra.mxu0 %v4812
    %4840 = vmatprep.subr.mxu0 0.0
    %4841 = vmatpush1.msra.mxu0 %v4813
    %4842 = vmatprep.subr.mxu0 0.0
    %4843 = vmatpush1.msra.mxu0 %v4814
    %4844 = vmatprep.subr.mxu0 0.0
    %4845 = vmatpush1.msra.mxu0 %v4815
    %4846 = vmatprep.subr.mxu0 0.0
    %4847 = vmatpush1.msra.mxu0 %v4816
    %4848 = vmatprep.subr.mxu0 0.0
    %4849 = vmatpush1.msra.mxu0 %v4817
    %4850 = vmatprep.subr.mxu0 0.0
    %4851 = vmatpush1.msra.mxu0 0.0
    %4852 = vmatprep.subr.mxu0 0.0
    %4853 = vmatpush1.msra.mxu0 0.0
    %4854 = vmatprep.subr.mxu0 0.0
    %4855 = vmatpush1.msra.mxu0 0.0
    %4856 = vmatprep.subr.mxu0 0.0
    %4857 = vmatpush1.msra.mxu0 0.0
    %4858 = vmatprep.subr.mxu0 0.0
    %4859 = vmatpush1.msra.mxu0 0.0
    %4860 = vmatprep.subr.mxu0 0.0
    %4861 = vmatpush1.msra.mxu0 0.0
    %4862 = vmatprep.subr.mxu0 0.0
    %4863 = vmatpush1.msra.mxu0 0.0
    %4864 = vmatprep.subr.mxu0 0.0
    %4865 = vmatpush1.msra.mxu0 0.0
    %4866 = vmatprep.subr.mxu0 0.0
    %4867 = vmatpush1.msra.mxu0 0.0
    %4868 = vmatprep.subr.mxu0 0.0
    %4869 = vmatpush1.msra.mxu0 0.0
    %4870 = vmatprep.subr.mxu0 0.0
    %4871 = vmatpush1.msra.mxu0 0.0
    %4872 = vmatprep.subr.mxu0 0.0
    %4873 = vmatpush1.msra.mxu0 0.0
    %4874 = vmatprep.subr.mxu0 0.0
    %4875 = vmatpush1.msra.mxu0 0.0
    %4876 = vmatprep.subr.mxu0 0.0
    %4877 = vmatpush1.msra.mxu0 0.0
    %4878 = vmatprep.subr.mxu0 0.0
    %4879 = vmatpush1.msra.mxu0 0.0
    %4880 = vmatprep.subr.mxu0 0.0
    %4881 = vmatpush1.msra.mxu0 0.0
    %4882 = vmatprep.mubr.f32.mxu0 0.0
    %4883 = vmatmul.mubr.f32.gmra.mrb[0].mxu0 %v4788
    %v4884 = vpop.f32.mrb[0].mxu0
    %v4885 = vadd.f32 0.0, %v4884
    %v4886 = vpop.f32.mrb[0].mxu0
    %4887 = vmatprep.mubr.f32.mxu0 0.0
    %4888 = vmatmul.mubr.f32.gmra.mrb[0].mxu0 %v4789
    %v4889 = vpop.f32.mrb[0].mxu0
    %v4890 = vadd.f32 0.0, %v4889
    %v4891 = vpop.f32.mrb[0].mxu0
    %4892 = vmatprep.mubr.f32.mxu0 0.0
    %4893 = vmatmul.mubr.f32.gmra.mrb[0].mxu0 %v4790
    %v4894 = vpop.f32.mrb[0].mxu0
    %v4895 = vadd.f32 0.0, %v4894
    %v4896 = vpop.f32.mrb[0].mxu0
    %4897 = vmatprep.mubr.f32.mxu0 0.0
    %4898 = vmatmul.mubr.f32.gmra.mrb[0].mxu0 %v4791
    %v4899 = vpop.f32.mrb[0].mxu0
    %v4900 = vadd.f32 0.0, %v4899
    %v4901 = vpop.f32.mrb[0].mxu0
    %4902 = vmatprep.mubr.f32.mxu0 0.0
    %4903 = vmatmul.mubr.f32.gmra.mrb[0].mxu0 %v4792
    %v4904 = vpop.f32.mrb[0].mxu0
    %v4905 = vadd.f32 0.0, %v4904
    %v4906 = vpop.f32.mrb[0].mxu0
    %4907 = vmatprep.mubr.f32.mxu0 0.0
    %4908 = vmatmul.mubr.f32.gmra.mrb[0].mxu0 %v4793
    %v4909 = vpop.f32.mrb[0].mxu0
    %v4910 = vadd.f32 0.0, %v4909
    %v4911 = vpop.f32.mrb[0].mxu0
    %4912 = vmatprep.mubr.f32.mxu0 0.0
    %4913 = vmatmul.mubr.f32.gmra.mrb[0].mxu0 %v4794
    %v4914 = vpop.f32.mrb[0].mxu0
    %v4915 = vadd.f32 0.0, %v4914
    %v4916 = vpop.f32.mrb[0].mxu0
    %4917 = vmatprep.mubr.f32.mxu0 0.0
    %4918 = vmatmul.mubr.f32.gmra.mrb[0].mxu0 %v4795
    %v4919 = vpop.f32.mrb[0].mxu0
    %v4920 = vadd.f32 0.0, %v4919
    %v4921 = vpop.f32.mrb[0].mxu0
    %4922 = vmatprep.mubr.f32.mxu0 0.0
    %4923 = vmatmul.mubr.f32.gmra.mrb[0].mxu0 %v4796
    %v4924 = vpop.f32.mrb[0].mxu0
    %v4925 = vadd.f32 0.0, %v4924
    %v4926 = vpop.f32.mrb[0].mxu0
    %4927 = vmatprep.mubr.f32.mxu0 0.0
    %4928 = vmatmul.mubr.f32.gmra.mrb[0].mxu0 %v4797
    %v4929 = vpop.f32.mrb[0].mxu0
    %v4930 = vadd.f32 0.0, %v4929
    %v4931 = vpop.f32.mrb[0].mxu0
    %4932 = vmatprep.mubr.f32.mxu0 0.0
    %4933 = vmatmul.mubr.f32.gmra.mrb[0].mxu0 %v4798
    %v4934 = vpop.f32.mrb[0].mxu0
    %v4935 = vadd.f32 0.0, %v4934
    %v4936 = vpop.f32.mrb[0].mxu0
    %4937 = vmatprep.mubr.f32.mxu0 0.0
    %4938 = vmatmul.mubr.f32.gmra.mrb[0].mxu0 %v4799
    %v4939 = vpop.f32.mrb[0].mxu0
    %v4940 = vadd.f32 0.0, %v4939
    %v4941 = vpop.f32.mrb[0].mxu0
    %4942 = vmatprep.mubr.f32.mxu0 0.0
    %4943 = vmatmul.mubr.f32.gmra.mrb[0].mxu0 %v4800
    %v4944 = vpop.f32.mrb[0].mxu0
    %v4945 = vpop.f32.mrb[0].mxu0
    %4946 = vdwg.mxu0
    %v4947 = vadd.f32 %v4776, %v4885
    %v4948 = vadd.f32 %v4777, %v4890
    %v4949 = vadd.f32 %v4778, %v4895
    %v4950 = vadd.f32 %v4779, %v4900
    %v4951 = vadd.f32 %v4780, %v4905
    %v4952 = vadd.f32 %v4781, %v4910
    %v4953 = vadd.f32 %v4782, %v4915
    %v4954 = vadd.f32 %v4783, %v4920
    %v4955 = vadd.f32 %v4784, %v4925
    %v4956 = vadd.f32 %v4785, %v4930
    %v4957 = vadd.f32 %v4786, %v4935
    %v4958 = vadd.f32 %v4787, %v4940
    %4959 = vmatprep.subr.mxu0 0.0
    %4960 = vmatpush1.msra.mxu0 %v3482
    %4961 = vmatprep.subr.mxu0 0.0
    %4962 = vmatpush1.msra.mxu0 %v3483
    %4963 = vmatprep.subr.mxu0 0.0
    %4964 = vmatpush1.msra.mxu0 %v3484
    %4965 = vmatprep.subr.mxu0 0.0
    %4966 = vmatpush1.msra.mxu0 %v3485
    %4967 = vmatprep.subr.mxu0 0.0
    %4968 = vmatpush1.msra.mxu0 %v3486
    %4969 = vmatprep.subr.mxu0 0.0
    %4970 = vmatpush1.msra.mxu0 %v3487
    %4971 = vmatprep.subr.mxu0 0.0
    %4972 = vmatpush1.msra.mxu0 %v3488
    %4973 = vmatprep.subr.mxu0 0.0
    %4974 = vmatpush1.msra.mxu0 %v3489
    %4975 = vmatprep.subr.mxu0 0.0
    %4976 = vmatpush1.msra.mxu0 %v3490
    %4977 = vmatprep.subr.mxu0 0.0
    %4978 = vmatpush1.msra.mxu0 %v3491
    %4979 = vmatprep.subr.mxu0 0.0
    %4980 = vmatpush1.msra.mxu0 %v3492
    %4981 = vmatprep.subr.mxu0 0.0
    %4982 = vmatpush1.msra.mxu0 %v3493
    %4983 = vmatprep.subr.mxu0 0.0
    %4984 = vmatpush1.msra.mxu0 %v3494
    %4985 = vmatprep.subr.mxu0 0.0
    %4986 = vmatpush1.msra.mxu0 %v3495
    %4987 = vmatprep.subr.mxu0 0.0
    %4988 = vmatpush1.msra.mxu0 %v3496
    %4989 = vmatprep.subr.mxu0 0.0
    %4990 = vmatpush1.msra.mxu0 %v3497
    %4991 = vmatprep.subr.mxu0 0.0
    %4992 = vmatpush1.msra.mxu0 0.0
    %4993 = vmatprep.subr.mxu0 0.0
    %4994 = vmatpush1.msra.mxu0 0.0
    %4995 = vmatprep.subr.mxu0 0.0
    %4996 = vmatpush1.msra.mxu0 0.0
    %4997 = vmatprep.subr.mxu0 0.0
    %4998 = vmatpush1.msra.mxu0 0.0
    %4999 = vmatprep.subr.mxu0 0.0
    %5000 = vmatpush1.msra.mxu0 0.0
    %5001 = vmatprep.subr.mxu0 0.0
    %5002 = vmatpush1.msra.mxu0 0.0
    %5003 = vmatprep.subr.mxu0 0.0
    %5004 = vmatpush1.msra.mxu0 0.0
    %5005 = vmatprep.subr.mxu0 0.0
    %5006 = vmatpush1.msra.mxu0 0.0
    %5007 = vmatprep.subr.mxu0 0.0
    %5008 = vmatpush1.msra.mxu0 0.0
    %5009 = vmatprep.subr.mxu0 0.0
    %5010 = vmatpush1.msra.mxu0 0.0
    %5011 = vmatprep.subr.mxu0 0.0
    %5012 = vmatpush1.msra.mxu0 0.0
    %5013 = vmatprep.subr.mxu0 0.0
    %5014 = vmatpush1.msra.mxu0 0.0
    %5015 = vmatprep.subr.mxu0 0.0
    %5016 = vmatpush1.msra.mxu0 0.0
    %5017 = vmatprep.subr.mxu0 0.0
    %5018 = vmatpush1.msra.mxu0 0.0
    %5019 = vmatprep.subr.mxu0 0.0
    %5020 = vmatpush1.msra.mxu0 0.0
    %5021 = vmatprep.subr.mxu0 0.0
    %5022 = vmatpush1.msra.mxu0 0.0
    %5023 = vmatprep.mubr.f32.mxu0 0.0
    %5024 = vmatmul.mubr.f32.gmra.mrb[0].mxu0 %v4101
    %v5025 = vpop.f32.mrb[0].mxu0
    %v5026 = vadd.f32 0.0, %v5025
    %v5027 = vpop.f32.mrb[0].mxu0
    %5028 = vmatprep.mubr.f32.mxu0 0.0
    %5029 = vmatmul.mubr.f32.gmra.mrb[0].mxu0 %v4102
    %v5030 = vpop.f32.mrb[0].mxu0
    %v5031 = vadd.f32 0.0, %v5030
    %v5032 = vpop.f32.mrb[0].mxu0
    %5033 = vmatprep.mubr.f32.mxu0 0.0
    %5034 = vmatmul.mubr.f32.gmra.mrb[0].mxu0 %v4103
    %v5035 = vpop.f32.mrb[0].mxu0
    %v5036 = vadd.f32 0.0, %v5035
    %v5037 = vpop.f32.mrb[0].mxu0
    %5038 = vmatprep.mubr.f32.mxu0 0.0
    %5039 = vmatmul.mubr.f32.gmra.mrb[0].mxu0 %v4104
    %v5040 = vpop.f32.mrb[0].mxu0
    %v5041 = vadd.f32 0.0, %v5040
    %v5042 = vpop.f32.mrb[0].mxu0
    %5043 = vmatprep.mubr.f32.mxu0 0.0
    %5044 = vmatmul.mubr.f32.gmra.mrb[0].mxu0 %v4105
    %v5045 = vpop.f32.mrb[0].mxu0
    %v5046 = vadd.f32 0.0, %v5045
    %v5047 = vpop.f32.mrb[0].mxu0
    %5048 = vmatprep.mubr.f32.mxu0 0.0
    %5049 = vmatmul.mubr.f32.gmra.mrb[0].mxu0 %v4106
    %v5050 = vpop.f32.mrb[0].mxu0
    %v5051 = vadd.f32 0.0, %v5050
    %v5052 = vpop.f32.mrb[0].mxu0
    %5053 = vmatprep.mubr.f32.mxu0 0.0
    %5054 = vmatmul.mubr.f32.gmra.mrb[0].mxu0 %v4107
    %v5055 = vpop.f32.mrb[0].mxu0
    %v5056 = vadd.f32 0.0, %v5055
    %v5057 = vpop.f32.mrb[0].mxu0
    %5058 = vmatprep.mubr.f32.mxu0 0.0
    %5059 = vmatmul.mubr.f32.gmra.mrb[0].mxu0 %v4108
    %v5060 = vpop.f32.mrb[0].mxu0
    %v5061 = vadd.f32 0.0, %v5060
    %v5062 = vpop.f32.mrb[0].mxu0
    %5063 = vmatprep.mubr.f32.mxu0 0.0
    %5064 = vmatmul.mubr.f32.gmra.mrb[0].mxu0 %v4109
    %v5065 = vpop.f32.mrb[0].mxu0
    %v5066 = vadd.f32 0.0, %v5065
    %v5067 = vpop.f32.mrb[0].mxu0
    %5068 = vmatprep.mubr.f32.mxu0 0.0
    %5069 = vmatmul.mubr.f32.gmra.mrb[0].mxu0 %v4110
    %v5070 = vpop.f32.mrb[0].mxu0
    %v5071 = vadd.f32 0.0, %v5070
    %v5072 = vpop.f32.mrb[0].mxu0
    %5073 = vmatprep.mubr.f32.mxu0 0.0
    %5074 = vmatmul.mubr.f32.gmra.mrb[0].mxu0 %v4111
    %v5075 = vpop.f32.mrb[0].mxu0
    %v5076 = vadd.f32 0.0, %v5075
    %v5077 = vpop.f32.mrb[0].mxu0
    %5078 = vmatprep.mubr.f32.mxu0 0.0
    %5079 = vmatmul.mubr.f32.gmra.mrb[0].mxu0 %v4112
    %v5080 = vpop.f32.mrb[0].mxu0
    %v5081 = vadd.f32 0.0, %v5080
    %v5082 = vpop.f32.mrb[0].mxu0
    %5083 = vmatprep.mubr.f32.mxu0 0.0
    %5084 = vmatmul.mubr.f32.gmra.mrb[0].mxu0 %v4113
    %v5085 = vpop.f32.mrb[0].mxu0
    %v5086 = vpop.f32.mrb[0].mxu0
    %5087 = vdwg.mxu0
    %5088 = vmatprep.subr.mxu0 0.0
    %5089 = vmatpush1.msra.mxu0 %v3464
    %5090 = vmatprep.subr.mxu0 0.0
    %5091 = vmatpush1.msra.mxu0 %v3465
    %5092 = vmatprep.subr.mxu0 0.0
    %5093 = vmatpush1.msra.mxu0 %v3466
    %5094 = vmatprep.subr.mxu0 0.0
    %5095 = vmatpush1.msra.mxu0 %v3467
    %5096 = vmatprep.subr.mxu0 0.0
    %5097 = vmatpush1.msra.mxu0 %v3468
    %5098 = vmatprep.subr.mxu0 0.0
    %5099 = vmatpush1.msra.mxu0 %v3469
    %5100 = vmatprep.subr.mxu0 0.0
    %5101 = vmatpush1.msra.mxu0 %v3470
    %5102 = vmatprep.subr.mxu0 0.0
    %5103 = vmatpush1.msra.mxu0 %v3471
    %5104 = vmatprep.subr.mxu0 0.0
    %5105 = vmatpush1.msra.mxu0 %v3472
    %5106 = vmatprep.subr.mxu0 0.0
    %5107 = vmatpush1.msra.mxu0 %v3473
    %5108 = vmatprep.subr.mxu0 0.0
    %5109 = vmatpush1.msra.mxu0 %v3474
    %5110 = vmatprep.subr.mxu0 0.0
    %5111 = vmatpush1.msra.mxu0 %v3475
    %5112 = vmatprep.subr.mxu0 0.0
    %5113 = vmatpush1.msra.mxu0 %v3476
    %5114 = vmatprep.subr.mxu0 0.0
    %5115 = vmatpush1.msra.mxu0 %v3477
    %5116 = vmatprep.subr.mxu0 0.0
    %5117 = vmatpush1.msra.mxu0 %v3478
    %5118 = vmatprep.subr.mxu0 0.0
    %5119 = vmatpush1.msra.mxu0 %v3479
    %5120 = vmatprep.subr.mxu0 0.0
    %5121 = vmatpush1.msra.mxu0 0.0
    %5122 = vmatprep.subr.mxu0 0.0
    %5123 = vmatpush1.msra.mxu0 0.0
    %5124 = vmatprep.subr.mxu0 0.0
    %5125 = vmatpush1.msra.mxu0 0.0
    %5126 = vmatprep.subr.mxu0 0.0
    %5127 = vmatpush1.msra.mxu0 0.0
    %5128 = vmatprep.subr.mxu0 0.0
    %5129 = vmatpush1.msra.mxu0 0.0
    %5130 = vmatprep.subr.mxu0 0.0
    %5131 = vmatpush1.msra.mxu0 0.0
    %5132 = vmatprep.subr.mxu0 0.0
    %5133 = vmatpush1.msra.mxu0 0.0
    %5134 = vmatprep.subr.mxu0 0.0
    %5135 = vmatpush1.msra.mxu0 0.0
    %5136 = vmatprep.subr.mxu0 0.0
    %5137 = vmatpush1.msra.mxu0 0.0
    %5138 = vmatprep.subr.mxu0 0.0
    %5139 = vmatpush1.msra.mxu0 0.0
    %5140 = vmatprep.subr.mxu0 0.0
    %5141 = vmatpush1.msra.mxu0 0.0
    %5142 = vmatprep.subr.mxu0 0.0
    %5143 = vmatpush1.msra.mxu0 0.0
    %5144 = vmatprep.subr.mxu0 0.0
    %5145 = vmatpush1.msra.mxu0 0.0
    %5146 = vmatprep.subr.mxu0 0.0
    %5147 = vmatpush1.msra.mxu0 0.0
    %5148 = vmatprep.subr.mxu0 0.0
    %5149 = vmatpush1.msra.mxu0 0.0
    %5150 = vmatprep.subr.mxu0 0.0
    %5151 = vmatpush1.msra.mxu0 0.0
    %5152 = vmatprep.mubr.f32.mxu0 0.0
    %5153 = vmatmul.mubr.f32.gmra.mrb[0].mxu0 %v3930
    %v5154 = vpop.f32.mrb[0].mxu0
    %v5155 = vadd.f32 %v5026, %v5154
    %v5156 = vpop.f32.mrb[0].mxu0
    %5157 = vmatprep.mubr.f32.mxu0 0.0
    %5158 = vmatmul.mubr.f32.gmra.mrb[0].mxu0 %v3931
    %v5159 = vpop.f32.mrb[0].mxu0
    %v5160 = vadd.f32 %v5031, %v5159
    %v5161 = vpop.f32.mrb[0].mxu0
    %5162 = vmatprep.mubr.f32.mxu0 0.0
    %5163 = vmatmul.mubr.f32.gmra.mrb[0].mxu0 %v3932
    %v5164 = vpop.f32.mrb[0].mxu0
    %v5165 = vadd.f32 %v5036, %v5164
    %v5166 = vpop.f32.mrb[0].mxu0
    %5167 = vmatprep.mubr.f32.mxu0 0.0
    %5168 = vmatmul.mubr.f32.gmra.mrb[0].mxu0 %v3933
    %v5169 = vpop.f32.mrb[0].mxu0
    %v5170 = vadd.f32 %v5041, %v5169
    %v5171 = vpop.f32.mrb[0].mxu0
    %5172 = vmatprep.mubr.f32.mxu0 0.0
    %5173 = vmatmul.mubr.f32.gmra.mrb[0].mxu0 %v3934
    %v5174 = vpop.f32.mrb[0].mxu0
    %v5175 = vadd.f32 %v5046, %v5174
    %v5176 = vpop.f32.mrb[0].mxu0
    %5177 = vmatprep.mubr.f32.mxu0 0.0
    %5178 = vmatmul.mubr.f32.gmra.mrb[0].mxu0 %v3935
    %v5179 = vpop.f32.mrb[0].mxu0
    %v5180 = vadd.f32 %v5051, %v5179
    %v5181 = vpop.f32.mrb[0].mxu0
    %5182 = vmatprep.mubr.f32.mxu0 0.0
    %5183 = vmatmul.mubr.f32.gmra.mrb[0].mxu0 %v3936
    %v5184 = vpop.f32.mrb[0].mxu0
    %v5185 = vadd.f32 %v5056, %v5184
    %v5186 = vpop.f32.mrb[0].mxu0
    %5187 = vmatprep.mubr.f32.mxu0 0.0
    %5188 = vmatmul.mubr.f32.gmra.mrb[0].mxu0 %v3937
    %v5189 = vpop.f32.mrb[0].mxu0
    %v5190 = vadd.f32 %v5061, %v5189
    %v5191 = vpop.f32.mrb[0].mxu0
    %5192 = vmatprep.mubr.f32.mxu0 0.0
    %5193 = vmatmul.mubr.f32.gmra.mrb[0].mxu0 %v3938
    %v5194 = vpop.f32.mrb[0].mxu0
    %v5195 = vadd.f32 %v5066, %v5194
    %v5196 = vpop.f32.mrb[0].mxu0
    %5197 = vmatprep.mubr.f32.mxu0 0.0
    %5198 = vmatmul.mubr.f32.gmra.mrb[0].mxu0 %v3939
    %v5199 = vpop.f32.mrb[0].mxu0
    %v5200 = vadd.f32 %v5071, %v5199
    %v5201 = vpop.f32.mrb[0].mxu0
    %5202 = vmatprep.mubr.f32.mxu0 0.0
    %5203 = vmatmul.mubr.f32.gmra.mrb[0].mxu0 %v3940
    %v5204 = vpop.f32.mrb[0].mxu0
    %v5205 = vadd.f32 %v5076, %v5204
    %v5206 = vpop.f32.mrb[0].mxu0
    %5207 = vmatprep.mubr.f32.mxu0 0.0
    %5208 = vmatmul.mubr.f32.gmra.mrb[0].mxu0 %v3941
    %v5209 = vpop.f32.mrb[0].mxu0
    %v5210 = vadd.f32 %v5081, %v5209
    %v5211 = vpop.f32.mrb[0].mxu0
    %5212 = vmatprep.mubr.f32.mxu0 0.0
    %5213 = vmatmul.mubr.f32.gmra.mrb[0].mxu0 %v3942
    %v5214 = vpop.f32.mrb[0].mxu0
    %v5215 = vpop.f32.mrb[0].mxu0
    %5216 = vdwg.mxu0
    %5217 = vmatprep.subr.mxu0 0.0
    %5218 = vmatpush1.msra.mxu0 %v3770
    %5219 = vmatprep.subr.mxu0 0.0
    %5220 = vmatpush1.msra.mxu0 %v3771
    %5221 = vmatprep.subr.mxu0 0.0
    %5222 = vmatpush1.msra.mxu0 %v3772
    %5223 = vmatprep.subr.mxu0 0.0
    %5224 = vmatpush1.msra.mxu0 %v3773
    %5225 = vmatprep.subr.mxu0 0.0
    %5226 = vmatpush1.msra.mxu0 %v3774
    %5227 = vmatprep.subr.mxu0 0.0
    %5228 = vmatpush1.msra.mxu0 %v3775
    %5229 = vmatprep.subr.mxu0 0.0
    %5230 = vmatpush1.msra.mxu0 %v3776
    %5231 = vmatprep.subr.mxu0 0.0
    %5232 = vmatpush1.msra.mxu0 %v3777
    %5233 = vmatprep.subr.mxu0 0.0
    %5234 = vmatpush1.msra.mxu0 %v3778
    %5235 = vmatprep.subr.mxu0 0.0
    %5236 = vmatpush1.msra.mxu0 %v3779
    %5237 = vmatprep.subr.mxu0 0.0
    %5238 = vmatpush1.msra.mxu0 %v3780
    %5239 = vmatprep.subr.mxu0 0.0
    %5240 = vmatpush1.msra.mxu0 %v3781
    %5241 = vmatprep.subr.mxu0 0.0
    %5242 = vmatpush1.msra.mxu0 %v3782
    %5243 = vmatprep.subr.mxu0 0.0
    %5244 = vmatpush1.msra.mxu0 %v3783
    %5245 = vmatprep.subr.mxu0 0.0
    %5246 = vmatpush1.msra.mxu0 %v3784
    %5247 = vmatprep.subr.mxu0 0.0
    %5248 = vmatpush1.msra.mxu0 %v3785
    %5249 = vmatprep.subr.mxu0 0.0
    %5250 = vmatpush1.msra.mxu0 0.0
    %5251 = vmatprep.subr.mxu0 0.0
    %5252 = vmatpush1.msra.mxu0 0.0
    %5253 = vmatprep.subr.mxu0 0.0
    %5254 = vmatpush1.msra.mxu0 0.0
    %5255 = vmatprep.subr.mxu0 0.0
    %5256 = vmatpush1.msra.mxu0 0.0
    %5257 = vmatprep.subr.mxu0 0.0
    %5258 = vmatpush1.msra.mxu0 0.0
    %5259 = vmatprep.subr.mxu0 0.0
    %5260 = vmatpush1.msra.mxu0 0.0
    %5261 = vmatprep.subr.mxu0 0.0
    %5262 = vmatpush1.msra.mxu0 0.0
    %5263 = vmatprep.subr.mxu0 0.0
    %5264 = vmatpush1.msra.mxu0 0.0
    %5265 = vmatprep.subr.mxu0 0.0
    %5266 = vmatpush1.msra.mxu0 0.0
    %5267 = vmatprep.subr.mxu0 0.0
    %5268 = vmatpush1.msra.mxu0 0.0
    %5269 = vmatprep.subr.mxu0 0.0
    %5270 = vmatpush1.msra.mxu0 0.0
    %5271 = vmatprep.subr.mxu0 0.0
    %5272 = vmatpush1.msra.mxu0 0.0
    %5273 = vmatprep.subr.mxu0 0.0
    %5274 = vmatpush1.msra.mxu0 0.0
    %5275 = vmatprep.subr.mxu0 0.0
    %5276 = vmatpush1.msra.mxu0 0.0
    %5277 = vmatprep.subr.mxu0 0.0
    %5278 = vmatpush1.msra.mxu0 0.0
    %5279 = vmatprep.subr.mxu0 0.0
    %5280 = vmatpush1.msra.mxu0 0.0
    %5281 = vmatprep.mubr.f32.mxu0 0.0
    %5282 = vmatmul.mubr.f32.gmra.mrb[0].mxu0 %v4272
    %v5283 = vpop.f32.mrb[0].mxu0
    %v5284 = vadd.f32 0.0, %v5283
    %v5285 = vpop.f32.mrb[0].mxu0
    %5286 = vmatprep.mubr.f32.mxu0 0.0
    %5287 = vmatmul.mubr.f32.gmra.mrb[0].mxu0 %v4273
    %v5288 = vpop.f32.mrb[0].mxu0
    %v5289 = vadd.f32 0.0, %v5288
    %v5290 = vpop.f32.mrb[0].mxu0
    %5291 = vmatprep.mubr.f32.mxu0 0.0
    %5292 = vmatmul.mubr.f32.gmra.mrb[0].mxu0 %v4274
    %v5293 = vpop.f32.mrb[0].mxu0
    %v5294 = vadd.f32 0.0, %v5293
    %v5295 = vpop.f32.mrb[0].mxu0
    %5296 = vmatprep.mubr.f32.mxu0 0.0
    %5297 = vmatmul.mubr.f32.gmra.mrb[0].mxu0 %v4275
    %v5298 = vpop.f32.mrb[0].mxu0
    %v5299 = vadd.f32 0.0, %v5298
    %v5300 = vpop.f32.mrb[0].mxu0
    %5301 = vmatprep.mubr.f32.mxu0 0.0
    %5302 = vmatmul.mubr.f32.gmra.mrb[0].mxu0 %v4276
    %v5303 = vpop.f32.mrb[0].mxu0
    %v5304 = vadd.f32 0.0, %v5303
    %v5305 = vpop.f32.mrb[0].mxu0
    %5306 = vmatprep.mubr.f32.mxu0 0.0
    %5307 = vmatmul.mubr.f32.gmra.mrb[0].mxu0 %v4277
    %v5308 = vpop.f32.mrb[0].mxu0
    %v5309 = vadd.f32 0.0, %v5308
    %v5310 = vpop.f32.mrb[0].mxu0
    %5311 = vmatprep.mubr.f32.mxu0 0.0
    %5312 = vmatmul.mubr.f32.gmra.mrb[0].mxu0 %v4278
    %v5313 = vpop.f32.mrb[0].mxu0
    %v5314 = vadd.f32 0.0, %v5313
    %v5315 = vpop.f32.mrb[0].mxu0
    %5316 = vmatprep.mubr.f32.mxu0 0.0
    %5317 = vmatmul.mubr.f32.gmra.mrb[0].mxu0 %v4279
    %v5318 = vpop.f32.mrb[0].mxu0
    %v5319 = vadd.f32 0.0, %v5318
    %v5320 = vpop.f32.mrb[0].mxu0
    %5321 = vmatprep.mubr.f32.mxu0 0.0
    %5322 = vmatmul.mubr.f32.gmra.mrb[0].mxu0 %v4280
    %v5323 = vpop.f32.mrb[0].mxu0
    %v5324 = vadd.f32 0.0, %v5323
    %v5325 = vpop.f32.mrb[0].mxu0
    %5326 = vmatprep.mubr.f32.mxu0 0.0
    %5327 = vmatmul.mubr.f32.gmra.mrb[0].mxu0 %v4281
    %v5328 = vpop.f32.mrb[0].mxu0
    %v5329 = vadd.f32 0.0, %v5328
    %v5330 = vpop.f32.mrb[0].mxu0
    %5331 = vmatprep.mubr.f32.mxu0 0.0
    %5332 = vmatmul.mubr.f32.gmra.mrb[0].mxu0 %v4282
    %v5333 = vpop.f32.mrb[0].mxu0
    %v5334 = vadd.f32 0.0, %v5333
    %v5335 = vpop.f32.mrb[0].mxu0
    %5336 = vmatprep.mubr.f32.mxu0 0.0
    %5337 = vmatmul.mubr.f32.gmra.mrb[0].mxu0 %v4283
    %v5338 = vpop.f32.mrb[0].mxu0
    %v5339 = vadd.f32 0.0, %v5338
    %v5340 = vpop.f32.mrb[0].mxu0
    %5341 = vmatprep.mubr.f32.mxu0 0.0
    %5342 = vmatmul.mubr.f32.gmra.mrb[0].mxu0 %v4284
    %v5343 = vpop.f32.mrb[0].mxu0
    %v5344 = vpop.f32.mrb[0].mxu0
    %5345 = vdwg.mxu0
    %v5346 = vadd.f32 %v5155, %v5284
    %v5347 = vadd.f32 %v5160, %v5289
    %v5348 = vadd.f32 %v5165, %v5294
    %v5349 = vadd.f32 %v5170, %v5299
    %v5350 = vadd.f32 %v5175, %v5304
    %v5351 = vadd.f32 %v5180, %v5309
    %v5352 = vadd.f32 %v5185, %v5314
    %v5353 = vadd.f32 %v5190, %v5319
    %v5354 = vadd.f32 %v5195, %v5324
    %v5355 = vadd.f32 %v5200, %v5329
    %v5356 = vadd.f32 %v5205, %v5334
    %v5357 = vadd.f32 %v5210, %v5339
    %5358 = vmatprep.subr.mxu0 0.0
    %5359 = vmatpush1.msra.mxu0 %v3944
    %5360 = vmatprep.subr.mxu0 0.0
    %5361 = vmatpush1.msra.mxu0 %v3945
    %5362 = vmatprep.subr.mxu0 0.0
    %5363 = vmatpush1.msra.mxu0 %v3946
    %5364 = vmatprep.subr.mxu0 0.0
    %5365 = vmatpush1.msra.mxu0 %v3947
    %5366 = vmatprep.subr.mxu0 0.0
    %5367 = vmatpush1.msra.mxu0 %v3948
    %5368 = vmatprep.subr.mxu0 0.0
    %5369 = vmatpush1.msra.mxu0 %v3949
    %5370 = vmatprep.subr.mxu0 0.0
    %5371 = vmatpush1.msra.mxu0 %v3950
    %5372 = vmatprep.subr.mxu0 0.0
    %5373 = vmatpush1.msra.mxu0 %v3951
    %5374 = vmatprep.subr.mxu0 0.0
    %5375 = vmatpush1.msra.mxu0 %v3952
    %5376 = vmatprep.subr.mxu0 0.0
    %5377 = vmatpush1.msra.mxu0 %v3953
    %5378 = vmatprep.subr.mxu0 0.0
    %5379 = vmatpush1.msra.mxu0 %v3954
    %5380 = vmatprep.subr.mxu0 0.0
    %5381 = vmatpush1.msra.mxu0 %v3955
    %5382 = vmatprep.subr.mxu0 0.0
    %5383 = vmatpush1.msra.mxu0 %v3956
    %5384 = vmatprep.subr.mxu0 0.0
    %5385 = vmatpush1.msra.mxu0 %v3957
    %5386 = vmatprep.subr.mxu0 0.0
    %5387 = vmatpush1.msra.mxu0 %v3958
    %5388 = vmatprep.subr.mxu0 0.0
    %5389 = vmatpush1.msra.mxu0 %v3959
    %5390 = vmatprep.subr.mxu0 0.0
    %5391 = vmatpush1.msra.mxu0 0.0
    %5392 = vmatprep.subr.mxu0 0.0
    %5393 = vmatpush1.msra.mxu0 0.0
    %5394 = vmatprep.subr.mxu0 0.0
    %5395 = vmatpush1.msra.mxu0 0.0
    %5396 = vmatprep.subr.mxu0 0.0
    %5397 = vmatpush1.msra.mxu0 0.0
    %5398 = vmatprep.subr.mxu0 0.0
    %5399 = vmatpush1.msra.mxu0 0.0
    %5400 = vmatprep.subr.mxu0 0.0
    %5401 = vmatpush1.msra.mxu0 0.0
    %5402 = vmatprep.subr.mxu0 0.0
    %5403 = vmatpush1.msra.mxu0 0.0
    %5404 = vmatprep.subr.mxu0 0.0
    %5405 = vmatpush1.msra.mxu0 0.0
    %5406 = vmatprep.subr.mxu0 0.0
    %5407 = vmatpush1.msra.mxu0 0.0
    %5408 = vmatprep.subr.mxu0 0.0
    %5409 = vmatpush1.msra.mxu0 0.0
    %5410 = vmatprep.subr.mxu0 0.0
    %5411 = vmatpush1.msra.mxu0 0.0
    %5412 = vmatprep.subr.mxu0 0.0
    %5413 = vmatpush1.msra.mxu0 0.0
    %5414 = vmatprep.subr.mxu0 0.0
    %5415 = vmatpush1.msra.mxu0 0.0
    %5416 = vmatprep.subr.mxu0 0.0
    %5417 = vmatpush1.msra.mxu0 0.0
    %5418 = vmatprep.subr.mxu0 0.0
    %5419 = vmatpush1.msra.mxu0 0.0
    %5420 = vmatprep.subr.mxu0 0.0
    %5421 = vmatpush1.msra.mxu0 0.0
    %5422 = vmatprep.mubr.f32.mxu0 0.0
    %5423 = vmatmul.mubr.f32.gmra.mrb[0].mxu0 %v4446
    %v5424 = vpop.f32.mrb[0].mxu0
    %v5425 = vadd.f32 0.0, %v5424
    %v5426 = vpop.f32.mrb[0].mxu0
    %5427 = vmatprep.mubr.f32.mxu0 0.0
    %5428 = vmatmul.mubr.f32.gmra.mrb[0].mxu0 %v4447
    %v5429 = vpop.f32.mrb[0].mxu0
    %v5430 = vadd.f32 0.0, %v5429
    %v5431 = vpop.f32.mrb[0].mxu0
    %5432 = vmatprep.mubr.f32.mxu0 0.0
    %5433 = vmatmul.mubr.f32.gmra.mrb[0].mxu0 %v4448
    %v5434 = vpop.f32.mrb[0].mxu0
    %v5435 = vadd.f32 0.0, %v5434
    %v5436 = vpop.f32.mrb[0].mxu0
    %5437 = vmatprep.mubr.f32.mxu0 0.0
    %5438 = vmatmul.mubr.f32.gmra.mrb[0].mxu0 %v4449
    %v5439 = vpop.f32.mrb[0].mxu0
    %v5440 = vadd.f32 0.0, %v5439
    %v5441 = vpop.f32.mrb[0].mxu0
    %5442 = vmatprep.mubr.f32.mxu0 0.0
    %5443 = vmatmul.mubr.f32.gmra.mrb[0].mxu0 %v4450
    %v5444 = vpop.f32.mrb[0].mxu0
    %v5445 = vadd.f32 0.0, %v5444
    %v5446 = vpop.f32.mrb[0].mxu0
    %5447 = vmatprep.mubr.f32.mxu0 0.0
    %5448 = vmatmul.mubr.f32.gmra.mrb[0].mxu0 %v4451
    %v5449 = vpop.f32.mrb[0].mxu0
    %v5450 = vadd.f32 0.0, %v5449
    %v5451 = vpop.f32.mrb[0].mxu0
    %5452 = vmatprep.mubr.f32.mxu0 0.0
    %5453 = vmatmul.mubr.f32.gmra.mrb[0].mxu0 %v4452
    %v5454 = vpop.f32.mrb[0].mxu0
    %v5455 = vadd.f32 0.0, %v5454
    %v5456 = vpop.f32.mrb[0].mxu0
    %5457 = vmatprep.mubr.f32.mxu0 0.0
    %5458 = vmatmul.mubr.f32.gmra.mrb[0].mxu0 %v4453
    %v5459 = vpop.f32.mrb[0].mxu0
    %v5460 = vadd.f32 0.0, %v5459
    %v5461 = vpop.f32.mrb[0].mxu0
    %5462 = vmatprep.mubr.f32.mxu0 0.0
    %5463 = vmatmul.mubr.f32.gmra.mrb[0].mxu0 %v4454
    %v5464 = vpop.f32.mrb[0].mxu0
    %v5465 = vadd.f32 0.0, %v5464
    %v5466 = vpop.f32.mrb[0].mxu0
    %5467 = vmatprep.mubr.f32.mxu0 0.0
    %5468 = vmatmul.mubr.f32.gmra.mrb[0].mxu0 %v4455
    %v5469 = vpop.f32.mrb[0].mxu0
    %v5470 = vadd.f32 0.0, %v5469
    %v5471 = vpop.f32.mrb[0].mxu0
    %5472 = vmatprep.mubr.f32.mxu0 0.0
    %5473 = vmatmul.mubr.f32.gmra.mrb[0].mxu0 %v4456
    %v5474 = vpop.f32.mrb[0].mxu0
    %v5475 = vadd.f32 0.0, %v5474
    %v5476 = vpop.f32.mrb[0].mxu0
    %5477 = vmatprep.mubr.f32.mxu0 0.0
    %5478 = vmatmul.mubr.f32.gmra.mrb[0].mxu0 %v4457
    %v5479 = vpop.f32.mrb[0].mxu0
    %v5480 = vadd.f32 0.0, %v5479
    %v5481 = vpop.f32.mrb[0].mxu0
    %5482 = vmatprep.mubr.f32.mxu0 0.0
    %5483 = vmatmul.mubr.f32.gmra.mrb[0].mxu0 %v4458
    %v5484 = vpop.f32.mrb[0].mxu0
    %v5485 = vpop.f32.mrb[0].mxu0
    %5486 = vdwg.mxu0
    %v5487 = vadd.f32 %v5346, %v5425
    %v5488 = vadd.f32 %v5347, %v5430
    %v5489 = vadd.f32 %v5348, %v5435
    %v5490 = vadd.f32 %v5349, %v5440
    %v5491 = vadd.f32 %v5350, %v5445
    %v5492 = vadd.f32 %v5351, %v5450
    %v5493 = vadd.f32 %v5352, %v5455
    %v5494 = vadd.f32 %v5353, %v5460
    %v5495 = vadd.f32 %v5354, %v5465
    %v5496 = vadd.f32 %v5355, %v5470
    %v5497 = vadd.f32 %v5356, %v5475
    %v5498 = vadd.f32 %v5357, %v5480
    %5499 = vmatprep.subr.mxu0 0.0
    %5500 = vmatpush1.msra.mxu0 %v4115
    %5501 = vmatprep.subr.mxu0 0.0
    %5502 = vmatpush1.msra.mxu0 %v4116
    %5503 = vmatprep.subr.mxu0 0.0
    %5504 = vmatpush1.msra.mxu0 %v4117
    %5505 = vmatprep.subr.mxu0 0.0
    %5506 = vmatpush1.msra.mxu0 %v4118
    %5507 = vmatprep.subr.mxu0 0.0
    %5508 = vmatpush1.msra.mxu0 %v4119
    %5509 = vmatprep.subr.mxu0 0.0
    %5510 = vmatpush1.msra.mxu0 %v4120
    %5511 = vmatprep.subr.mxu0 0.0
    %5512 = vmatpush1.msra.mxu0 %v4121
    %5513 = vmatprep.subr.mxu0 0.0
    %5514 = vmatpush1.msra.mxu0 %v4122
    %5515 = vmatprep.subr.mxu0 0.0
    %5516 = vmatpush1.msra.mxu0 %v4123
    %5517 = vmatprep.subr.mxu0 0.0
    %5518 = vmatpush1.msra.mxu0 %v4124
    %5519 = vmatprep.subr.mxu0 0.0
    %5520 = vmatpush1.msra.mxu0 %v4125
    %5521 = vmatprep.subr.mxu0 0.0
    %5522 = vmatpush1.msra.mxu0 %v4126
    %5523 = vmatprep.subr.mxu0 0.0
    %5524 = vmatpush1.msra.mxu0 %v4127
    %5525 = vmatprep.subr.mxu0 0.0
    %5526 = vmatpush1.msra.mxu0 %v4128
    %5527 = vmatprep.subr.mxu0 0.0
    %5528 = vmatpush1.msra.mxu0 %v4129
    %5529 = vmatprep.subr.mxu0 0.0
    %5530 = vmatpush1.msra.mxu0 %v4130
    %5531 = vmatprep.subr.mxu0 0.0
    %5532 = vmatpush1.msra.mxu0 0.0
    %5533 = vmatprep.subr.mxu0 0.0
    %5534 = vmatpush1.msra.mxu0 0.0
    %5535 = vmatprep.subr.mxu0 0.0
    %5536 = vmatpush1.msra.mxu0 0.0
    %5537 = vmatprep.subr.mxu0 0.0
    %5538 = vmatpush1.msra.mxu0 0.0
    %5539 = vmatprep.subr.mxu0 0.0
    %5540 = vmatpush1.msra.mxu0 0.0
    %5541 = vmatprep.subr.mxu0 0.0
    %5542 = vmatpush1.msra.mxu0 0.0
    %5543 = vmatprep.subr.mxu0 0.0
    %5544 = vmatpush1.msra.mxu0 0.0
    %5545 = vmatprep.subr.mxu0 0.0
    %5546 = vmatpush1.msra.mxu0 0.0
    %5547 = vmatprep.subr.mxu0 0.0
    %5548 = vmatpush1.msra.mxu0 0.0
    %5549 = vmatprep.subr.mxu0 0.0
    %5550 = vmatpush1.msra.mxu0 0.0
    %5551 = vmatprep.subr.mxu0 0.0
    %5552 = vmatpush1.msra.mxu0 0.0
    %5553 = vmatprep.subr.mxu0 0.0
    %5554 = vmatpush1.msra.mxu0 0.0
    %5555 = vmatprep.subr.mxu0 0.0
    %5556 = vmatpush1.msra.mxu0 0.0
    %5557 = vmatprep.subr.mxu0 0.0
    %5558 = vmatpush1.msra.mxu0 0.0
    %5559 = vmatprep.subr.mxu0 0.0
    %5560 = vmatpush1.msra.mxu0 0.0
    %5561 = vmatprep.subr.mxu0 0.0
    %5562 = vmatpush1.msra.mxu0 0.0
    %5563 = vmatprep.mubr.f32.mxu0 0.0
    %5564 = vmatmul.mubr.f32.gmra.mrb[0].mxu0 %v4617
    %v5565 = vpop.f32.mrb[0].mxu0
    %v5566 = vadd.f32 0.0, %v5565
    %v5567 = vpop.f32.mrb[0].mxu0
    %5568 = vmatprep.mubr.f32.mxu0 0.0
    %5569 = vmatmul.mubr.f32.gmra.mrb[0].mxu0 %v4618
    %v5570 = vpop.f32.mrb[0].mxu0
    %v5571 = vadd.f32 0.0, %v5570
    %v5572 = vpop.f32.mrb[0].mxu0
    %5573 = vmatprep.mubr.f32.mxu0 0.0
    %5574 = vmatmul.mubr.f32.gmra.mrb[0].mxu0 %v4619
    %v5575 = vpop.f32.mrb[0].mxu0
    %v5576 = vadd.f32 0.0, %v5575
    %v5577 = vpop.f32.mrb[0].mxu0
    %5578 = vmatprep.mubr.f32.mxu0 0.0
    %5579 = vmatmul.mubr.f32.gmra.mrb[0].mxu0 %v4620
    %v5580 = vpop.f32.mrb[0].mxu0
    %v5581 = vadd.f32 0.0, %v5580
    %v5582 = vpop.f32.mrb[0].mxu0
    %5583 = vmatprep.mubr.f32.mxu0 0.0
    %5584 = vmatmul.mubr.f32.gmra.mrb[0].mxu0 %v4621
    %v5585 = vpop.f32.mrb[0].mxu0
    %v5586 = vadd.f32 0.0, %v5585
    %v5587 = vpop.f32.mrb[0].mxu0
    %5588 = vmatprep.mubr.f32.mxu0 0.0
    %5589 = vmatmul.mubr.f32.gmra.mrb[0].mxu0 %v4622
    %v5590 = vpop.f32.mrb[0].mxu0
    %v5591 = vadd.f32 0.0, %v5590
    %v5592 = vpop.f32.mrb[0].mxu0
    %5593 = vmatprep.mubr.f32.mxu0 0.0
    %5594 = vmatmul.mubr.f32.gmra.mrb[0].mxu0 %v4623
    %v5595 = vpop.f32.mrb[0].mxu0
    %v5596 = vadd.f32 0.0, %v5595
    %v5597 = vpop.f32.mrb[0].mxu0
    %5598 = vmatprep.mubr.f32.mxu0 0.0
    %5599 = vmatmul.mubr.f32.gmra.mrb[0].mxu0 %v4624
    %v5600 = vpop.f32.mrb[0].mxu0
    %v5601 = vadd.f32 0.0, %v5600
    %v5602 = vpop.f32.mrb[0].mxu0
    %5603 = vmatprep.mubr.f32.mxu0 0.0
    %5604 = vmatmul.mubr.f32.gmra.mrb[0].mxu0 %v4625
    %v5605 = vpop.f32.mrb[0].mxu0
    %v5606 = vadd.f32 0.0, %v5605
    %v5607 = vpop.f32.mrb[0].mxu0
    %5608 = vmatprep.mubr.f32.mxu0 0.0
    %5609 = vmatmul.mubr.f32.gmra.mrb[0].mxu0 %v4626
    %v5610 = vpop.f32.mrb[0].mxu0
    %v5611 = vadd.f32 0.0, %v5610
    %v5612 = vpop.f32.mrb[0].mxu0
    %5613 = vmatprep.mubr.f32.mxu0 0.0
    %5614 = vmatmul.mubr.f32.gmra.mrb[0].mxu0 %v4627
    %v5615 = vpop.f32.mrb[0].mxu0
    %v5616 = vadd.f32 0.0, %v5615
    %v5617 = vpop.f32.mrb[0].mxu0
    %5618 = vmatprep.mubr.f32.mxu0 0.0
    %5619 = vmatmul.mubr.f32.gmra.mrb[0].mxu0 %v4628
    %v5620 = vpop.f32.mrb[0].mxu0
    %v5621 = vadd.f32 0.0, %v5620
    %v5622 = vpop.f32.mrb[0].mxu0
    %5623 = vmatprep.mubr.f32.mxu0 0.0
    %5624 = vmatmul.mubr.f32.gmra.mrb[0].mxu0 %v4629
    %v5625 = vpop.f32.mrb[0].mxu0
    %v5626 = vpop.f32.mrb[0].mxu0
    %5627 = vdwg.mxu0
    %v5628 = vadd.f32 %v5487, %v5566
    %v5629 = vadd.f32 %v5488, %v5571
    %v5630 = vadd.f32 %v5489, %v5576
    %v5631 = vadd.f32 %v5490, %v5581
    %v5632 = vadd.f32 %v5491, %v5586
    %v5633 = vadd.f32 %v5492, %v5591
    %v5634 = vadd.f32 %v5493, %v5596
    %v5635 = vadd.f32 %v5494, %v5601
    %v5636 = vadd.f32 %v5495, %v5606
    %v5637 = vadd.f32 %v5496, %v5611
    %v5638 = vadd.f32 %v5497, %v5616
    %v5639 = vadd.f32 %v5498, %v5621
    %5640 = vmatprep.subr.mxu0 0.0
    %5641 = vmatpush1.msra.mxu0 %v4286
    %5642 = vmatprep.subr.mxu0 0.0
    %5643 = vmatpush1.msra.mxu0 %v4287
    %5644 = vmatprep.subr.mxu0 0.0
    %5645 = vmatpush1.msra.mxu0 %v4288
    %5646 = vmatprep.subr.mxu0 0.0
    %5647 = vmatpush1.msra.mxu0 %v4289
    %5648 = vmatprep.subr.mxu0 0.0
    %5649 = vmatpush1.msra.mxu0 %v4290
    %5650 = vmatprep.subr.mxu0 0.0
    %5651 = vmatpush1.msra.mxu0 %v4291
    %5652 = vmatprep.subr.mxu0 0.0
    %5653 = vmatpush1.msra.mxu0 %v4292
    %5654 = vmatprep.subr.mxu0 0.0
    %5655 = vmatpush1.msra.mxu0 %v4293
    %5656 = vmatprep.subr.mxu0 0.0
    %5657 = vmatpush1.msra.mxu0 %v4294
    %5658 = vmatprep.subr.mxu0 0.0
    %5659 = vmatpush1.msra.mxu0 %v4295
    %5660 = vmatprep.subr.mxu0 0.0
    %5661 = vmatpush1.msra.mxu0 %v4296
    %5662 = vmatprep.subr.mxu0 0.0
    %5663 = vmatpush1.msra.mxu0 %v4297
    %5664 = vmatprep.subr.mxu0 0.0
    %5665 = vmatpush1.msra.mxu0 %v4298
    %5666 = vmatprep.subr.mxu0 0.0
    %5667 = vmatpush1.msra.mxu0 %v4299
    %5668 = vmatprep.subr.mxu0 0.0
    %5669 = vmatpush1.msra.mxu0 %v4300
    %5670 = vmatprep.subr.mxu0 0.0
    %5671 = vmatpush1.msra.mxu0 %v4301
    %5672 = vmatprep.subr.mxu0 0.0
    %5673 = vmatpush1.msra.mxu0 0.0
    %5674 = vmatprep.subr.mxu0 0.0
    %5675 = vmatpush1.msra.mxu0 0.0
    %5676 = vmatprep.subr.mxu0 0.0
    %5677 = vmatpush1.msra.mxu0 0.0
    %5678 = vmatprep.subr.mxu0 0.0
    %5679 = vmatpush1.msra.mxu0 0.0
    %5680 = vmatprep.subr.mxu0 0.0
    %5681 = vmatpush1.msra.mxu0 0.0
    %5682 = vmatprep.subr.mxu0 0.0
    %5683 = vmatpush1.msra.mxu0 0.0
    %5684 = vmatprep.subr.mxu0 0.0
    %5685 = vmatpush1.msra.mxu0 0.0
    %5686 = vmatprep.subr.mxu0 0.0
    %5687 = vmatpush1.msra.mxu0 0.0
    %5688 = vmatprep.subr.mxu0 0.0
    %5689 = vmatpush1.msra.mxu0 0.0
    %5690 = vmatprep.subr.mxu0 0.0
    %5691 = vmatpush1.msra.mxu0 0.0
    %5692 = vmatprep.subr.mxu0 0.0
    %5693 = vmatpush1.msra.mxu0 0.0
    %5694 = vmatprep.subr.mxu0 0.0
    %5695 = vmatpush1.msra.mxu0 0.0
    %5696 = vmatprep.subr.mxu0 0.0
    %5697 = vmatpush1.msra.mxu0 0.0
    %5698 = vmatprep.subr.mxu0 0.0
    %5699 = vmatpush1.msra.mxu0 0.0
    %5700 = vmatprep.subr.mxu0 0.0
    %5701 = vmatpush1.msra.mxu0 0.0
    %5702 = vmatprep.subr.mxu0 0.0
    %5703 = vmatpush1.msra.mxu0 0.0
    %5704 = vmatprep.mubr.f32.mxu0 0.0
    %5705 = vmatmul.mubr.f32.gmra.mrb[0].mxu0 %v4788
    %v5706 = vpop.f32.mrb[0].mxu0
    %v5707 = vadd.f32 0.0, %v5706
    %v5708 = vpop.f32.mrb[0].mxu0
    %5709 = vmatprep.mubr.f32.mxu0 0.0
    %5710 = vmatmul.mubr.f32.gmra.mrb[0].mxu0 %v4789
    %v5711 = vpop.f32.mrb[0].mxu0
    %v5712 = vadd.f32 0.0, %v5711
    %v5713 = vpop.f32.mrb[0].mxu0
    %5714 = vmatprep.mubr.f32.mxu0 0.0
    %5715 = vmatmul.mubr.f32.gmra.mrb[0].mxu0 %v4790
    %v5716 = vpop.f32.mrb[0].mxu0
    %v5717 = vadd.f32 0.0, %v5716
    %v5718 = vpop.f32.mrb[0].mxu0
    %5719 = vmatprep.mubr.f32.mxu0 0.0
    %5720 = vmatmul.mubr.f32.gmra.mrb[0].mxu0 %v4791
    %v5721 = vpop.f32.mrb[0].mxu0
    %v5722 = vadd.f32 0.0, %v5721
    %v5723 = vpop.f32.mrb[0].mxu0
    %5724 = vmatprep.mubr.f32.mxu0 0.0
    %5725 = vmatmul.mubr.f32.gmra.mrb[0].mxu0 %v4792
    %v5726 = vpop.f32.mrb[0].mxu0
    %v5727 = vadd.f32 0.0, %v5726
    %v5728 = vpop.f32.mrb[0].mxu0
    %5729 = vmatprep.mubr.f32.mxu0 0.0
    %5730 = vmatmul.mubr.f32.gmra.mrb[0].mxu0 %v4793
    %v5731 = vpop.f32.mrb[0].mxu0
    %v5732 = vadd.f32 0.0, %v5731
    %v5733 = vpop.f32.mrb[0].mxu0
    %5734 = vmatprep.mubr.f32.mxu0 0.0
    %5735 = vmatmul.mubr.f32.gmra.mrb[0].mxu0 %v4794
    %v5736 = vpop.f32.mrb[0].mxu0
    %v5737 = vadd.f32 0.0, %v5736
    %v5738 = vpop.f32.mrb[0].mxu0
    %5739 = vmatprep.mubr.f32.mxu0 0.0
    %5740 = vmatmul.mubr.f32.gmra.mrb[0].mxu0 %v4795
    %v5741 = vpop.f32.mrb[0].mxu0
    %v5742 = vadd.f32 0.0, %v5741
    %v5743 = vpop.f32.mrb[0].mxu0
    %5744 = vmatprep.mubr.f32.mxu0 0.0
    %5745 = vmatmul.mubr.f32.gmra.mrb[0].mxu0 %v4796
    %v5746 = vpop.f32.mrb[0].mxu0
    %v5747 = vadd.f32 0.0, %v5746
    %v5748 = vpop.f32.mrb[0].mxu0
    %5749 = vmatprep.mubr.f32.mxu0 0.0
    %5750 = vmatmul.mubr.f32.gmra.mrb[0].mxu0 %v4797
    %v5751 = vpop.f32.mrb[0].mxu0
    %v5752 = vadd.f32 0.0, %v5751
    %v5753 = vpop.f32.mrb[0].mxu0
    %5754 = vmatprep.mubr.f32.mxu0 0.0
    %5755 = vmatmul.mubr.f32.gmra.mrb[0].mxu0 %v4798
    %v5756 = vpop.f32.mrb[0].mxu0
    %v5757 = vadd.f32 0.0, %v5756
    %v5758 = vpop.f32.mrb[0].mxu0
    %5759 = vmatprep.mubr.f32.mxu0 0.0
    %5760 = vmatmul.mubr.f32.gmra.mrb[0].mxu0 %v4799
    %v5761 = vpop.f32.mrb[0].mxu0
    %v5762 = vadd.f32 0.0, %v5761
    %v5763 = vpop.f32.mrb[0].mxu0
    %5764 = vmatprep.mubr.f32.mxu0 0.0
    %5765 = vmatmul.mubr.f32.gmra.mrb[0].mxu0 %v4800
    %v5766 = vpop.f32.mrb[0].mxu0
    %v5767 = vpop.f32.mrb[0].mxu0
    %5768 = vdwg.mxu0
    %v5769 = vadd.f32 %v5628, %v5707
    %v5770 = vadd.f32 %v5629, %v5712
    %v5771 = vadd.f32 %v5630, %v5717
    %v5772 = vadd.f32 %v5631, %v5722
    %v5773 = vadd.f32 %v5632, %v5727
    %v5774 = vadd.f32 %v5633, %v5732
    %v5775 = vadd.f32 %v5634, %v5737
    %v5776 = vadd.f32 %v5635, %v5742
    %v5777 = vadd.f32 %v5636, %v5747
    %v5778 = vadd.f32 %v5637, %v5752
    %v5779 = vadd.f32 %v5638, %v5757
    %v5780 = vadd.f32 %v5639, %v5762
    %s5781 = sadd.s32 %s3448, 3
    %s5782 = smul.u32 %s5781, 120
    %s5783 = scalar_lea.vmem [#allocation2], %s5782
    %v5784 = vld [vmem:[%s5783] sm:$0xff]
    %v5785 = vld [vmem:[%s5783 + $0x8] sm:$0xff]
    %v5786 = vld [vmem:[%s5783 + $0x10] sm:$0xff]
    %v5787 = vld [vmem:[%s5783 + $0x18] sm:$0xff]
    %v5788 = vld [vmem:[%s5783 + $0x20] sm:$0xff]
    %v5789 = vld [vmem:[%s5783 + $0x28] sm:$0xff]
    %v5790 = vld [vmem:[%s5783 + $0x30] sm:$0xff]
    %v5791 = vld [vmem:[%s5783 + $0x38] sm:$0xff]
    %v5792 = vld [vmem:[%s5783 + $0x40] sm:$0xff]
    %v5793 = vld [vmem:[%s5783 + $0x48] sm:$0xff]
    %v5794 = vld [vmem:[%s5783 + $0x50] sm:$0xff]
    %v5795 = vld [vmem:[%s5783 + $0x58] sm:$0xff]
    %v5796 = vld [vmem:[%s5783 + $0x60] sm:$0xff]
    %5797 = vmatprep.subr.mxu0 0.0
    %5798 = vmatpush1.msra.mxu0 %v4460
    %5799 = vmatprep.subr.mxu0 0.0
    %5800 = vmatpush1.msra.mxu0 %v4461
    %5801 = vmatprep.subr.mxu0 0.0
    %5802 = vmatpush1.msra.mxu0 %v4462
    %5803 = vmatprep.subr.mxu0 0.0
    %5804 = vmatpush1.msra.mxu0 %v4463
    %5805 = vmatprep.subr.mxu0 0.0
    %5806 = vmatpush1.msra.mxu0 %v4464
    %5807 = vmatprep.subr.mxu0 0.0
    %5808 = vmatpush1.msra.mxu0 %v4465
    %5809 = vmatprep.subr.mxu0 0.0
    %5810 = vmatpush1.msra.mxu0 %v4466
    %5811 = vmatprep.subr.mxu0 0.0
    %5812 = vmatpush1.msra.mxu0 %v4467
    %5813 = vmatprep.subr.mxu0 0.0
    %5814 = vmatpush1.msra.mxu0 %v4468
    %5815 = vmatprep.subr.mxu0 0.0
    %5816 = vmatpush1.msra.mxu0 %v4469
    %5817 = vmatprep.subr.mxu0 0.0
    %5818 = vmatpush1.msra.mxu0 %v4470
    %5819 = vmatprep.subr.mxu0 0.0
    %5820 = vmatpush1.msra.mxu0 %v4471
    %5821 = vmatprep.subr.mxu0 0.0
    %5822 = vmatpush1.msra.mxu0 %v4472
    %5823 = vmatprep.subr.mxu0 0.0
    %5824 = vmatpush1.msra.mxu0 %v4473
    %5825 = vmatprep.subr.mxu0 0.0
    %5826 = vmatpush1.msra.mxu0 %v4474
    %5827 = vmatprep.subr.mxu0 0.0
    %5828 = vmatpush1.msra.mxu0 %v4475
    %5829 = vmatprep.subr.mxu0 0.0
    %5830 = vmatpush1.msra.mxu0 0.0
    %5831 = vmatprep.subr.mxu0 0.0
    %5832 = vmatpush1.msra.mxu0 0.0
    %5833 = vmatprep.subr.mxu0 0.0
    %5834 = vmatpush1.msra.mxu0 0.0
    %5835 = vmatprep.subr.mxu0 0.0
    %5836 = vmatpush1.msra.mxu0 0.0
    %5837 = vmatprep.subr.mxu0 0.0
    %5838 = vmatpush1.msra.mxu0 0.0
    %5839 = vmatprep.subr.mxu0 0.0
    %5840 = vmatpush1.msra.mxu0 0.0
    %5841 = vmatprep.subr.mxu0 0.0
    %5842 = vmatpush1.msra.mxu0 0.0
    %5843 = vmatprep.subr.mxu0 0.0
    %5844 = vmatpush1.msra.mxu0 0.0
    %5845 = vmatprep.subr.mxu0 0.0
    %5846 = vmatpush1.msra.mxu0 0.0
    %5847 = vmatprep.subr.mxu0 0.0
    %5848 = vmatpush1.msra.mxu0 0.0
    %5849 = vmatprep.subr.mxu0 0.0
    %5850 = vmatpush1.msra.mxu0 0.0
    %5851 = vmatprep.subr.mxu0 0.0
    %5852 = vmatpush1.msra.mxu0 0.0
    %5853 = vmatprep.subr.mxu0 0.0
    %5854 = vmatpush1.msra.mxu0 0.0
    %5855 = vmatprep.subr.mxu0 0.0
    %5856 = vmatpush1.msra.mxu0 0.0
    %5857 = vmatprep.subr.mxu0 0.0
    %5858 = vmatpush1.msra.mxu0 0.0
    %5859 = vmatprep.subr.mxu0 0.0
    %5860 = vmatpush1.msra.mxu0 0.0
    %5861 = vmatprep.mubr.f32.mxu0 0.0
    %5862 = vmatmul.mubr.f32.gmra.mrb[0].mxu0 %v5784
    %v5863 = vpop.f32.mrb[0].mxu0
    %v5864 = vadd.f32 0.0, %v5863
    %v5865 = vpop.f32.mrb[0].mxu0
    %5866 = vmatprep.mubr.f32.mxu0 0.0
    %5867 = vmatmul.mubr.f32.gmra.mrb[0].mxu0 %v5785
    %v5868 = vpop.f32.mrb[0].mxu0
    %v5869 = vadd.f32 0.0, %v5868
    %v5870 = vpop.f32.mrb[0].mxu0
    %5871 = vmatprep.mubr.f32.mxu0 0.0
    %5872 = vmatmul.mubr.f32.gmra.mrb[0].mxu0 %v5786
    %v5873 = vpop.f32.mrb[0].mxu0
    %v5874 = vadd.f32 0.0, %v5873
    %v5875 = vpop.f32.mrb[0].mxu0
    %5876 = vmatprep.mubr.f32.mxu0 0.0
    %5877 = vmatmul.mubr.f32.gmra.mrb[0].mxu0 %v5787
    %v5878 = vpop.f32.mrb[0].mxu0
    %v5879 = vadd.f32 0.0, %v5878
    %v5880 = vpop.f32.mrb[0].mxu0
    %5881 = vmatprep.mubr.f32.mxu0 0.0
    %5882 = vmatmul.mubr.f32.gmra.mrb[0].mxu0 %v5788
    %v5883 = vpop.f32.mrb[0].mxu0
    %v5884 = vadd.f32 0.0, %v5883
    %v5885 = vpop.f32.mrb[0].mxu0
    %5886 = vmatprep.mubr.f32.mxu0 0.0
    %5887 = vmatmul.mubr.f32.gmra.mrb[0].mxu0 %v5789
    %v5888 = vpop.f32.mrb[0].mxu0
    %v5889 = vadd.f32 0.0, %v5888
    %v5890 = vpop.f32.mrb[0].mxu0
    %5891 = vmatprep.mubr.f32.mxu0 0.0
    %5892 = vmatmul.mubr.f32.gmra.mrb[0].mxu0 %v5790
    %v5893 = vpop.f32.mrb[0].mxu0
    %v5894 = vadd.f32 0.0, %v5893
    %v5895 = vpop.f32.mrb[0].mxu0
    %5896 = vmatprep.mubr.f32.mxu0 0.0
    %5897 = vmatmul.mubr.f32.gmra.mrb[0].mxu0 %v5791
    %v5898 = vpop.f32.mrb[0].mxu0
    %v5899 = vadd.f32 0.0, %v5898
    %v5900 = vpop.f32.mrb[0].mxu0
    %5901 = vmatprep.mubr.f32.mxu0 0.0
    %5902 = vmatmul.mubr.f32.gmra.mrb[0].mxu0 %v5792
    %v5903 = vpop.f32.mrb[0].mxu0
    %v5904 = vadd.f32 0.0, %v5903
    %v5905 = vpop.f32.mrb[0].mxu0
    %5906 = vmatprep.mubr.f32.mxu0 0.0
    %5907 = vmatmul.mubr.f32.gmra.mrb[0].mxu0 %v5793
    %v5908 = vpop.f32.mrb[0].mxu0
    %v5909 = vadd.f32 0.0, %v5908
    %v5910 = vpop.f32.mrb[0].mxu0
    %5911 = vmatprep.mubr.f32.mxu0 0.0
    %5912 = vmatmul.mubr.f32.gmra.mrb[0].mxu0 %v5794
    %v5913 = vpop.f32.mrb[0].mxu0
    %v5914 = vadd.f32 0.0, %v5913
    %v5915 = vpop.f32.mrb[0].mxu0
    %5916 = vmatprep.mubr.f32.mxu0 0.0
    %5917 = vmatmul.mubr.f32.gmra.mrb[0].mxu0 %v5795
    %v5918 = vpop.f32.mrb[0].mxu0
    %v5919 = vadd.f32 0.0, %v5918
    %v5920 = vpop.f32.mrb[0].mxu0
    %5921 = vmatprep.mubr.f32.mxu0 0.0
    %5922 = vmatmul.mubr.f32.gmra.mrb[0].mxu0 %v5796
    %v5923 = vpop.f32.mrb[0].mxu0
    %v5924 = vpop.f32.mrb[0].mxu0
    %5925 = vdwg.mxu0
    %v5926 = vadd.f32 %v5769, %v5864
    %v5927 = vadd.f32 %v5770, %v5869
    %v5928 = vadd.f32 %v5771, %v5874
    %v5929 = vadd.f32 %v5772, %v5879
    %v5930 = vadd.f32 %v5773, %v5884
    %v5931 = vadd.f32 %v5774, %v5889
    %v5932 = vadd.f32 %v5775, %v5894
    %v5933 = vadd.f32 %v5776, %v5899
    %v5934 = vadd.f32 %v5777, %v5904
    %v5935 = vadd.f32 %v5778, %v5909
    %v5936 = vadd.f32 %v5779, %v5914
    %v5937 = vadd.f32 %v5780, %v5919
    %v5938 = vld [vmem:[%s5783 + $0x8] sm:$0xff]
    %v5939 = vld [vmem:[%s5783 + $0x10] sm:$0xff]
    %v5940 = vld [vmem:[%s5783 + $0x18] sm:$0xff]
    %v5941 = vld [vmem:[%s5783 + $0x20] sm:$0xff]
    %v5942 = vld [vmem:[%s5783 + $0x28] sm:$0xff]
    %v5943 = vld [vmem:[%s5783 + $0x30] sm:$0xff]
    %v5944 = vld [vmem:[%s5783 + $0x38] sm:$0xff]
    %v5945 = vld [vmem:[%s5783 + $0x40] sm:$0xff]
    %v5946 = vld [vmem:[%s5783 + $0x48] sm:$0xff]
    %v5947 = vld [vmem:[%s5783 + $0x50] sm:$0xff]
    %v5948 = vld [vmem:[%s5783 + $0x58] sm:$0xff]
    %v5949 = vld [vmem:[%s5783 + $0x60] sm:$0xff]
    %v5950 = vld [vmem:[%s5783 + $0x68] sm:$0xff]
    %5951 = vmatprep.subr.mxu0 0.0
    %5952 = vmatpush1.msra.mxu0 %v4631
    %5953 = vmatprep.subr.mxu0 0.0
    %5954 = vmatpush1.msra.mxu0 %v4632
    %5955 = vmatprep.subr.mxu0 0.0
    %5956 = vmatpush1.msra.mxu0 %v4633
    %5957 = vmatprep.subr.mxu0 0.0
    %5958 = vmatpush1.msra.mxu0 %v4634
    %5959 = vmatprep.subr.mxu0 0.0
    %5960 = vmatpush1.msra.mxu0 %v4635
    %5961 = vmatprep.subr.mxu0 0.0
    %5962 = vmatpush1.msra.mxu0 %v4636
    %5963 = vmatprep.subr.mxu0 0.0
    %5964 = vmatpush1.msra.mxu0 %v4637
    %5965 = vmatprep.subr.mxu0 0.0
    %5966 = vmatpush1.msra.mxu0 %v4638
    %5967 = vmatprep.subr.mxu0 0.0
    %5968 = vmatpush1.msra.mxu0 %v4639
    %5969 = vmatprep.subr.mxu0 0.0
    %5970 = vmatpush1.msra.mxu0 %v4640
    %5971 = vmatprep.subr.mxu0 0.0
    %5972 = vmatpush1.msra.mxu0 %v4641
    %5973 = vmatprep.subr.mxu0 0.0
    %5974 = vmatpush1.msra.mxu0 %v4642
    %5975 = vmatprep.subr.mxu0 0.0
    %5976 = vmatpush1.msra.mxu0 %v4643
    %5977 = vmatprep.subr.mxu0 0.0
    %5978 = vmatpush1.msra.mxu0 %v4644
    %5979 = vmatprep.subr.mxu0 0.0
    %5980 = vmatpush1.msra.mxu0 %v4645
    %5981 = vmatprep.subr.mxu0 0.0
    %5982 = vmatpush1.msra.mxu0 %v4646
    %5983 = vmatprep.subr.mxu0 0.0
    %5984 = vmatpush1.msra.mxu0 0.0
    %5985 = vmatprep.subr.mxu0 0.0
    %5986 = vmatpush1.msra.mxu0 0.0
    %5987 = vmatprep.subr.mxu0 0.0
    %5988 = vmatpush1.msra.mxu0 0.0
    %5989 = vmatprep.subr.mxu0 0.0
    %5990 = vmatpush1.msra.mxu0 0.0
    %5991 = vmatprep.subr.mxu0 0.0
    %5992 = vmatpush1.msra.mxu0 0.0
    %5993 = vmatprep.subr.mxu0 0.0
    %5994 = vmatpush1.msra.mxu0 0.0
    %5995 = vmatprep.subr.mxu0 0.0
    %5996 = vmatpush1.msra.mxu0 0.0
    %5997 = vmatprep.subr.mxu0 0.0
    %5998 = vmatpush1.msra.mxu0 0.0
    %5999 = vmatprep.subr.mxu0 0.0
    %6000 = vmatpush1.msra.mxu0 0.0
    %6001 = vmatprep.subr.mxu0 0.0
    %6002 = vmatpush1.msra.mxu0 0.0
    %6003 = vmatprep.subr.mxu0 0.0
    %6004 = vmatpush1.msra.mxu0 0.0
    %6005 = vmatprep.subr.mxu0 0.0
    %6006 = vmatpush1.msra.mxu0 0.0
    %6007 = vmatprep.subr.mxu0 0.0
    %6008 = vmatpush1.msra.mxu0 0.0
    %6009 = vmatprep.subr.mxu0 0.0
    %6010 = vmatpush1.msra.mxu0 0.0
    %6011 = vmatprep.subr.mxu0 0.0
    %6012 = vmatpush1.msra.mxu0 0.0
    %6013 = vmatprep.subr.mxu0 0.0
    %6014 = vmatpush1.msra.mxu0 0.0
    %6015 = vmatprep.mubr.f32.mxu0 0.0
    %6016 = vmatmul.mubr.f32.gmra.mrb[0].mxu0 %v5938
    %v6017 = vpop.f32.mrb[0].mxu0
    %v6018 = vadd.f32 0.0, %v6017
    %v6019 = vpop.f32.mrb[0].mxu0
    %6020 = vmatprep.mubr.f32.mxu0 0.0
    %6021 = vmatmul.mubr.f32.gmra.mrb[0].mxu0 %v5939
    %v6022 = vpop.f32.mrb[0].mxu0
    %v6023 = vadd.f32 0.0, %v6022
    %v6024 = vpop.f32.mrb[0].mxu0
    %6025 = vmatprep.mubr.f32.mxu0 0.0
    %6026 = vmatmul.mubr.f32.gmra.mrb[0].mxu0 %v5940
    %v6027 = vpop.f32.mrb[0].mxu0
    %v6028 = vadd.f32 0.0, %v6027
    %v6029 = vpop.f32.mrb[0].mxu0
    %6030 = vmatprep.mubr.f32.mxu0 0.0
    %6031 = vmatmul.mubr.f32.gmra.mrb[0].mxu0 %v5941
    %v6032 = vpop.f32.mrb[0].mxu0
    %v6033 = vadd.f32 0.0, %v6032
    %v6034 = vpop.f32.mrb[0].mxu0
    %6035 = vmatprep.mubr.f32.mxu0 0.0
    %6036 = vmatmul.mubr.f32.gmra.mrb[0].mxu0 %v5942
    %v6037 = vpop.f32.mrb[0].mxu0
    %v6038 = vadd.f32 0.0, %v6037
    %v6039 = vpop.f32.mrb[0].mxu0
    %6040 = vmatprep.mubr.f32.mxu0 0.0
    %6041 = vmatmul.mubr.f32.gmra.mrb[0].mxu0 %v5943
    %v6042 = vpop.f32.mrb[0].mxu0
    %v6043 = vadd.f32 0.0, %v6042
    %v6044 = vpop.f32.mrb[0].mxu0
    %6045 = vmatprep.mubr.f32.mxu0 0.0
    %6046 = vmatmul.mubr.f32.gmra.mrb[0].mxu0 %v5944
    %v6047 = vpop.f32.mrb[0].mxu0
    %v6048 = vadd.f32 0.0, %v6047
    %v6049 = vpop.f32.mrb[0].mxu0
    %6050 = vmatprep.mubr.f32.mxu0 0.0
    %6051 = vmatmul.mubr.f32.gmra.mrb[0].mxu0 %v5945
    %v6052 = vpop.f32.mrb[0].mxu0
    %v6053 = vadd.f32 0.0, %v6052
    %v6054 = vpop.f32.mrb[0].mxu0
    %6055 = vmatprep.mubr.f32.mxu0 0.0
    %6056 = vmatmul.mubr.f32.gmra.mrb[0].mxu0 %v5946
    %v6057 = vpop.f32.mrb[0].mxu0
    %v6058 = vadd.f32 0.0, %v6057
    %v6059 = vpop.f32.mrb[0].mxu0
    %6060 = vmatprep.mubr.f32.mxu0 0.0
    %6061 = vmatmul.mubr.f32.gmra.mrb[0].mxu0 %v5947
    %v6062 = vpop.f32.mrb[0].mxu0
    %v6063 = vadd.f32 0.0, %v6062
    %v6064 = vpop.f32.mrb[0].mxu0
    %6065 = vmatprep.mubr.f32.mxu0 0.0
    %6066 = vmatmul.mubr.f32.gmra.mrb[0].mxu0 %v5948
    %v6067 = vpop.f32.mrb[0].mxu0
    %v6068 = vadd.f32 0.0, %v6067
    %v6069 = vpop.f32.mrb[0].mxu0
    %6070 = vmatprep.mubr.f32.mxu0 0.0
    %6071 = vmatmul.mubr.f32.gmra.mrb[0].mxu0 %v5949
    %v6072 = vpop.f32.mrb[0].mxu0
    %v6073 = vadd.f32 0.0, %v6072
    %v6074 = vpop.f32.mrb[0].mxu0
    %6075 = vmatprep.mubr.f32.mxu0 0.0
    %6076 = vmatmul.mubr.f32.gmra.mrb[0].mxu0 %v5950
    %v6077 = vpop.f32.mrb[0].mxu0
    %v6078 = vpop.f32.mrb[0].mxu0
    %6079 = vdwg.mxu0
    %v6080 = vadd.f32 %v5926, %v6018
    %v6081 = vadd.f32 %v5927, %v6023
    %v6082 = vadd.f32 %v5928, %v6028
    %v6083 = vadd.f32 %v5929, %v6033
    %v6084 = vadd.f32 %v5930, %v6038
    %v6085 = vadd.f32 %v5931, %v6043
    %v6086 = vadd.f32 %v5932, %v6048
    %v6087 = vadd.f32 %v5933, %v6053
    %v6088 = vadd.f32 %v5934, %v6058
    %v6089 = vadd.f32 %v5935, %v6063
    %v6090 = vadd.f32 %v5936, %v6068
    %v6091 = vadd.f32 %v5937, %v6073
    %v6092 = vld [vmem:[%s5783 + $0x10] sm:$0xff]
    %v6093 = vld [vmem:[%s5783 + $0x18] sm:$0xff]
    %v6094 = vld [vmem:[%s5783 + $0x20] sm:$0xff]
    %v6095 = vld [vmem:[%s5783 + $0x28] sm:$0xff]
    %v6096 = vld [vmem:[%s5783 + $0x30] sm:$0xff]
    %v6097 = vld [vmem:[%s5783 + $0x38] sm:$0xff]
    %v6098 = vld [vmem:[%s5783 + $0x40] sm:$0xff]
    %v6099 = vld [vmem:[%s5783 + $0x48] sm:$0xff]
    %v6100 = vld [vmem:[%s5783 + $0x50] sm:$0xff]
    %v6101 = vld [vmem:[%s5783 + $0x58] sm:$0xff]
    %v6102 = vld [vmem:[%s5783 + $0x60] sm:$0xff]
    %v6103 = vld [vmem:[%s5783 + $0x68] sm:$0xff]
    %v6104 = vld [vmem:[%s5783 + $0x70] sm:$0xff]
    %6105 = vmatprep.subr.mxu0 0.0
    %6106 = vmatpush1.msra.mxu0 %v4802
    %6107 = vmatprep.subr.mxu0 0.0
    %6108 = vmatpush1.msra.mxu0 %v4803
    %6109 = vmatprep.subr.mxu0 0.0
    %6110 = vmatpush1.msra.mxu0 %v4804
    %6111 = vmatprep.subr.mxu0 0.0
    %6112 = vmatpush1.msra.mxu0 %v4805
    %6113 = vmatprep.subr.mxu0 0.0
    %6114 = vmatpush1.msra.mxu0 %v4806
    %6115 = vmatprep.subr.mxu0 0.0
    %6116 = vmatpush1.msra.mxu0 %v4807
    %6117 = vmatprep.subr.mxu0 0.0
    %6118 = vmatpush1.msra.mxu0 %v4808
    %6119 = vmatprep.subr.mxu0 0.0
    %6120 = vmatpush1.msra.mxu0 %v4809
    %6121 = vmatprep.subr.mxu0 0.0
    %6122 = vmatpush1.msra.mxu0 %v4810
    %6123 = vmatprep.subr.mxu0 0.0
    %6124 = vmatpush1.msra.mxu0 %v4811
    %6125 = vmatprep.subr.mxu0 0.0
    %6126 = vmatpush1.msra.mxu0 %v4812
    %6127 = vmatprep.subr.mxu0 0.0
    %6128 = vmatpush1.msra.mxu0 %v4813
    %6129 = vmatprep.subr.mxu0 0.0
    %6130 = vmatpush1.msra.mxu0 %v4814
    %6131 = vmatprep.subr.mxu0 0.0
    %6132 = vmatpush1.msra.mxu0 %v4815
    %6133 = vmatprep.subr.mxu0 0.0
    %6134 = vmatpush1.msra.mxu0 %v4816
    %6135 = vmatprep.subr.mxu0 0.0
    %6136 = vmatpush1.msra.mxu0 %v4817
    %6137 = vmatprep.subr.mxu0 0.0
    %6138 = vmatpush1.msra.mxu0 0.0
    %6139 = vmatprep.subr.mxu0 0.0
    %6140 = vmatpush1.msra.mxu0 0.0
    %6141 = vmatprep.subr.mxu0 0.0
    %6142 = vmatpush1.msra.mxu0 0.0
    %6143 = vmatprep.subr.mxu0 0.0
    %6144 = vmatpush1.msra.mxu0 0.0
    %6145 = vmatprep.subr.mxu0 0.0
    %6146 = vmatpush1.msra.mxu0 0.0
    %6147 = vmatprep.subr.mxu0 0.0
    %6148 = vmatpush1.msra.mxu0 0.0
    %6149 = vmatprep.subr.mxu0 0.0
    %6150 = vmatpush1.msra.mxu0 0.0
    %6151 = vmatprep.subr.mxu0 0.0
    %6152 = vmatpush1.msra.mxu0 0.0
    %6153 = vmatprep.subr.mxu0 0.0
    %6154 = vmatpush1.msra.mxu0 0.0
    %6155 = vmatprep.subr.mxu0 0.0
    %6156 = vmatpush1.msra.mxu0 0.0
    %6157 = vmatprep.subr.mxu0 0.0
    %6158 = vmatpush1.msra.mxu0 0.0
    %6159 = vmatprep.subr.mxu0 0.0
    %6160 = vmatpush1.msra.mxu0 0.0
    %6161 = vmatprep.subr.mxu0 0.0
    %6162 = vmatpush1.msra.mxu0 0.0
    %6163 = vmatprep.subr.mxu0 0.0
    %6164 = vmatpush1.msra.mxu0 0.0
    %6165 = vmatprep.subr.mxu0 0.0
    %6166 = vmatpush1.msra.mxu0 0.0
    %6167 = vmatprep.subr.mxu0 0.0
    %6168 = vmatpush1.msra.mxu0 0.0
    %6169 = vmatprep.mubr.f32.mxu0 0.0
    %6170 = vmatmul.mubr.f32.gmra.mrb[0].mxu0 %v6092
    %v6171 = vpop.f32.mrb[0].mxu0
    %v6172 = vadd.f32 0.0, %v6171
    %v6173 = vpop.f32.mrb[0].mxu0
    %6174 = vmatprep.mubr.f32.mxu0 0.0
    %6175 = vmatmul.mubr.f32.gmra.mrb[0].mxu0 %v6093
    %v6176 = vpop.f32.mrb[0].mxu0
    %v6177 = vadd.f32 0.0, %v6176
    %v6178 = vpop.f32.mrb[0].mxu0
    %6179 = vmatprep.mubr.f32.mxu0 0.0
    %6180 = vmatmul.mubr.f32.gmra.mrb[0].mxu0 %v6094
    %v6181 = vpop.f32.mrb[0].mxu0
    %v6182 = vadd.f32 0.0, %v6181
    %v6183 = vpop.f32.mrb[0].mxu0
    %6184 = vmatprep.mubr.f32.mxu0 0.0
    %6185 = vmatmul.mubr.f32.gmra.mrb[0].mxu0 %v6095
    %v6186 = vpop.f32.mrb[0].mxu0
    %v6187 = vadd.f32 0.0, %v6186
    %v6188 = vpop.f32.mrb[0].mxu0
    %6189 = vmatprep.mubr.f32.mxu0 0.0
    %6190 = vmatmul.mubr.f32.gmra.mrb[0].mxu0 %v6096
    %v6191 = vpop.f32.mrb[0].mxu0
    %v6192 = vadd.f32 0.0, %v6191
    %v6193 = vpop.f32.mrb[0].mxu0
    %6194 = vmatprep.mubr.f32.mxu0 0.0
    %6195 = vmatmul.mubr.f32.gmra.mrb[0].mxu0 %v6097
    %v6196 = vpop.f32.mrb[0].mxu0
    %v6197 = vadd.f32 0.0, %v6196
    %v6198 = vpop.f32.mrb[0].mxu0
    %6199 = vmatprep.mubr.f32.mxu0 0.0
    %6200 = vmatmul.mubr.f32.gmra.mrb[0].mxu0 %v6098
    %v6201 = vpop.f32.mrb[0].mxu0
    %v6202 = vadd.f32 0.0, %v6201
    %v6203 = vpop.f32.mrb[0].mxu0
    %6204 = vmatprep.mubr.f32.mxu0 0.0
    %6205 = vmatmul.mubr.f32.gmra.mrb[0].mxu0 %v6099
    %v6206 = vpop.f32.mrb[0].mxu0
    %v6207 = vadd.f32 0.0, %v6206
    %v6208 = vpop.f32.mrb[0].mxu0
    %6209 = vmatprep.mubr.f32.mxu0 0.0
    %6210 = vmatmul.mubr.f32.gmra.mrb[0].mxu0 %v6100
    %v6211 = vpop.f32.mrb[0].mxu0
    %v6212 = vadd.f32 0.0, %v6211
    %v6213 = vpop.f32.mrb[0].mxu0
    %6214 = vmatprep.mubr.f32.mxu0 0.0
    %6215 = vmatmul.mubr.f32.gmra.mrb[0].mxu0 %v6101
    %v6216 = vpop.f32.mrb[0].mxu0
    %v6217 = vadd.f32 0.0, %v6216
    %v6218 = vpop.f32.mrb[0].mxu0
    %6219 = vmatprep.mubr.f32.mxu0 0.0
    %6220 = vmatmul.mubr.f32.gmra.mrb[0].mxu0 %v6102
    %v6221 = vpop.f32.mrb[0].mxu0
    %v6222 = vadd.f32 0.0, %v6221
    %v6223 = vpop.f32.mrb[0].mxu0
    %6224 = vmatprep.mubr.f32.mxu0 0.0
    %6225 = vmatmul.mubr.f32.gmra.mrb[0].mxu0 %v6103
    %v6226 = vpop.f32.mrb[0].mxu0
    %v6227 = vadd.f32 0.0, %v6226
    %v6228 = vpop.f32.mrb[0].mxu0
    %6229 = vmatprep.mubr.f32.mxu0 0.0
    %6230 = vmatmul.mubr.f32.gmra.mrb[0].mxu0 %v6104
    %v6231 = vpop.f32.mrb[0].mxu0
    %v6232 = vpop.f32.mrb[0].mxu0
    %6233 = vdwg.mxu0
    %v6234 = vadd.f32 %v6080, %v6172
    %v6235 = vadd.f32 %v6081, %v6177
    %v6236 = vadd.f32 %v6082, %v6182
    %v6237 = vadd.f32 %v6083, %v6187
    %v6238 = vadd.f32 %v6084, %v6192
    %v6239 = vadd.f32 %v6085, %v6197
    %v6240 = vadd.f32 %v6086, %v6202
    %v6241 = vadd.f32 %v6087, %v6207
    %v6242 = vadd.f32 %v6088, %v6212
    %v6243 = vadd.f32 %v6089, %v6217
    %v6244 = vadd.f32 %v6090, %v6222
    %v6245 = vadd.f32 %v6091, %v6227
    %v6246 = vmax.f32 %v4947, %v4948
    %v6247 = vmax.f32 %v6234, %v6235
    %v6248 = vmax.f32 %v6246, %v6247
    %v6250 = vlaneseq
    %v6251 = vshrl.u32 %v6250, 7
    %v6252 = vsub.s32 0, %v6251
    %v6253 = vrot.slane %v39, %v6252
    %v6255 = vadd.f32 %v6248, %v6253
    %v6256 = vmax.f32 %v6255, 0.0
    %s6257 = smul.u32 %s3442, 6
    %s6258 = smul.u32 %s6257, 128
    %s6259 = scalar_lea.vmem %s5, %s6258
    %v6260 = vld [vmem:[%s6259] sm:$0xff]
    %v6261 = vld [vmem:[%s6259 + $0x8] sm:$0xff]
    %v6262 = vld [vmem:[%s6259 + $0x10] sm:$0xff]
    %v6263 = vld [vmem:[%s6259 + $0x18] sm:$0xff]
    %v6264 = vld [vmem:[%s6259 + $0x20] sm:$0xff]
    %v6265 = vld [vmem:[%s6259 + $0x28] sm:$0xff]
    %v6266 = vld [vmem:[%s6259 + $0x30] sm:$0xff]
    %v6267 = vld [vmem:[%s6259 + $0x38] sm:$0xff]
    %v6268 = vld [vmem:[%s6259 + $0x40] sm:$0xff]
    %v6269 = vld [vmem:[%s6259 + $0x48] sm:$0xff]
    %v6270 = vld [vmem:[%s6259 + $0x50] sm:$0xff]
    %v6271 = vld [vmem:[%s6259 + $0x58] sm:$0xff]
    %v6272 = vld [vmem:[%s6259 + $0x60] sm:$0xff]
    %v6273 = vld [vmem:[%s6259 + $0x68] sm:$0xff]
    %v6274 = vld [vmem:[%s6259 + $0x70] sm:$0xff]
    %v6275 = vld [vmem:[%s6259 + $0x78] sm:$0xff]
    %6276 = vmatprep.subr.mxu0 0.0
    %6277 = vmatpush1.msra.mxu0 %v6260
    %6278 = vmatprep.subr.mxu0 0.0
    %6279 = vmatpush1.msra.mxu0 %v6261
    %6280 = vmatprep.subr.mxu0 0.0
    %6281 = vmatpush1.msra.mxu0 %v6262
    %6282 = vmatprep.subr.mxu0 0.0
    %6283 = vmatpush1.msra.mxu0 %v6263
    %6284 = vmatprep.subr.mxu0 0.0
    %6285 = vmatpush1.msra.mxu0 %v6264
    %6286 = vmatprep.subr.mxu0 0.0
    %6287 = vmatpush1.msra.mxu0 %v6265
    %6288 = vmatprep.subr.mxu0 0.0
    %6289 = vmatpush1.msra.mxu0 %v6266
    %6290 = vmatprep.subr.mxu0 0.0
    %6291 = vmatpush1.msra.mxu0 %v6267
    %6292 = vmatprep.subr.mxu0 0.0
    %6293 = vmatpush1.msra.mxu0 %v6268
    %6294 = vmatprep.subr.mxu0 0.0
    %6295 = vmatpush1.msra.mxu0 %v6269
    %6296 = vmatprep.subr.mxu0 0.0
    %6297 = vmatpush1.msra.mxu0 %v6270
    %6298 = vmatprep.subr.mxu0 0.0
    %6299 = vmatpush1.msra.mxu0 %v6271
    %6300 = vmatprep.subr.mxu0 0.0
    %6301 = vmatpush1.msra.mxu0 %v6272
    %6302 = vmatprep.subr.mxu0 0.0
    %6303 = vmatpush1.msra.mxu0 %v6273
    %6304 = vmatprep.subr.mxu0 0.0
    %6305 = vmatpush1.msra.mxu0 %v6274
    %6306 = vmatprep.subr.mxu0 0.0
    %6307 = vmatpush1.msra.mxu0 %v6275
    %6308 = vmatprep.subr.mxu0 0.0
    %6309 = vmatpush1.msra.mxu0 0.0
    %6310 = vmatprep.subr.mxu0 0.0
    %6311 = vmatpush1.msra.mxu0 0.0
    %6312 = vmatprep.subr.mxu0 0.0
    %6313 = vmatpush1.msra.mxu0 0.0
    %6314 = vmatprep.subr.mxu0 0.0
    %6315 = vmatpush1.msra.mxu0 0.0
    %6316 = vmatprep.subr.mxu0 0.0
    %6317 = vmatpush1.msra.mxu0 0.0
    %6318 = vmatprep.subr.mxu0 0.0
    %6319 = vmatpush1.msra.mxu0 0.0
    %6320 = vmatprep.subr.mxu0 0.0
    %6321 = vmatpush1.msra.mxu0 0.0
    %6322 = vmatprep.subr.mxu0 0.0
    %6323 = vmatpush1.msra.mxu0 0.0
    %6324 = vmatprep.subr.mxu0 0.0
    %6325 = vmatpush1.msra.mxu0 0.0
    %6326 = vmatprep.subr.mxu0 0.0
    %6327 = vmatpush1.msra.mxu0 0.0
    %6328 = vmatprep.subr.mxu0 0.0
    %6329 = vmatpush1.msra.mxu0 0.0
    %6330 = vmatprep.subr.mxu0 0.0
    %6331 = vmatpush1.msra.mxu0 0.0
    %6332 = vmatprep.subr.mxu0 0.0
    %6333 = vmatpush1.msra.mxu0 0.0
    %6334 = vmatprep.subr.mxu0 0.0
    %6335 = vmatpush1.msra.mxu0 0.0
    %6336 = vmatprep.subr.mxu0 0.0
    %6337 = vmatpush1.msra.mxu0 0.0
    %6338 = vmatprep.subr.mxu0 0.0
    %6339 = vmatpush1.msra.mxu0 0.0
    %6340 = vmatprep.mubr.f32.mxu0 0.0
    %6341 = vmatmul.mubr.f32.gmra.mrb[0].mxu0 %v6256
    %v6342 = vpop.f32.mrb[0].mxu0
    %v6343 = vadd.f32 0.0, %v6342
    %v6344 = vpop.f32.mrb[0].mxu0
    %6345 = vdwg.mxu0
    %v6346 = vadd.f32 %v3447, %v6343
    %v6347 = vmax.f32 %v4949, %v4950
    %v6348 = vmax.f32 %v6236, %v6237
    %v6349 = vmax.f32 %v6347, %v6348
    %v6350 = vadd.f32 %v6349, %v6253
    %v6351 = vmax.f32 %v6350, 0.0
    %s6352 = sadd.s32 %s6257, 1
    %s6353 = smul.u32 %s6352, 128
    %s6354 = scalar_lea.vmem %s5, %s6353
    %v6355 = vld [vmem:[%s6354] sm:$0xff]
    %v6356 = vld [vmem:[%s6354 + $0x8] sm:$0xff]
    %v6357 = vld [vmem:[%s6354 + $0x10] sm:$0xff]
    %v6358 = vld [vmem:[%s6354 + $0x18] sm:$0xff]
    %v6359 = vld [vmem:[%s6354 + $0x20] sm:$0xff]
    %v6360 = vld [vmem:[%s6354 + $0x28] sm:$0xff]
    %v6361 = vld [vmem:[%s6354 + $0x30] sm:$0xff]
    %v6362 = vld [vmem:[%s6354 + $0x38] sm:$0xff]
    %v6363 = vld [vmem:[%s6354 + $0x40] sm:$0xff]
    %v6364 = vld [vmem:[%s6354 + $0x48] sm:$0xff]
    %v6365 = vld [vmem:[%s6354 + $0x50] sm:$0xff]
    %v6366 = vld [vmem:[%s6354 + $0x58] sm:$0xff]
    %v6367 = vld [vmem:[%s6354 + $0x60] sm:$0xff]
    %v6368 = vld [vmem:[%s6354 + $0x68] sm:$0xff]
    %v6369 = vld [vmem:[%s6354 + $0x70] sm:$0xff]
    %v6370 = vld [vmem:[%s6354 + $0x78] sm:$0xff]
    %6371 = vmatprep.subr.mxu0 0.0
    %6372 = vmatpush1.msra.mxu0 %v6355
    %6373 = vmatprep.subr.mxu0 0.0
    %6374 = vmatpush1.msra.mxu0 %v6356
    %6375 = vmatprep.subr.mxu0 0.0
    %6376 = vmatpush1.msra.mxu0 %v6357
    %6377 = vmatprep.subr.mxu0 0.0
    %6378 = vmatpush1.msra.mxu0 %v6358
    %6379 = vmatprep.subr.mxu0 0.0
    %6380 = vmatpush1.msra.mxu0 %v6359
    %6381 = vmatprep.subr.mxu0 0.0
    %6382 = vmatpush1.msra.mxu0 %v6360
    %6383 = vmatprep.subr.mxu0 0.0
    %6384 = vmatpush1.msra.mxu0 %v6361
    %6385 = vmatprep.subr.mxu0 0.0
    %6386 = vmatpush1.msra.mxu0 %v6362
    %6387 = vmatprep.subr.mxu0 0.0
    %6388 = vmatpush1.msra.mxu0 %v6363
    %6389 = vmatprep.subr.mxu0 0.0
    %6390 = vmatpush1.msra.mxu0 %v6364
    %6391 = vmatprep.subr.mxu0 0.0
    %6392 = vmatpush1.msra.mxu0 %v6365
    %6393 = vmatprep.subr.mxu0 0.0
    %6394 = vmatpush1.msra.mxu0 %v6366
    %6395 = vmatprep.subr.mxu0 0.0
    %6396 = vmatpush1.msra.mxu0 %v6367
    %6397 = vmatprep.subr.mxu0 0.0
    %6398 = vmatpush1.msra.mxu0 %v6368
    %6399 = vmatprep.subr.mxu0 0.0
    %6400 = vmatpush1.msra.mxu0 %v6369
    %6401 = vmatprep.subr.mxu0 0.0
    %6402 = vmatpush1.msra.mxu0 %v6370
    %6403 = vmatprep.subr.mxu0 0.0
    %6404 = vmatpush1.msra.mxu0 0.0
    %6405 = vmatprep.subr.mxu0 0.0
    %6406 = vmatpush1.msra.mxu0 0.0
    %6407 = vmatprep.subr.mxu0 0.0
    %6408 = vmatpush1.msra.mxu0 0.0
    %6409 = vmatprep.subr.mxu0 0.0
    %6410 = vmatpush1.msra.mxu0 0.0
    %6411 = vmatprep.subr.mxu0 0.0
    %6412 = vmatpush1.msra.mxu0 0.0
    %6413 = vmatprep.subr.mxu0 0.0
    %6414 = vmatpush1.msra.mxu0 0.0
    %6415 = vmatprep.subr.mxu0 0.0
    %6416 = vmatpush1.msra.mxu0 0.0
    %6417 = vmatprep.subr.mxu0 0.0
    %6418 = vmatpush1.msra.mxu0 0.0
    %6419 = vmatprep.subr.mxu0 0.0
    %6420 = vmatpush1.msra.mxu0 0.0
    %6421 = vmatprep.subr.mxu0 0.0
    %6422 = vmatpush1.msra.mxu0 0.0
    %6423 = vmatprep.subr.mxu0 0.0
    %6424 = vmatpush1.msra.mxu0 0.0
    %6425 = vmatprep.subr.mxu0 0.0
    %6426 = vmatpush1.msra.mxu0 0.0
    %6427 = vmatprep.subr.mxu0 0.0
    %6428 = vmatpush1.msra.mxu0 0.0
    %6429 = vmatprep.subr.mxu0 0.0
    %6430 = vmatpush1.msra.mxu0 0.0
    %6431 = vmatprep.subr.mxu0 0.0
    %6432 = vmatpush1.msra.mxu0 0.0
    %6433 = vmatprep.subr.mxu0 0.0
    %6434 = vmatpush1.msra.mxu0 0.0
    %6435 = vmatprep.mubr.f32.mxu0 0.0
    %6436 = vmatmul.mubr.f32.gmra.mrb[0].mxu0 %v6351
    %v6437 = vpop.f32.mrb[0].mxu0
    %v6438 = vadd.f32 0.0, %v6437
    %v6439 = vpop.f32.mrb[0].mxu0
    %6440 = vdwg.mxu0
    %v6441 = vadd.f32 %v6346, %v6438
    %v6442 = vmax.f32 %v4951, %v4952
    %v6443 = vmax.f32 %v6238, %v6239
    %v6444 = vmax.f32 %v6442, %v6443
    %v6445 = vadd.f32 %v6444, %v6253
    %v6446 = vmax.f32 %v6445, 0.0
    %s6447 = sadd.s32 %s6257, 2
    %s6448 = smul.u32 %s6447, 128
    %s6449 = scalar_lea.vmem %s5, %s6448
    %v6450 = vld [vmem:[%s6449] sm:$0xff]
    %v6451 = vld [vmem:[%s6449 + $0x8] sm:$0xff]
    %v6452 = vld [vmem:[%s6449 + $0x10] sm:$0xff]
    %v6453 = vld [vmem:[%s6449 + $0x18] sm:$0xff]
    %v6454 = vld [vmem:[%s6449 + $0x20] sm:$0xff]
    %v6455 = vld [vmem:[%s6449 + $0x28] sm:$0xff]
    %v6456 = vld [vmem:[%s6449 + $0x30] sm:$0xff]
    %v6457 = vld [vmem:[%s6449 + $0x38] sm:$0xff]
    %v6458 = vld [vmem:[%s6449 + $0x40] sm:$0xff]
    %v6459 = vld [vmem:[%s6449 + $0x48] sm:$0xff]
    %v6460 = vld [vmem:[%s6449 + $0x50] sm:$0xff]
    %v6461 = vld [vmem:[%s6449 + $0x58] sm:$0xff]
    %v6462 = vld [vmem:[%s6449 + $0x60] sm:$0xff]
    %v6463 = vld [vmem:[%s6449 + $0x68] sm:$0xff]
    %v6464 = vld [vmem:[%s6449 + $0x70] sm:$0xff]
    %v6465 = vld [vmem:[%s6449 + $0x78] sm:$0xff]
    %6466 = vmatprep.subr.mxu0 0.0
    %6467 = vmatpush1.msra.mxu0 %v6450
    %6468 = vmatprep.subr.mxu0 0.0
    %6469 = vmatpush1.msra.mxu0 %v6451
    %6470 = vmatprep.subr.mxu0 0.0
    %6471 = vmatpush1.msra.mxu0 %v6452
    %6472 = vmatprep.subr.mxu0 0.0
    %6473 = vmatpush1.msra.mxu0 %v6453
    %6474 = vmatprep.subr.mxu0 0.0
    %6475 = vmatpush1.msra.mxu0 %v6454
    %6476 = vmatprep.subr.mxu0 0.0
    %6477 = vmatpush1.msra.mxu0 %v6455
    %6478 = vmatprep.subr.mxu0 0.0
    %6479 = vmatpush1.msra.mxu0 %v6456
    %6480 = vmatprep.subr.mxu0 0.0
    %6481 = vmatpush1.msra.mxu0 %v6457
    %6482 = vmatprep.subr.mxu0 0.0
    %6483 = vmatpush1.msra.mxu0 %v6458
    %6484 = vmatprep.subr.mxu0 0.0
    %6485 = vmatpush1.msra.mxu0 %v6459
    %6486 = vmatprep.subr.mxu0 0.0
    %6487 = vmatpush1.msra.mxu0 %v6460
    %6488 = vmatprep.subr.mxu0 0.0
    %6489 = vmatpush1.msra.mxu0 %v6461
    %6490 = vmatprep.subr.mxu0 0.0
    %6491 = vmatpush1.msra.mxu0 %v6462
    %6492 = vmatprep.subr.mxu0 0.0
    %6493 = vmatpush1.msra.mxu0 %v6463
    %6494 = vmatprep.subr.mxu0 0.0
    %6495 = vmatpush1.msra.mxu0 %v6464
    %6496 = vmatprep.subr.mxu0 0.0
    %6497 = vmatpush1.msra.mxu0 %v6465
    %6498 = vmatprep.subr.mxu0 0.0
    %6499 = vmatpush1.msra.mxu0 0.0
    %6500 = vmatprep.subr.mxu0 0.0
    %6501 = vmatpush1.msra.mxu0 0.0
    %6502 = vmatprep.subr.mxu0 0.0
    %6503 = vmatpush1.msra.mxu0 0.0
    %6504 = vmatprep.subr.mxu0 0.0
    %6505 = vmatpush1.msra.mxu0 0.0
    %6506 = vmatprep.subr.mxu0 0.0
    %6507 = vmatpush1.msra.mxu0 0.0
    %6508 = vmatprep.subr.mxu0 0.0
    %6509 = vmatpush1.msra.mxu0 0.0
    %6510 = vmatprep.subr.mxu0 0.0
    %6511 = vmatpush1.msra.mxu0 0.0
    %6512 = vmatprep.subr.mxu0 0.0
    %6513 = vmatpush1.msra.mxu0 0.0
    %6514 = vmatprep.subr.mxu0 0.0
    %6515 = vmatpush1.msra.mxu0 0.0
    %6516 = vmatprep.subr.mxu0 0.0
    %6517 = vmatpush1.msra.mxu0 0.0
    %6518 = vmatprep.subr.mxu0 0.0
    %6519 = vmatpush1.msra.mxu0 0.0
    %6520 = vmatprep.subr.mxu0 0.0
    %6521 = vmatpush1.msra.mxu0 0.0
    %6522 = vmatprep.subr.mxu0 0.0
    %6523 = vmatpush1.msra.mxu0 0.0
    %6524 = vmatprep.subr.mxu0 0.0
    %6525 = vmatpush1.msra.mxu0 0.0
    %6526 = vmatprep.subr.mxu0 0.0
    %6527 = vmatpush1.msra.mxu0 0.0
    %6528 = vmatprep.subr.mxu0 0.0
    %6529 = vmatpush1.msra.mxu0 0.0
    %6530 = vmatprep.mubr.f32.mxu0 0.0
    %6531 = vmatmul.mubr.f32.gmra.mrb[0].mxu0 %v6446
    %v6532 = vpop.f32.mrb[0].mxu0
    %v6533 = vadd.f32 0.0, %v6532
    %v6534 = vpop.f32.mrb[0].mxu0
    %6535 = vdwg.mxu0
    %v6536 = vadd.f32 %v6441, %v6533
    %v6537 = vmax.f32 %v4953, %v4954
    %v6538 = vmax.f32 %v6240, %v6241
    %v6539 = vmax.f32 %v6537, %v6538
    %v6540 = vadd.f32 %v6539, %v6253
    %v6541 = vmax.f32 %v6540, 0.0
    %s6542 = sadd.s32 %s6257, 3
    %s6543 = smul.u32 %s6542, 128
    %s6544 = scalar_lea.vmem %s5, %s6543
    %v6545 = vld [vmem:[%s6544] sm:$0xff]
    %v6546 = vld [vmem:[%s6544 + $0x8] sm:$0xff]
    %v6547 = vld [vmem:[%s6544 + $0x10] sm:$0xff]
    %v6548 = vld [vmem:[%s6544 + $0x18] sm:$0xff]
    %v6549 = vld [vmem:[%s6544 + $0x20] sm:$0xff]
    %v6550 = vld [vmem:[%s6544 + $0x28] sm:$0xff]
    %v6551 = vld [vmem:[%s6544 + $0x30] sm:$0xff]
    %v6552 = vld [vmem:[%s6544 + $0x38] sm:$0xff]
    %v6553 = vld [vmem:[%s6544 + $0x40] sm:$0xff]
    %v6554 = vld [vmem:[%s6544 + $0x48] sm:$0xff]
    %v6555 = vld [vmem:[%s6544 + $0x50] sm:$0xff]
    %v6556 = vld [vmem:[%s6544 + $0x58] sm:$0xff]
    %v6557 = vld [vmem:[%s6544 + $0x60] sm:$0xff]
    %v6558 = vld [vmem:[%s6544 + $0x68] sm:$0xff]
    %v6559 = vld [vmem:[%s6544 + $0x70] sm:$0xff]
    %v6560 = vld [vmem:[%s6544 + $0x78] sm:$0xff]
    %6561 = vmatprep.subr.mxu0 0.0
    %6562 = vmatpush1.msra.mxu0 %v6545
    %6563 = vmatprep.subr.mxu0 0.0
    %6564 = vmatpush1.msra.mxu0 %v6546
    %6565 = vmatprep.subr.mxu0 0.0
    %6566 = vmatpush1.msra.mxu0 %v6547
    %6567 = vmatprep.subr.mxu0 0.0
    %6568 = vmatpush1.msra.mxu0 %v6548
    %6569 = vmatprep.subr.mxu0 0.0
    %6570 = vmatpush1.msra.mxu0 %v6549
    %6571 = vmatprep.subr.mxu0 0.0
    %6572 = vmatpush1.msra.mxu0 %v6550
    %6573 = vmatprep.subr.mxu0 0.0
    %6574 = vmatpush1.msra.mxu0 %v6551
    %6575 = vmatprep.subr.mxu0 0.0
    %6576 = vmatpush1.msra.mxu0 %v6552
    %6577 = vmatprep.subr.mxu0 0.0
    %6578 = vmatpush1.msra.mxu0 %v6553
    %6579 = vmatprep.subr.mxu0 0.0
    %6580 = vmatpush1.msra.mxu0 %v6554
    %6581 = vmatprep.subr.mxu0 0.0
    %6582 = vmatpush1.msra.mxu0 %v6555
    %6583 = vmatprep.subr.mxu0 0.0
    %6584 = vmatpush1.msra.mxu0 %v6556
    %6585 = vmatprep.subr.mxu0 0.0
    %6586 = vmatpush1.msra.mxu0 %v6557
    %6587 = vmatprep.subr.mxu0 0.0
    %6588 = vmatpush1.msra.mxu0 %v6558
    %6589 = vmatprep.subr.mxu0 0.0
    %6590 = vmatpush1.msra.mxu0 %v6559
    %6591 = vmatprep.subr.mxu0 0.0
    %6592 = vmatpush1.msra.mxu0 %v6560
    %6593 = vmatprep.subr.mxu0 0.0
    %6594 = vmatpush1.msra.mxu0 0.0
    %6595 = vmatprep.subr.mxu0 0.0
    %6596 = vmatpush1.msra.mxu0 0.0
    %6597 = vmatprep.subr.mxu0 0.0
    %6598 = vmatpush1.msra.mxu0 0.0
    %6599 = vmatprep.subr.mxu0 0.0
    %6600 = vmatpush1.msra.mxu0 0.0
    %6601 = vmatprep.subr.mxu0 0.0
    %6602 = vmatpush1.msra.mxu0 0.0
    %6603 = vmatprep.subr.mxu0 0.0
    %6604 = vmatpush1.msra.mxu0 0.0
    %6605 = vmatprep.subr.mxu0 0.0
    %6606 = vmatpush1.msra.mxu0 0.0
    %6607 = vmatprep.subr.mxu0 0.0
    %6608 = vmatpush1.msra.mxu0 0.0
    %6609 = vmatprep.subr.mxu0 0.0
    %6610 = vmatpush1.msra.mxu0 0.0
    %6611 = vmatprep.subr.mxu0 0.0
    %6612 = vmatpush1.msra.mxu0 0.0
    %6613 = vmatprep.subr.mxu0 0.0
    %6614 = vmatpush1.msra.mxu0 0.0
    %6615 = vmatprep.subr.mxu0 0.0
    %6616 = vmatpush1.msra.mxu0 0.0
    %6617 = vmatprep.subr.mxu0 0.0
    %6618 = vmatpush1.msra.mxu0 0.0
    %6619 = vmatprep.subr.mxu0 0.0
    %6620 = vmatpush1.msra.mxu0 0.0
    %6621 = vmatprep.subr.mxu0 0.0
    %6622 = vmatpush1.msra.mxu0 0.0
    %6623 = vmatprep.subr.mxu0 0.0
    %6624 = vmatpush1.msra.mxu0 0.0
    %6625 = vmatprep.mubr.f32.mxu0 0.0
    %6626 = vmatmul.mubr.f32.gmra.mrb[0].mxu0 %v6541
    %v6627 = vpop.f32.mrb[0].mxu0
    %v6628 = vadd.f32 0.0, %v6627
    %v6629 = vpop.f32.mrb[0].mxu0
    %6630 = vdwg.mxu0
    %v6631 = vadd.f32 %v6536, %v6628
    %v6632 = vmax.f32 %v4955, %v4956
    %v6633 = vmax.f32 %v6242, %v6243
    %v6634 = vmax.f32 %v6632, %v6633
    %v6635 = vadd.f32 %v6634, %v6253
    %v6636 = vmax.f32 %v6635, 0.0
    %s6637 = sadd.s32 %s6257, 4
    %s6638 = smul.u32 %s6637, 128
    %s6639 = scalar_lea.vmem %s5, %s6638
    %v6640 = vld [vmem:[%s6639] sm:$0xff]
    %v6641 = vld [vmem:[%s6639 + $0x8] sm:$0xff]
    %v6642 = vld [vmem:[%s6639 + $0x10] sm:$0xff]
    %v6643 = vld [vmem:[%s6639 + $0x18] sm:$0xff]
    %v6644 = vld [vmem:[%s6639 + $0x20] sm:$0xff]
    %v6645 = vld [vmem:[%s6639 + $0x28] sm:$0xff]
    %v6646 = vld [vmem:[%s6639 + $0x30] sm:$0xff]
    %v6647 = vld [vmem:[%s6639 + $0x38] sm:$0xff]
    %v6648 = vld [vmem:[%s6639 + $0x40] sm:$0xff]
    %v6649 = vld [vmem:[%s6639 + $0x48] sm:$0xff]
    %v6650 = vld [vmem:[%s6639 + $0x50] sm:$0xff]
    %v6651 = vld [vmem:[%s6639 + $0x58] sm:$0xff]
    %v6652 = vld [vmem:[%s6639 + $0x60] sm:$0xff]
    %v6653 = vld [vmem:[%s6639 + $0x68] sm:$0xff]
    %v6654 = vld [vmem:[%s6639 + $0x70] sm:$0xff]
    %v6655 = vld [vmem:[%s6639 + $0x78] sm:$0xff]
    %6656 = vmatprep.subr.mxu0 0.0
    %6657 = vmatpush1.msra.mxu0 %v6640
    %6658 = vmatprep.subr.mxu0 0.0
    %6659 = vmatpush1.msra.mxu0 %v6641
    %6660 = vmatprep.subr.mxu0 0.0
    %6661 = vmatpush1.msra.mxu0 %v6642
    %6662 = vmatprep.subr.mxu0 0.0
    %6663 = vmatpush1.msra.mxu0 %v6643
    %6664 = vmatprep.subr.mxu0 0.0
    %6665 = vmatpush1.msra.mxu0 %v6644
    %6666 = vmatprep.subr.mxu0 0.0
    %6667 = vmatpush1.msra.mxu0 %v6645
    %6668 = vmatprep.subr.mxu0 0.0
    %6669 = vmatpush1.msra.mxu0 %v6646
    %6670 = vmatprep.subr.mxu0 0.0
    %6671 = vmatpush1.msra.mxu0 %v6647
    %6672 = vmatprep.subr.mxu0 0.0
    %6673 = vmatpush1.msra.mxu0 %v6648
    %6674 = vmatprep.subr.mxu0 0.0
    %6675 = vmatpush1.msra.mxu0 %v6649
    %6676 = vmatprep.subr.mxu0 0.0
    %6677 = vmatpush1.msra.mxu0 %v6650
    %6678 = vmatprep.subr.mxu0 0.0
    %6679 = vmatpush1.msra.mxu0 %v6651
    %6680 = vmatprep.subr.mxu0 0.0
    %6681 = vmatpush1.msra.mxu0 %v6652
    %6682 = vmatprep.subr.mxu0 0.0
    %6683 = vmatpush1.msra.mxu0 %v6653
    %6684 = vmatprep.subr.mxu0 0.0
    %6685 = vmatpush1.msra.mxu0 %v6654
    %6686 = vmatprep.subr.mxu0 0.0
    %6687 = vmatpush1.msra.mxu0 %v6655
    %6688 = vmatprep.subr.mxu0 0.0
    %6689 = vmatpush1.msra.mxu0 0.0
    %6690 = vmatprep.subr.mxu0 0.0
    %6691 = vmatpush1.msra.mxu0 0.0
    %6692 = vmatprep.subr.mxu0 0.0
    %6693 = vmatpush1.msra.mxu0 0.0
    %6694 = vmatprep.subr.mxu0 0.0
    %6695 = vmatpush1.msra.mxu0 0.0
    %6696 = vmatprep.subr.mxu0 0.0
    %6697 = vmatpush1.msra.mxu0 0.0
    %6698 = vmatprep.subr.mxu0 0.0
    %6699 = vmatpush1.msra.mxu0 0.0
    %6700 = vmatprep.subr.mxu0 0.0
    %6701 = vmatpush1.msra.mxu0 0.0
    %6702 = vmatprep.subr.mxu0 0.0
    %6703 = vmatpush1.msra.mxu0 0.0
    %6704 = vmatprep.subr.mxu0 0.0
    %6705 = vmatpush1.msra.mxu0 0.0
    %6706 = vmatprep.subr.mxu0 0.0
    %6707 = vmatpush1.msra.mxu0 0.0
    %6708 = vmatprep.subr.mxu0 0.0
    %6709 = vmatpush1.msra.mxu0 0.0
    %6710 = vmatprep.subr.mxu0 0.0
    %6711 = vmatpush1.msra.mxu0 0.0
    %6712 = vmatprep.subr.mxu0 0.0
    %6713 = vmatpush1.msra.mxu0 0.0
    %6714 = vmatprep.subr.mxu0 0.0
    %6715 = vmatpush1.msra.mxu0 0.0
    %6716 = vmatprep.subr.mxu0 0.0
    %6717 = vmatpush1.msra.mxu0 0.0
    %6718 = vmatprep.subr.mxu0 0.0
    %6719 = vmatpush1.msra.mxu0 0.0
    %6720 = vmatprep.mubr.f32.mxu0 0.0
    %6721 = vmatmul.mubr.f32.gmra.mrb[0].mxu0 %v6636
    %v6722 = vpop.f32.mrb[0].mxu0
    %v6723 = vadd.f32 0.0, %v6722
    %v6724 = vpop.f32.mrb[0].mxu0
    %6725 = vdwg.mxu0
    %v6726 = vadd.f32 %v6631, %v6723
    %v6727 = vmax.f32 %v4957, %v4958
    %v6728 = vmax.f32 %v6244, %v6245
    %v6729 = vmax.f32 %v6727, %v6728
    %v6730 = vadd.f32 %v6729, %v6253
    %v6731 = vmax.f32 %v6730, 0.0
    %s6732 = sadd.s32 %s6257, 5
    %s6733 = smul.u32 %s6732, 128
    %s6734 = scalar_lea.vmem %s5, %s6733
    %v6735 = vld [vmem:[%s6734] sm:$0xff]
    %v6736 = vld [vmem:[%s6734 + $0x8] sm:$0xff]
    %v6737 = vld [vmem:[%s6734 + $0x10] sm:$0xff]
    %v6738 = vld [vmem:[%s6734 + $0x18] sm:$0xff]
    %v6739 = vld [vmem:[%s6734 + $0x20] sm:$0xff]
    %v6740 = vld [vmem:[%s6734 + $0x28] sm:$0xff]
    %v6741 = vld [vmem:[%s6734 + $0x30] sm:$0xff]
    %v6742 = vld [vmem:[%s6734 + $0x38] sm:$0xff]
    %v6743 = vld [vmem:[%s6734 + $0x40] sm:$0xff]
    %v6744 = vld [vmem:[%s6734 + $0x48] sm:$0xff]
    %v6745 = vld [vmem:[%s6734 + $0x50] sm:$0xff]
    %v6746 = vld [vmem:[%s6734 + $0x58] sm:$0xff]
    %v6747 = vld [vmem:[%s6734 + $0x60] sm:$0xff]
    %v6748 = vld [vmem:[%s6734 + $0x68] sm:$0xff]
    %v6749 = vld [vmem:[%s6734 + $0x70] sm:$0xff]
    %v6750 = vld [vmem:[%s6734 + $0x78] sm:$0xff]
    %6751 = vmatprep.subr.mxu0 0.0
    %6752 = vmatpush1.msra.mxu0 %v6735
    %6753 = vmatprep.subr.mxu0 0.0
    %6754 = vmatpush1.msra.mxu0 %v6736
    %6755 = vmatprep.subr.mxu0 0.0
    %6756 = vmatpush1.msra.mxu0 %v6737
    %6757 = vmatprep.subr.mxu0 0.0
    %6758 = vmatpush1.msra.mxu0 %v6738
    %6759 = vmatprep.subr.mxu0 0.0
    %6760 = vmatpush1.msra.mxu0 %v6739
    %6761 = vmatprep.subr.mxu0 0.0
    %6762 = vmatpush1.msra.mxu0 %v6740
    %6763 = vmatprep.subr.mxu0 0.0
    %6764 = vmatpush1.msra.mxu0 %v6741
    %6765 = vmatprep.subr.mxu0 0.0
    %6766 = vmatpush1.msra.mxu0 %v6742
    %6767 = vmatprep.subr.mxu0 0.0
    %6768 = vmatpush1.msra.mxu0 %v6743
    %6769 = vmatprep.subr.mxu0 0.0
    %6770 = vmatpush1.msra.mxu0 %v6744
    %6771 = vmatprep.subr.mxu0 0.0
    %6772 = vmatpush1.msra.mxu0 %v6745
    %6773 = vmatprep.subr.mxu0 0.0
    %6774 = vmatpush1.msra.mxu0 %v6746
    %6775 = vmatprep.subr.mxu0 0.0
    %6776 = vmatpush1.msra.mxu0 %v6747
    %6777 = vmatprep.subr.mxu0 0.0
    %6778 = vmatpush1.msra.mxu0 %v6748
    %6779 = vmatprep.subr.mxu0 0.0
    %6780 = vmatpush1.msra.mxu0 %v6749
    %6781 = vmatprep.subr.mxu0 0.0
    %6782 = vmatpush1.msra.mxu0 %v6750
    %6783 = vmatprep.subr.mxu0 0.0
    %6784 = vmatpush1.msra.mxu0 0.0
    %6785 = vmatprep.subr.mxu0 0.0
    %6786 = vmatpush1.msra.mxu0 0.0
    %6787 = vmatprep.subr.mxu0 0.0
    %6788 = vmatpush1.msra.mxu0 0.0
    %6789 = vmatprep.subr.mxu0 0.0
    %6790 = vmatpush1.msra.mxu0 0.0
    %6791 = vmatprep.subr.mxu0 0.0
    %6792 = vmatpush1.msra.mxu0 0.0
    %6793 = vmatprep.subr.mxu0 0.0
    %6794 = vmatpush1.msra.mxu0 0.0
    %6795 = vmatprep.subr.mxu0 0.0
    %6796 = vmatpush1.msra.mxu0 0.0
    %6797 = vmatprep.subr.mxu0 0.0
    %6798 = vmatpush1.msra.mxu0 0.0
    %6799 = vmatprep.subr.mxu0 0.0
    %6800 = vmatpush1.msra.mxu0 0.0
    %6801 = vmatprep.subr.mxu0 0.0
    %6802 = vmatpush1.msra.mxu0 0.0
    %6803 = vmatprep.subr.mxu0 0.0
    %6804 = vmatpush1.msra.mxu0 0.0
    %6805 = vmatprep.subr.mxu0 0.0
    %6806 = vmatpush1.msra.mxu0 0.0
    %6807 = vmatprep.subr.mxu0 0.0
    %6808 = vmatpush1.msra.mxu0 0.0
    %6809 = vmatprep.subr.mxu0 0.0
    %6810 = vmatpush1.msra.mxu0 0.0
    %6811 = vmatprep.subr.mxu0 0.0
    %6812 = vmatpush1.msra.mxu0 0.0
    %6813 = vmatprep.subr.mxu0 0.0
    %6814 = vmatpush1.msra.mxu0 0.0
    %6815 = vmatprep.mubr.f32.mxu0 0.0
    %6816 = vmatmul.mubr.f32.gmra.mrb[0].mxu0 %v6731
    %v6817 = vpop.f32.mrb[0].mxu0
    %v6818 = vadd.f32 0.0, %v6817
    %v6819 = vpop.f32.mrb[0].mxu0
    %6820 = vdwg.mxu0
    %v6821 = vadd.f32 %v6726, %v6818
  $region57: #{lenet_forward.1} parent=0 // loop_footer
    %s3446 = sadd.s32 1, %s3442
  $region58: #{lenet_forward.1} parent=0 // loop_footer_branch
    %3441 = sbr.rel target = $region54
  $region59: #{lenet_forward.1} parent=0 // loop_exit
    _
  %v6822 = vld [vmem:[%s6] sm:$0x1]
  %v6824 = vlaneseq
  %v6825 = vshrl.u32 %v6824, 7
  %v6826 = vsub.s32 0, %v6825
  %v6827 = vrot.slane %v6822, %v6826
  %v6829 = vadd.f32 %v3447, %v6827
  %v6830 = vmax.f32 %v6829, 0.0
  %v6831 = vld [vmem:[%s7] sm:$0xff]
  %v6832 = vld [vmem:[%s7 + $0x8] sm:$0xff]
  %v6833 = vld [vmem:[%s7 + $0x10] sm:$0xff]
  %v6834 = vld [vmem:[%s7 + $0x18] sm:$0xff]
  %v6835 = vld [vmem:[%s7 + $0x20] sm:$0xff]
  %v6836 = vld [vmem:[%s7 + $0x28] sm:$0xff]
  %v6837 = vld [vmem:[%s7 + $0x30] sm:$0xff]
  %v6838 = vld [vmem:[%s7 + $0x38] sm:$0xff]
  %v6839 = vld [vmem:[%s7 + $0x40] sm:$0xff]
  %v6840 = vld [vmem:[%s7 + $0x48] sm:$0xff]
  %v6841 = vld [vmem:[%s7 + $0x50] sm:$0xff]
  %v6842 = vld [vmem:[%s7 + $0x58] sm:$0xff]
  %v6843 = vld [vmem:[%s7 + $0x60] sm:$0xff]
  %v6844 = vld [vmem:[%s7 + $0x68] sm:$0xff]
  %v6845 = vld [vmem:[%s7 + $0x70] sm:$0xff]
  %v6846 = vld [vmem:[%s7 + $0x78] sm:$0xff]
  %v6847 = vld [vmem:[%s8] sm:$0x1]
  %v6849 = vlaneseq
  %v6850 = vshrl.u32 %v6849, 7
  %v6851 = vsub.s32 0, %v6850
  %v6852 = vrot.slane %v6847, %v6851
  %6854 = vmatprep.subr.mxu0 0.0
  %6855 = vmatpush1.msra.mxu0 %v6831
  %6856 = vmatprep.subr.mxu0 0.0
  %6857 = vmatpush1.msra.mxu0 %v6832
  %6858 = vmatprep.subr.mxu0 0.0
  %6859 = vmatpush1.msra.mxu0 %v6833
  %6860 = vmatprep.subr.mxu0 0.0
  %6861 = vmatpush1.msra.mxu0 %v6834
  %6862 = vmatprep.subr.mxu0 0.0
  %6863 = vmatpush1.msra.mxu0 %v6835
  %6864 = vmatprep.subr.mxu0 0.0
  %6865 = vmatpush1.msra.mxu0 %v6836
  %6866 = vmatprep.subr.mxu0 0.0
  %6867 = vmatpush1.msra.mxu0 %v6837
  %6868 = vmatprep.subr.mxu0 0.0
  %6869 = vmatpush1.msra.mxu0 %v6838
  %6870 = vmatprep.subr.mxu0 0.0
  %6871 = vmatpush1.msra.mxu0 %v6839
  %6872 = vmatprep.subr.mxu0 0.0
  %6873 = vmatpush1.msra.mxu0 %v6840
  %6874 = vmatprep.subr.mxu0 0.0
  %6875 = vmatpush1.msra.mxu0 %v6841
  %6876 = vmatprep.subr.mxu0 0.0
  %6877 = vmatpush1.msra.mxu0 %v6842
  %6878 = vmatprep.subr.mxu0 0.0
  %6879 = vmatpush1.msra.mxu0 %v6843
  %6880 = vmatprep.subr.mxu0 0.0
  %6881 = vmatpush1.msra.mxu0 %v6844
  %6882 = vmatprep.subr.mxu0 0.0
  %6883 = vmatpush1.msra.mxu0 %v6845
  %6884 = vmatprep.subr.mxu0 0.0
  %6885 = vmatpush1.msra.mxu0 %v6846
  %6886 = vmatprep.subr.mxu0 0.0
  %6887 = vmatpush1.msra.mxu0 0.0
  %6888 = vmatprep.subr.mxu0 0.0
  %6889 = vmatpush1.msra.mxu0 0.0
  %6890 = vmatprep.subr.mxu0 0.0
  %6891 = vmatpush1.msra.mxu0 0.0
  %6892 = vmatprep.subr.mxu0 0.0
  %6893 = vmatpush1.msra.mxu0 0.0
  %6894 = vmatprep.subr.mxu0 0.0
  %6895 = vmatpush1.msra.mxu0 0.0
  %6896 = vmatprep.subr.mxu0 0.0
  %6897 = vmatpush1.msra.mxu0 0.0
  %6898 = vmatprep.subr.mxu0 0.0
  %6899 = vmatpush1.msra.mxu0 0.0
  %6900 = vmatprep.subr.mxu0 0.0
  %6901 = vmatpush1.msra.mxu0 0.0
  %6902 = vmatprep.subr.mxu0 0.0
  %6903 = vmatpush1.msra.mxu0 0.0
  %6904 = vmatprep.subr.mxu0 0.0
  %6905 = vmatpush1.msra.mxu0 0.0
  %6906 = vmatprep.subr.mxu0 0.0
  %6907 = vmatpush1.msra.mxu0 0.0
  %6908 = vmatprep.subr.mxu0 0.0
  %6909 = vmatpush1.msra.mxu0 0.0
  %6910 = vmatprep.subr.mxu0 0.0
  %6911 = vmatpush1.msra.mxu0 0.0
  %6912 = vmatprep.subr.mxu0 0.0
  %6913 = vmatpush1.msra.mxu0 0.0
  %6914 = vmatprep.subr.mxu0 0.0
  %6915 = vmatpush1.msra.mxu0 0.0
  %6916 = vmatprep.subr.mxu0 0.0
  %6917 = vmatpush1.msra.mxu0 0.0
  %6918 = vmatprep.mubr.f32.mxu0 0.0
  %6919 = vmatmul.mubr.f32.gmra.mrb[0].mxu0 %v6830
  %v6920 = vpop.f32.mrb[0].mxu0
  %v6921 = vadd.f32 %v6852, %v6920
  %v6922 = vpop.f32.mrb[0].mxu0
  %6923 = vdwg.mxu0
  %v6924 = vmax.f32 %v6921, 0.0
  %v6925 = vld [vmem:[%s9] sm:$0xff]
  %v6926 = vld [vmem:[%s9 + $0x8] sm:$0xff]
  %v6927 = vld [vmem:[%s9 + $0x10] sm:$0xff]
  %v6928 = vld [vmem:[%s9 + $0x18] sm:$0xff]
  %v6929 = vld [vmem:[%s9 + $0x20] sm:$0xff]
  %v6930 = vld [vmem:[%s9 + $0x28] sm:$0xff]
  %v6931 = vld [vmem:[%s9 + $0x30] sm:$0xff]
  %v6932 = vld [vmem:[%s9 + $0x38] sm:$0xff]
  %v6933 = vld [vmem:[%s9 + $0x40] sm:$0xff]
  %v6934 = vld [vmem:[%s9 + $0x48] sm:$0xff]
  %v6935 = vld [vmem:[%s9 + $0x50] sm:$0xff]
  %v6936 = vld [vmem:[%s9 + $0x58] sm:$0xff]
  %v6937 = vld [vmem:[%s9 + $0x60] sm:$0xff]
  %v6938 = vld [vmem:[%s9 + $0x68] sm:$0xff]
  %v6939 = vld [vmem:[%s9 + $0x70] sm:$0xff]
  %v6940 = vld [vmem:[%s9 + $0x78] sm:$0xff]
  %v6941 = vld [vmem:[%s10] sm:$0x1]
  %v6943 = vlaneseq
  %v6944 = vshrl.u32 %v6943, 7
  %v6945 = vsub.s32 0, %v6944
  %v6946 = vrot.slane %v6941, %v6945
  %6948 = vmatprep.subr.mxu0 0.0
  %6949 = vmatpush1.msra.mxu0 %v6925
  %6950 = vmatprep.subr.mxu0 0.0
  %6951 = vmatpush1.msra.mxu0 %v6926
  %6952 = vmatprep.subr.mxu0 0.0
  %6953 = vmatpush1.msra.mxu0 %v6927
  %6954 = vmatprep.subr.mxu0 0.0
  %6955 = vmatpush1.msra.mxu0 %v6928
  %6956 = vmatprep.subr.mxu0 0.0
  %6957 = vmatpush1.msra.mxu0 %v6929
  %6958 = vmatprep.subr.mxu0 0.0
  %6959 = vmatpush1.msra.mxu0 %v6930
  %6960 = vmatprep.subr.mxu0 0.0
  %6961 = vmatpush1.msra.mxu0 %v6931
  %6962 = vmatprep.subr.mxu0 0.0
  %6963 = vmatpush1.msra.mxu0 %v6932
  %6964 = vmatprep.subr.mxu0 0.0
  %6965 = vmatpush1.msra.mxu0 %v6933
  %6966 = vmatprep.subr.mxu0 0.0
  %6967 = vmatpush1.msra.mxu0 %v6934
  %6968 = vmatprep.subr.mxu0 0.0
  %6969 = vmatpush1.msra.mxu0 %v6935
  %6970 = vmatprep.subr.mxu0 0.0
  %6971 = vmatpush1.msra.mxu0 %v6936
  %6972 = vmatprep.subr.mxu0 0.0
  %6973 = vmatpush1.msra.mxu0 %v6937
  %6974 = vmatprep.subr.mxu0 0.0
  %6975 = vmatpush1.msra.mxu0 %v6938
  %6976 = vmatprep.subr.mxu0 0.0
  %6977 = vmatpush1.msra.mxu0 %v6939
  %6978 = vmatprep.subr.mxu0 0.0
  %6979 = vmatpush1.msra.mxu0 %v6940
  %6980 = vmatprep.subr.mxu0 0.0
  %6981 = vmatpush1.msra.mxu0 0.0
  %6982 = vmatprep.subr.mxu0 0.0
  %6983 = vmatpush1.msra.mxu0 0.0
  %6984 = vmatprep.subr.mxu0 0.0
  %6985 = vmatpush1.msra.mxu0 0.0
  %6986 = vmatprep.subr.mxu0 0.0
  %6987 = vmatpush1.msra.mxu0 0.0
  %6988 = vmatprep.subr.mxu0 0.0
  %6989 = vmatpush1.msra.mxu0 0.0
  %6990 = vmatprep.subr.mxu0 0.0
  %6991 = vmatpush1.msra.mxu0 0.0
  %6992 = vmatprep.subr.mxu0 0.0
  %6993 = vmatpush1.msra.mxu0 0.0
  %6994 = vmatprep.subr.mxu0 0.0
  %6995 = vmatpush1.msra.mxu0 0.0
  %6996 = vmatprep.subr.mxu0 0.0
  %6997 = vmatpush1.msra.mxu0 0.0
  %6998 = vmatprep.subr.mxu0 0.0
  %6999 = vmatpush1.msra.mxu0 0.0
  %7000 = vmatprep.subr.mxu0 0.0
  %7001 = vmatpush1.msra.mxu0 0.0
  %7002 = vmatprep.subr.mxu0 0.0
  %7003 = vmatpush1.msra.mxu0 0.0
  %7004 = vmatprep.subr.mxu0 0.0
  %7005 = vmatpush1.msra.mxu0 0.0
  %7006 = vmatprep.subr.mxu0 0.0
  %7007 = vmatpush1.msra.mxu0 0.0
  %7008 = vmatprep.subr.mxu0 0.0
  %7009 = vmatpush1.msra.mxu0 0.0
  %7010 = vmatprep.subr.mxu0 0.0
  %7011 = vmatpush1.msra.mxu0 0.0
  %7012 = vmatprep.mubr.f32.mxu0 0.0
  %7013 = vmatmul.mubr.f32.gmra.mrb[0].mxu0 %v6924
  %v7014 = vpop.f32.mrb[0].mxu0
  %v7015 = vadd.f32 %v6946, %v7014
  %v7016 = vpop.f32.mrb[0].mxu0
  %7017 = vdwg.mxu0
  %v7018 = vmax.f32 %v7015, 0.0
  %7019 = vst [vmem:[%s11] sm:$0xff] %v7018
  // Predicated region
  $region60: #{lenet_forward.1} parent=0 // pred_check
    _
  $region61: #{lenet_forward.1} parent=0 // pred_check_branch
    %7021 = sbr.rel (0) target = $region63
  $region62: #{lenet_forward.1} parent=0 // pred_region
    _
  $region63: #{lenet_forward.1} parent=0 // pred_fallthru
    _
  // Predicated region
  $region64: #{lenet_forward.1} parent=0 // pred_check
    _
  $region65: #{lenet_forward.1} parent=0 // pred_check_branch
    %7023 = sbr.rel (0) target = $region67
  $region66: #{lenet_forward.1} parent=0 // pred_region
    _
  $region67: #{lenet_forward.1} parent=0 // pred_fallthru
    _

</llo_original>
